<compile_context>
chip_gen: v7x
topology: tpu7x:2x2x1
jax: 0.10.0
libtpu: 0.0.40
codegen_flags: <defaults>
</compile_context>

<pallas_src>
import jax
import jax.numpy as jnp
from jax.experimental import pallas as pl
from jax.experimental.pallas import tpu as pltpu


# ----------------------------------------------------------------------------
# Fused kernel: one grid program == one adjacency branch.
#   x_1 = l2n(relu(adj @ W1 + b1))
#   x_k = l2n(relu(adj @ (x_{k-1} @ Wk) + bk))   k = 2..5
#   x_6 =      relu(adj @ (x_5     @ W6) + b6)
#   score = sum_k MLP(x_k)      (accumulated layer by layer)
# ----------------------------------------------------------------------------
def gnn_bet5_kernel(adj1_hbm, adj2_hbm,
                    w1_ref, b1_ref, w2_ref, b2_ref, w3_ref, b3_ref,
                    w4_ref, b4_ref, w5_ref, b5_ref, w6_ref, b6_ref,
                    mw1_ref, mb1_ref, mw2_ref, mb2_ref, mw3_ref, mb3_ref,
                    score_ref,
                    adj_vmem, dma_sem):
    # ---- bring this branch's adjacency into VMEM (single-buffered) ---------
    branch = pl.program_id(0)

    @pl.when(branch == 0)
    def _():
        cp = pltpu.make_async_copy(adj1_hbm, adj_vmem, dma_sem)
        cp.start()
        cp.wait()

    @pl.when(branch == 1)
    def _():
        cp = pltpu.make_async_copy(adj2_hbm, adj_vmem, dma_sem)
        cp.start()
        cp.wait()

    adj = adj_vmem[...]                                  # (N, N) bf16, resident
    n_nodes = adj.shape[0]

    # ---- hoisted MLP parameters (used 6x; no repeated loads/broadcasts) ----
    mw1 = mw1_ref[...]                                   # (F, H)  f32
    mw2 = mw2_ref[...]                                   # (H, H)  f32
    mw3 = mw3_ref[...]                                   # (H, 1)  f32
    mb1 = jnp.broadcast_to(mb1_ref[...], (n_nodes, mw1.shape[1]))
    mb2 = jnp.broadcast_to(mb2_ref[...], (n_nodes, mw2.shape[1]))
    mb3 = mb3_ref[...]                                   # (1, 1)

    def l2norm(y):                                       # F.normalize(p=2, dim=1)
        ss = jnp.sum(y * y, axis=1, keepdims=True)
        return y * jax.lax.rsqrt(jnp.maximum(ss, 1e-24))  # == y / max(||y||, 1e-12)

    def prop_init(w, b):                                 # GNN_Layer_Init
        y = jnp.dot(adj, w, preferred_element_type=jnp.float32) + b
        return jnp.maximum(y, 0.0)

    def prop(x, w, b):                                   # GNN_Layer
        h = jnp.dot(x, w, preferred_element_type=jnp.float32)
        y = jnp.dot(adj, h.astype(jnp.bfloat16),
                    preferred_element_type=jnp.float32) + b
        return jnp.maximum(y, 0.0)

    def mlp(x):                                          # score head (dropout = id)
        h1 = jnp.maximum(
            jnp.dot(x, mw1, preferred_element_type=jnp.float32) + mb1, 0.0)
        h2 = jnp.maximum(
            jnp.dot(h1, mw2, preferred_element_type=jnp.float32) + mb2, 0.0)
        return jnp.dot(h2, mw3, preferred_element_type=jnp.float32) + mb3

    # ---- layer chain with interleaved score accumulation -------------------
    x = l2norm(prop_init(w1_ref[...], b1_ref[...]))
    score = mlp(x)
    for w_ref, b_ref in ((w2_ref, b2_ref), (w3_ref, b3_ref),
                         (w4_ref, b4_ref), (w5_ref, b5_ref)):
        x = l2norm(prop(x, w_ref[...], b_ref[...]))
        score = score + mlp(x)
    x = prop(x, w6_ref[...], b6_ref[...])                # last layer: relu only
    score = score + mlp(x)

    score_ref[...] = score.astype(score_ref.dtype)       # (N, 1)


def _full_spec(shape):
    nd = len(shape)
    return pl.BlockSpec(shape, lambda *_, _nd=nd: (0,) * _nd)


def gnn_bet5_forward(adj1, adj2, p):
    N = adj1.shape[0]

    # Ship the big MXU operands as bf16 (halves adj DMA bytes + VMEM residency,
    # 2x MXU rate); everything else stays f32.
    adj1_bf = adj1.astype(jnp.bfloat16)
    adj2_bf = adj2.astype(jnp.bfloat16)
    w1_bf = p["W1"].astype(jnp.bfloat16)

    def b2d(v):                                          # 1-D bias -> (1, F) row
        return v.reshape(1, -1)

    weight_args = (
        w1_bf, b2d(p["b1"]), p["W2"], b2d(p["b2"]), p["W3"], b2d(p["b3"]),
        p["W4"], b2d(p["b4"]), p["W5"], b2d(p["b5"]), p["W6"], b2d(p["b6"]),
        p["mw1"], b2d(p["mb1"]), p["mw2"], b2d(p["mb2"]), p["mw3"], b2d(p["mb3"]),
    )

    in_specs = [pl.BlockSpec(memory_space=pl.ANY),       # adj1 stays in HBM
                pl.BlockSpec(memory_space=pl.ANY)]       # adj2 stays in HBM
    in_specs += [_full_spec(w.shape) for w in weight_args]   # weights resident

    # VMEM budget: actual need (+4x headroom), capped well below v7x's 64 MiB.
    def _nbytes(a):
        return int(a.size) * a.dtype.itemsize
    resident = _nbytes(adj1_bf)                          # single-buffered adj scratch
    resident += 2 * sum(_nbytes(w) for w in weight_args)  # double-buffered weights
    resident += 2 * N * 4                                # double-buffered (N, 1) out
    vmem_limit = int(min(48 << 20, max(8 << 20, 4 * resident)))

    scores = pl.pallas_call(
        gnn_bet5_kernel,
        out_shape=jax.ShapeDtypeStruct((2, N, 1), jnp.float32),
        grid_spec=pltpu.PrefetchScalarGridSpec(
            num_scalar_prefetch=0,
            grid=(2,),                                   # adj1 branch, adj2 branch
            in_specs=in_specs,
            out_specs=pl.BlockSpec((None, N, 1), lambda b: (b, 0, 0)),
            scratch_shapes=[pltpu.VMEM((N, N), jnp.bfloat16),   # adj, single buffer
                            pltpu.SemaphoreType.DMA],
        ),
        compiler_params=pltpu.CompilerParams(
            dimension_semantics=("parallel",),           # 2 TCs on v7x, harmless on v5e/v6e
            vmem_limit_bytes=vmem_limit,
        ),
    )(adj1_bf, adj2_bf, *weight_args)

    return scores[0] * scores[1]                         # torch.mul(score1, score2)


# ----------------------------------------------------------------------------
# Pure-JAX f32 reference (same math, no Pallas) for a sanity check
# ----------------------------------------------------------------------------
def _l2norm_ref(x):
    n = jnp.sqrt(jnp.sum(x * x, axis=1, keepdims=True))
    return x / jnp.maximum(n, 1e-12)


def reference_forward(adj1, adj2, p):
    def init_layer(adj):
        return adj @ p["W1"] + p["b1"]

    def layer(x, adj, W, b):
        return adj @ (x @ W) + b

    def mlp(x):
        h1 = jnp.maximum(x @ p["mw1"] + p["mb1"], 0.0)
        h2 = jnp.maximum(h1 @ p["mw2"] + p["mb2"], 0.0)
        return h2 @ p["mw3"] + p["mb3"]

    def branch(adj):
        xs = []
        x = _l2norm_ref(jnp.maximum(init_layer(adj), 0.0))
        xs.append(x)
        for (W, b) in [(p["W2"], p["b2"]), (p["W3"], p["b3"]),
                       (p["W4"], p["b4"]), (p["W5"], p["b5"])]:
            x = _l2norm_ref(jnp.maximum(layer(x, adj, W, b), 0.0))
            xs.append(x)
        x = jnp.maximum(layer(x, adj, p["W6"], p["b6"]), 0.0)   # no l2-norm on last
        xs.append(x)
        return sum(mlp(xi) for xi in xs)

    return branch(adj1) * branch(adj2)


# ----------------------------------------------------------------------------
# Main
# ----------------------------------------------------------------------------
if __name__ == "__main__":
    N = 128          # ninput = number of nodes
    NHID = 32
    H = 2 * NHID     # MLP hidden width

    key = jax.random.PRNGKey(0)
    ks = jax.random.split(key, 22)

    def init_w(k, shape, fan_in):
        return jax.random.normal(k, shape, jnp.float32) / jnp.sqrt(fan_in)

    params = {
        "W1": init_w(ks[0], (N, NHID), N),       "b1": init_w(ks[1], (NHID,), N),
        "W2": init_w(ks[2], (NHID, NHID), NHID), "b2": init_w(ks[3], (NHID,), NHID),
        "W3": init_w(ks[4], (NHID, NHID), NHID), "b3": init_w(ks[5], (NHID,), NHID),
        "W4": init_w(ks[6], (NHID, NHID), NHID), "b4": init_w(ks[7], (NHID,), NHID),
        "W5": init_w(ks[8], (NHID, NHID), NHID), "b5": init_w(ks[9], (NHID,), NHID),
        "W6": init_w(ks[10], (NHID, NHID), NHID), "b6": init_w(ks[11], (NHID,), NHID),
        "mw1": init_w(ks[12], (NHID, H), NHID),  "mb1": init_w(ks[13], (H,), NHID),
        "mw2": init_w(ks[14], (H, H), H),        "mb2": init_w(ks[15], (H,), H),
        "mw3": init_w(ks[16], (H, 1), H),        "mb3": init_w(ks[17], (1,), H),
    }

    # Dense random "adjacency" matrices (row-normalized, non-negative).
    a1 = jnp.abs(jax.random.normal(ks[18], (N, N), jnp.float32))
    a2 = jnp.abs(jax.random.normal(ks[19], (N, N), jnp.float32))
    adj1 = a1 / jnp.sum(a1, axis=1, keepdims=True)
    adj2 = a2 / jnp.sum(a2, axis=1, keepdims=True)

    out = jax.jit(gnn_bet5_forward)(adj1, adj2, params)
    out = jax.block_until_ready(out)

    ref = reference_forward(adj1, adj2, params)

    assert out.shape == (N, 1), out.shape
    assert bool(jnp.all(jnp.isfinite(out)))
    # Tolerance accounts for bf16 adj / h operands (f32 accumulation) across
    # the 6-layer chain vs. the pure-f32 reference.
    max_abs = float(jnp.max(jnp.abs(out - ref)))
    assert bool(jnp.allclose(out, ref, rtol=1e-1, atol=2e-2)), max_abs
    print("KERNEL_OK")
</pallas_src>

<mosaic_0001>
module attributes {stable_mosaic.version = 11 : i64} {
  func.func @gnn_bet5_kernel(%arg0: i32, %arg1: memref<128x128xbf16, #tpu.memory_space<any>>, %arg2: memref<128x128xbf16, #tpu.memory_space<any>>, %arg3: memref<128x32xbf16, #tpu.memory_space<vmem>>, %arg4: memref<1x32xf32, #tpu.memory_space<vmem>>, %arg5: memref<32x32xf32, #tpu.memory_space<vmem>>, %arg6: memref<1x32xf32, #tpu.memory_space<vmem>>, %arg7: memref<32x32xf32, #tpu.memory_space<vmem>>, %arg8: memref<1x32xf32, #tpu.memory_space<vmem>>, %arg9: memref<32x32xf32, #tpu.memory_space<vmem>>, %arg10: memref<1x32xf32, #tpu.memory_space<vmem>>, %arg11: memref<32x32xf32, #tpu.memory_space<vmem>>, %arg12: memref<1x32xf32, #tpu.memory_space<vmem>>, %arg13: memref<32x32xf32, #tpu.memory_space<vmem>>, %arg14: memref<1x32xf32, #tpu.memory_space<vmem>>, %arg15: memref<32x64xf32, #tpu.memory_space<vmem>>, %arg16: memref<1x64xf32, #tpu.memory_space<vmem>>, %arg17: memref<64x64xf32, #tpu.memory_space<vmem>>, %arg18: memref<1x64xf32, #tpu.memory_space<vmem>>, %arg19: memref<64x1xf32, #tpu.memory_space<vmem>>, %arg20: memref<1x1xf32, #tpu.memory_space<vmem>>, %arg21: memref<1x128x1xf32, #tpu.memory_space<vmem>>, %arg22: memref<128x128xbf16, #tpu.memory_space<vmem>>, %arg23: memref<!tpu.dma_semaphore, #tpu.memory_space<semaphore_mem>>) attributes {dimension_semantics = [#tpu.dimension_semantics<parallel>], iteration_bounds = array<i64: 2>, scalar_prefetch = 0 : i64, scratch_operands = 2 : i64, tpu.core_type = #tpu.core_type<tc>, window_params = [{}, {}, {pipeline_mode = #tpu.pipeline_mode<synchronous>, transform_indices = @transform_2, window_bounds = array<i64: 128, 32>}, {pipeline_mode = #tpu.pipeline_mode<synchronous>, transform_indices = @transform_3, window_bounds = array<i64: 1, 32>}, {pipeline_mode = #tpu.pipeline_mode<synchronous>, transform_indices = @transform_4, window_bounds = array<i64: 32, 32>}, {pipeline_mode = #tpu.pipeline_mode<synchronous>, transform_indices = @transform_5, window_bounds = array<i64: 1, 32>}, {pipeline_mode = #tpu.pipeline_mode<synchronous>, transform_indices = @transform_6, window_bounds = array<i64: 32, 32>}, {pipeline_mode = #tpu.pipeline_mode<synchronous>, transform_indices = @transform_7, window_bounds = array<i64: 1, 32>}, {pipeline_mode = #tpu.pipeline_mode<synchronous>, transform_indices = @transform_8, window_bounds = array<i64: 32, 32>}, {pipeline_mode = #tpu.pipeline_mode<synchronous>, transform_indices = @transform_9, window_bounds = array<i64: 1, 32>}, {pipeline_mode = #tpu.pipeline_mode<synchronous>, transform_indices = @transform_10, window_bounds = array<i64: 32, 32>}, {pipeline_mode = #tpu.pipeline_mode<synchronous>, transform_indices = @transform_11, window_bounds = array<i64: 1, 32>}, {pipeline_mode = #tpu.pipeline_mode<synchronous>, transform_indices = @transform_12, window_bounds = array<i64: 32, 32>}, {pipeline_mode = #tpu.pipeline_mode<synchronous>, transform_indices = @transform_13, window_bounds = array<i64: 1, 32>}, {pipeline_mode = #tpu.pipeline_mode<synchronous>, transform_indices = @transform_14, window_bounds = array<i64: 32, 64>}, {pipeline_mode = #tpu.pipeline_mode<synchronous>, transform_indices = @transform_15, window_bounds = array<i64: 1, 64>}, {pipeline_mode = #tpu.pipeline_mode<synchronous>, transform_indices = @transform_16, window_bounds = array<i64: 64, 64>}, {pipeline_mode = #tpu.pipeline_mode<synchronous>, transform_indices = @transform_17, window_bounds = array<i64: 1, 64>}, {pipeline_mode = #tpu.pipeline_mode<synchronous>, transform_indices = @transform_18, window_bounds = array<i64: 64, 1>}, {pipeline_mode = #tpu.pipeline_mode<synchronous>, transform_indices = @transform_19, window_bounds = array<i64: 1, 1>}, {transform_indices = @transform_20, window_bounds = array<i64: 1, 128, 1>}]} {
    %c0_i32 = arith.constant 0 : i32
    %0 = arith.cmpi eq, %arg0, %c0_i32 : i32
    %1 = arith.extui %0 : i1 to i32
    %c0_i32_0 = arith.constant 0 : i32
    %2 = arith.cmpi ne, %1, %c0_i32_0 : i32
    scf.if %2 {
      tpu.enqueue_dma source(%arg1 : memref<128x128xbf16, #tpu.memory_space<any>>) target(%arg22 : memref<128x128xbf16, #tpu.memory_space<vmem>>) target_semaphore(%arg23 : memref<!tpu.dma_semaphore, #tpu.memory_space<semaphore_mem>>)
      tpu.wait_dma2 semaphore(%arg23 : memref<!tpu.dma_semaphore, #tpu.memory_space<semaphore_mem>>) src(%arg1 : memref<128x128xbf16, #tpu.memory_space<any>>) dst(%arg22 : memref<128x128xbf16, #tpu.memory_space<vmem>>)
    } else {
    }
    %c1_i32 = arith.constant 1 : i32
    %3 = arith.cmpi eq, %arg0, %c1_i32 : i32
    %4 = arith.extui %3 : i1 to i32
    %c0_i32_1 = arith.constant 0 : i32
    %5 = arith.cmpi ne, %4, %c0_i32_1 : i32
    scf.if %5 {
      tpu.enqueue_dma source(%arg2 : memref<128x128xbf16, #tpu.memory_space<any>>) target(%arg22 : memref<128x128xbf16, #tpu.memory_space<vmem>>) target_semaphore(%arg23 : memref<!tpu.dma_semaphore, #tpu.memory_space<semaphore_mem>>)
      tpu.wait_dma2 semaphore(%arg23 : memref<!tpu.dma_semaphore, #tpu.memory_space<semaphore_mem>>) src(%arg2 : memref<128x128xbf16, #tpu.memory_space<any>>) dst(%arg22 : memref<128x128xbf16, #tpu.memory_space<vmem>>)
    } else {
    }
    %c0 = arith.constant 0 : index
    %c0_2 = arith.constant 0 : index
    %6 = vector.load %arg22[%c0, %c0_2] : memref<128x128xbf16, #tpu.memory_space<vmem>>, vector<128x128xbf16>
    %c0_3 = arith.constant 0 : index
    %c0_4 = arith.constant 0 : index
    %7 = vector.load %arg15[%c0_3, %c0_4] : memref<32x64xf32, #tpu.memory_space<vmem>>, vector<32x64xf32>
    %c0_5 = arith.constant 0 : index
    %c0_6 = arith.constant 0 : index
    %8 = vector.load %arg17[%c0_5, %c0_6] : memref<64x64xf32, #tpu.memory_space<vmem>>, vector<64x64xf32>
    %c0_7 = arith.constant 0 : index
    %c0_8 = arith.constant 0 : index
    %9 = vector.load %arg19[%c0_7, %c0_8] : memref<64x1xf32, #tpu.memory_space<vmem>>, vector<64x1xf32>
    %c0_9 = arith.constant 0 : index
    %c0_10 = arith.constant 0 : index
    %10 = vector.load %arg16[%c0_9, %c0_10] : memref<1x64xf32, #tpu.memory_space<vmem>>, vector<1x64xf32>
    %11 = vector.shape_cast %10 : vector<1x64xf32> to vector<1x64xf32>
    %12 = vector.broadcast %11 : vector<1x64xf32> to vector<128x64xf32>
    %c0_11 = arith.constant 0 : index
    %c0_12 = arith.constant 0 : index
    %13 = vector.load %arg18[%c0_11, %c0_12] : memref<1x64xf32, #tpu.memory_space<vmem>>, vector<1x64xf32>
    %14 = vector.shape_cast %13 : vector<1x64xf32> to vector<1x64xf32>
    %15 = vector.broadcast %14 : vector<1x64xf32> to vector<128x64xf32>
    %c0_13 = arith.constant 0 : index
    %c0_14 = arith.constant 0 : index
    %16 = vector.load %arg20[%c0_13, %c0_14] : memref<1x1xf32, #tpu.memory_space<vmem>>, vector<1x1xf32>
    %c0_15 = arith.constant 0 : index
    %c0_16 = arith.constant 0 : index
    %17 = vector.load %arg3[%c0_15, %c0_16] : memref<128x32xbf16, #tpu.memory_space<vmem>>, vector<128x32xbf16>
    %c0_17 = arith.constant 0 : index
    %c0_18 = arith.constant 0 : index
    %18 = vector.load %arg4[%c0_17, %c0_18] : memref<1x32xf32, #tpu.memory_space<vmem>>, vector<1x32xf32>
    %cst = arith.constant dense<0.000000e+00> : vector<128x32xf32>
    %19 = tpu.matmul %6, %17, %cst {dimension_numbers = #tpu.dot_dimension_numbers<[1], [0], [0], [1], [0, 0, 1, 1], [], []>} : vector<128x128xbf16>, vector<128x32xbf16>, vector<128x32xf32> -> vector<128x32xf32>
    %20 = vector.broadcast %18 : vector<1x32xf32> to vector<128x32xf32>
    %21 = arith.addf %19, %20 : vector<128x32xf32>
    %cst_19 = arith.constant 0.000000e+00 : f32
    %22 = vector.broadcast %cst_19 : f32 to vector<128x32xf32>
    %23 = arith.maximumf %21, %22 : vector<128x32xf32>
    %24 = arith.mulf %23, %23 : vector<128x32xf32>
    %cst_20 = arith.constant dense<0.000000e+00> : vector<128xf32>
    %25 = vector.multi_reduction <add>, %24, %cst_20 [1] : vector<128x32xf32> to vector<128xf32>
    %26 = vector.shape_cast %25 : vector<128xf32> to vector<128x1xf32>
    %cst_21 = arith.constant 1.000000e-24 : f32
    %27 = vector.broadcast %cst_21 : f32 to vector<128x1xf32>
    %28 = arith.maximumf %26, %27 : vector<128x1xf32>
    %29 = math.rsqrt %28 : vector<128x1xf32>
    %30 = vector.broadcast %29 : vector<128x1xf32> to vector<128x32xf32>
    %31 = arith.mulf %23, %30 : vector<128x32xf32>
    %cst_22 = arith.constant dense<0.000000e+00> : vector<128x64xf32>
    %32 = tpu.matmul %31, %7, %cst_22 {dimension_numbers = #tpu.dot_dimension_numbers<[1], [0], [0], [1], [0, 0, 1, 1], [], []>} : vector<128x32xf32>, vector<32x64xf32>, vector<128x64xf32> -> vector<128x64xf32>
    %33 = arith.addf %32, %12 : vector<128x64xf32>
    %cst_23 = arith.constant 0.000000e+00 : f32
    %34 = vector.broadcast %cst_23 : f32 to vector<128x64xf32>
    %35 = arith.maximumf %33, %34 : vector<128x64xf32>
    %cst_24 = arith.constant dense<0.000000e+00> : vector<128x64xf32>
    %36 = tpu.matmul %35, %8, %cst_24 {dimension_numbers = #tpu.dot_dimension_numbers<[1], [0], [0], [1], [0, 0, 1, 1], [], []>} : vector<128x64xf32>, vector<64x64xf32>, vector<128x64xf32> -> vector<128x64xf32>
    %37 = arith.addf %36, %15 : vector<128x64xf32>
    %cst_25 = arith.constant 0.000000e+00 : f32
    %38 = vector.broadcast %cst_25 : f32 to vector<128x64xf32>
    %39 = arith.maximumf %37, %38 : vector<128x64xf32>
    %cst_26 = arith.constant dense<0.000000e+00> : vector<128x1xf32>
    %40 = tpu.matmul %39, %9, %cst_26 {dimension_numbers = #tpu.dot_dimension_numbers<[1], [0], [0], [1], [0, 0, 1, 1], [], []>} : vector<128x64xf32>, vector<64x1xf32>, vector<128x1xf32> -> vector<128x1xf32>
    %41 = vector.broadcast %16 : vector<1x1xf32> to vector<128x1xf32>
    %42 = arith.addf %40, %41 : vector<128x1xf32>
    %c0_27 = arith.constant 0 : index
    %c0_28 = arith.constant 0 : index
    %43 = vector.load %arg5[%c0_27, %c0_28] : memref<32x32xf32, #tpu.memory_space<vmem>>, vector<32x32xf32>
    %c0_29 = arith.constant 0 : index
    %c0_30 = arith.constant 0 : index
    %44 = vector.load %arg6[%c0_29, %c0_30] : memref<1x32xf32, #tpu.memory_space<vmem>>, vector<1x32xf32>
    %cst_31 = arith.constant dense<0.000000e+00> : vector<128x32xf32>
    %45 = tpu.matmul %31, %43, %cst_31 {dimension_numbers = #tpu.dot_dimension_numbers<[1], [0], [0], [1], [0, 0, 1, 1], [], []>} : vector<128x32xf32>, vector<32x32xf32>, vector<128x32xf32> -> vector<128x32xf32>
    %46 = arith.truncf %45 : vector<128x32xf32> to vector<128x32xbf16>
    %cst_32 = arith.constant dense<0.000000e+00> : vector<128x32xf32>
    %47 = tpu.matmul %6, %46, %cst_32 {dimension_numbers = #tpu.dot_dimension_numbers<[1], [0], [0], [1], [0, 0, 1, 1], [], []>} : vector<128x128xbf16>, vector<128x32xbf16>, vector<128x32xf32> -> vector<128x32xf32>
    %48 = vector.broadcast %44 : vector<1x32xf32> to vector<128x32xf32>
    %49 = arith.addf %47, %48 : vector<128x32xf32>
    %cst_33 = arith.constant 0.000000e+00 : f32
    %50 = vector.broadcast %cst_33 : f32 to vector<128x32xf32>
    %51 = arith.maximumf %49, %50 : vector<128x32xf32>
    %52 = arith.mulf %51, %51 : vector<128x32xf32>
    %cst_34 = arith.constant dense<0.000000e+00> : vector<128xf32>
    %53 = vector.multi_reduction <add>, %52, %cst_34 [1] : vector<128x32xf32> to vector<128xf32>
    %54 = vector.shape_cast %53 : vector<128xf32> to vector<128x1xf32>
    %cst_35 = arith.constant 1.000000e-24 : f32
    %55 = vector.broadcast %cst_35 : f32 to vector<128x1xf32>
    %56 = arith.maximumf %54, %55 : vector<128x1xf32>
    %57 = math.rsqrt %56 : vector<128x1xf32>
    %58 = vector.broadcast %57 : vector<128x1xf32> to vector<128x32xf32>
    %59 = arith.mulf %51, %58 : vector<128x32xf32>
    %cst_36 = arith.constant dense<0.000000e+00> : vector<128x64xf32>
    %60 = tpu.matmul %59, %7, %cst_36 {dimension_numbers = #tpu.dot_dimension_numbers<[1], [0], [0], [1], [0, 0, 1, 1], [], []>} : vector<128x32xf32>, vector<32x64xf32>, vector<128x64xf32> -> vector<128x64xf32>
    %61 = arith.addf %60, %12 : vector<128x64xf32>
    %cst_37 = arith.constant 0.000000e+00 : f32
    %62 = vector.broadcast %cst_37 : f32 to vector<128x64xf32>
    %63 = arith.maximumf %61, %62 : vector<128x64xf32>
    %cst_38 = arith.constant dense<0.000000e+00> : vector<128x64xf32>
    %64 = tpu.matmul %63, %8, %cst_38 {dimension_numbers = #tpu.dot_dimension_numbers<[1], [0], [0], [1], [0, 0, 1, 1], [], []>} : vector<128x64xf32>, vector<64x64xf32>, vector<128x64xf32> -> vector<128x64xf32>
    %65 = arith.addf %64, %15 : vector<128x64xf32>
    %cst_39 = arith.constant 0.000000e+00 : f32
    %66 = vector.broadcast %cst_39 : f32 to vector<128x64xf32>
    %67 = arith.maximumf %65, %66 : vector<128x64xf32>
    %cst_40 = arith.constant dense<0.000000e+00> : vector<128x1xf32>
    %68 = tpu.matmul %67, %9, %cst_40 {dimension_numbers = #tpu.dot_dimension_numbers<[1], [0], [0], [1], [0, 0, 1, 1], [], []>} : vector<128x64xf32>, vector<64x1xf32>, vector<128x1xf32> -> vector<128x1xf32>
    %69 = vector.broadcast %16 : vector<1x1xf32> to vector<128x1xf32>
    %70 = arith.addf %68, %69 : vector<128x1xf32>
    %71 = arith.addf %42, %70 : vector<128x1xf32>
    %c0_41 = arith.constant 0 : index
    %c0_42 = arith.constant 0 : index
    %72 = vector.load %arg7[%c0_41, %c0_42] : memref<32x32xf32, #tpu.memory_space<vmem>>, vector<32x32xf32>
    %c0_43 = arith.constant 0 : index
    %c0_44 = arith.constant 0 : index
    %73 = vector.load %arg8[%c0_43, %c0_44] : memref<1x32xf32, #tpu.memory_space<vmem>>, vector<1x32xf32>
    %cst_45 = arith.constant dense<0.000000e+00> : vector<128x32xf32>
    %74 = tpu.matmul %59, %72, %cst_45 {dimension_numbers = #tpu.dot_dimension_numbers<[1], [0], [0], [1], [0, 0, 1, 1], [], []>} : vector<128x32xf32>, vector<32x32xf32>, vector<128x32xf32> -> vector<128x32xf32>
    %75 = arith.truncf %74 : vector<128x32xf32> to vector<128x32xbf16>
    %cst_46 = arith.constant dense<0.000000e+00> : vector<128x32xf32>
    %76 = tpu.matmul %6, %75, %cst_46 {dimension_numbers = #tpu.dot_dimension_numbers<[1], [0], [0], [1], [0, 0, 1, 1], [], []>} : vector<128x128xbf16>, vector<128x32xbf16>, vector<128x32xf32> -> vector<128x32xf32>
    %77 = vector.broadcast %73 : vector<1x32xf32> to vector<128x32xf32>
    %78 = arith.addf %76, %77 : vector<128x32xf32>
    %cst_47 = arith.constant 0.000000e+00 : f32
    %79 = vector.broadcast %cst_47 : f32 to vector<128x32xf32>
    %80 = arith.maximumf %78, %79 : vector<128x32xf32>
    %81 = arith.mulf %80, %80 : vector<128x32xf32>
    %cst_48 = arith.constant dense<0.000000e+00> : vector<128xf32>
    %82 = vector.multi_reduction <add>, %81, %cst_48 [1] : vector<128x32xf32> to vector<128xf32>
    %83 = vector.shape_cast %82 : vector<128xf32> to vector<128x1xf32>
    %cst_49 = arith.constant 1.000000e-24 : f32
    %84 = vector.broadcast %cst_49 : f32 to vector<128x1xf32>
    %85 = arith.maximumf %83, %84 : vector<128x1xf32>
    %86 = math.rsqrt %85 : vector<128x1xf32>
    %87 = vector.broadcast %86 : vector<128x1xf32> to vector<128x32xf32>
    %88 = arith.mulf %80, %87 : vector<128x32xf32>
    %cst_50 = arith.constant dense<0.000000e+00> : vector<128x64xf32>
    %89 = tpu.matmul %88, %7, %cst_50 {dimension_numbers = #tpu.dot_dimension_numbers<[1], [0], [0], [1], [0, 0, 1, 1], [], []>} : vector<128x32xf32>, vector<32x64xf32>, vector<128x64xf32> -> vector<128x64xf32>
    %90 = arith.addf %89, %12 : vector<128x64xf32>
    %cst_51 = arith.constant 0.000000e+00 : f32
    %91 = vector.broadcast %cst_51 : f32 to vector<128x64xf32>
    %92 = arith.maximumf %90, %91 : vector<128x64xf32>
    %cst_52 = arith.constant dense<0.000000e+00> : vector<128x64xf32>
    %93 = tpu.matmul %92, %8, %cst_52 {dimension_numbers = #tpu.dot_dimension_numbers<[1], [0], [0], [1], [0, 0, 1, 1], [], []>} : vector<128x64xf32>, vector<64x64xf32>, vector<128x64xf32> -> vector<128x64xf32>
    %94 = arith.addf %93, %15 : vector<128x64xf32>
    %cst_53 = arith.constant 0.000000e+00 : f32
    %95 = vector.broadcast %cst_53 : f32 to vector<128x64xf32>
    %96 = arith.maximumf %94, %95 : vector<128x64xf32>
    %cst_54 = arith.constant dense<0.000000e+00> : vector<128x1xf32>
    %97 = tpu.matmul %96, %9, %cst_54 {dimension_numbers = #tpu.dot_dimension_numbers<[1], [0], [0], [1], [0, 0, 1, 1], [], []>} : vector<128x64xf32>, vector<64x1xf32>, vector<128x1xf32> -> vector<128x1xf32>
    %98 = vector.broadcast %16 : vector<1x1xf32> to vector<128x1xf32>
    %99 = arith.addf %97, %98 : vector<128x1xf32>
    %100 = arith.addf %71, %99 : vector<128x1xf32>
    %c0_55 = arith.constant 0 : index
    %c0_56 = arith.constant 0 : index
    %101 = vector.load %arg9[%c0_55, %c0_56] : memref<32x32xf32, #tpu.memory_space<vmem>>, vector<32x32xf32>
    %c0_57 = arith.constant 0 : index
    %c0_58 = arith.constant 0 : index
    %102 = vector.load %arg10[%c0_57, %c0_58] : memref<1x32xf32, #tpu.memory_space<vmem>>, vector<1x32xf32>
    %cst_59 = arith.constant dense<0.000000e+00> : vector<128x32xf32>
    %103 = tpu.matmul %88, %101, %cst_59 {dimension_numbers = #tpu.dot_dimension_numbers<[1], [0], [0], [1], [0, 0, 1, 1], [], []>} : vector<128x32xf32>, vector<32x32xf32>, vector<128x32xf32> -> vector<128x32xf32>
    %104 = arith.truncf %103 : vector<128x32xf32> to vector<128x32xbf16>
    %cst_60 = arith.constant dense<0.000000e+00> : vector<128x32xf32>
    %105 = tpu.matmul %6, %104, %cst_60 {dimension_numbers = #tpu.dot_dimension_numbers<[1], [0], [0], [1], [0, 0, 1, 1], [], []>} : vector<128x128xbf16>, vector<128x32xbf16>, vector<128x32xf32> -> vector<128x32xf32>
    %106 = vector.broadcast %102 : vector<1x32xf32> to vector<128x32xf32>
    %107 = arith.addf %105, %106 : vector<128x32xf32>
    %cst_61 = arith.constant 0.000000e+00 : f32
    %108 = vector.broadcast %cst_61 : f32 to vector<128x32xf32>
    %109 = arith.maximumf %107, %108 : vector<128x32xf32>
    %110 = arith.mulf %109, %109 : vector<128x32xf32>
    %cst_62 = arith.constant dense<0.000000e+00> : vector<128xf32>
    %111 = vector.multi_reduction <add>, %110, %cst_62 [1] : vector<128x32xf32> to vector<128xf32>
    %112 = vector.shape_cast %111 : vector<128xf32> to vector<128x1xf32>
    %cst_63 = arith.constant 1.000000e-24 : f32
    %113 = vector.broadcast %cst_63 : f32 to vector<128x1xf32>
    %114 = arith.maximumf %112, %113 : vector<128x1xf32>
    %115 = math.rsqrt %114 : vector<128x1xf32>
    %116 = vector.broadcast %115 : vector<128x1xf32> to vector<128x32xf32>
    %117 = arith.mulf %109, %116 : vector<128x32xf32>
    %cst_64 = arith.constant dense<0.000000e+00> : vector<128x64xf32>
    %118 = tpu.matmul %117, %7, %cst_64 {dimension_numbers = #tpu.dot_dimension_numbers<[1], [0], [0], [1], [0, 0, 1, 1], [], []>} : vector<128x32xf32>, vector<32x64xf32>, vector<128x64xf32> -> vector<128x64xf32>
    %119 = arith.addf %118, %12 : vector<128x64xf32>
    %cst_65 = arith.constant 0.000000e+00 : f32
    %120 = vector.broadcast %cst_65 : f32 to vector<128x64xf32>
    %121 = arith.maximumf %119, %120 : vector<128x64xf32>
    %cst_66 = arith.constant dense<0.000000e+00> : vector<128x64xf32>
    %122 = tpu.matmul %121, %8, %cst_66 {dimension_numbers = #tpu.dot_dimension_numbers<[1], [0], [0], [1], [0, 0, 1, 1], [], []>} : vector<128x64xf32>, vector<64x64xf32>, vector<128x64xf32> -> vector<128x64xf32>
    %123 = arith.addf %122, %15 : vector<128x64xf32>
    %cst_67 = arith.constant 0.000000e+00 : f32
    %124 = vector.broadcast %cst_67 : f32 to vector<128x64xf32>
    %125 = arith.maximumf %123, %124 : vector<128x64xf32>
    %cst_68 = arith.constant dense<0.000000e+00> : vector<128x1xf32>
    %126 = tpu.matmul %125, %9, %cst_68 {dimension_numbers = #tpu.dot_dimension_numbers<[1], [0], [0], [1], [0, 0, 1, 1], [], []>} : vector<128x64xf32>, vector<64x1xf32>, vector<128x1xf32> -> vector<128x1xf32>
    %127 = vector.broadcast %16 : vector<1x1xf32> to vector<128x1xf32>
    %128 = arith.addf %126, %127 : vector<128x1xf32>
    %129 = arith.addf %100, %128 : vector<128x1xf32>
    %c0_69 = arith.constant 0 : index
    %c0_70 = arith.constant 0 : index
    %130 = vector.load %arg11[%c0_69, %c0_70] : memref<32x32xf32, #tpu.memory_space<vmem>>, vector<32x32xf32>
    %c0_71 = arith.constant 0 : index
    %c0_72 = arith.constant 0 : index
    %131 = vector.load %arg12[%c0_71, %c0_72] : memref<1x32xf32, #tpu.memory_space<vmem>>, vector<1x32xf32>
    %cst_73 = arith.constant dense<0.000000e+00> : vector<128x32xf32>
    %132 = tpu.matmul %117, %130, %cst_73 {dimension_numbers = #tpu.dot_dimension_numbers<[1], [0], [0], [1], [0, 0, 1, 1], [], []>} : vector<128x32xf32>, vector<32x32xf32>, vector<128x32xf32> -> vector<128x32xf32>
    %133 = arith.truncf %132 : vector<128x32xf32> to vector<128x32xbf16>
    %cst_74 = arith.constant dense<0.000000e+00> : vector<128x32xf32>
    %134 = tpu.matmul %6, %133, %cst_74 {dimension_numbers = #tpu.dot_dimension_numbers<[1], [0], [0], [1], [0, 0, 1, 1], [], []>} : vector<128x128xbf16>, vector<128x32xbf16>, vector<128x32xf32> -> vector<128x32xf32>
    %135 = vector.broadcast %131 : vector<1x32xf32> to vector<128x32xf32>
    %136 = arith.addf %134, %135 : vector<128x32xf32>
    %cst_75 = arith.constant 0.000000e+00 : f32
    %137 = vector.broadcast %cst_75 : f32 to vector<128x32xf32>
    %138 = arith.maximumf %136, %137 : vector<128x32xf32>
    %139 = arith.mulf %138, %138 : vector<128x32xf32>
    %cst_76 = arith.constant dense<0.000000e+00> : vector<128xf32>
    %140 = vector.multi_reduction <add>, %139, %cst_76 [1] : vector<128x32xf32> to vector<128xf32>
    %141 = vector.shape_cast %140 : vector<128xf32> to vector<128x1xf32>
    %cst_77 = arith.constant 1.000000e-24 : f32
    %142 = vector.broadcast %cst_77 : f32 to vector<128x1xf32>
    %143 = arith.maximumf %141, %142 : vector<128x1xf32>
    %144 = math.rsqrt %143 : vector<128x1xf32>
    %145 = vector.broadcast %144 : vector<128x1xf32> to vector<128x32xf32>
    %146 = arith.mulf %138, %145 : vector<128x32xf32>
    %cst_78 = arith.constant dense<0.000000e+00> : vector<128x64xf32>
    %147 = tpu.matmul %146, %7, %cst_78 {dimension_numbers = #tpu.dot_dimension_numbers<[1], [0], [0], [1], [0, 0, 1, 1], [], []>} : vector<128x32xf32>, vector<32x64xf32>, vector<128x64xf32> -> vector<128x64xf32>
    %148 = arith.addf %147, %12 : vector<128x64xf32>
    %cst_79 = arith.constant 0.000000e+00 : f32
    %149 = vector.broadcast %cst_79 : f32 to vector<128x64xf32>
    %150 = arith.maximumf %148, %149 : vector<128x64xf32>
    %cst_80 = arith.constant dense<0.000000e+00> : vector<128x64xf32>
    %151 = tpu.matmul %150, %8, %cst_80 {dimension_numbers = #tpu.dot_dimension_numbers<[1], [0], [0], [1], [0, 0, 1, 1], [], []>} : vector<128x64xf32>, vector<64x64xf32>, vector<128x64xf32> -> vector<128x64xf32>
    %152 = arith.addf %151, %15 : vector<128x64xf32>
    %cst_81 = arith.constant 0.000000e+00 : f32
    %153 = vector.broadcast %cst_81 : f32 to vector<128x64xf32>
    %154 = arith.maximumf %152, %153 : vector<128x64xf32>
    %cst_82 = arith.constant dense<0.000000e+00> : vector<128x1xf32>
    %155 = tpu.matmul %154, %9, %cst_82 {dimension_numbers = #tpu.dot_dimension_numbers<[1], [0], [0], [1], [0, 0, 1, 1], [], []>} : vector<128x64xf32>, vector<64x1xf32>, vector<128x1xf32> -> vector<128x1xf32>
    %156 = vector.broadcast %16 : vector<1x1xf32> to vector<128x1xf32>
    %157 = arith.addf %155, %156 : vector<128x1xf32>
    %158 = arith.addf %129, %157 : vector<128x1xf32>
    %c0_83 = arith.constant 0 : index
    %c0_84 = arith.constant 0 : index
    %159 = vector.load %arg13[%c0_83, %c0_84] : memref<32x32xf32, #tpu.memory_space<vmem>>, vector<32x32xf32>
    %c0_85 = arith.constant 0 : index
    %c0_86 = arith.constant 0 : index
    %160 = vector.load %arg14[%c0_85, %c0_86] : memref<1x32xf32, #tpu.memory_space<vmem>>, vector<1x32xf32>
    %cst_87 = arith.constant dense<0.000000e+00> : vector<128x32xf32>
    %161 = tpu.matmul %146, %159, %cst_87 {dimension_numbers = #tpu.dot_dimension_numbers<[1], [0], [0], [1], [0, 0, 1, 1], [], []>} : vector<128x32xf32>, vector<32x32xf32>, vector<128x32xf32> -> vector<128x32xf32>
    %162 = arith.truncf %161 : vector<128x32xf32> to vector<128x32xbf16>
    %cst_88 = arith.constant dense<0.000000e+00> : vector<128x32xf32>
    %163 = tpu.matmul %6, %162, %cst_88 {dimension_numbers = #tpu.dot_dimension_numbers<[1], [0], [0], [1], [0, 0, 1, 1], [], []>} : vector<128x128xbf16>, vector<128x32xbf16>, vector<128x32xf32> -> vector<128x32xf32>
    %164 = vector.broadcast %160 : vector<1x32xf32> to vector<128x32xf32>
    %165 = arith.addf %163, %164 : vector<128x32xf32>
    %cst_89 = arith.constant 0.000000e+00 : f32
    %166 = vector.broadcast %cst_89 : f32 to vector<128x32xf32>
    %167 = arith.maximumf %165, %166 : vector<128x32xf32>
    %cst_90 = arith.constant dense<0.000000e+00> : vector<128x64xf32>
    %168 = tpu.matmul %167, %7, %cst_90 {dimension_numbers = #tpu.dot_dimension_numbers<[1], [0], [0], [1], [0, 0, 1, 1], [], []>} : vector<128x32xf32>, vector<32x64xf32>, vector<128x64xf32> -> vector<128x64xf32>
    %169 = arith.addf %168, %12 : vector<128x64xf32>
    %cst_91 = arith.constant 0.000000e+00 : f32
    %170 = vector.broadcast %cst_91 : f32 to vector<128x64xf32>
    %171 = arith.maximumf %169, %170 : vector<128x64xf32>
    %cst_92 = arith.constant dense<0.000000e+00> : vector<128x64xf32>
    %172 = tpu.matmul %171, %8, %cst_92 {dimension_numbers = #tpu.dot_dimension_numbers<[1], [0], [0], [1], [0, 0, 1, 1], [], []>} : vector<128x64xf32>, vector<64x64xf32>, vector<128x64xf32> -> vector<128x64xf32>
    %173 = arith.addf %172, %15 : vector<128x64xf32>
    %cst_93 = arith.constant 0.000000e+00 : f32
    %174 = vector.broadcast %cst_93 : f32 to vector<128x64xf32>
    %175 = arith.maximumf %173, %174 : vector<128x64xf32>
    %cst_94 = arith.constant dense<0.000000e+00> : vector<128x1xf32>
    %176 = tpu.matmul %175, %9, %cst_94 {dimension_numbers = #tpu.dot_dimension_numbers<[1], [0], [0], [1], [0, 0, 1, 1], [], []>} : vector<128x64xf32>, vector<64x1xf32>, vector<128x1xf32> -> vector<128x1xf32>
    %177 = vector.broadcast %16 : vector<1x1xf32> to vector<128x1xf32>
    %178 = arith.addf %176, %177 : vector<128x1xf32>
    %179 = arith.addf %158, %178 : vector<128x1xf32>
    %c0_95 = arith.constant 0 : index
    %c0_96 = arith.constant 0 : index
    %c0_97 = arith.constant 0 : index
    %180 = vector.load %arg21[%c0_95, %c0_96, %c0_97] : memref<1x128x1xf32, #tpu.memory_space<vmem>>, vector<1x128x1xf32>
    %181 = vector.shape_cast %180 : vector<1x128x1xf32> to vector<128x1xf32>
    %182 = vector.shape_cast %179 : vector<128x1xf32> to vector<1x128x1xf32>
    tpu.vector_store %arg21[%c0_95, %c0_96, %c0_97], %182 {strides = array<i32>} : memref<1x128x1xf32, #tpu.memory_space<vmem>>, vector<1x128x1xf32>,
    return
  }
  func.func @transform_2(%arg0: i32) -> (i32, i32) {
    %c0_i32 = arith.constant 0 : i32
    %c0_i32_0 = arith.constant 0 : i32
    %c0_i32_1 = arith.constant 0 : i32
    return %c0_i32, %c0_i32_0 : i32, i32
  }
  func.func @transform_3(%arg0: i32) -> (i32, i32) {
    %c0_i32 = arith.constant 0 : i32
    %c0_i32_0 = arith.constant 0 : i32
    %c0_i32_1 = arith.constant 0 : i32
    return %c0_i32, %c0_i32_0 : i32, i32
  }
  func.func @transform_4(%arg0: i32) -> (i32, i32) {
    %c0_i32 = arith.constant 0 : i32
    %c0_i32_0 = arith.constant 0 : i32
    %c0_i32_1 = arith.constant 0 : i32
    return %c0_i32, %c0_i32_0 : i32, i32
  }
  func.func @transform_5(%arg0: i32) -> (i32, i32) {
    %c0_i32 = arith.constant 0 : i32
    %c0_i32_0 = arith.constant 0 : i32
    %c0_i32_1 = arith.constant 0 : i32
    return %c0_i32, %c0_i32_0 : i32, i32
  }
  func.func @transform_6(%arg0: i32) -> (i32, i32) {
    %c0_i32 = arith.constant 0 : i32
    %c0_i32_0 = arith.constant 0 : i32
    %c0_i32_1 = arith.constant 0 : i32
    return %c0_i32, %c0_i32_0 : i32, i32
  }
  func.func @transform_7(%arg0: i32) -> (i32, i32) {
    %c0_i32 = arith.constant 0 : i32
    %c0_i32_0 = arith.constant 0 : i32
    %c0_i32_1 = arith.constant 0 : i32
    return %c0_i32, %c0_i32_0 : i32, i32
  }
  func.func @transform_8(%arg0: i32) -> (i32, i32) {
    %c0_i32 = arith.constant 0 : i32
    %c0_i32_0 = arith.constant 0 : i32
    %c0_i32_1 = arith.constant 0 : i32
    return %c0_i32, %c0_i32_0 : i32, i32
  }
  func.func @transform_9(%arg0: i32) -> (i32, i32) {
    %c0_i32 = arith.constant 0 : i32
    %c0_i32_0 = arith.constant 0 : i32
    %c0_i32_1 = arith.constant 0 : i32
    return %c0_i32, %c0_i32_0 : i32, i32
  }
  func.func @transform_10(%arg0: i32) -> (i32, i32) {
    %c0_i32 = arith.constant 0 : i32
    %c0_i32_0 = arith.constant 0 : i32
    %c0_i32_1 = arith.constant 0 : i32
    return %c0_i32, %c0_i32_0 : i32, i32
  }
  func.func @transform_11(%arg0: i32) -> (i32, i32) {
    %c0_i32 = arith.constant 0 : i32
    %c0_i32_0 = arith.constant 0 : i32
    %c0_i32_1 = arith.constant 0 : i32
    return %c0_i32, %c0_i32_0 : i32, i32
  }
  func.func @transform_12(%arg0: i32) -> (i32, i32) {
    %c0_i32 = arith.constant 0 : i32
    %c0_i32_0 = arith.constant 0 : i32
    %c0_i32_1 = arith.constant 0 : i32
    return %c0_i32, %c0_i32_0 : i32, i32
  }
  func.func @transform_13(%arg0: i32) -> (i32, i32) {
    %c0_i32 = arith.constant 0 : i32
    %c0_i32_0 = arith.constant 0 : i32
    %c0_i32_1 = arith.constant 0 : i32
    return %c0_i32, %c0_i32_0 : i32, i32
  }
  func.func @transform_14(%arg0: i32) -> (i32, i32) {
    %c0_i32 = arith.constant 0 : i32
    %c0_i32_0 = arith.constant 0 : i32
    %c0_i32_1 = arith.constant 0 : i32
    return %c0_i32, %c0_i32_0 : i32, i32
  }
  func.func @transform_15(%arg0: i32) -> (i32, i32) {
    %c0_i32 = arith.constant 0 : i32
    %c0_i32_0 = arith.constant 0 : i32
    %c0_i32_1 = arith.constant 0 : i32
    return %c0_i32, %c0_i32_0 : i32, i32
  }
  func.func @transform_16(%arg0: i32) -> (i32, i32) {
    %c0_i32 = arith.constant 0 : i32
    %c0_i32_0 = arith.constant 0 : i32
    %c0_i32_1 = arith.constant 0 : i32
    return %c0_i32, %c0_i32_0 : i32, i32
  }
  func.func @transform_17(%arg0: i32) -> (i32, i32) {
    %c0_i32 = arith.constant 0 : i32
    %c0_i32_0 = arith.constant 0 : i32
    %c0_i32_1 = arith.constant 0 : i32
    return %c0_i32, %c0_i32_0 : i32, i32
  }
  func.func @transform_18(%arg0: i32) -> (i32, i32) {
    %c0_i32 = arith.constant 0 : i32
    %c0_i32_0 = arith.constant 0 : i32
    %c0_i32_1 = arith.constant 0 : i32
    return %c0_i32, %c0_i32_0 : i32, i32
  }
  func.func @transform_19(%arg0: i32) -> (i32, i32) {
    %c0_i32 = arith.constant 0 : i32
    %c0_i32_0 = arith.constant 0 : i32
    %c0_i32_1 = arith.constant 0 : i32
    return %c0_i32, %c0_i32_0 : i32, i32
  }
  func.func @transform_20(%arg0: i32) -> (i32, i32, i32) {
    %c0_i32 = arith.constant 0 : i32
    %c0_i32_0 = arith.constant 0 : i32
    %c0_i32_1 = arith.constant 0 : i32
    return %arg0, %c0_i32, %c0_i32_0 : i32, i32, i32
  }
}

</mosaic_0001>

<llo_original>
// kernel: gnn_bet5_forward.1
$region0: #{gnn_bet5_forward.1}
  #allocation0 [shape = 'u32[]', space=smem, size = 0x4, offset = 0x4, fixed_abs, tag = 'smem constant byte address 0x4 - core index']
  #allocation1 [shape = 'u32[144,128]{1,0:T(1,128)}', space=vmem, size = 0x12000, scoped, tag = 'internal scratch']
  #allocation2 [shape = 'bf16[128,128]{1,0:T(16,128)(2,1)}', space=vmem, size = 0x8000, scoped, tag = 'scratch operand']
  #allocation3 [shape = 's32[1]{0}', space=sflag, size = 0x4, scoped, tag = 'scratch operand']
  #allocation4 [shape = 'f32[1,1]{1,0:T(1,128)S(1)}', space=vmem, size = 0x200, scoped, tag = 'scoped memory for gnn_bet5_forward.1']
  #allocation5 [shape = 's32[]', space=sflag, size = 0x4, offset = 0, fixed_abs, tag = 'sflag constant byte address 0x0 - dummy sync flag']
  #allocation6 [shape = 's32[]', space=sflag, size = 0x4, offset = 0, fixed_abs, tag = 'sflag constant byte address 0x0 - dummy sync flag']
  %s0 = inlined_call_operand.vmem [shape: bf16[128,128], index: 0, kind: input, shape index: {}]
  %s1 = inlined_call_operand.vmem [shape: bf16[128,128], index: 1, kind: input, shape index: {}]
  %s2 = inlined_call_operand.vmem [shape: bf16[128,32], index: 2, kind: input, shape index: {}]
  %s3 = inlined_call_operand.vmem [shape: f32[1,32], index: 3, kind: input, shape index: {}]
  %s4 = inlined_call_operand.vmem [shape: f32[32,32], index: 4, kind: input, shape index: {}]
  %s5 = inlined_call_operand.vmem [shape: f32[1,32], index: 5, kind: input, shape index: {}]
  %s6 = inlined_call_operand.vmem [shape: f32[32,32], index: 6, kind: input, shape index: {}]
  %s7 = inlined_call_operand.vmem [shape: f32[1,32], index: 7, kind: input, shape index: {}]
  %s8 = inlined_call_operand.vmem [shape: f32[32,32], index: 8, kind: input, shape index: {}]
  %s9 = inlined_call_operand.vmem [shape: f32[1,32], index: 9, kind: input, shape index: {}]
  %s10 = inlined_call_operand.vmem [shape: f32[32,32], index: 10, kind: input, shape index: {}]
  %s11 = inlined_call_operand.vmem [shape: f32[1,32], index: 11, kind: input, shape index: {}]
  %s12 = inlined_call_operand.vmem [shape: f32[32,32], index: 12, kind: input, shape index: {}]
  %s13 = inlined_call_operand.vmem [shape: f32[1,32], index: 13, kind: input, shape index: {}]
  %s14 = inlined_call_operand.vmem [shape: f32[32,64], index: 14, kind: input, shape index: {}]
  %s15 = inlined_call_operand.vmem [shape: f32[1,64], index: 15, kind: input, shape index: {}]
  %s16 = inlined_call_operand.vmem [shape: f32[64,64], index: 16, kind: input, shape index: {}]
  %s17 = inlined_call_operand.vmem [shape: f32[1,64], index: 17, kind: input, shape index: {}]
  %s18 = inlined_call_operand.vmem [shape: f32[64,1], index: 18, kind: input, shape index: {}]
  %s19 = inlined_call_operand.<no memory space> [shape: f32[1,1], index: 19, kind: input, shape index: {}]
  %s20 = inlined_call_operand.vmem [shape: f32[2,128,1], index: 20, kind: output, shape index: {}]
  %s21 = sld [smem:[#allocation0]]
  $region181: #{gnn_bet5_forward.1} parent=0
    _
  %s23 = ssub.s32 1, %s21
  %s24 = scalar_select 0, %s23, %s21
  %v25 = vstv %s19
  %26 = vst [vmem:[#allocation4] sm:$0x1] %v25
  loop: start=0, step=1, limit=4
  $region2: #{gnn_bet5_forward.1} parent=0 // loop_pre_header
    _
  $region3: #{gnn_bet5_forward.1} parent=0 // loop_header
    %s28 = sphi 0, %s32
    %p29 = scmp.ge.s32.totalorder %s28, 4
    %s36 = sphi 0, %s36
    %s38 = sphi 0, %s36
    %s39 = sphi 0, %s38
    %s53 = sphi 0, %s39
    %s57 = sphi 0, %s57
    %s59 = sphi 0, %s57
    %s60 = sphi 0, %s59
    %s74 = sphi 0, %s60
    %s78 = sphi 0, %s78
    %s80 = sphi 0, %s78
    %s81 = sphi 0, %s80
    %s95 = sphi 0, %s81
    %s99 = sphi 0, %s99
    %s101 = sphi 0, %s99
    %s102 = sphi 0, %s101
    %s116 = sphi 0, %s102
    %s120 = sphi 0, %s120
    %s122 = sphi 0, %s120
    %s123 = sphi 0, %s122
    %s137 = sphi 0, %s123
    %s141 = sphi 0, %s141
    %s143 = sphi 0, %s141
    %s144 = sphi 0, %s143
    %s158 = sphi 0, %s144
    %s162 = sphi 0, %s162
    %s164 = sphi 0, %s162
    %s165 = sphi 0, %s164
    %s179 = sphi 0, %s165
    %s183 = sphi 0, %s183
    %s185 = sphi 0, %s183
    %s186 = sphi 0, %s185
    %s200 = sphi 0, %s186
    %s204 = sphi 0, %s204
    %s206 = sphi 0, %s204
    %s207 = sphi 0, %s206
    %s221 = sphi 0, %s207
    %s225 = sphi 0, %s225
    %s227 = sphi 0, %s225
    %s228 = sphi 0, %s227
    %s242 = sphi 0, %s228
    %s246 = sphi 0, %s246
    %s248 = sphi 0, %s246
    %s249 = sphi 0, %s248
    %s263 = sphi 0, %s249
    %s267 = sphi 0, %s267
    %s269 = sphi 0, %s267
    %s270 = sphi 0, %s269
    %s284 = sphi 0, %s270
    %s288 = sphi 0, %s288
    %s290 = sphi 0, %s288
    %s291 = sphi 0, %s290
    %s305 = sphi 0, %s291
    %s309 = sphi 0, %s309
    %s311 = sphi 0, %s309
    %s312 = sphi 0, %s311
    %s326 = sphi 0, %s312
    %s330 = sphi 0, %s330
    %s332 = sphi 0, %s330
    %s333 = sphi 0, %s332
    %s347 = sphi 0, %s333
    %s351 = sphi 0, %s351
    %s353 = sphi 0, %s351
    %s354 = sphi 0, %s353
    %s368 = sphi 0, %s354
    %s372 = sphi 0, %s372
    %s374 = sphi 0, %s372
    %s375 = sphi 0, %s374
    %s389 = sphi 0, %s375
    %s393 = sphi 0, %s393
    %s395 = sphi 0, %s393
    %s396 = sphi 0, %s395
    %s410 = sphi 0, %s396
    %s416 = sphi 0, %s418
    %s419 = sphi 0, %s416
    %s420 = sphi 0, %s419
    %s436 = sphi 0, %s420
  $region4: #{gnn_bet5_forward.1} parent=0 // loop_header_branch
    %31 = sbr.rel (%p29) target = $region8
  $region5: #{gnn_bet5_forward.1} parent=0 // loop_body
    %s33 = ssub.s32 %s28, 1
    %s34 = ssub.s32 %s28, 2
    %s35 = sadd.s32 %s28, 1
    %s37 = sadd.s32 %s36, 1
    %p40 = scmp.eq.s32.totalorder %s28, 1
    %p41 = scmp.ne.s32.totalorder %s36, %s38
    %p42 = scmp.eq.s32.totalorder %s28, 0
    %p43 = por %p41, %p42
    %p44 = scmp.ne.s32.totalorder %s36, %s38
    %p45 = scmp.eq.s32.totalorder %s33, 1
    %p46 = por %p44, %p45
    %p47 = scmp.ne.s32.totalorder %s38, %s39
    %p48 = scmp.eq.s32.totalorder %s33, 0
    %p49 = por %p47, %p48
    %p50 = scmp.ne.s32.totalorder %s38, %s39
    %p51 = scmp.eq.s32.totalorder %s34, 1
    %p52 = por %p50, %p51
    %p54 = scmp.ne.s32.totalorder %s39, %s53
    %p55 = scmp.eq.s32.totalorder %s34, 0
    %p56 = por %p54, %p55
    %s58 = sadd.s32 %s57, 1
    %p61 = scmp.eq.s32.totalorder %s28, 1
    %p62 = scmp.ne.s32.totalorder %s57, %s59
    %p63 = scmp.eq.s32.totalorder %s28, 0
    %p64 = por %p62, %p63
    %p65 = scmp.ne.s32.totalorder %s57, %s59
    %p66 = scmp.eq.s32.totalorder %s33, 1
    %p67 = por %p65, %p66
    %p68 = scmp.ne.s32.totalorder %s59, %s60
    %p69 = scmp.eq.s32.totalorder %s33, 0
    %p70 = por %p68, %p69
    %p71 = scmp.ne.s32.totalorder %s59, %s60
    %p72 = scmp.eq.s32.totalorder %s34, 1
    %p73 = por %p71, %p72
    %p75 = scmp.ne.s32.totalorder %s60, %s74
    %p76 = scmp.eq.s32.totalorder %s34, 0
    %p77 = por %p75, %p76
    %s79 = sadd.s32 %s78, 1
    %p82 = scmp.eq.s32.totalorder %s28, 1
    %p83 = scmp.ne.s32.totalorder %s78, %s80
    %p84 = scmp.eq.s32.totalorder %s28, 0
    %p85 = por %p83, %p84
    %p86 = scmp.ne.s32.totalorder %s78, %s80
    %p87 = scmp.eq.s32.totalorder %s33, 1
    %p88 = por %p86, %p87
    %p89 = scmp.ne.s32.totalorder %s80, %s81
    %p90 = scmp.eq.s32.totalorder %s33, 0
    %p91 = por %p89, %p90
    %p92 = scmp.ne.s32.totalorder %s80, %s81
    %p93 = scmp.eq.s32.totalorder %s34, 1
    %p94 = por %p92, %p93
    %p96 = scmp.ne.s32.totalorder %s81, %s95
    %p97 = scmp.eq.s32.totalorder %s34, 0
    %p98 = por %p96, %p97
    %s100 = sadd.s32 %s99, 1
    %p103 = scmp.eq.s32.totalorder %s28, 1
    %p104 = scmp.ne.s32.totalorder %s99, %s101
    %p105 = scmp.eq.s32.totalorder %s28, 0
    %p106 = por %p104, %p105
    %p107 = scmp.ne.s32.totalorder %s99, %s101
    %p108 = scmp.eq.s32.totalorder %s33, 1
    %p109 = por %p107, %p108
    %p110 = scmp.ne.s32.totalorder %s101, %s102
    %p111 = scmp.eq.s32.totalorder %s33, 0
    %p112 = por %p110, %p111
    %p113 = scmp.ne.s32.totalorder %s101, %s102
    %p114 = scmp.eq.s32.totalorder %s34, 1
    %p115 = por %p113, %p114
    %p117 = scmp.ne.s32.totalorder %s102, %s116
    %p118 = scmp.eq.s32.totalorder %s34, 0
    %p119 = por %p117, %p118
    %s121 = sadd.s32 %s120, 1
    %p124 = scmp.eq.s32.totalorder %s28, 1
    %p125 = scmp.ne.s32.totalorder %s120, %s122
    %p126 = scmp.eq.s32.totalorder %s28, 0
    %p127 = por %p125, %p126
    %p128 = scmp.ne.s32.totalorder %s120, %s122
    %p129 = scmp.eq.s32.totalorder %s33, 1
    %p130 = por %p128, %p129
    %p131 = scmp.ne.s32.totalorder %s122, %s123
    %p132 = scmp.eq.s32.totalorder %s33, 0
    %p133 = por %p131, %p132
    %p134 = scmp.ne.s32.totalorder %s122, %s123
    %p135 = scmp.eq.s32.totalorder %s34, 1
    %p136 = por %p134, %p135
    %p138 = scmp.ne.s32.totalorder %s123, %s137
    %p139 = scmp.eq.s32.totalorder %s34, 0
    %p140 = por %p138, %p139
    %s142 = sadd.s32 %s141, 1
    %p145 = scmp.eq.s32.totalorder %s28, 1
    %p146 = scmp.ne.s32.totalorder %s141, %s143
    %p147 = scmp.eq.s32.totalorder %s28, 0
    %p148 = por %p146, %p147
    %p149 = scmp.ne.s32.totalorder %s141, %s143
    %p150 = scmp.eq.s32.totalorder %s33, 1
    %p151 = por %p149, %p150
    %p152 = scmp.ne.s32.totalorder %s143, %s144
    %p153 = scmp.eq.s32.totalorder %s33, 0
    %p154 = por %p152, %p153
    %p155 = scmp.ne.s32.totalorder %s143, %s144
    %p156 = scmp.eq.s32.totalorder %s34, 1
    %p157 = por %p155, %p156
    %p159 = scmp.ne.s32.totalorder %s144, %s158
    %p160 = scmp.eq.s32.totalorder %s34, 0
    %p161 = por %p159, %p160
    %s163 = sadd.s32 %s162, 1
    %p166 = scmp.eq.s32.totalorder %s28, 1
    %p167 = scmp.ne.s32.totalorder %s162, %s164
    %p168 = scmp.eq.s32.totalorder %s28, 0
    %p169 = por %p167, %p168
    %p170 = scmp.ne.s32.totalorder %s162, %s164
    %p171 = scmp.eq.s32.totalorder %s33, 1
    %p172 = por %p170, %p171
    %p173 = scmp.ne.s32.totalorder %s164, %s165
    %p174 = scmp.eq.s32.totalorder %s33, 0
    %p175 = por %p173, %p174
    %p176 = scmp.ne.s32.totalorder %s164, %s165
    %p177 = scmp.eq.s32.totalorder %s34, 1
    %p178 = por %p176, %p177
    %p180 = scmp.ne.s32.totalorder %s165, %s179
    %p181 = scmp.eq.s32.totalorder %s34, 0
    %p182 = por %p180, %p181
    %s184 = sadd.s32 %s183, 1
    %p187 = scmp.eq.s32.totalorder %s28, 1
    %p188 = scmp.ne.s32.totalorder %s183, %s185
    %p189 = scmp.eq.s32.totalorder %s28, 0
    %p190 = por %p188, %p189
    %p191 = scmp.ne.s32.totalorder %s183, %s185
    %p192 = scmp.eq.s32.totalorder %s33, 1
    %p193 = por %p191, %p192
    %p194 = scmp.ne.s32.totalorder %s185, %s186
    %p195 = scmp.eq.s32.totalorder %s33, 0
    %p196 = por %p194, %p195
    %p197 = scmp.ne.s32.totalorder %s185, %s186
    %p198 = scmp.eq.s32.totalorder %s34, 1
    %p199 = por %p197, %p198
    %p201 = scmp.ne.s32.totalorder %s186, %s200
    %p202 = scmp.eq.s32.totalorder %s34, 0
    %p203 = por %p201, %p202
    %s205 = sadd.s32 %s204, 1
    %p208 = scmp.eq.s32.totalorder %s28, 1
    %p209 = scmp.ne.s32.totalorder %s204, %s206
    %p210 = scmp.eq.s32.totalorder %s28, 0
    %p211 = por %p209, %p210
    %p212 = scmp.ne.s32.totalorder %s204, %s206
    %p213 = scmp.eq.s32.totalorder %s33, 1
    %p214 = por %p212, %p213
    %p215 = scmp.ne.s32.totalorder %s206, %s207
    %p216 = scmp.eq.s32.totalorder %s33, 0
    %p217 = por %p215, %p216
    %p218 = scmp.ne.s32.totalorder %s206, %s207
    %p219 = scmp.eq.s32.totalorder %s34, 1
    %p220 = por %p218, %p219
    %p222 = scmp.ne.s32.totalorder %s207, %s221
    %p223 = scmp.eq.s32.totalorder %s34, 0
    %p224 = por %p222, %p223
    %s226 = sadd.s32 %s225, 1
    %p229 = scmp.eq.s32.totalorder %s28, 1
    %p230 = scmp.ne.s32.totalorder %s225, %s227
    %p231 = scmp.eq.s32.totalorder %s28, 0
    %p232 = por %p230, %p231
    %p233 = scmp.ne.s32.totalorder %s225, %s227
    %p234 = scmp.eq.s32.totalorder %s33, 1
    %p235 = por %p233, %p234
    %p236 = scmp.ne.s32.totalorder %s227, %s228
    %p237 = scmp.eq.s32.totalorder %s33, 0
    %p238 = por %p236, %p237
    %p239 = scmp.ne.s32.totalorder %s227, %s228
    %p240 = scmp.eq.s32.totalorder %s34, 1
    %p241 = por %p239, %p240
    %p243 = scmp.ne.s32.totalorder %s228, %s242
    %p244 = scmp.eq.s32.totalorder %s34, 0
    %p245 = por %p243, %p244
    %s247 = sadd.s32 %s246, 1
    %p250 = scmp.eq.s32.totalorder %s28, 1
    %p251 = scmp.ne.s32.totalorder %s246, %s248
    %p252 = scmp.eq.s32.totalorder %s28, 0
    %p253 = por %p251, %p252
    %p254 = scmp.ne.s32.totalorder %s246, %s248
    %p255 = scmp.eq.s32.totalorder %s33, 1
    %p256 = por %p254, %p255
    %p257 = scmp.ne.s32.totalorder %s248, %s249
    %p258 = scmp.eq.s32.totalorder %s33, 0
    %p259 = por %p257, %p258
    %p260 = scmp.ne.s32.totalorder %s248, %s249
    %p261 = scmp.eq.s32.totalorder %s34, 1
    %p262 = por %p260, %p261
    %p264 = scmp.ne.s32.totalorder %s249, %s263
    %p265 = scmp.eq.s32.totalorder %s34, 0
    %p266 = por %p264, %p265
    %s268 = sadd.s32 %s267, 1
    %p271 = scmp.eq.s32.totalorder %s28, 1
    %p272 = scmp.ne.s32.totalorder %s267, %s269
    %p273 = scmp.eq.s32.totalorder %s28, 0
    %p274 = por %p272, %p273
    %p275 = scmp.ne.s32.totalorder %s267, %s269
    %p276 = scmp.eq.s32.totalorder %s33, 1
    %p277 = por %p275, %p276
    %p278 = scmp.ne.s32.totalorder %s269, %s270
    %p279 = scmp.eq.s32.totalorder %s33, 0
    %p280 = por %p278, %p279
    %p281 = scmp.ne.s32.totalorder %s269, %s270
    %p282 = scmp.eq.s32.totalorder %s34, 1
    %p283 = por %p281, %p282
    %p285 = scmp.ne.s32.totalorder %s270, %s284
    %p286 = scmp.eq.s32.totalorder %s34, 0
    %p287 = por %p285, %p286
    %s289 = sadd.s32 %s288, 1
    %p292 = scmp.eq.s32.totalorder %s28, 1
    %p293 = scmp.ne.s32.totalorder %s288, %s290
    %p294 = scmp.eq.s32.totalorder %s28, 0
    %p295 = por %p293, %p294
    %p296 = scmp.ne.s32.totalorder %s288, %s290
    %p297 = scmp.eq.s32.totalorder %s33, 1
    %p298 = por %p296, %p297
    %p299 = scmp.ne.s32.totalorder %s290, %s291
    %p300 = scmp.eq.s32.totalorder %s33, 0
    %p301 = por %p299, %p300
    %p302 = scmp.ne.s32.totalorder %s290, %s291
    %p303 = scmp.eq.s32.totalorder %s34, 1
    %p304 = por %p302, %p303
    %p306 = scmp.ne.s32.totalorder %s291, %s305
    %p307 = scmp.eq.s32.totalorder %s34, 0
    %p308 = por %p306, %p307
    %s310 = sadd.s32 %s309, 1
    %p313 = scmp.eq.s32.totalorder %s28, 1
    %p314 = scmp.ne.s32.totalorder %s309, %s311
    %p315 = scmp.eq.s32.totalorder %s28, 0
    %p316 = por %p314, %p315
    %p317 = scmp.ne.s32.totalorder %s309, %s311
    %p318 = scmp.eq.s32.totalorder %s33, 1
    %p319 = por %p317, %p318
    %p320 = scmp.ne.s32.totalorder %s311, %s312
    %p321 = scmp.eq.s32.totalorder %s33, 0
    %p322 = por %p320, %p321
    %p323 = scmp.ne.s32.totalorder %s311, %s312
    %p324 = scmp.eq.s32.totalorder %s34, 1
    %p325 = por %p323, %p324
    %p327 = scmp.ne.s32.totalorder %s312, %s326
    %p328 = scmp.eq.s32.totalorder %s34, 0
    %p329 = por %p327, %p328
    %s331 = sadd.s32 %s330, 1
    %p334 = scmp.eq.s32.totalorder %s28, 1
    %p335 = scmp.ne.s32.totalorder %s330, %s332
    %p336 = scmp.eq.s32.totalorder %s28, 0
    %p337 = por %p335, %p336
    %p338 = scmp.ne.s32.totalorder %s330, %s332
    %p339 = scmp.eq.s32.totalorder %s33, 1
    %p340 = por %p338, %p339
    %p341 = scmp.ne.s32.totalorder %s332, %s333
    %p342 = scmp.eq.s32.totalorder %s33, 0
    %p343 = por %p341, %p342
    %p344 = scmp.ne.s32.totalorder %s332, %s333
    %p345 = scmp.eq.s32.totalorder %s34, 1
    %p346 = por %p344, %p345
    %p348 = scmp.ne.s32.totalorder %s333, %s347
    %p349 = scmp.eq.s32.totalorder %s34, 0
    %p350 = por %p348, %p349
    %s352 = sadd.s32 %s351, 1
    %p355 = scmp.eq.s32.totalorder %s28, 1
    %p356 = scmp.ne.s32.totalorder %s351, %s353
    %p357 = scmp.eq.s32.totalorder %s28, 0
    %p358 = por %p356, %p357
    %p359 = scmp.ne.s32.totalorder %s351, %s353
    %p360 = scmp.eq.s32.totalorder %s33, 1
    %p361 = por %p359, %p360
    %p362 = scmp.ne.s32.totalorder %s353, %s354
    %p363 = scmp.eq.s32.totalorder %s33, 0
    %p364 = por %p362, %p363
    %p365 = scmp.ne.s32.totalorder %s353, %s354
    %p366 = scmp.eq.s32.totalorder %s34, 1
    %p367 = por %p365, %p366
    %p369 = scmp.ne.s32.totalorder %s354, %s368
    %p370 = scmp.eq.s32.totalorder %s34, 0
    %p371 = por %p369, %p370
    %s373 = sadd.s32 %s372, 1
    %p376 = scmp.eq.s32.totalorder %s28, 1
    %p377 = scmp.ne.s32.totalorder %s372, %s374
    %p378 = scmp.eq.s32.totalorder %s28, 0
    %p379 = por %p377, %p378
    %p380 = scmp.ne.s32.totalorder %s372, %s374
    %p381 = scmp.eq.s32.totalorder %s33, 1
    %p382 = por %p380, %p381
    %p383 = scmp.ne.s32.totalorder %s374, %s375
    %p384 = scmp.eq.s32.totalorder %s33, 0
    %p385 = por %p383, %p384
    %p386 = scmp.ne.s32.totalorder %s374, %s375
    %p387 = scmp.eq.s32.totalorder %s34, 1
    %p388 = por %p386, %p387
    %p390 = scmp.ne.s32.totalorder %s375, %s389
    %p391 = scmp.eq.s32.totalorder %s34, 0
    %p392 = por %p390, %p391
    %s394 = sadd.s32 %s393, 1
    %p397 = scmp.eq.s32.totalorder %s28, 1
    %p398 = scmp.ne.s32.totalorder %s393, %s395
    %p399 = scmp.eq.s32.totalorder %s28, 0
    %p400 = por %p398, %p399
    %p401 = scmp.ne.s32.totalorder %s393, %s395
    %p402 = scmp.eq.s32.totalorder %s33, 1
    %p403 = por %p401, %p402
    %p404 = scmp.ne.s32.totalorder %s395, %s396
    %p405 = scmp.eq.s32.totalorder %s33, 0
    %p406 = por %p404, %p405
    %p407 = scmp.ne.s32.totalorder %s395, %s396
    %p408 = scmp.eq.s32.totalorder %s34, 1
    %p409 = por %p407, %p408
    %p411 = scmp.ne.s32.totalorder %s396, %s410
    %p412 = scmp.eq.s32.totalorder %s34, 0
    %p413 = por %p411, %p412
    %s414 = ssub.s32 %s28, %s35
    %p415 = scmp.eq.s32.totalorder %s414, 0
    %s417 = sadd.s32 %s416, 1
    %s418 = scalar_select %p415, %s416, %s417
    %p421 = pneg %p415
    %p422 = scmp.eq.s32.totalorder %s28, 1
    %p423 = por %p421, %p422
    %p424 = scmp.ne.s32.totalorder %s416, %s419
    %p425 = scmp.eq.s32.totalorder %s28, 0
    %p426 = por %p424, %p425
    %p427 = scmp.ne.s32.totalorder %s416, %s419
    %p428 = scmp.eq.s32.totalorder %s33, 1
    %p429 = por %p427, %p428
    %p430 = scmp.ne.s32.totalorder %s419, %s420
    %p431 = scmp.eq.s32.totalorder %s33, 0
    %p432 = por %p430, %p431
    %p433 = scmp.ne.s32.totalorder %s419, %s420
    %p434 = scmp.eq.s32.totalorder %s34, 1
    %p435 = por %p433, %p434
    %p437 = scmp.ne.s32.totalorder %s420, %s436
    %p438 = scmp.eq.s32.totalorder %s34, 0
    %p439 = por %p437, %p438
    %p440 = scmp.le.s32.totalorder 1, %s28
    %p441 = scmp.lt.s32.totalorder %s28, 3
    %p442 = pnand %p440, %p441
    %p443 = pneg %p442
    // Predicated region
    $region9: #{gnn_bet5_forward.1} parent=5 // pred_check
      _
    $region10: #{gnn_bet5_forward.1} parent=5 // pred_check_branch
      %445 = sbr.rel (%p442) target = $region12
    $region11: #{gnn_bet5_forward.1} parent=5 // pred_region
      %s446 = ssub.s32 %s28, 1
      // Predicated region
      $region13: #{gnn_bet5_forward.1} parent=11 // pred_check
        %p447 = pneg %p49
      $region14: #{gnn_bet5_forward.1} parent=11 // pred_check_branch
        %449 = sbr.rel (%p447) target = $region16
      $region15: #{gnn_bet5_forward.1} parent=11 // pred_region
        _
      $region16: #{gnn_bet5_forward.1} parent=11 // pred_fallthru
        _
      // Predicated region
      $region17: #{gnn_bet5_forward.1} parent=11 // pred_check
        %p450 = pneg %p70
      $region18: #{gnn_bet5_forward.1} parent=11 // pred_check_branch
        %452 = sbr.rel (%p450) target = $region20
      $region19: #{gnn_bet5_forward.1} parent=11 // pred_region
        _
      $region20: #{gnn_bet5_forward.1} parent=11 // pred_fallthru
        _
      // Predicated region
      $region21: #{gnn_bet5_forward.1} parent=11 // pred_check
        %p453 = pneg %p91
      $region22: #{gnn_bet5_forward.1} parent=11 // pred_check_branch
        %455 = sbr.rel (%p453) target = $region24
      $region23: #{gnn_bet5_forward.1} parent=11 // pred_region
        _
      $region24: #{gnn_bet5_forward.1} parent=11 // pred_fallthru
        _
      // Predicated region
      $region25: #{gnn_bet5_forward.1} parent=11 // pred_check
        %p456 = pneg %p112
      $region26: #{gnn_bet5_forward.1} parent=11 // pred_check_branch
        %458 = sbr.rel (%p456) target = $region28
      $region27: #{gnn_bet5_forward.1} parent=11 // pred_region
        _
      $region28: #{gnn_bet5_forward.1} parent=11 // pred_fallthru
        _
      // Predicated region
      $region29: #{gnn_bet5_forward.1} parent=11 // pred_check
        %p459 = pneg %p133
      $region30: #{gnn_bet5_forward.1} parent=11 // pred_check_branch
        %461 = sbr.rel (%p459) target = $region32
      $region31: #{gnn_bet5_forward.1} parent=11 // pred_region
        _
      $region32: #{gnn_bet5_forward.1} parent=11 // pred_fallthru
        _
      // Predicated region
      $region33: #{gnn_bet5_forward.1} parent=11 // pred_check
        %p462 = pneg %p154
      $region34: #{gnn_bet5_forward.1} parent=11 // pred_check_branch
        %464 = sbr.rel (%p462) target = $region36
      $region35: #{gnn_bet5_forward.1} parent=11 // pred_region
        _
      $region36: #{gnn_bet5_forward.1} parent=11 // pred_fallthru
        _
      // Predicated region
      $region37: #{gnn_bet5_forward.1} parent=11 // pred_check
        %p465 = pneg %p175
      $region38: #{gnn_bet5_forward.1} parent=11 // pred_check_branch
        %467 = sbr.rel (%p465) target = $region40
      $region39: #{gnn_bet5_forward.1} parent=11 // pred_region
        _
      $region40: #{gnn_bet5_forward.1} parent=11 // pred_fallthru
        _
      // Predicated region
      $region41: #{gnn_bet5_forward.1} parent=11 // pred_check
        %p468 = pneg %p196
      $region42: #{gnn_bet5_forward.1} parent=11 // pred_check_branch
        %470 = sbr.rel (%p468) target = $region44
      $region43: #{gnn_bet5_forward.1} parent=11 // pred_region
        _
      $region44: #{gnn_bet5_forward.1} parent=11 // pred_fallthru
        _
      // Predicated region
      $region45: #{gnn_bet5_forward.1} parent=11 // pred_check
        %p471 = pneg %p217
      $region46: #{gnn_bet5_forward.1} parent=11 // pred_check_branch
        %473 = sbr.rel (%p471) target = $region48
      $region47: #{gnn_bet5_forward.1} parent=11 // pred_region
        _
      $region48: #{gnn_bet5_forward.1} parent=11 // pred_fallthru
        _
      // Predicated region
      $region49: #{gnn_bet5_forward.1} parent=11 // pred_check
        %p474 = pneg %p238
      $region50: #{gnn_bet5_forward.1} parent=11 // pred_check_branch
        %476 = sbr.rel (%p474) target = $region52
      $region51: #{gnn_bet5_forward.1} parent=11 // pred_region
        _
      $region52: #{gnn_bet5_forward.1} parent=11 // pred_fallthru
        _
      // Predicated region
      $region53: #{gnn_bet5_forward.1} parent=11 // pred_check
        %p477 = pneg %p259
      $region54: #{gnn_bet5_forward.1} parent=11 // pred_check_branch
        %479 = sbr.rel (%p477) target = $region56
      $region55: #{gnn_bet5_forward.1} parent=11 // pred_region
        _
      $region56: #{gnn_bet5_forward.1} parent=11 // pred_fallthru
        _
      // Predicated region
      $region57: #{gnn_bet5_forward.1} parent=11 // pred_check
        %p480 = pneg %p280
      $region58: #{gnn_bet5_forward.1} parent=11 // pred_check_branch
        %482 = sbr.rel (%p480) target = $region60
      $region59: #{gnn_bet5_forward.1} parent=11 // pred_region
        _
      $region60: #{gnn_bet5_forward.1} parent=11 // pred_fallthru
        _
      // Predicated region
      $region61: #{gnn_bet5_forward.1} parent=11 // pred_check
        %p483 = pneg %p301
      $region62: #{gnn_bet5_forward.1} parent=11 // pred_check_branch
        %485 = sbr.rel (%p483) target = $region64
      $region63: #{gnn_bet5_forward.1} parent=11 // pred_region
        _
      $region64: #{gnn_bet5_forward.1} parent=11 // pred_fallthru
        _
      // Predicated region
      $region65: #{gnn_bet5_forward.1} parent=11 // pred_check
        %p486 = pneg %p322
      $region66: #{gnn_bet5_forward.1} parent=11 // pred_check_branch
        %488 = sbr.rel (%p486) target = $region68
      $region67: #{gnn_bet5_forward.1} parent=11 // pred_region
        _
      $region68: #{gnn_bet5_forward.1} parent=11 // pred_fallthru
        _
      // Predicated region
      $region69: #{gnn_bet5_forward.1} parent=11 // pred_check
        %p489 = pneg %p343
      $region70: #{gnn_bet5_forward.1} parent=11 // pred_check_branch
        %491 = sbr.rel (%p489) target = $region72
      $region71: #{gnn_bet5_forward.1} parent=11 // pred_region
        _
      $region72: #{gnn_bet5_forward.1} parent=11 // pred_fallthru
        _
      // Predicated region
      $region73: #{gnn_bet5_forward.1} parent=11 // pred_check
        %p492 = pneg %p364
      $region74: #{gnn_bet5_forward.1} parent=11 // pred_check_branch
        %494 = sbr.rel (%p492) target = $region76
      $region75: #{gnn_bet5_forward.1} parent=11 // pred_region
        _
      $region76: #{gnn_bet5_forward.1} parent=11 // pred_fallthru
        _
      // Predicated region
      $region77: #{gnn_bet5_forward.1} parent=11 // pred_check
        %p495 = pneg %p385
      $region78: #{gnn_bet5_forward.1} parent=11 // pred_check_branch
        %497 = sbr.rel (%p495) target = $region80
      $region79: #{gnn_bet5_forward.1} parent=11 // pred_region
        _
      $region80: #{gnn_bet5_forward.1} parent=11 // pred_fallthru
        _
      // Predicated region
      $region81: #{gnn_bet5_forward.1} parent=11 // pred_check
        %p498 = pneg %p406
      $region82: #{gnn_bet5_forward.1} parent=11 // pred_check_branch
        %500 = sbr.rel (%p498) target = $region84
      $region83: #{gnn_bet5_forward.1} parent=11 // pred_region
        _
      $region84: #{gnn_bet5_forward.1} parent=11 // pred_fallthru
        _
    $region12: #{gnn_bet5_forward.1} parent=5 // pred_fallthru
      _
    %p501 = scmp.lt.s32.totalorder %s28, 2
    // Predicated region
    $region85: #{gnn_bet5_forward.1} parent=5 // pred_check
      %p502 = pneg %p501
    $region86: #{gnn_bet5_forward.1} parent=5 // pred_check_branch
      %504 = sbr.rel (%p502) target = $region88
    $region87: #{gnn_bet5_forward.1} parent=5 // pred_region
      _
    $region88: #{gnn_bet5_forward.1} parent=5 // pred_fallthru
      _
    %p505 = scmp.le.s32.totalorder 1, %s28
    %p506 = scmp.lt.s32.totalorder %s28, 3
    %p507 = pnand %p505, %p506
    %p508 = pneg %p507
    // Predicated region
    $region89: #{gnn_bet5_forward.1} parent=5 // pred_check
      _
    $region90: #{gnn_bet5_forward.1} parent=5 // pred_check_branch
      %510 = sbr.rel (%p507) target = $region92
    $region91: #{gnn_bet5_forward.1} parent=5 // pred_region
      %s511 = ssub.s32 %s28, 1
      %p512 = pneg %p49
      %p513 = pneg %p46
      %p514 = pneg %p70
      %p515 = pneg %p67
      %p516 = pneg %p91
      %p517 = pneg %p88
      %p518 = pneg %p112
      %p519 = pneg %p109
      %p520 = pneg %p133
      %p521 = pneg %p130
      %p522 = pneg %p154
      %p523 = pneg %p151
      %p524 = pneg %p175
      %p525 = pneg %p172
      %p526 = pneg %p196
      %p527 = pneg %p193
      %p528 = pneg %p217
      %p529 = pneg %p214
      %p530 = pneg %p238
      %p531 = pneg %p235
      %p532 = pneg %p259
      %p533 = pneg %p256
      %p534 = pneg %p280
      %p535 = pneg %p277
      %p536 = pneg %p301
      %p537 = pneg %p298
      %p538 = pneg %p322
      %p539 = pneg %p319
      %p540 = pneg %p343
      %p541 = pneg %p340
      %p542 = pneg %p364
      %p543 = pneg %p361
      %p544 = pneg %p385
      %p545 = pneg %p382
      %p546 = pneg %p406
      %p547 = pneg %p403
      %p548 = pneg %p432
      %p549 = pneg %p429
      %p550 = scmp.lt.s32.totalorder %s33, 1
      %s551 = scalar_select %p550, %s33, 1
      %s552 = smul.addr %s551, 16
      %s553 = smul.addr %s552, 8
      %s554 = scalar_lea.vmem %s20, %s553
      %p555 = scmp.lt.s32.totalorder %s33, 1
      %s556 = scalar_select %p555, %s33, 1
      %s557 = smul.addr %s556, 16
      %s558 = smul.addr %s557, 8
      %s559 = scalar_lea.vmem %s20, %s558
      %p561 = scmp.eq.s32.totalorder %s33, 0
      // Predicated region
      $region93: #{gnn_bet5_forward.1} parent=91 // pred_check
        %p562 = pneg %p561
      $region94: #{gnn_bet5_forward.1} parent=91 // pred_check_branch
        %564 = sbr.rel (%p562) target = $region96
      $region95: #{gnn_bet5_forward.1} parent=91 // pred_region
        %p566 = scmp.lt.u32.totalorder 64, 8
        %p567 = pneg %p566
        // Predicated region
        $region97: #{gnn_bet5_forward.1} parent=95 // pred_check
          _
        $region98: #{gnn_bet5_forward.1} parent=95 // pred_check_branch
          %569 = sbr.rel (%p566) target = $region100
        $region99: #{gnn_bet5_forward.1} parent=95 // pred_region
          %s584 = sand.u32 64, 7
          %p585 = scmp.eq.s32.totalorder %s584, 0
          // Predicated region
          $region112: #{gnn_bet5_forward.1} parent=99 // pred_check
            %p586 = pneg %p585
          $region113: #{gnn_bet5_forward.1} parent=99 // pred_check_branch
            %588 = sbr.rel (%p586) target = $region115
          $region114: #{gnn_bet5_forward.1} parent=99 // pred_region
            loop: start=0, step=1, limit=1
            $region116: #{gnn_bet5_forward.1} parent=114 // loop_pre_header
              _
            $region117: #{gnn_bet5_forward.1} parent=114 // loop_header
              %s590 = sphi 0, %s594
              %p591 = scmp.ge.s32.totalorder %s590, 1
              %s595 = sphi %s0, %s0
              %s596 = sphi [#allocation2], [#allocation2]
            $region118: #{gnn_bet5_forward.1} parent=114 // loop_header_branch
              %593 = sbr.rel (%p591) target = $region122
            $region119: #{gnn_bet5_forward.1} parent=114 // loop_body
              %v597 = vld [vmem:[%s595] sm:$0xff]
              %598 = vst [vmem:[%s596] sm:$0xff] %v597
              %v599 = vld [vmem:[%s595 + $0x8] sm:$0xff]
              %600 = vst [vmem:[%s596 + $0x8] sm:$0xff] %v599
              %v601 = vld [vmem:[%s595 + $0x10] sm:$0xff]
              %602 = vst [vmem:[%s596 + $0x10] sm:$0xff] %v601
              %v603 = vld [vmem:[%s595 + $0x18] sm:$0xff]
              %604 = vst [vmem:[%s596 + $0x18] sm:$0xff] %v603
              %v605 = vld [vmem:[%s595 + $0x20] sm:$0xff]
              %606 = vst [vmem:[%s596 + $0x20] sm:$0xff] %v605
              %v607 = vld [vmem:[%s595 + $0x28] sm:$0xff]
              %608 = vst [vmem:[%s596 + $0x28] sm:$0xff] %v607
              %v609 = vld [vmem:[%s595 + $0x30] sm:$0xff]
              %610 = vst [vmem:[%s596 + $0x30] sm:$0xff] %v609
              %v611 = vld [vmem:[%s595 + $0x38] sm:$0xff]
              %612 = vst [vmem:[%s596 + $0x38] sm:$0xff] %v611
            $region120: #{gnn_bet5_forward.1} parent=114 // loop_footer
              %s594 = sadd.s32 1, %s590
            $region121: #{gnn_bet5_forward.1} parent=114 // loop_footer_branch
              %589 = sbr.rel target = $region117
            $region122: #{gnn_bet5_forward.1} parent=114 // loop_exit
              _
          $region115: #{gnn_bet5_forward.1} parent=99 // pred_fallthru
            _
          %p613 = pneg %p585
          // Predicated region
          $region123: #{gnn_bet5_forward.1} parent=99 // pred_check
            _
          $region124: #{gnn_bet5_forward.1} parent=99 // pred_check_branch
            %615 = sbr.rel (%p585) target = $region126
          $region125: #{gnn_bet5_forward.1} parent=99 // pred_region
            %s616 = sand.u32 64, 7
          $region126: #{gnn_bet5_forward.1} parent=99 // pred_fallthru
            _
        $region100: #{gnn_bet5_forward.1} parent=95 // pred_fallthru
          _
        // Predicated region
        $region101: #{gnn_bet5_forward.1} parent=95 // pred_check
          %p570 = pneg %p566
        $region102: #{gnn_bet5_forward.1} parent=95 // pred_check_branch
          %572 = sbr.rel (%p570) target = $region104
        $region103: #{gnn_bet5_forward.1} parent=95 // pred_region
          %s573 = sshllo.u32 0, 64
          loop: start=0, step=1, limit=1
          $region105: #{gnn_bet5_forward.1} parent=103 // loop_pre_header
            _
          $region106: #{gnn_bet5_forward.1} parent=103 // loop_header
            %s575 = sphi 0, %s579
            %p576 = scmp.ge.s32.totalorder %s575, 1
            %s580 = sphi %s0, %s0
            %s581 = sphi [#allocation2], [#allocation2]
          $region107: #{gnn_bet5_forward.1} parent=103 // loop_header_branch
            %578 = sbr.rel (%p576) target = $region111
          $region108: #{gnn_bet5_forward.1} parent=103 // loop_body
            %v582 = vld [vmem:[%s580] sm:%s573]
            %583 = vst [vmem:[%s581] sm:%s573] %v582
          $region109: #{gnn_bet5_forward.1} parent=103 // loop_footer
            %s579 = sadd.s32 1, %s575
          $region110: #{gnn_bet5_forward.1} parent=103 // loop_footer_branch
            %574 = sbr.rel target = $region106
          $region111: #{gnn_bet5_forward.1} parent=103 // loop_exit
            _
        $region104: #{gnn_bet5_forward.1} parent=95 // pred_fallthru
          _
        // Predicated region
        $region127: #{gnn_bet5_forward.1} parent=95 // pred_check
          _
        $region128: #{gnn_bet5_forward.1} parent=95 // pred_check_branch
          %619 = sbr.rel (0) target = $region130
        $region129: #{gnn_bet5_forward.1} parent=95 // pred_region
          %620 = vsyncadd [#allocation3], 1024
        $region130: #{gnn_bet5_forward.1} parent=95 // pred_fallthru
          _
        %s621 = smul.u32 4, 16
        %s622 = smul.u32 %s621, 1
        %s623 = sshll.u32 %s622, 4
        %624 = dma.done [#allocation3], %s623
      $region96: #{gnn_bet5_forward.1} parent=91 // pred_fallthru
        _
      %p625 = scmp.eq.s32.totalorder %s33, 1
      // Predicated region
      $region131: #{gnn_bet5_forward.1} parent=91 // pred_check
        %p626 = pneg %p625
      $region132: #{gnn_bet5_forward.1} parent=91 // pred_check_branch
        %628 = sbr.rel (%p626) target = $region134
      $region133: #{gnn_bet5_forward.1} parent=91 // pred_region
        %p630 = scmp.lt.u32.totalorder 64, 8
        %p631 = pneg %p630
        // Predicated region
        $region135: #{gnn_bet5_forward.1} parent=133 // pred_check
          _
        $region136: #{gnn_bet5_forward.1} parent=133 // pred_check_branch
          %633 = sbr.rel (%p630) target = $region138
        $region137: #{gnn_bet5_forward.1} parent=133 // pred_region
          %s648 = sand.u32 64, 7
          %p649 = scmp.eq.s32.totalorder %s648, 0
          // Predicated region
          $region150: #{gnn_bet5_forward.1} parent=137 // pred_check
            %p650 = pneg %p649
          $region151: #{gnn_bet5_forward.1} parent=137 // pred_check_branch
            %652 = sbr.rel (%p650) target = $region153
          $region152: #{gnn_bet5_forward.1} parent=137 // pred_region
            loop: start=0, step=1, limit=1
            $region154: #{gnn_bet5_forward.1} parent=152 // loop_pre_header
              _
            $region155: #{gnn_bet5_forward.1} parent=152 // loop_header
              %s654 = sphi 0, %s658
              %p655 = scmp.ge.s32.totalorder %s654, 1
              %s659 = sphi %s1, %s1
              %s660 = sphi [#allocation2], [#allocation2]
            $region156: #{gnn_bet5_forward.1} parent=152 // loop_header_branch
              %657 = sbr.rel (%p655) target = $region160
            $region157: #{gnn_bet5_forward.1} parent=152 // loop_body
              %v661 = vld [vmem:[%s659] sm:$0xff]
              %662 = vst [vmem:[%s660] sm:$0xff] %v661
              %v663 = vld [vmem:[%s659 + $0x8] sm:$0xff]
              %664 = vst [vmem:[%s660 + $0x8] sm:$0xff] %v663
              %v665 = vld [vmem:[%s659 + $0x10] sm:$0xff]
              %666 = vst [vmem:[%s660 + $0x10] sm:$0xff] %v665
              %v667 = vld [vmem:[%s659 + $0x18] sm:$0xff]
              %668 = vst [vmem:[%s660 + $0x18] sm:$0xff] %v667
              %v669 = vld [vmem:[%s659 + $0x20] sm:$0xff]
              %670 = vst [vmem:[%s660 + $0x20] sm:$0xff] %v669
              %v671 = vld [vmem:[%s659 + $0x28] sm:$0xff]
              %672 = vst [vmem:[%s660 + $0x28] sm:$0xff] %v671
              %v673 = vld [vmem:[%s659 + $0x30] sm:$0xff]
              %674 = vst [vmem:[%s660 + $0x30] sm:$0xff] %v673
              %v675 = vld [vmem:[%s659 + $0x38] sm:$0xff]
              %676 = vst [vmem:[%s660 + $0x38] sm:$0xff] %v675
            $region158: #{gnn_bet5_forward.1} parent=152 // loop_footer
              %s658 = sadd.s32 1, %s654
            $region159: #{gnn_bet5_forward.1} parent=152 // loop_footer_branch
              %653 = sbr.rel target = $region155
            $region160: #{gnn_bet5_forward.1} parent=152 // loop_exit
              _
          $region153: #{gnn_bet5_forward.1} parent=137 // pred_fallthru
            _
          %p677 = pneg %p649
          // Predicated region
          $region161: #{gnn_bet5_forward.1} parent=137 // pred_check
            _
          $region162: #{gnn_bet5_forward.1} parent=137 // pred_check_branch
            %679 = sbr.rel (%p649) target = $region164
          $region163: #{gnn_bet5_forward.1} parent=137 // pred_region
            %s680 = sand.u32 64, 7
          $region164: #{gnn_bet5_forward.1} parent=137 // pred_fallthru
            _
        $region138: #{gnn_bet5_forward.1} parent=133 // pred_fallthru
          _
        // Predicated region
        $region139: #{gnn_bet5_forward.1} parent=133 // pred_check
          %p634 = pneg %p630
        $region140: #{gnn_bet5_forward.1} parent=133 // pred_check_branch
          %636 = sbr.rel (%p634) target = $region142
        $region141: #{gnn_bet5_forward.1} parent=133 // pred_region
          %s637 = sshllo.u32 0, 64
          loop: start=0, step=1, limit=1
          $region143: #{gnn_bet5_forward.1} parent=141 // loop_pre_header
            _
          $region144: #{gnn_bet5_forward.1} parent=141 // loop_header
            %s639 = sphi 0, %s643
            %p640 = scmp.ge.s32.totalorder %s639, 1
            %s644 = sphi %s1, %s1
            %s645 = sphi [#allocation2], [#allocation2]
          $region145: #{gnn_bet5_forward.1} parent=141 // loop_header_branch
            %642 = sbr.rel (%p640) target = $region149
          $region146: #{gnn_bet5_forward.1} parent=141 // loop_body
            %v646 = vld [vmem:[%s644] sm:%s637]
            %647 = vst [vmem:[%s645] sm:%s637] %v646
          $region147: #{gnn_bet5_forward.1} parent=141 // loop_footer
            %s643 = sadd.s32 1, %s639
          $region148: #{gnn_bet5_forward.1} parent=141 // loop_footer_branch
            %638 = sbr.rel target = $region144
          $region149: #{gnn_bet5_forward.1} parent=141 // loop_exit
            _
        $region142: #{gnn_bet5_forward.1} parent=133 // pred_fallthru
          _
        // Predicated region
        $region165: #{gnn_bet5_forward.1} parent=133 // pred_check
          _
        $region166: #{gnn_bet5_forward.1} parent=133 // pred_check_branch
          %683 = sbr.rel (0) target = $region168
        $region167: #{gnn_bet5_forward.1} parent=133 // pred_region
          %684 = vsyncadd [#allocation3], 1024
        $region168: #{gnn_bet5_forward.1} parent=133 // pred_fallthru
          _
        %s685 = smul.u32 4, 16
        %s686 = smul.u32 %s685, 1
        %s687 = sshll.u32 %s686, 4
        %688 = dma.done [#allocation3], %s687
      $region134: #{gnn_bet5_forward.1} parent=91 // pred_fallthru
        _
      %v689 = vld [vmem:[#allocation2] sm:$0xff]
      %v690 = vld [vmem:[#allocation2 + $0x8] sm:$0xff]
      %v691 = vld [vmem:[#allocation2 + $0x10] sm:$0xff]
      %v692 = vld [vmem:[#allocation2 + $0x18] sm:$0xff]
      %v693 = vld [vmem:[#allocation2 + $0x20] sm:$0xff]
      %v694 = vld [vmem:[#allocation2 + $0x28] sm:$0xff]
      %v695 = vld [vmem:[#allocation2 + $0x30] sm:$0xff]
      %v696 = vld [vmem:[#allocation2 + $0x38] sm:$0xff]
      %v697 = vld [vmem:[%s14] sm:$0xff]
      %v698 = vld [vmem:[%s14 + $0x8] sm:$0xff]
      %v699 = vld [vmem:[%s14 + $0x10] sm:$0xff]
      %v700 = vld [vmem:[%s14 + $0x18] sm:$0xff]
      %v701 = vld [vmem:[%s16] sm:$0xff]
      %v702 = vld [vmem:[%s16 + $0x8] sm:$0xff]
      %v703 = vld [vmem:[%s16 + $0x10] sm:$0xff]
      %v704 = vld [vmem:[%s16 + $0x18] sm:$0xff]
      %v705 = vld [vmem:[%s16 + $0x20] sm:$0xff]
      %v706 = vld [vmem:[%s16 + $0x28] sm:$0xff]
      %v707 = vld [vmem:[%s16 + $0x30] sm:$0xff]
      %v708 = vld [vmem:[%s16 + $0x38] sm:$0xff]
      %v709 = vld [vmem:[%s18] sm:$0xff]
      %v710 = vld [vmem:[%s18 + $0x8] sm:$0xff]
      %v711 = vld [vmem:[%s18 + $0x10] sm:$0xff]
      %v712 = vld [vmem:[%s18 + $0x18] sm:$0xff]
      %v713 = vld [vmem:[%s18 + $0x20] sm:$0xff]
      %v714 = vld [vmem:[%s18 + $0x28] sm:$0xff]
      %v715 = vld [vmem:[%s18 + $0x30] sm:$0xff]
      %v716 = vld [vmem:[%s18 + $0x38] sm:$0xff]
      %v717 = vld [vmem:[%s15] sm:$0x1]
      %v719 = vlaneseq
      %v720 = vshrl.u32 %v719, 7
      %v721 = vsub.s32 0, %v720
      %v722 = vrot.slane %v717, %v721
      %v724 = vld [vmem:[%s17] sm:$0x1]
      %v726 = vlaneseq
      %v727 = vshrl.u32 %v726, 7
      %v728 = vsub.s32 0, %v727
      %v729 = vrot.slane %v724, %v728
      %v731 = vld [vmem:[#allocation4] sm:$0x1]
      %v732 = vld [vmem:[%s2] sm:$0xf]
      %v733 = vld [vmem:[%s2 + $0x4] sm:$0xf]
      %v734 = vld [vmem:[%s2 + $0x8] sm:$0xf]
      %v735 = vld [vmem:[%s2 + $0xc] sm:$0xf]
      %v736 = vld [vmem:[%s2 + $0x10] sm:$0xf]
      %v737 = vld [vmem:[%s2 + $0x14] sm:$0xf]
      %v738 = vld [vmem:[%s2 + $0x18] sm:$0xf]
      %v739 = vld [vmem:[%s2 + $0x1c] sm:$0xf]
      %v740 = vld [vmem:[%s2 + $0x20] sm:$0xf]
      %v741 = vld [vmem:[%s2 + $0x24] sm:$0xf]
      %v742 = vld [vmem:[%s2 + $0x28] sm:$0xf]
      %v743 = vld [vmem:[%s2 + $0x2c] sm:$0xf]
      %v744 = vld [vmem:[%s2 + $0x30] sm:$0xf]
      %v745 = vld [vmem:[%s2 + $0x34] sm:$0xf]
      %v746 = vld [vmem:[%s2 + $0x38] sm:$0xf]
      %v747 = vld [vmem:[%s2 + $0x3c] sm:$0xf]
      %v748 = vld [vmem:[%s3] sm:$0x1]
      %v750 = vlaneseq
      %v751 = vshrl.u32 %v750, 7
      %v752 = vsub.s32 0, %v751
      %v753 = vrot.slane %v748, %v752
      %v771 = vunpack.c.l.b16 %v732
      %v772 = vunpack.c.l.b16 %v733
      %v773 = vunpack.c.l.b16 %v734
      %v774 = vunpack.c.l.b16 %v735
      %v775 = vunpack.c.l.b16 %v736
      %v776 = vunpack.c.l.b16 %v737
      %v777 = vunpack.c.l.b16 %v738
      %v778 = vunpack.c.l.b16 %v739
      %v779 = vunpack.c.l.b16 %v740
      %v780 = vunpack.c.l.b16 %v741
      %v781 = vunpack.c.l.b16 %v742
      %v782 = vunpack.c.l.b16 %v743
      %v783 = vunpack.c.l.b16 %v744
      %v784 = vunpack.c.l.b16 %v745
      %v785 = vunpack.c.l.b16 %v746
      %v786 = vunpack.c.l.b16 %v747
      %v787 = vpack.c.b16 %v772, %v771
      %v788 = vpack.c.b16 %v774, %v773
      %v789 = vpack.c.b16 %v776, %v775
      %v790 = vpack.c.b16 %v778, %v777
      %v791 = vpack.c.b16 %v780, %v779
      %v792 = vpack.c.b16 %v782, %v781
      %v793 = vpack.c.b16 %v784, %v783
      %v794 = vpack.c.b16 %v786, %v785
      %803 = vmatprep.subr.bf16.mxu0 0
      %804 = vmatpush1.bf16.msra.mxu0 %v787
      %805 = vmatprep.subr.bf16.mxu0 0
      %806 = vmatpush1.bf16.msra.mxu0 %v788
      %807 = vmatprep.subr.bf16.mxu0 0
      %808 = vmatpush1.bf16.msra.mxu0 %v789
      %809 = vmatprep.subr.bf16.mxu0 0
      %810 = vmatpush1.bf16.msra.mxu0 %v790
      %811 = vmatprep.subr.bf16.mxu0 0
      %812 = vmatpush1.bf16.msra.mxu0 %v791
      %813 = vmatprep.subr.bf16.mxu0 0
      %814 = vmatpush1.bf16.msra.mxu0 %v792
      %815 = vmatprep.subr.bf16.mxu0 0
      %816 = vmatpush1.bf16.msra.mxu0 %v793
      %817 = vmatprep.subr.bf16.mxu0 0
      %818 = vmatpush1.bf16.msra.mxu0 %v794
      %819 = vmatprep.subr.bf16.mxu0 0
      %820 = vmatpush1.bf16.msra.mxu0 0
      %821 = vmatprep.subr.bf16.mxu0 0
      %822 = vmatpush1.bf16.msra.mxu0 0
      %823 = vmatprep.subr.bf16.mxu0 0
      %824 = vmatpush1.bf16.msra.mxu0 0
      %825 = vmatprep.subr.bf16.mxu0 0
      %826 = vmatpush1.bf16.msra.mxu0 0
      %827 = vmatprep.subr.bf16.mxu0 0
      %828 = vmatpush1.bf16.msra.mxu0 0
      %829 = vmatprep.subr.bf16.mxu0 0
      %830 = vmatpush1.bf16.msra.mxu0 0
      %831 = vmatprep.subr.bf16.mxu0 0
      %832 = vmatpush1.bf16.msra.mxu0 0
      %833 = vmatprep.subr.bf16.mxu0 0
      %834 = vmatpush1.bf16.msra.mxu0 0
      %835 = vmatprep.mubr.bf16.mxu0 0
      %836 = vmatmul.mubr.bf16.gmra.mrb[0].mxu0 %v689
      %v837 = vpop.f32.mrb[0].mxu0
      %v838 = vadd.f32 %v753, %v837
      %v839 = vpop.f32.mrb[0].mxu0
      %v840 = vpop.f32.mrb[0].mxu0
      %v841 = vadd.f32 %v753, %v840
      %v842 = vpop.f32.mrb[0].mxu0
      %843 = vmatprep.mubr.bf16.mxu0 0
      %844 = vmatmul.mubr.bf16.gmra.mrb[0].mxu0 %v690
      %v845 = vpop.f32.mrb[0].mxu0
      %v846 = vadd.f32 %v753, %v845
      %v847 = vpop.f32.mrb[0].mxu0
      %v848 = vpop.f32.mrb[0].mxu0
      %v849 = vadd.f32 %v753, %v848
      %v850 = vpop.f32.mrb[0].mxu0
      %851 = vmatprep.mubr.bf16.mxu0 0
      %852 = vmatmul.mubr.bf16.gmra.mrb[0].mxu0 %v691
      %v853 = vpop.f32.mrb[0].mxu0
      %v854 = vadd.f32 %v753, %v853
      %v855 = vpop.f32.mrb[0].mxu0
      %v856 = vpop.f32.mrb[0].mxu0
      %v857 = vadd.f32 %v753, %v856
      %v858 = vpop.f32.mrb[0].mxu0
      %859 = vmatprep.mubr.bf16.mxu0 0
      %860 = vmatmul.mubr.bf16.gmra.mrb[0].mxu0 %v692
      %v861 = vpop.f32.mrb[0].mxu0
      %v862 = vadd.f32 %v753, %v861
      %v863 = vpop.f32.mrb[0].mxu0
      %v864 = vpop.f32.mrb[0].mxu0
      %v865 = vadd.f32 %v753, %v864
      %v866 = vpop.f32.mrb[0].mxu0
      %867 = vmatprep.mubr.bf16.mxu0 0
      %868 = vmatmul.mubr.bf16.gmra.mrb[0].mxu0 %v693
      %v869 = vpop.f32.mrb[0].mxu0
      %v870 = vadd.f32 %v753, %v869
      %v871 = vpop.f32.mrb[0].mxu0
      %v872 = vpop.f32.mrb[0].mxu0
      %v873 = vadd.f32 %v753, %v872
      %v874 = vpop.f32.mrb[0].mxu0
      %875 = vmatprep.mubr.bf16.mxu0 0
      %876 = vmatmul.mubr.bf16.gmra.mrb[0].mxu0 %v694
      %v877 = vpop.f32.mrb[0].mxu0
      %v878 = vadd.f32 %v753, %v877
      %v879 = vpop.f32.mrb[0].mxu0
      %v880 = vpop.f32.mrb[0].mxu0
      %v881 = vadd.f32 %v753, %v880
      %v882 = vpop.f32.mrb[0].mxu0
      %883 = vmatprep.mubr.bf16.mxu0 0
      %884 = vmatmul.mubr.bf16.gmra.mrb[0].mxu0 %v695
      %v885 = vpop.f32.mrb[0].mxu0
      %v886 = vadd.f32 %v753, %v885
      %v887 = vpop.f32.mrb[0].mxu0
      %v888 = vpop.f32.mrb[0].mxu0
      %v889 = vadd.f32 %v753, %v888
      %v890 = vpop.f32.mrb[0].mxu0
      %891 = vmatprep.mubr.bf16.mxu0 0
      %892 = vmatmul.mubr.bf16.gmra.mrb[0].mxu0 %v696
      %v893 = vpop.f32.mrb[0].mxu0
      %v894 = vadd.f32 %v753, %v893
      %v895 = vpop.f32.mrb[0].mxu0
      %v896 = vpop.f32.mrb[0].mxu0
      %v897 = vadd.f32 %v753, %v896
      %v898 = vpop.f32.mrb[0].mxu0
      %899 = vdwg.mxu0
      %v900 = vmax.f32 %v838, 0.0
      %v901 = vmax.f32 %v841, 0.0
      %v902 = vmax.f32 %v846, 0.0
      %v903 = vmax.f32 %v849, 0.0
      %v904 = vmax.f32 %v854, 0.0
      %v905 = vmax.f32 %v857, 0.0
      %v906 = vmax.f32 %v862, 0.0
      %v907 = vmax.f32 %v865, 0.0
      %v908 = vmax.f32 %v870, 0.0
      %v909 = vmax.f32 %v873, 0.0
      %v910 = vmax.f32 %v878, 0.0
      %v911 = vmax.f32 %v881, 0.0
      %v912 = vmax.f32 %v886, 0.0
      %v913 = vmax.f32 %v889, 0.0
      %v914 = vmax.f32 %v894, 0.0
      %v915 = vmax.f32 %v897, 0.0
      %v916 = vmul.f32 %v900, %v900
      %v917 = vmul.f32 %v901, %v901
      %v918 = vmul.f32 %v902, %v902
      %v919 = vmul.f32 %v903, %v903
      %v920 = vmul.f32 %v904, %v904
      %v921 = vmul.f32 %v905, %v905
      %v922 = vmul.f32 %v906, %v906
      %v923 = vmul.f32 %v907, %v907
      %v924 = vmul.f32 %v908, %v908
      %v925 = vmul.f32 %v909, %v909
      %v926 = vmul.f32 %v910, %v910
      %v927 = vmul.f32 %v911, %v911
      %v928 = vmul.f32 %v912, %v912
      %v929 = vmul.f32 %v913, %v913
      %v930 = vmul.f32 %v914, %v914
      %v931 = vmul.f32 %v915, %v915
      %vm932 = vcmask 261120
      %v933 = vsel %vm932, %v916, 0.0
      %934 = vadd.xlane.f32.xlu0 %v933
      %v935 = vpop.xlane.xlu0 %934
      %v936 = vsel %vm932, %v917, 0.0
      %937 = vadd.xlane.f32.xlu0 %v936
      %v938 = vpop.xlane.xlu0 %937
      %v939 = vsel %vm932, %v918, 0.0
      %940 = vadd.xlane.f32.xlu0 %v939
      %v941 = vpop.xlane.xlu0 %940
      %v942 = vsel %vm932, %v919, 0.0
      %943 = vadd.xlane.f32.xlu0 %v942
      %v944 = vpop.xlane.xlu0 %943
      %v945 = vsel %vm932, %v920, 0.0
      %946 = vadd.xlane.f32.xlu0 %v945
      %v947 = vpop.xlane.xlu0 %946
      %v948 = vsel %vm932, %v921, 0.0
      %949 = vadd.xlane.f32.xlu0 %v948
      %v950 = vpop.xlane.xlu0 %949
      %v951 = vsel %vm932, %v922, 0.0
      %952 = vadd.xlane.f32.xlu0 %v951
      %v953 = vpop.xlane.xlu0 %952
      %v954 = vsel %vm932, %v923, 0.0
      %955 = vadd.xlane.f32.xlu0 %v954
      %v956 = vpop.xlane.xlu0 %955
      %v957 = vsel %vm932, %v924, 0.0
      %958 = vadd.xlane.f32.xlu0 %v957
      %v959 = vpop.xlane.xlu0 %958
      %v960 = vsel %vm932, %v925, 0.0
      %961 = vadd.xlane.f32.xlu0 %v960
      %v962 = vpop.xlane.xlu0 %961
      %v963 = vsel %vm932, %v926, 0.0
      %964 = vadd.xlane.f32.xlu0 %v963
      %v965 = vpop.xlane.xlu0 %964
      %v966 = vsel %vm932, %v927, 0.0
      %967 = vadd.xlane.f32.xlu0 %v966
      %v968 = vpop.xlane.xlu0 %967
      %v969 = vsel %vm932, %v928, 0.0
      %970 = vadd.xlane.f32.xlu0 %v969
      %v971 = vpop.xlane.xlu0 %970
      %v972 = vsel %vm932, %v929, 0.0
      %973 = vadd.xlane.f32.xlu0 %v972
      %v974 = vpop.xlane.xlu0 %973
      %v975 = vsel %vm932, %v930, 0.0
      %976 = vadd.xlane.f32.xlu0 %v975
      %v977 = vpop.xlane.xlu0 %976
      %v978 = vsel %vm932, %v931, 0.0
      %979 = vadd.xlane.f32.xlu0 %v978
      %v980 = vpop.xlane.xlu0 %979
      %v981 = vmax.f32 %v935, 1e-24
      %v982 = vmax.f32 %v938, 1e-24
      %v983 = vmax.f32 %v941, 1e-24
      %v984 = vmax.f32 %v944, 1e-24
      %v985 = vmax.f32 %v947, 1e-24
      %v986 = vmax.f32 %v950, 1e-24
      %v987 = vmax.f32 %v953, 1e-24
      %v988 = vmax.f32 %v956, 1e-24
      %v989 = vmax.f32 %v959, 1e-24
      %v990 = vmax.f32 %v962, 1e-24
      %v991 = vmax.f32 %v965, 1e-24
      %v992 = vmax.f32 %v968, 1e-24
      %v993 = vmax.f32 %v971, 1e-24
      %v994 = vmax.f32 %v974, 1e-24
      %v995 = vmax.f32 %v977, 1e-24
      %v996 = vmax.f32 %v980, 1e-24
      %v997 = vrsqrt.pop %v981
      %v998 = vrsqrt.pop %v982
      %v999 = vrsqrt.pop %v983
      %v1000 = vrsqrt.pop %v984
      %v1001 = vrsqrt.pop %v985
      %v1002 = vrsqrt.pop %v986
      %v1003 = vrsqrt.pop %v987
      %v1004 = vrsqrt.pop %v988
      %v1005 = vrsqrt.pop %v989
      %v1006 = vrsqrt.pop %v990
      %v1007 = vrsqrt.pop %v991
      %v1008 = vrsqrt.pop %v992
      %v1009 = vrsqrt.pop %v993
      %v1010 = vrsqrt.pop %v994
      %v1011 = vrsqrt.pop %v995
      %v1012 = vrsqrt.pop %v996
      %v1013 = vmul.f32 %v900, %v997
      %v1014 = vmul.f32 %v901, %v998
      %v1015 = vmul.f32 %v902, %v999
      %v1016 = vmul.f32 %v903, %v1000
      %v1017 = vmul.f32 %v904, %v1001
      %v1018 = vmul.f32 %v905, %v1002
      %v1019 = vmul.f32 %v906, %v1003
      %v1020 = vmul.f32 %v907, %v1004
      %v1021 = vmul.f32 %v908, %v1005
      %v1022 = vmul.f32 %v909, %v1006
      %v1023 = vmul.f32 %v910, %v1007
      %v1024 = vmul.f32 %v911, %v1008
      %v1025 = vmul.f32 %v912, %v1009
      %v1026 = vmul.f32 %v913, %v1010
      %v1027 = vmul.f32 %v914, %v1011
      %v1028 = vmul.f32 %v915, %v1012
      %v1030 = vsel %vm932, %v1013, 0
      %v1033 = vsel %vm932, %v1014, 0
      %v1036 = vsel %vm932, %v1015, 0
      %v1039 = vsel %vm932, %v1016, 0
      %v1042 = vsel %vm932, %v1017, 0
      %v1045 = vsel %vm932, %v1018, 0
      %v1048 = vsel %vm932, %v1019, 0
      %v1051 = vsel %vm932, %v1020, 0
      %v1054 = vsel %vm932, %v1021, 0
      %v1057 = vsel %vm932, %v1022, 0
      %v1060 = vsel %vm932, %v1023, 0
      %v1063 = vsel %vm932, %v1024, 0
      %v1066 = vsel %vm932, %v1025, 0
      %v1069 = vsel %vm932, %v1026, 0
      %v1072 = vsel %vm932, %v1027, 0
      %v1075 = vsel %vm932, %v1028, 0
      %1077 = vmatprep.subr.mxu0 0.0
      %1078 = vmatpush1.msra.mxu0 %v697
      %1079 = vmatprep.subr.mxu0 0.0
      %1080 = vmatpush1.msra.mxu0 %v698
      %1081 = vmatprep.subr.mxu0 0.0
      %1082 = vmatpush1.msra.mxu0 %v699
      %1083 = vmatprep.subr.mxu0 0.0
      %1084 = vmatpush1.msra.mxu0 %v700
      %1085 = vmatprep.subr.mxu0 0.0
      %1086 = vmatpush1.msra.mxu0 0.0
      %1087 = vmatprep.subr.mxu0 0.0
      %1088 = vmatpush1.msra.mxu0 0.0
      %1089 = vmatprep.subr.mxu0 0.0
      %1090 = vmatpush1.msra.mxu0 0.0
      %1091 = vmatprep.subr.mxu0 0.0
      %1092 = vmatpush1.msra.mxu0 0.0
      %1093 = vmatprep.subr.mxu0 0.0
      %1094 = vmatpush1.msra.mxu0 0.0
      %1095 = vmatprep.subr.mxu0 0.0
      %1096 = vmatpush1.msra.mxu0 0.0
      %1097 = vmatprep.subr.mxu0 0.0
      %1098 = vmatpush1.msra.mxu0 0.0
      %1099 = vmatprep.subr.mxu0 0.0
      %1100 = vmatpush1.msra.mxu0 0.0
      %1101 = vmatprep.subr.mxu0 0.0
      %1102 = vmatpush1.msra.mxu0 0.0
      %1103 = vmatprep.subr.mxu0 0.0
      %1104 = vmatpush1.msra.mxu0 0.0
      %1105 = vmatprep.subr.mxu0 0.0
      %1106 = vmatpush1.msra.mxu0 0.0
      %1107 = vmatprep.subr.mxu0 0.0
      %1108 = vmatpush1.msra.mxu0 0.0
      %1109 = vmatprep.subr.mxu0 0.0
      %1110 = vmatpush1.msra.mxu0 0.0
      %1111 = vmatprep.subr.mxu0 0.0
      %1112 = vmatpush1.msra.mxu0 0.0
      %1113 = vmatprep.subr.mxu0 0.0
      %1114 = vmatpush1.msra.mxu0 0.0
      %1115 = vmatprep.subr.mxu0 0.0
      %1116 = vmatpush1.msra.mxu0 0.0
      %1117 = vmatprep.subr.mxu0 0.0
      %1118 = vmatpush1.msra.mxu0 0.0
      %1119 = vmatprep.subr.mxu0 0.0
      %1120 = vmatpush1.msra.mxu0 0.0
      %1121 = vmatprep.subr.mxu0 0.0
      %1122 = vmatpush1.msra.mxu0 0.0
      %1123 = vmatprep.subr.mxu0 0.0
      %1124 = vmatpush1.msra.mxu0 0.0
      %1125 = vmatprep.subr.mxu0 0.0
      %1126 = vmatpush1.msra.mxu0 0.0
      %1127 = vmatprep.subr.mxu0 0.0
      %1128 = vmatpush1.msra.mxu0 0.0
      %1129 = vmatprep.subr.mxu0 0.0
      %1130 = vmatpush1.msra.mxu0 0.0
      %1131 = vmatprep.subr.mxu0 0.0
      %1132 = vmatpush1.msra.mxu0 0.0
      %1133 = vmatprep.subr.mxu0 0.0
      %1134 = vmatpush1.msra.mxu0 0.0
      %1135 = vmatprep.subr.mxu0 0.0
      %1136 = vmatpush1.msra.mxu0 0.0
      %1137 = vmatprep.subr.mxu0 0.0
      %1138 = vmatpush1.msra.mxu0 0.0
      %1139 = vmatprep.subr.mxu0 0.0
      %1140 = vmatpush1.msra.mxu0 0.0
      %1141 = vmatprep.mubr.f32.mxu0 0.0
      %1142 = vmatmul.mubr.f32.gmra.mrb[0].mxu0 %v1030
      %v1143 = vpop.f32.mrb[0].mxu0
      %v1144 = vadd.f32 %v722, %v1143
      %v1145 = vpop.f32.mrb[0].mxu0
      %1146 = vmatprep.mubr.f32.mxu0 0.0
      %1147 = vmatmul.mubr.f32.gmra.mrb[0].mxu0 %v1033
      %v1148 = vpop.f32.mrb[0].mxu0
      %v1149 = vadd.f32 %v722, %v1148
      %v1150 = vpop.f32.mrb[0].mxu0
      %1151 = vmatprep.mubr.f32.mxu0 0.0
      %1152 = vmatmul.mubr.f32.gmra.mrb[0].mxu0 %v1036
      %v1153 = vpop.f32.mrb[0].mxu0
      %v1154 = vadd.f32 %v722, %v1153
      %v1155 = vpop.f32.mrb[0].mxu0
      %1156 = vmatprep.mubr.f32.mxu0 0.0
      %1157 = vmatmul.mubr.f32.gmra.mrb[0].mxu0 %v1039
      %v1158 = vpop.f32.mrb[0].mxu0
      %v1159 = vadd.f32 %v722, %v1158
      %v1160 = vpop.f32.mrb[0].mxu0
      %1161 = vmatprep.mubr.f32.mxu0 0.0
      %1162 = vmatmul.mubr.f32.gmra.mrb[0].mxu0 %v1042
      %v1163 = vpop.f32.mrb[0].mxu0
      %v1164 = vadd.f32 %v722, %v1163
      %v1165 = vpop.f32.mrb[0].mxu0
      %1166 = vmatprep.mubr.f32.mxu0 0.0
      %1167 = vmatmul.mubr.f32.gmra.mrb[0].mxu0 %v1045
      %v1168 = vpop.f32.mrb[0].mxu0
      %v1169 = vadd.f32 %v722, %v1168
      %v1170 = vpop.f32.mrb[0].mxu0
      %1171 = vmatprep.mubr.f32.mxu0 0.0
      %1172 = vmatmul.mubr.f32.gmra.mrb[0].mxu0 %v1048
      %v1173 = vpop.f32.mrb[0].mxu0
      %v1174 = vadd.f32 %v722, %v1173
      %v1175 = vpop.f32.mrb[0].mxu0
      %1176 = vmatprep.mubr.f32.mxu0 0.0
      %1177 = vmatmul.mubr.f32.gmra.mrb[0].mxu0 %v1051
      %v1178 = vpop.f32.mrb[0].mxu0
      %v1179 = vadd.f32 %v722, %v1178
      %v1180 = vpop.f32.mrb[0].mxu0
      %1181 = vmatprep.mubr.f32.mxu0 0.0
      %1182 = vmatmul.mubr.f32.gmra.mrb[0].mxu0 %v1054
      %v1183 = vpop.f32.mrb[0].mxu0
      %v1184 = vadd.f32 %v722, %v1183
      %v1185 = vpop.f32.mrb[0].mxu0
      %1186 = vmatprep.mubr.f32.mxu0 0.0
      %1187 = vmatmul.mubr.f32.gmra.mrb[0].mxu0 %v1057
      %v1188 = vpop.f32.mrb[0].mxu0
      %v1189 = vadd.f32 %v722, %v1188
      %v1190 = vpop.f32.mrb[0].mxu0
      %1191 = vmatprep.mubr.f32.mxu0 0.0
      %1192 = vmatmul.mubr.f32.gmra.mrb[0].mxu0 %v1060
      %v1193 = vpop.f32.mrb[0].mxu0
      %v1194 = vadd.f32 %v722, %v1193
      %v1195 = vpop.f32.mrb[0].mxu0
      %1196 = vmatprep.mubr.f32.mxu0 0.0
      %1197 = vmatmul.mubr.f32.gmra.mrb[0].mxu0 %v1063
      %v1198 = vpop.f32.mrb[0].mxu0
      %v1199 = vadd.f32 %v722, %v1198
      %v1200 = vpop.f32.mrb[0].mxu0
      %1201 = vmatprep.mubr.f32.mxu0 0.0
      %1202 = vmatmul.mubr.f32.gmra.mrb[0].mxu0 %v1066
      %v1203 = vpop.f32.mrb[0].mxu0
      %v1204 = vadd.f32 %v722, %v1203
      %v1205 = vpop.f32.mrb[0].mxu0
      %1206 = vmatprep.mubr.f32.mxu0 0.0
      %1207 = vmatmul.mubr.f32.gmra.mrb[0].mxu0 %v1069
      %v1208 = vpop.f32.mrb[0].mxu0
      %v1209 = vadd.f32 %v722, %v1208
      %v1210 = vpop.f32.mrb[0].mxu0
      %1211 = vmatprep.mubr.f32.mxu0 0.0
      %1212 = vmatmul.mubr.f32.gmra.mrb[0].mxu0 %v1072
      %v1213 = vpop.f32.mrb[0].mxu0
      %v1214 = vadd.f32 %v722, %v1213
      %v1215 = vpop.f32.mrb[0].mxu0
      %1216 = vmatprep.mubr.f32.mxu0 0.0
      %1217 = vmatmul.mubr.f32.gmra.mrb[0].mxu0 %v1075
      %v1218 = vpop.f32.mrb[0].mxu0
      %v1219 = vadd.f32 %v722, %v1218
      %v1220 = vpop.f32.mrb[0].mxu0
      %1221 = vdwg.mxu0
      %v1222 = vmax.f32 %v1144, 0.0
      %v1223 = vmax.f32 %v1149, 0.0
      %v1224 = vmax.f32 %v1154, 0.0
      %v1225 = vmax.f32 %v1159, 0.0
      %v1226 = vmax.f32 %v1164, 0.0
      %v1227 = vmax.f32 %v1169, 0.0
      %v1228 = vmax.f32 %v1174, 0.0
      %v1229 = vmax.f32 %v1179, 0.0
      %v1230 = vmax.f32 %v1184, 0.0
      %v1231 = vmax.f32 %v1189, 0.0
      %v1232 = vmax.f32 %v1194, 0.0
      %v1233 = vmax.f32 %v1199, 0.0
      %v1234 = vmax.f32 %v1204, 0.0
      %v1235 = vmax.f32 %v1209, 0.0
      %v1236 = vmax.f32 %v1214, 0.0
      %v1237 = vmax.f32 %v1219, 0.0
      %vm1238 = vcmask 523264
      %v1240 = vsel %vm1238, %v1222, 0
      %v1243 = vsel %vm1238, %v1223, 0
      %v1246 = vsel %vm1238, %v1224, 0
      %v1249 = vsel %vm1238, %v1225, 0
      %v1252 = vsel %vm1238, %v1226, 0
      %v1255 = vsel %vm1238, %v1227, 0
      %v1258 = vsel %vm1238, %v1228, 0
      %v1261 = vsel %vm1238, %v1229, 0
      %v1264 = vsel %vm1238, %v1230, 0
      %v1267 = vsel %vm1238, %v1231, 0
      %v1270 = vsel %vm1238, %v1232, 0
      %v1273 = vsel %vm1238, %v1233, 0
      %v1276 = vsel %vm1238, %v1234, 0
      %v1279 = vsel %vm1238, %v1235, 0
      %v1282 = vsel %vm1238, %v1236, 0
      %v1285 = vsel %vm1238, %v1237, 0
      %1287 = vmatprep.subr.mxu0 0.0
      %1288 = vmatpush1.msra.mxu0 %v701
      %1289 = vmatprep.subr.mxu0 0.0
      %1290 = vmatpush1.msra.mxu0 %v702
      %1291 = vmatprep.subr.mxu0 0.0
      %1292 = vmatpush1.msra.mxu0 %v703
      %1293 = vmatprep.subr.mxu0 0.0
      %1294 = vmatpush1.msra.mxu0 %v704
      %1295 = vmatprep.subr.mxu0 0.0
      %1296 = vmatpush1.msra.mxu0 %v705
      %1297 = vmatprep.subr.mxu0 0.0
      %1298 = vmatpush1.msra.mxu0 %v706
      %1299 = vmatprep.subr.mxu0 0.0
      %1300 = vmatpush1.msra.mxu0 %v707
      %1301 = vmatprep.subr.mxu0 0.0
      %1302 = vmatpush1.msra.mxu0 %v708
      %1303 = vmatprep.subr.mxu0 0.0
      %1304 = vmatpush1.msra.mxu0 0.0
      %1305 = vmatprep.subr.mxu0 0.0
      %1306 = vmatpush1.msra.mxu0 0.0
      %1307 = vmatprep.subr.mxu0 0.0
      %1308 = vmatpush1.msra.mxu0 0.0
      %1309 = vmatprep.subr.mxu0 0.0
      %1310 = vmatpush1.msra.mxu0 0.0
      %1311 = vmatprep.subr.mxu0 0.0
      %1312 = vmatpush1.msra.mxu0 0.0
      %1313 = vmatprep.subr.mxu0 0.0
      %1314 = vmatpush1.msra.mxu0 0.0
      %1315 = vmatprep.subr.mxu0 0.0
      %1316 = vmatpush1.msra.mxu0 0.0
      %1317 = vmatprep.subr.mxu0 0.0
      %1318 = vmatpush1.msra.mxu0 0.0
      %1319 = vmatprep.subr.mxu0 0.0
      %1320 = vmatpush1.msra.mxu0 0.0
      %1321 = vmatprep.subr.mxu0 0.0
      %1322 = vmatpush1.msra.mxu0 0.0
      %1323 = vmatprep.subr.mxu0 0.0
      %1324 = vmatpush1.msra.mxu0 0.0
      %1325 = vmatprep.subr.mxu0 0.0
      %1326 = vmatpush1.msra.mxu0 0.0
      %1327 = vmatprep.subr.mxu0 0.0
      %1328 = vmatpush1.msra.mxu0 0.0
      %1329 = vmatprep.subr.mxu0 0.0
      %1330 = vmatpush1.msra.mxu0 0.0
      %1331 = vmatprep.subr.mxu0 0.0
      %1332 = vmatpush1.msra.mxu0 0.0
      %1333 = vmatprep.subr.mxu0 0.0
      %1334 = vmatpush1.msra.mxu0 0.0
      %1335 = vmatprep.subr.mxu0 0.0
      %1336 = vmatpush1.msra.mxu0 0.0
      %1337 = vmatprep.subr.mxu0 0.0
      %1338 = vmatpush1.msra.mxu0 0.0
      %1339 = vmatprep.subr.mxu0 0.0
      %1340 = vmatpush1.msra.mxu0 0.0
      %1341 = vmatprep.subr.mxu0 0.0
      %1342 = vmatpush1.msra.mxu0 0.0
      %1343 = vmatprep.subr.mxu0 0.0
      %1344 = vmatpush1.msra.mxu0 0.0
      %1345 = vmatprep.subr.mxu0 0.0
      %1346 = vmatpush1.msra.mxu0 0.0
      %1347 = vmatprep.subr.mxu0 0.0
      %1348 = vmatpush1.msra.mxu0 0.0
      %1349 = vmatprep.subr.mxu0 0.0
      %1350 = vmatpush1.msra.mxu0 0.0
      %1351 = vmatprep.mubr.f32.mxu0 0.0
      %1352 = vmatmul.mubr.f32.gmra.mrb[0].mxu0 %v1240
      %v1353 = vpop.f32.mrb[0].mxu0
      %v1354 = vadd.f32 %v729, %v1353
      %v1355 = vpop.f32.mrb[0].mxu0
      %1356 = vmatprep.mubr.f32.mxu0 0.0
      %1357 = vmatmul.mubr.f32.gmra.mrb[0].mxu0 %v1243
      %v1358 = vpop.f32.mrb[0].mxu0
      %v1359 = vadd.f32 %v729, %v1358
      %v1360 = vpop.f32.mrb[0].mxu0
      %1361 = vmatprep.mubr.f32.mxu0 0.0
      %1362 = vmatmul.mubr.f32.gmra.mrb[0].mxu0 %v1246
      %v1363 = vpop.f32.mrb[0].mxu0
      %v1364 = vadd.f32 %v729, %v1363
      %v1365 = vpop.f32.mrb[0].mxu0
      %1366 = vmatprep.mubr.f32.mxu0 0.0
      %1367 = vmatmul.mubr.f32.gmra.mrb[0].mxu0 %v1249
      %v1368 = vpop.f32.mrb[0].mxu0
      %v1369 = vadd.f32 %v729, %v1368
      %v1370 = vpop.f32.mrb[0].mxu0
      %1371 = vmatprep.mubr.f32.mxu0 0.0
      %1372 = vmatmul.mubr.f32.gmra.mrb[0].mxu0 %v1252
      %v1373 = vpop.f32.mrb[0].mxu0
      %v1374 = vadd.f32 %v729, %v1373
      %v1375 = vpop.f32.mrb[0].mxu0
      %1376 = vmatprep.mubr.f32.mxu0 0.0
      %1377 = vmatmul.mubr.f32.gmra.mrb[0].mxu0 %v1255
      %v1378 = vpop.f32.mrb[0].mxu0
      %v1379 = vadd.f32 %v729, %v1378
      %v1380 = vpop.f32.mrb[0].mxu0
      %1381 = vmatprep.mubr.f32.mxu0 0.0
      %1382 = vmatmul.mubr.f32.gmra.mrb[0].mxu0 %v1258
      %v1383 = vpop.f32.mrb[0].mxu0
      %v1384 = vadd.f32 %v729, %v1383
      %v1385 = vpop.f32.mrb[0].mxu0
      %1386 = vmatprep.mubr.f32.mxu0 0.0
      %1387 = vmatmul.mubr.f32.gmra.mrb[0].mxu0 %v1261
      %v1388 = vpop.f32.mrb[0].mxu0
      %v1389 = vadd.f32 %v729, %v1388
      %v1390 = vpop.f32.mrb[0].mxu0
      %1391 = vmatprep.mubr.f32.mxu0 0.0
      %1392 = vmatmul.mubr.f32.gmra.mrb[0].mxu0 %v1264
      %v1393 = vpop.f32.mrb[0].mxu0
      %v1394 = vadd.f32 %v729, %v1393
      %v1395 = vpop.f32.mrb[0].mxu0
      %1396 = vmatprep.mubr.f32.mxu0 0.0
      %1397 = vmatmul.mubr.f32.gmra.mrb[0].mxu0 %v1267
      %v1398 = vpop.f32.mrb[0].mxu0
      %v1399 = vadd.f32 %v729, %v1398
      %v1400 = vpop.f32.mrb[0].mxu0
      %1401 = vmatprep.mubr.f32.mxu0 0.0
      %1402 = vmatmul.mubr.f32.gmra.mrb[0].mxu0 %v1270
      %v1403 = vpop.f32.mrb[0].mxu0
      %v1404 = vadd.f32 %v729, %v1403
      %v1405 = vpop.f32.mrb[0].mxu0
      %1406 = vmatprep.mubr.f32.mxu0 0.0
      %1407 = vmatmul.mubr.f32.gmra.mrb[0].mxu0 %v1273
      %v1408 = vpop.f32.mrb[0].mxu0
      %v1409 = vadd.f32 %v729, %v1408
      %v1410 = vpop.f32.mrb[0].mxu0
      %1411 = vmatprep.mubr.f32.mxu0 0.0
      %1412 = vmatmul.mubr.f32.gmra.mrb[0].mxu0 %v1276
      %v1413 = vpop.f32.mrb[0].mxu0
      %v1414 = vadd.f32 %v729, %v1413
      %v1415 = vpop.f32.mrb[0].mxu0
      %1416 = vmatprep.mubr.f32.mxu0 0.0
      %1417 = vmatmul.mubr.f32.gmra.mrb[0].mxu0 %v1279
      %v1418 = vpop.f32.mrb[0].mxu0
      %v1419 = vadd.f32 %v729, %v1418
      %v1420 = vpop.f32.mrb[0].mxu0
      %1421 = vmatprep.mubr.f32.mxu0 0.0
      %1422 = vmatmul.mubr.f32.gmra.mrb[0].mxu0 %v1282
      %v1423 = vpop.f32.mrb[0].mxu0
      %v1424 = vadd.f32 %v729, %v1423
      %v1425 = vpop.f32.mrb[0].mxu0
      %1426 = vmatprep.mubr.f32.mxu0 0.0
      %1427 = vmatmul.mubr.f32.gmra.mrb[0].mxu0 %v1285
      %v1428 = vpop.f32.mrb[0].mxu0
      %v1429 = vadd.f32 %v729, %v1428
      %v1430 = vpop.f32.mrb[0].mxu0
      %1431 = vdwg.mxu0
      %v1432 = vmax.f32 %v1354, 0.0
      %v1433 = vmax.f32 %v1359, 0.0
      %v1434 = vmax.f32 %v1364, 0.0
      %v1435 = vmax.f32 %v1369, 0.0
      %v1436 = vmax.f32 %v1374, 0.0
      %v1437 = vmax.f32 %v1379, 0.0
      %v1438 = vmax.f32 %v1384, 0.0
      %v1439 = vmax.f32 %v1389, 0.0
      %v1440 = vmax.f32 %v1394, 0.0
      %v1441 = vmax.f32 %v1399, 0.0
      %v1442 = vmax.f32 %v1404, 0.0
      %v1443 = vmax.f32 %v1409, 0.0
      %v1444 = vmax.f32 %v1414, 0.0
      %v1445 = vmax.f32 %v1419, 0.0
      %v1446 = vmax.f32 %v1424, 0.0
      %v1447 = vmax.f32 %v1429, 0.0
      %v1449 = vlaneseq
      %v1450 = vshrl.u32 %v1449, 7
      %v1451 = vsub.s32 0, %v1450
      %v1452 = vrot.slane %v731, %v1451
      %v1455 = vsel %vm1238, %v1432, 0
      %v1458 = vsel %vm1238, %v1433, 0
      %v1461 = vsel %vm1238, %v1434, 0
      %v1464 = vsel %vm1238, %v1435, 0
      %v1467 = vsel %vm1238, %v1436, 0
      %v1470 = vsel %vm1238, %v1437, 0
      %v1473 = vsel %vm1238, %v1438, 0
      %v1476 = vsel %vm1238, %v1439, 0
      %v1479 = vsel %vm1238, %v1440, 0
      %v1482 = vsel %vm1238, %v1441, 0
      %v1485 = vsel %vm1238, %v1442, 0
      %v1488 = vsel %vm1238, %v1443, 0
      %v1491 = vsel %vm1238, %v1444, 0
      %v1494 = vsel %vm1238, %v1445, 0
      %v1497 = vsel %vm1238, %v1446, 0
      %v1500 = vsel %vm1238, %v1447, 0
      %1502 = vmatprep.subr.mxu0 0.0
      %1503 = vmatpush1.msra.mxu0 %v709
      %1504 = vmatprep.subr.mxu0 0.0
      %1505 = vmatpush1.msra.mxu0 %v710
      %1506 = vmatprep.subr.mxu0 0.0
      %1507 = vmatpush1.msra.mxu0 %v711
      %1508 = vmatprep.subr.mxu0 0.0
      %1509 = vmatpush1.msra.mxu0 %v712
      %1510 = vmatprep.subr.mxu0 0.0
      %1511 = vmatpush1.msra.mxu0 %v713
      %1512 = vmatprep.subr.mxu0 0.0
      %1513 = vmatpush1.msra.mxu0 %v714
      %1514 = vmatprep.subr.mxu0 0.0
      %1515 = vmatpush1.msra.mxu0 %v715
      %1516 = vmatprep.subr.mxu0 0.0
      %1517 = vmatpush1.msra.mxu0 %v716
      %1518 = vmatprep.subr.mxu0 0.0
      %1519 = vmatpush1.msra.mxu0 0.0
      %1520 = vmatprep.subr.mxu0 0.0
      %1521 = vmatpush1.msra.mxu0 0.0
      %1522 = vmatprep.subr.mxu0 0.0
      %1523 = vmatpush1.msra.mxu0 0.0
      %1524 = vmatprep.subr.mxu0 0.0
      %1525 = vmatpush1.msra.mxu0 0.0
      %1526 = vmatprep.subr.mxu0 0.0
      %1527 = vmatpush1.msra.mxu0 0.0
      %1528 = vmatprep.subr.mxu0 0.0
      %1529 = vmatpush1.msra.mxu0 0.0
      %1530 = vmatprep.subr.mxu0 0.0
      %1531 = vmatpush1.msra.mxu0 0.0
      %1532 = vmatprep.subr.mxu0 0.0
      %1533 = vmatpush1.msra.mxu0 0.0
      %1534 = vmatprep.subr.mxu0 0.0
      %1535 = vmatpush1.msra.mxu0 0.0
      %1536 = vmatprep.subr.mxu0 0.0
      %1537 = vmatpush1.msra.mxu0 0.0
      %1538 = vmatprep.subr.mxu0 0.0
      %1539 = vmatpush1.msra.mxu0 0.0
      %1540 = vmatprep.subr.mxu0 0.0
      %1541 = vmatpush1.msra.mxu0 0.0
      %1542 = vmatprep.subr.mxu0 0.0
      %1543 = vmatpush1.msra.mxu0 0.0
      %1544 = vmatprep.subr.mxu0 0.0
      %1545 = vmatpush1.msra.mxu0 0.0
      %1546 = vmatprep.subr.mxu0 0.0
      %1547 = vmatpush1.msra.mxu0 0.0
      %1548 = vmatprep.subr.mxu0 0.0
      %1549 = vmatpush1.msra.mxu0 0.0
      %1550 = vmatprep.subr.mxu0 0.0
      %1551 = vmatpush1.msra.mxu0 0.0
      %1552 = vmatprep.subr.mxu0 0.0
      %1553 = vmatpush1.msra.mxu0 0.0
      %1554 = vmatprep.subr.mxu0 0.0
      %1555 = vmatpush1.msra.mxu0 0.0
      %1556 = vmatprep.subr.mxu0 0.0
      %1557 = vmatpush1.msra.mxu0 0.0
      %1558 = vmatprep.subr.mxu0 0.0
      %1559 = vmatpush1.msra.mxu0 0.0
      %1560 = vmatprep.subr.mxu0 0.0
      %1561 = vmatpush1.msra.mxu0 0.0
      %1562 = vmatprep.subr.mxu0 0.0
      %1563 = vmatpush1.msra.mxu0 0.0
      %1564 = vmatprep.subr.mxu0 0.0
      %1565 = vmatpush1.msra.mxu0 0.0
      %1566 = vmatprep.mubr.f32.mxu0 0.0
      %1567 = vmatmul.mubr.f32.gmra.mrb[0].mxu0 %v1455
      %v1568 = vpop.f32.mrb[0].mxu0
      %v1569 = vadd.f32 %v1452, %v1568
      %v1570 = vpop.f32.mrb[0].mxu0
      %1571 = vmatprep.mubr.f32.mxu0 0.0
      %1572 = vmatmul.mubr.f32.gmra.mrb[0].mxu0 %v1458
      %v1573 = vpop.f32.mrb[0].mxu0
      %v1574 = vadd.f32 %v1452, %v1573
      %v1575 = vpop.f32.mrb[0].mxu0
      %1576 = vmatprep.mubr.f32.mxu0 0.0
      %1577 = vmatmul.mubr.f32.gmra.mrb[0].mxu0 %v1461
      %v1578 = vpop.f32.mrb[0].mxu0
      %v1579 = vadd.f32 %v1452, %v1578
      %v1580 = vpop.f32.mrb[0].mxu0
      %1581 = vmatprep.mubr.f32.mxu0 0.0
      %1582 = vmatmul.mubr.f32.gmra.mrb[0].mxu0 %v1464
      %v1583 = vpop.f32.mrb[0].mxu0
      %v1584 = vadd.f32 %v1452, %v1583
      %v1585 = vpop.f32.mrb[0].mxu0
      %1586 = vmatprep.mubr.f32.mxu0 0.0
      %1587 = vmatmul.mubr.f32.gmra.mrb[0].mxu0 %v1467
      %v1588 = vpop.f32.mrb[0].mxu0
      %v1589 = vadd.f32 %v1452, %v1588
      %v1590 = vpop.f32.mrb[0].mxu0
      %1591 = vmatprep.mubr.f32.mxu0 0.0
      %1592 = vmatmul.mubr.f32.gmra.mrb[0].mxu0 %v1470
      %v1593 = vpop.f32.mrb[0].mxu0
      %v1594 = vadd.f32 %v1452, %v1593
      %v1595 = vpop.f32.mrb[0].mxu0
      %1596 = vmatprep.mubr.f32.mxu0 0.0
      %1597 = vmatmul.mubr.f32.gmra.mrb[0].mxu0 %v1473
      %v1598 = vpop.f32.mrb[0].mxu0
      %v1599 = vadd.f32 %v1452, %v1598
      %v1600 = vpop.f32.mrb[0].mxu0
      %1601 = vmatprep.mubr.f32.mxu0 0.0
      %1602 = vmatmul.mubr.f32.gmra.mrb[0].mxu0 %v1476
      %v1603 = vpop.f32.mrb[0].mxu0
      %v1604 = vadd.f32 %v1452, %v1603
      %v1605 = vpop.f32.mrb[0].mxu0
      %1606 = vmatprep.mubr.f32.mxu0 0.0
      %1607 = vmatmul.mubr.f32.gmra.mrb[0].mxu0 %v1479
      %v1608 = vpop.f32.mrb[0].mxu0
      %v1609 = vadd.f32 %v1452, %v1608
      %v1610 = vpop.f32.mrb[0].mxu0
      %1611 = vmatprep.mubr.f32.mxu0 0.0
      %1612 = vmatmul.mubr.f32.gmra.mrb[0].mxu0 %v1482
      %v1613 = vpop.f32.mrb[0].mxu0
      %v1614 = vadd.f32 %v1452, %v1613
      %v1615 = vpop.f32.mrb[0].mxu0
      %1616 = vmatprep.mubr.f32.mxu0 0.0
      %1617 = vmatmul.mubr.f32.gmra.mrb[0].mxu0 %v1485
      %v1618 = vpop.f32.mrb[0].mxu0
      %v1619 = vadd.f32 %v1452, %v1618
      %v1620 = vpop.f32.mrb[0].mxu0
      %1621 = vmatprep.mubr.f32.mxu0 0.0
      %1622 = vmatmul.mubr.f32.gmra.mrb[0].mxu0 %v1488
      %v1623 = vpop.f32.mrb[0].mxu0
      %v1624 = vadd.f32 %v1452, %v1623
      %v1625 = vpop.f32.mrb[0].mxu0
      %1626 = vmatprep.mubr.f32.mxu0 0.0
      %1627 = vmatmul.mubr.f32.gmra.mrb[0].mxu0 %v1491
      %v1628 = vpop.f32.mrb[0].mxu0
      %v1629 = vadd.f32 %v1452, %v1628
      %v1630 = vpop.f32.mrb[0].mxu0
      %1631 = vmatprep.mubr.f32.mxu0 0.0
      %1632 = vmatmul.mubr.f32.gmra.mrb[0].mxu0 %v1494
      %v1633 = vpop.f32.mrb[0].mxu0
      %v1634 = vadd.f32 %v1452, %v1633
      %v1635 = vpop.f32.mrb[0].mxu0
      %1636 = vmatprep.mubr.f32.mxu0 0.0
      %1637 = vmatmul.mubr.f32.gmra.mrb[0].mxu0 %v1497
      %v1638 = vpop.f32.mrb[0].mxu0
      %v1639 = vadd.f32 %v1452, %v1638
      %v1640 = vpop.f32.mrb[0].mxu0
      %1641 = vmatprep.mubr.f32.mxu0 0.0
      %1642 = vmatmul.mubr.f32.gmra.mrb[0].mxu0 %v1500
      %v1643 = vpop.f32.mrb[0].mxu0
      %v1644 = vadd.f32 %v1452, %v1643
      %v1645 = vpop.f32.mrb[0].mxu0
      %1646 = vdwg.mxu0
      %v1647 = vld [vmem:[%s4] sm:$0xff]
      %v1648 = vld [vmem:[%s4 + $0x8] sm:$0xff]
      %v1649 = vld [vmem:[%s4 + $0x10] sm:$0xff]
      %v1650 = vld [vmem:[%s4 + $0x18] sm:$0xff]
      %v1651 = vld [vmem:[%s5] sm:$0x1]
      %1652 = vmatprep.subr.mxu0 0.0
      %1653 = vmatpush1.msra.mxu0 %v1647
      %1654 = vmatprep.subr.mxu0 0.0
      %1655 = vmatpush1.msra.mxu0 %v1648
      %1656 = vmatprep.subr.mxu0 0.0
      %1657 = vmatpush1.msra.mxu0 %v1649
      %1658 = vmatprep.subr.mxu0 0.0
      %1659 = vmatpush1.msra.mxu0 %v1650
      %1660 = vmatprep.subr.mxu0 0.0
      %1661 = vmatpush1.msra.mxu0 0.0
      %1662 = vmatprep.subr.mxu0 0.0
      %1663 = vmatpush1.msra.mxu0 0.0
      %1664 = vmatprep.subr.mxu0 0.0
      %1665 = vmatpush1.msra.mxu0 0.0
      %1666 = vmatprep.subr.mxu0 0.0
      %1667 = vmatpush1.msra.mxu0 0.0
      %1668 = vmatprep.subr.mxu0 0.0
      %1669 = vmatpush1.msra.mxu0 0.0
      %1670 = vmatprep.subr.mxu0 0.0
      %1671 = vmatpush1.msra.mxu0 0.0
      %1672 = vmatprep.subr.mxu0 0.0
      %1673 = vmatpush1.msra.mxu0 0.0
      %1674 = vmatprep.subr.mxu0 0.0
      %1675 = vmatpush1.msra.mxu0 0.0
      %1676 = vmatprep.subr.mxu0 0.0
      %1677 = vmatpush1.msra.mxu0 0.0
      %1678 = vmatprep.subr.mxu0 0.0
      %1679 = vmatpush1.msra.mxu0 0.0
      %1680 = vmatprep.subr.mxu0 0.0
      %1681 = vmatpush1.msra.mxu0 0.0
      %1682 = vmatprep.subr.mxu0 0.0
      %1683 = vmatpush1.msra.mxu0 0.0
      %1684 = vmatprep.subr.mxu0 0.0
      %1685 = vmatpush1.msra.mxu0 0.0
      %1686 = vmatprep.subr.mxu0 0.0
      %1687 = vmatpush1.msra.mxu0 0.0
      %1688 = vmatprep.subr.mxu0 0.0
      %1689 = vmatpush1.msra.mxu0 0.0
      %1690 = vmatprep.subr.mxu0 0.0
      %1691 = vmatpush1.msra.mxu0 0.0
      %1692 = vmatprep.subr.mxu0 0.0
      %1693 = vmatpush1.msra.mxu0 0.0
      %1694 = vmatprep.subr.mxu0 0.0
      %1695 = vmatpush1.msra.mxu0 0.0
      %1696 = vmatprep.subr.mxu0 0.0
      %1697 = vmatpush1.msra.mxu0 0.0
      %1698 = vmatprep.subr.mxu0 0.0
      %1699 = vmatpush1.msra.mxu0 0.0
      %1700 = vmatprep.subr.mxu0 0.0
      %1701 = vmatpush1.msra.mxu0 0.0
      %1702 = vmatprep.subr.mxu0 0.0
      %1703 = vmatpush1.msra.mxu0 0.0
      %1704 = vmatprep.subr.mxu0 0.0
      %1705 = vmatpush1.msra.mxu0 0.0
      %1706 = vmatprep.subr.mxu0 0.0
      %1707 = vmatpush1.msra.mxu0 0.0
      %1708 = vmatprep.subr.mxu0 0.0
      %1709 = vmatpush1.msra.mxu0 0.0
      %1710 = vmatprep.subr.mxu0 0.0
      %1711 = vmatpush1.msra.mxu0 0.0
      %1712 = vmatprep.subr.mxu0 0.0
      %1713 = vmatpush1.msra.mxu0 0.0
      %1714 = vmatprep.subr.mxu0 0.0
      %1715 = vmatpush1.msra.mxu0 0.0
      %1716 = vmatprep.mubr.f32.mxu0 0.0
      %1717 = vmatmul.mubr.f32.gmra.mrb[0].mxu0 %v1030
      %v1718 = vpop.f32.mrb[0].mxu0
      %v1719 = vadd.f32 0.0, %v1718
      %v1720 = vpop.f32.mrb[0].mxu0
      %1721 = vmatprep.mubr.f32.mxu0 0.0
      %1722 = vmatmul.mubr.f32.gmra.mrb[0].mxu0 %v1033
      %v1723 = vpop.f32.mrb[0].mxu0
      %v1724 = vadd.f32 0.0, %v1723
      %v1725 = vpop.f32.mrb[0].mxu0
      %1726 = vmatprep.mubr.f32.mxu0 0.0
      %1727 = vmatmul.mubr.f32.gmra.mrb[0].mxu0 %v1036
      %v1728 = vpop.f32.mrb[0].mxu0
      %v1729 = vadd.f32 0.0, %v1728
      %v1730 = vpop.f32.mrb[0].mxu0
      %1731 = vmatprep.mubr.f32.mxu0 0.0
      %1732 = vmatmul.mubr.f32.gmra.mrb[0].mxu0 %v1039
      %v1733 = vpop.f32.mrb[0].mxu0
      %v1734 = vadd.f32 0.0, %v1733
      %v1735 = vpop.f32.mrb[0].mxu0
      %1736 = vmatprep.mubr.f32.mxu0 0.0
      %1737 = vmatmul.mubr.f32.gmra.mrb[0].mxu0 %v1042
      %v1738 = vpop.f32.mrb[0].mxu0
      %v1739 = vadd.f32 0.0, %v1738
      %v1740 = vpop.f32.mrb[0].mxu0
      %1741 = vmatprep.mubr.f32.mxu0 0.0
      %1742 = vmatmul.mubr.f32.gmra.mrb[0].mxu0 %v1045
      %v1743 = vpop.f32.mrb[0].mxu0
      %v1744 = vadd.f32 0.0, %v1743
      %v1745 = vpop.f32.mrb[0].mxu0
      %1746 = vmatprep.mubr.f32.mxu0 0.0
      %1747 = vmatmul.mubr.f32.gmra.mrb[0].mxu0 %v1048
      %v1748 = vpop.f32.mrb[0].mxu0
      %v1749 = vadd.f32 0.0, %v1748
      %v1750 = vpop.f32.mrb[0].mxu0
      %1751 = vmatprep.mubr.f32.mxu0 0.0
      %1752 = vmatmul.mubr.f32.gmra.mrb[0].mxu0 %v1051
      %v1753 = vpop.f32.mrb[0].mxu0
      %v1754 = vadd.f32 0.0, %v1753
      %v1755 = vpop.f32.mrb[0].mxu0
      %1756 = vmatprep.mubr.f32.mxu0 0.0
      %1757 = vmatmul.mubr.f32.gmra.mrb[0].mxu0 %v1054
      %v1758 = vpop.f32.mrb[0].mxu0
      %v1759 = vadd.f32 0.0, %v1758
      %v1760 = vpop.f32.mrb[0].mxu0
      %1761 = vmatprep.mubr.f32.mxu0 0.0
      %1762 = vmatmul.mubr.f32.gmra.mrb[0].mxu0 %v1057
      %v1763 = vpop.f32.mrb[0].mxu0
      %v1764 = vadd.f32 0.0, %v1763
      %v1765 = vpop.f32.mrb[0].mxu0
      %1766 = vmatprep.mubr.f32.mxu0 0.0
      %1767 = vmatmul.mubr.f32.gmra.mrb[0].mxu0 %v1060
      %v1768 = vpop.f32.mrb[0].mxu0
      %v1769 = vadd.f32 0.0, %v1768
      %v1770 = vpop.f32.mrb[0].mxu0
      %1771 = vmatprep.mubr.f32.mxu0 0.0
      %1772 = vmatmul.mubr.f32.gmra.mrb[0].mxu0 %v1063
      %v1773 = vpop.f32.mrb[0].mxu0
      %v1774 = vadd.f32 0.0, %v1773
      %v1775 = vpop.f32.mrb[0].mxu0
      %1776 = vmatprep.mubr.f32.mxu0 0.0
      %1777 = vmatmul.mubr.f32.gmra.mrb[0].mxu0 %v1066
      %v1778 = vpop.f32.mrb[0].mxu0
      %v1779 = vadd.f32 0.0, %v1778
      %v1780 = vpop.f32.mrb[0].mxu0
      %1781 = vmatprep.mubr.f32.mxu0 0.0
      %1782 = vmatmul.mubr.f32.gmra.mrb[0].mxu0 %v1069
      %v1783 = vpop.f32.mrb[0].mxu0
      %v1784 = vadd.f32 0.0, %v1783
      %v1785 = vpop.f32.mrb[0].mxu0
      %1786 = vmatprep.mubr.f32.mxu0 0.0
      %1787 = vmatmul.mubr.f32.gmra.mrb[0].mxu0 %v1072
      %v1788 = vpop.f32.mrb[0].mxu0
      %v1789 = vadd.f32 0.0, %v1788
      %v1790 = vpop.f32.mrb[0].mxu0
      %1791 = vmatprep.mubr.f32.mxu0 0.0
      %1792 = vmatmul.mubr.f32.gmra.mrb[0].mxu0 %v1075
      %v1793 = vpop.f32.mrb[0].mxu0
      %v1794 = vadd.f32 0.0, %v1793
      %v1795 = vpop.f32.mrb[0].mxu0
      %1796 = vdwg.mxu0
      %v1797 = vpack.c.bf16 %v1724, %v1719
      %v1798 = vpack.c.bf16 %v1734, %v1729
      %v1799 = vpack.c.bf16 %v1744, %v1739
      %v1800 = vpack.c.bf16 %v1754, %v1749
      %v1801 = vpack.c.bf16 %v1764, %v1759
      %v1802 = vpack.c.bf16 %v1774, %v1769
      %v1803 = vpack.c.bf16 %v1784, %v1779
      %v1804 = vpack.c.bf16 %v1794, %v1789
      %v1806 = vlaneseq
      %v1807 = vshrl.u32 %v1806, 7
      %v1808 = vsub.s32 0, %v1807
      %v1809 = vrot.slane %v1651, %v1808
      %1811 = vmatprep.subr.bf16.mxu0 0
      %1812 = vmatpush1.bf16.msra.mxu0 %v1797
      %1813 = vmatprep.subr.bf16.mxu0 0
      %1814 = vmatpush1.bf16.msra.mxu0 %v1798
      %1815 = vmatprep.subr.bf16.mxu0 0
      %1816 = vmatpush1.bf16.msra.mxu0 %v1799
      %1817 = vmatprep.subr.bf16.mxu0 0
      %1818 = vmatpush1.bf16.msra.mxu0 %v1800
      %1819 = vmatprep.subr.bf16.mxu0 0
      %1820 = vmatpush1.bf16.msra.mxu0 %v1801
      %1821 = vmatprep.subr.bf16.mxu0 0
      %1822 = vmatpush1.bf16.msra.mxu0 %v1802
      %1823 = vmatprep.subr.bf16.mxu0 0
      %1824 = vmatpush1.bf16.msra.mxu0 %v1803
      %1825 = vmatprep.subr.bf16.mxu0 0
      %1826 = vmatpush1.bf16.msra.mxu0 %v1804
      %1827 = vmatprep.subr.bf16.mxu0 0
      %1828 = vmatpush1.bf16.msra.mxu0 0
      %1829 = vmatprep.subr.bf16.mxu0 0
      %1830 = vmatpush1.bf16.msra.mxu0 0
      %1831 = vmatprep.subr.bf16.mxu0 0
      %1832 = vmatpush1.bf16.msra.mxu0 0
      %1833 = vmatprep.subr.bf16.mxu0 0
      %1834 = vmatpush1.bf16.msra.mxu0 0
      %1835 = vmatprep.subr.bf16.mxu0 0
      %1836 = vmatpush1.bf16.msra.mxu0 0
      %1837 = vmatprep.subr.bf16.mxu0 0
      %1838 = vmatpush1.bf16.msra.mxu0 0
      %1839 = vmatprep.subr.bf16.mxu0 0
      %1840 = vmatpush1.bf16.msra.mxu0 0
      %1841 = vmatprep.subr.bf16.mxu0 0
      %1842 = vmatpush1.bf16.msra.mxu0 0
      %1843 = vmatprep.mubr.bf16.mxu0 0
      %1844 = vmatmul.mubr.bf16.gmra.mrb[0].mxu0 %v689
      %v1845 = vpop.f32.mrb[0].mxu0
      %v1846 = vadd.f32 %v1809, %v1845
      %v1847 = vpop.f32.mrb[0].mxu0
      %v1848 = vpop.f32.mrb[0].mxu0
      %v1849 = vadd.f32 %v1809, %v1848
      %v1850 = vpop.f32.mrb[0].mxu0
      %1851 = vmatprep.mubr.bf16.mxu0 0
      %1852 = vmatmul.mubr.bf16.gmra.mrb[0].mxu0 %v690
      %v1853 = vpop.f32.mrb[0].mxu0
      %v1854 = vadd.f32 %v1809, %v1853
      %v1855 = vpop.f32.mrb[0].mxu0
      %v1856 = vpop.f32.mrb[0].mxu0
      %v1857 = vadd.f32 %v1809, %v1856
      %v1858 = vpop.f32.mrb[0].mxu0
      %1859 = vmatprep.mubr.bf16.mxu0 0
      %1860 = vmatmul.mubr.bf16.gmra.mrb[0].mxu0 %v691
      %v1861 = vpop.f32.mrb[0].mxu0
      %v1862 = vadd.f32 %v1809, %v1861
      %v1863 = vpop.f32.mrb[0].mxu0
      %v1864 = vpop.f32.mrb[0].mxu0
      %v1865 = vadd.f32 %v1809, %v1864
      %v1866 = vpop.f32.mrb[0].mxu0
      %1867 = vmatprep.mubr.bf16.mxu0 0
      %1868 = vmatmul.mubr.bf16.gmra.mrb[0].mxu0 %v692
      %v1869 = vpop.f32.mrb[0].mxu0
      %v1870 = vadd.f32 %v1809, %v1869
      %v1871 = vpop.f32.mrb[0].mxu0
      %v1872 = vpop.f32.mrb[0].mxu0
      %v1873 = vadd.f32 %v1809, %v1872
      %v1874 = vpop.f32.mrb[0].mxu0
      %1875 = vmatprep.mubr.bf16.mxu0 0
      %1876 = vmatmul.mubr.bf16.gmra.mrb[0].mxu0 %v693
      %v1877 = vpop.f32.mrb[0].mxu0
      %v1878 = vadd.f32 %v1809, %v1877
      %v1879 = vpop.f32.mrb[0].mxu0
      %v1880 = vpop.f32.mrb[0].mxu0
      %v1881 = vadd.f32 %v1809, %v1880
      %v1882 = vpop.f32.mrb[0].mxu0
      %1883 = vmatprep.mubr.bf16.mxu0 0
      %1884 = vmatmul.mubr.bf16.gmra.mrb[0].mxu0 %v694
      %v1885 = vpop.f32.mrb[0].mxu0
      %v1886 = vadd.f32 %v1809, %v1885
      %v1887 = vpop.f32.mrb[0].mxu0
      %v1888 = vpop.f32.mrb[0].mxu0
      %v1889 = vadd.f32 %v1809, %v1888
      %v1890 = vpop.f32.mrb[0].mxu0
      %1891 = vmatprep.mubr.bf16.mxu0 0
      %1892 = vmatmul.mubr.bf16.gmra.mrb[0].mxu0 %v695
      %v1893 = vpop.f32.mrb[0].mxu0
      %v1894 = vadd.f32 %v1809, %v1893
      %v1895 = vpop.f32.mrb[0].mxu0
      %v1896 = vpop.f32.mrb[0].mxu0
      %v1897 = vadd.f32 %v1809, %v1896
      %v1898 = vpop.f32.mrb[0].mxu0
      %1899 = vmatprep.mubr.bf16.mxu0 0
      %1900 = vmatmul.mubr.bf16.gmra.mrb[0].mxu0 %v696
      %v1901 = vpop.f32.mrb[0].mxu0
      %v1902 = vadd.f32 %v1809, %v1901
      %v1903 = vpop.f32.mrb[0].mxu0
      %v1904 = vpop.f32.mrb[0].mxu0
      %v1905 = vadd.f32 %v1809, %v1904
      %v1906 = vpop.f32.mrb[0].mxu0
      %1907 = vdwg.mxu0
      %v1908 = vmax.f32 %v1846, 0.0
      %v1909 = vmax.f32 %v1849, 0.0
      %v1910 = vmax.f32 %v1854, 0.0
      %v1911 = vmax.f32 %v1857, 0.0
      %v1912 = vmax.f32 %v1862, 0.0
      %v1913 = vmax.f32 %v1865, 0.0
      %v1914 = vmax.f32 %v1870, 0.0
      %v1915 = vmax.f32 %v1873, 0.0
      %v1916 = vmax.f32 %v1878, 0.0
      %v1917 = vmax.f32 %v1881, 0.0
      %v1918 = vmax.f32 %v1886, 0.0
      %v1919 = vmax.f32 %v1889, 0.0
      %v1920 = vmax.f32 %v1894, 0.0
      %v1921 = vmax.f32 %v1897, 0.0
      %v1922 = vmax.f32 %v1902, 0.0
      %v1923 = vmax.f32 %v1905, 0.0
      %v1924 = vmul.f32 %v1908, %v1908
      %v1925 = vmul.f32 %v1909, %v1909
      %v1926 = vmul.f32 %v1910, %v1910
      %v1927 = vmul.f32 %v1911, %v1911
      %v1928 = vmul.f32 %v1912, %v1912
      %v1929 = vmul.f32 %v1913, %v1913
      %v1930 = vmul.f32 %v1914, %v1914
      %v1931 = vmul.f32 %v1915, %v1915
      %v1932 = vmul.f32 %v1916, %v1916
      %v1933 = vmul.f32 %v1917, %v1917
      %v1934 = vmul.f32 %v1918, %v1918
      %v1935 = vmul.f32 %v1919, %v1919
      %v1936 = vmul.f32 %v1920, %v1920
      %v1937 = vmul.f32 %v1921, %v1921
      %v1938 = vmul.f32 %v1922, %v1922
      %v1939 = vmul.f32 %v1923, %v1923
      %v1940 = vsel %vm932, %v1924, 0.0
      %1941 = vadd.xlane.f32.xlu0 %v1940
      %v1942 = vpop.xlane.xlu0 %1941
      %v1943 = vsel %vm932, %v1925, 0.0
      %1944 = vadd.xlane.f32.xlu0 %v1943
      %v1945 = vpop.xlane.xlu0 %1944
      %v1946 = vsel %vm932, %v1926, 0.0
      %1947 = vadd.xlane.f32.xlu0 %v1946
      %v1948 = vpop.xlane.xlu0 %1947
      %v1949 = vsel %vm932, %v1927, 0.0
      %1950 = vadd.xlane.f32.xlu0 %v1949
      %v1951 = vpop.xlane.xlu0 %1950
      %v1952 = vsel %vm932, %v1928, 0.0
      %1953 = vadd.xlane.f32.xlu0 %v1952
      %v1954 = vpop.xlane.xlu0 %1953
      %v1955 = vsel %vm932, %v1929, 0.0
      %1956 = vadd.xlane.f32.xlu0 %v1955
      %v1957 = vpop.xlane.xlu0 %1956
      %v1958 = vsel %vm932, %v1930, 0.0
      %1959 = vadd.xlane.f32.xlu0 %v1958
      %v1960 = vpop.xlane.xlu0 %1959
      %v1961 = vsel %vm932, %v1931, 0.0
      %1962 = vadd.xlane.f32.xlu0 %v1961
      %v1963 = vpop.xlane.xlu0 %1962
      %v1964 = vsel %vm932, %v1932, 0.0
      %1965 = vadd.xlane.f32.xlu0 %v1964
      %v1966 = vpop.xlane.xlu0 %1965
      %v1967 = vsel %vm932, %v1933, 0.0
      %1968 = vadd.xlane.f32.xlu0 %v1967
      %v1969 = vpop.xlane.xlu0 %1968
      %v1970 = vsel %vm932, %v1934, 0.0
      %1971 = vadd.xlane.f32.xlu0 %v1970
      %v1972 = vpop.xlane.xlu0 %1971
      %v1973 = vsel %vm932, %v1935, 0.0
      %1974 = vadd.xlane.f32.xlu0 %v1973
      %v1975 = vpop.xlane.xlu0 %1974
      %v1976 = vsel %vm932, %v1936, 0.0
      %1977 = vadd.xlane.f32.xlu0 %v1976
      %v1978 = vpop.xlane.xlu0 %1977
      %v1979 = vsel %vm932, %v1937, 0.0
      %1980 = vadd.xlane.f32.xlu0 %v1979
      %v1981 = vpop.xlane.xlu0 %1980
      %v1982 = vsel %vm932, %v1938, 0.0
      %1983 = vadd.xlane.f32.xlu0 %v1982
      %v1984 = vpop.xlane.xlu0 %1983
      %v1985 = vsel %vm932, %v1939, 0.0
      %1986 = vadd.xlane.f32.xlu0 %v1985
      %v1987 = vpop.xlane.xlu0 %1986
      %v1988 = vmax.f32 %v1942, 1e-24
      %v1989 = vmax.f32 %v1945, 1e-24
      %v1990 = vmax.f32 %v1948, 1e-24
      %v1991 = vmax.f32 %v1951, 1e-24
      %v1992 = vmax.f32 %v1954, 1e-24
      %v1993 = vmax.f32 %v1957, 1e-24
      %v1994 = vmax.f32 %v1960, 1e-24
      %v1995 = vmax.f32 %v1963, 1e-24
      %v1996 = vmax.f32 %v1966, 1e-24
      %v1997 = vmax.f32 %v1969, 1e-24
      %v1998 = vmax.f32 %v1972, 1e-24
      %v1999 = vmax.f32 %v1975, 1e-24
      %v2000 = vmax.f32 %v1978, 1e-24
      %v2001 = vmax.f32 %v1981, 1e-24
      %v2002 = vmax.f32 %v1984, 1e-24
      %v2003 = vmax.f32 %v1987, 1e-24
      %v2004 = vrsqrt.pop %v1988
      %v2005 = vrsqrt.pop %v1989
      %v2006 = vrsqrt.pop %v1990
      %v2007 = vrsqrt.pop %v1991
      %v2008 = vrsqrt.pop %v1992
      %v2009 = vrsqrt.pop %v1993
      %v2010 = vrsqrt.pop %v1994
      %v2011 = vrsqrt.pop %v1995
      %v2012 = vrsqrt.pop %v1996
      %v2013 = vrsqrt.pop %v1997
      %v2014 = vrsqrt.pop %v1998
      %v2015 = vrsqrt.pop %v1999
      %v2016 = vrsqrt.pop %v2000
      %v2017 = vrsqrt.pop %v2001
      %v2018 = vrsqrt.pop %v2002
      %v2019 = vrsqrt.pop %v2003
      %v2020 = vmul.f32 %v1908, %v2004
      %v2021 = vmul.f32 %v1909, %v2005
      %v2022 = vmul.f32 %v1910, %v2006
      %v2023 = vmul.f32 %v1911, %v2007
      %v2024 = vmul.f32 %v1912, %v2008
      %v2025 = vmul.f32 %v1913, %v2009
      %v2026 = vmul.f32 %v1914, %v2010
      %v2027 = vmul.f32 %v1915, %v2011
      %v2028 = vmul.f32 %v1916, %v2012
      %v2029 = vmul.f32 %v1917, %v2013
      %v2030 = vmul.f32 %v1918, %v2014
      %v2031 = vmul.f32 %v1919, %v2015
      %v2032 = vmul.f32 %v1920, %v2016
      %v2033 = vmul.f32 %v1921, %v2017
      %v2034 = vmul.f32 %v1922, %v2018
      %v2035 = vmul.f32 %v1923, %v2019
      %v2037 = vsel %vm932, %v2020, 0
      %v2040 = vsel %vm932, %v2021, 0
      %v2043 = vsel %vm932, %v2022, 0
      %v2046 = vsel %vm932, %v2023, 0
      %v2049 = vsel %vm932, %v2024, 0
      %v2052 = vsel %vm932, %v2025, 0
      %v2055 = vsel %vm932, %v2026, 0
      %v2058 = vsel %vm932, %v2027, 0
      %v2061 = vsel %vm932, %v2028, 0
      %v2064 = vsel %vm932, %v2029, 0
      %v2067 = vsel %vm932, %v2030, 0
      %v2070 = vsel %vm932, %v2031, 0
      %v2073 = vsel %vm932, %v2032, 0
      %v2076 = vsel %vm932, %v2033, 0
      %v2079 = vsel %vm932, %v2034, 0
      %v2082 = vsel %vm932, %v2035, 0
      %2084 = vmatprep.subr.mxu0 0.0
      %2085 = vmatpush1.msra.mxu0 %v697
      %2086 = vmatprep.subr.mxu0 0.0
      %2087 = vmatpush1.msra.mxu0 %v698
      %2088 = vmatprep.subr.mxu0 0.0
      %2089 = vmatpush1.msra.mxu0 %v699
      %2090 = vmatprep.subr.mxu0 0.0
      %2091 = vmatpush1.msra.mxu0 %v700
      %2092 = vmatprep.subr.mxu0 0.0
      %2093 = vmatpush1.msra.mxu0 0.0
      %2094 = vmatprep.subr.mxu0 0.0
      %2095 = vmatpush1.msra.mxu0 0.0
      %2096 = vmatprep.subr.mxu0 0.0
      %2097 = vmatpush1.msra.mxu0 0.0
      %2098 = vmatprep.subr.mxu0 0.0
      %2099 = vmatpush1.msra.mxu0 0.0
      %2100 = vmatprep.subr.mxu0 0.0
      %2101 = vmatpush1.msra.mxu0 0.0
      %2102 = vmatprep.subr.mxu0 0.0
      %2103 = vmatpush1.msra.mxu0 0.0
      %2104 = vmatprep.subr.mxu0 0.0
      %2105 = vmatpush1.msra.mxu0 0.0
      %2106 = vmatprep.subr.mxu0 0.0
      %2107 = vmatpush1.msra.mxu0 0.0
      %2108 = vmatprep.subr.mxu0 0.0
      %2109 = vmatpush1.msra.mxu0 0.0
      %2110 = vmatprep.subr.mxu0 0.0
      %2111 = vmatpush1.msra.mxu0 0.0
      %2112 = vmatprep.subr.mxu0 0.0
      %2113 = vmatpush1.msra.mxu0 0.0
      %2114 = vmatprep.subr.mxu0 0.0
      %2115 = vmatpush1.msra.mxu0 0.0
      %2116 = vmatprep.subr.mxu0 0.0
      %2117 = vmatpush1.msra.mxu0 0.0
      %2118 = vmatprep.subr.mxu0 0.0
      %2119 = vmatpush1.msra.mxu0 0.0
      %2120 = vmatprep.subr.mxu0 0.0
      %2121 = vmatpush1.msra.mxu0 0.0
      %2122 = vmatprep.subr.mxu0 0.0
      %2123 = vmatpush1.msra.mxu0 0.0
      %2124 = vmatprep.subr.mxu0 0.0
      %2125 = vmatpush1.msra.mxu0 0.0
      %2126 = vmatprep.subr.mxu0 0.0
      %2127 = vmatpush1.msra.mxu0 0.0
      %2128 = vmatprep.subr.mxu0 0.0
      %2129 = vmatpush1.msra.mxu0 0.0
      %2130 = vmatprep.subr.mxu0 0.0
      %2131 = vmatpush1.msra.mxu0 0.0
      %2132 = vmatprep.subr.mxu0 0.0
      %2133 = vmatpush1.msra.mxu0 0.0
      %2134 = vmatprep.subr.mxu0 0.0
      %2135 = vmatpush1.msra.mxu0 0.0
      %2136 = vmatprep.subr.mxu0 0.0
      %2137 = vmatpush1.msra.mxu0 0.0
      %2138 = vmatprep.subr.mxu0 0.0
      %2139 = vmatpush1.msra.mxu0 0.0
      %2140 = vmatprep.subr.mxu0 0.0
      %2141 = vmatpush1.msra.mxu0 0.0
      %2142 = vmatprep.subr.mxu0 0.0
      %2143 = vmatpush1.msra.mxu0 0.0
      %2144 = vmatprep.subr.mxu0 0.0
      %2145 = vmatpush1.msra.mxu0 0.0
      %2146 = vmatprep.subr.mxu0 0.0
      %2147 = vmatpush1.msra.mxu0 0.0
      %2148 = vmatprep.mubr.f32.mxu0 0.0
      %2149 = vmatmul.mubr.f32.gmra.mrb[0].mxu0 %v2037
      %v2150 = vpop.f32.mrb[0].mxu0
      %v2151 = vadd.f32 %v722, %v2150
      %v2152 = vpop.f32.mrb[0].mxu0
      %2153 = vmatprep.mubr.f32.mxu0 0.0
      %2154 = vmatmul.mubr.f32.gmra.mrb[0].mxu0 %v2040
      %v2155 = vpop.f32.mrb[0].mxu0
      %v2156 = vadd.f32 %v722, %v2155
      %v2157 = vpop.f32.mrb[0].mxu0
      %2158 = vmatprep.mubr.f32.mxu0 0.0
      %2159 = vmatmul.mubr.f32.gmra.mrb[0].mxu0 %v2043
      %v2160 = vpop.f32.mrb[0].mxu0
      %v2161 = vadd.f32 %v722, %v2160
      %v2162 = vpop.f32.mrb[0].mxu0
      %2163 = vmatprep.mubr.f32.mxu0 0.0
      %2164 = vmatmul.mubr.f32.gmra.mrb[0].mxu0 %v2046
      %v2165 = vpop.f32.mrb[0].mxu0
      %v2166 = vadd.f32 %v722, %v2165
      %v2167 = vpop.f32.mrb[0].mxu0
      %2168 = vmatprep.mubr.f32.mxu0 0.0
      %2169 = vmatmul.mubr.f32.gmra.mrb[0].mxu0 %v2049
      %v2170 = vpop.f32.mrb[0].mxu0
      %v2171 = vadd.f32 %v722, %v2170
      %v2172 = vpop.f32.mrb[0].mxu0
      %2173 = vmatprep.mubr.f32.mxu0 0.0
      %2174 = vmatmul.mubr.f32.gmra.mrb[0].mxu0 %v2052
      %v2175 = vpop.f32.mrb[0].mxu0
      %v2176 = vadd.f32 %v722, %v2175
      %v2177 = vpop.f32.mrb[0].mxu0
      %2178 = vmatprep.mubr.f32.mxu0 0.0
      %2179 = vmatmul.mubr.f32.gmra.mrb[0].mxu0 %v2055
      %v2180 = vpop.f32.mrb[0].mxu0
      %v2181 = vadd.f32 %v722, %v2180
      %v2182 = vpop.f32.mrb[0].mxu0
      %2183 = vmatprep.mubr.f32.mxu0 0.0
      %2184 = vmatmul.mubr.f32.gmra.mrb[0].mxu0 %v2058
      %v2185 = vpop.f32.mrb[0].mxu0
      %v2186 = vadd.f32 %v722, %v2185
      %v2187 = vpop.f32.mrb[0].mxu0
      %2188 = vmatprep.mubr.f32.mxu0 0.0
      %2189 = vmatmul.mubr.f32.gmra.mrb[0].mxu0 %v2061
      %v2190 = vpop.f32.mrb[0].mxu0
      %v2191 = vadd.f32 %v722, %v2190
      %v2192 = vpop.f32.mrb[0].mxu0
      %2193 = vmatprep.mubr.f32.mxu0 0.0
      %2194 = vmatmul.mubr.f32.gmra.mrb[0].mxu0 %v2064
      %v2195 = vpop.f32.mrb[0].mxu0
      %v2196 = vadd.f32 %v722, %v2195
      %v2197 = vpop.f32.mrb[0].mxu0
      %2198 = vmatprep.mubr.f32.mxu0 0.0
      %2199 = vmatmul.mubr.f32.gmra.mrb[0].mxu0 %v2067
      %v2200 = vpop.f32.mrb[0].mxu0
      %v2201 = vadd.f32 %v722, %v2200
      %v2202 = vpop.f32.mrb[0].mxu0
      %2203 = vmatprep.mubr.f32.mxu0 0.0
      %2204 = vmatmul.mubr.f32.gmra.mrb[0].mxu0 %v2070
      %v2205 = vpop.f32.mrb[0].mxu0
      %v2206 = vadd.f32 %v722, %v2205
      %v2207 = vpop.f32.mrb[0].mxu0
      %2208 = vmatprep.mubr.f32.mxu0 0.0
      %2209 = vmatmul.mubr.f32.gmra.mrb[0].mxu0 %v2073
      %v2210 = vpop.f32.mrb[0].mxu0
      %v2211 = vadd.f32 %v722, %v2210
      %v2212 = vpop.f32.mrb[0].mxu0
      %2213 = vmatprep.mubr.f32.mxu0 0.0
      %2214 = vmatmul.mubr.f32.gmra.mrb[0].mxu0 %v2076
      %v2215 = vpop.f32.mrb[0].mxu0
      %v2216 = vadd.f32 %v722, %v2215
      %v2217 = vpop.f32.mrb[0].mxu0
      %2218 = vmatprep.mubr.f32.mxu0 0.0
      %2219 = vmatmul.mubr.f32.gmra.mrb[0].mxu0 %v2079
      %v2220 = vpop.f32.mrb[0].mxu0
      %v2221 = vadd.f32 %v722, %v2220
      %v2222 = vpop.f32.mrb[0].mxu0
      %2223 = vmatprep.mubr.f32.mxu0 0.0
      %2224 = vmatmul.mubr.f32.gmra.mrb[0].mxu0 %v2082
      %v2225 = vpop.f32.mrb[0].mxu0
      %v2226 = vadd.f32 %v722, %v2225
      %v2227 = vpop.f32.mrb[0].mxu0
      %2228 = vdwg.mxu0
      %v2229 = vmax.f32 %v2151, 0.0
      %v2230 = vmax.f32 %v2156, 0.0
      %v2231 = vmax.f32 %v2161, 0.0
      %v2232 = vmax.f32 %v2166, 0.0
      %v2233 = vmax.f32 %v2171, 0.0
      %v2234 = vmax.f32 %v2176, 0.0
      %v2235 = vmax.f32 %v2181, 0.0
      %v2236 = vmax.f32 %v2186, 0.0
      %v2237 = vmax.f32 %v2191, 0.0
      %v2238 = vmax.f32 %v2196, 0.0
      %v2239 = vmax.f32 %v2201, 0.0
      %v2240 = vmax.f32 %v2206, 0.0
      %v2241 = vmax.f32 %v2211, 0.0
      %v2242 = vmax.f32 %v2216, 0.0
      %v2243 = vmax.f32 %v2221, 0.0
      %v2244 = vmax.f32 %v2226, 0.0
      %v2246 = vsel %vm1238, %v2229, 0
      %v2249 = vsel %vm1238, %v2230, 0
      %v2252 = vsel %vm1238, %v2231, 0
      %v2255 = vsel %vm1238, %v2232, 0
      %v2258 = vsel %vm1238, %v2233, 0
      %v2261 = vsel %vm1238, %v2234, 0
      %v2264 = vsel %vm1238, %v2235, 0
      %v2267 = vsel %vm1238, %v2236, 0
      %v2270 = vsel %vm1238, %v2237, 0
      %v2273 = vsel %vm1238, %v2238, 0
      %v2276 = vsel %vm1238, %v2239, 0
      %v2279 = vsel %vm1238, %v2240, 0
      %v2282 = vsel %vm1238, %v2241, 0
      %v2285 = vsel %vm1238, %v2242, 0
      %v2288 = vsel %vm1238, %v2243, 0
      %v2291 = vsel %vm1238, %v2244, 0
      %2293 = vmatprep.subr.mxu0 0.0
      %2294 = vmatpush1.msra.mxu0 %v701
      %2295 = vmatprep.subr.mxu0 0.0
      %2296 = vmatpush1.msra.mxu0 %v702
      %2297 = vmatprep.subr.mxu0 0.0
      %2298 = vmatpush1.msra.mxu0 %v703
      %2299 = vmatprep.subr.mxu0 0.0
      %2300 = vmatpush1.msra.mxu0 %v704
      %2301 = vmatprep.subr.mxu0 0.0
      %2302 = vmatpush1.msra.mxu0 %v705
      %2303 = vmatprep.subr.mxu0 0.0
      %2304 = vmatpush1.msra.mxu0 %v706
      %2305 = vmatprep.subr.mxu0 0.0
      %2306 = vmatpush1.msra.mxu0 %v707
      %2307 = vmatprep.subr.mxu0 0.0
      %2308 = vmatpush1.msra.mxu0 %v708
      %2309 = vmatprep.subr.mxu0 0.0
      %2310 = vmatpush1.msra.mxu0 0.0
      %2311 = vmatprep.subr.mxu0 0.0
      %2312 = vmatpush1.msra.mxu0 0.0
      %2313 = vmatprep.subr.mxu0 0.0
      %2314 = vmatpush1.msra.mxu0 0.0
      %2315 = vmatprep.subr.mxu0 0.0
      %2316 = vmatpush1.msra.mxu0 0.0
      %2317 = vmatprep.subr.mxu0 0.0
      %2318 = vmatpush1.msra.mxu0 0.0
      %2319 = vmatprep.subr.mxu0 0.0
      %2320 = vmatpush1.msra.mxu0 0.0
      %2321 = vmatprep.subr.mxu0 0.0
      %2322 = vmatpush1.msra.mxu0 0.0
      %2323 = vmatprep.subr.mxu0 0.0
      %2324 = vmatpush1.msra.mxu0 0.0
      %2325 = vmatprep.subr.mxu0 0.0
      %2326 = vmatpush1.msra.mxu0 0.0
      %2327 = vmatprep.subr.mxu0 0.0
      %2328 = vmatpush1.msra.mxu0 0.0
      %2329 = vmatprep.subr.mxu0 0.0
      %2330 = vmatpush1.msra.mxu0 0.0
      %2331 = vmatprep.subr.mxu0 0.0
      %2332 = vmatpush1.msra.mxu0 0.0
      %2333 = vmatprep.subr.mxu0 0.0
      %2334 = vmatpush1.msra.mxu0 0.0
      %2335 = vmatprep.subr.mxu0 0.0
      %2336 = vmatpush1.msra.mxu0 0.0
      %2337 = vmatprep.subr.mxu0 0.0
      %2338 = vmatpush1.msra.mxu0 0.0
      %2339 = vmatprep.subr.mxu0 0.0
      %2340 = vmatpush1.msra.mxu0 0.0
      %2341 = vmatprep.subr.mxu0 0.0
      %2342 = vmatpush1.msra.mxu0 0.0
      %2343 = vmatprep.subr.mxu0 0.0
      %2344 = vmatpush1.msra.mxu0 0.0
      %2345 = vmatprep.subr.mxu0 0.0
      %2346 = vmatpush1.msra.mxu0 0.0
      %2347 = vmatprep.subr.mxu0 0.0
      %2348 = vmatpush1.msra.mxu0 0.0
      %2349 = vmatprep.subr.mxu0 0.0
      %2350 = vmatpush1.msra.mxu0 0.0
      %2351 = vmatprep.subr.mxu0 0.0
      %2352 = vmatpush1.msra.mxu0 0.0
      %2353 = vmatprep.subr.mxu0 0.0
      %2354 = vmatpush1.msra.mxu0 0.0
      %2355 = vmatprep.subr.mxu0 0.0
      %2356 = vmatpush1.msra.mxu0 0.0
      %2357 = vmatprep.mubr.f32.mxu0 0.0
      %2358 = vmatmul.mubr.f32.gmra.mrb[0].mxu0 %v2246
      %v2359 = vpop.f32.mrb[0].mxu0
      %v2360 = vadd.f32 %v729, %v2359
      %v2361 = vpop.f32.mrb[0].mxu0
      %2362 = vmatprep.mubr.f32.mxu0 0.0
      %2363 = vmatmul.mubr.f32.gmra.mrb[0].mxu0 %v2249
      %v2364 = vpop.f32.mrb[0].mxu0
      %v2365 = vadd.f32 %v729, %v2364
      %v2366 = vpop.f32.mrb[0].mxu0
      %2367 = vmatprep.mubr.f32.mxu0 0.0
      %2368 = vmatmul.mubr.f32.gmra.mrb[0].mxu0 %v2252
      %v2369 = vpop.f32.mrb[0].mxu0
      %v2370 = vadd.f32 %v729, %v2369
      %v2371 = vpop.f32.mrb[0].mxu0
      %2372 = vmatprep.mubr.f32.mxu0 0.0
      %2373 = vmatmul.mubr.f32.gmra.mrb[0].mxu0 %v2255
      %v2374 = vpop.f32.mrb[0].mxu0
      %v2375 = vadd.f32 %v729, %v2374
      %v2376 = vpop.f32.mrb[0].mxu0
      %2377 = vmatprep.mubr.f32.mxu0 0.0
      %2378 = vmatmul.mubr.f32.gmra.mrb[0].mxu0 %v2258
      %v2379 = vpop.f32.mrb[0].mxu0
      %v2380 = vadd.f32 %v729, %v2379
      %v2381 = vpop.f32.mrb[0].mxu0
      %2382 = vmatprep.mubr.f32.mxu0 0.0
      %2383 = vmatmul.mubr.f32.gmra.mrb[0].mxu0 %v2261
      %v2384 = vpop.f32.mrb[0].mxu0
      %v2385 = vadd.f32 %v729, %v2384
      %v2386 = vpop.f32.mrb[0].mxu0
      %2387 = vmatprep.mubr.f32.mxu0 0.0
      %2388 = vmatmul.mubr.f32.gmra.mrb[0].mxu0 %v2264
      %v2389 = vpop.f32.mrb[0].mxu0
      %v2390 = vadd.f32 %v729, %v2389
      %v2391 = vpop.f32.mrb[0].mxu0
      %2392 = vmatprep.mubr.f32.mxu0 0.0
      %2393 = vmatmul.mubr.f32.gmra.mrb[0].mxu0 %v2267
      %v2394 = vpop.f32.mrb[0].mxu0
      %v2395 = vadd.f32 %v729, %v2394
      %v2396 = vpop.f32.mrb[0].mxu0
      %2397 = vmatprep.mubr.f32.mxu0 0.0
      %2398 = vmatmul.mubr.f32.gmra.mrb[0].mxu0 %v2270
      %v2399 = vpop.f32.mrb[0].mxu0
      %v2400 = vadd.f32 %v729, %v2399
      %v2401 = vpop.f32.mrb[0].mxu0
      %2402 = vmatprep.mubr.f32.mxu0 0.0
      %2403 = vmatmul.mubr.f32.gmra.mrb[0].mxu0 %v2273
      %v2404 = vpop.f32.mrb[0].mxu0
      %v2405 = vadd.f32 %v729, %v2404
      %v2406 = vpop.f32.mrb[0].mxu0
      %2407 = vmatprep.mubr.f32.mxu0 0.0
      %2408 = vmatmul.mubr.f32.gmra.mrb[0].mxu0 %v2276
      %v2409 = vpop.f32.mrb[0].mxu0
      %v2410 = vadd.f32 %v729, %v2409
      %v2411 = vpop.f32.mrb[0].mxu0
      %2412 = vmatprep.mubr.f32.mxu0 0.0
      %2413 = vmatmul.mubr.f32.gmra.mrb[0].mxu0 %v2279
      %v2414 = vpop.f32.mrb[0].mxu0
      %v2415 = vadd.f32 %v729, %v2414
      %v2416 = vpop.f32.mrb[0].mxu0
      %2417 = vmatprep.mubr.f32.mxu0 0.0
      %2418 = vmatmul.mubr.f32.gmra.mrb[0].mxu0 %v2282
      %v2419 = vpop.f32.mrb[0].mxu0
      %v2420 = vadd.f32 %v729, %v2419
      %v2421 = vpop.f32.mrb[0].mxu0
      %2422 = vmatprep.mubr.f32.mxu0 0.0
      %2423 = vmatmul.mubr.f32.gmra.mrb[0].mxu0 %v2285
      %v2424 = vpop.f32.mrb[0].mxu0
      %v2425 = vadd.f32 %v729, %v2424
      %v2426 = vpop.f32.mrb[0].mxu0
      %2427 = vmatprep.mubr.f32.mxu0 0.0
      %2428 = vmatmul.mubr.f32.gmra.mrb[0].mxu0 %v2288
      %v2429 = vpop.f32.mrb[0].mxu0
      %v2430 = vadd.f32 %v729, %v2429
      %v2431 = vpop.f32.mrb[0].mxu0
      %2432 = vmatprep.mubr.f32.mxu0 0.0
      %2433 = vmatmul.mubr.f32.gmra.mrb[0].mxu0 %v2291
      %v2434 = vpop.f32.mrb[0].mxu0
      %v2435 = vadd.f32 %v729, %v2434
      %v2436 = vpop.f32.mrb[0].mxu0
      %2437 = vdwg.mxu0
      %v2438 = vmax.f32 %v2360, 0.0
      %v2439 = vmax.f32 %v2365, 0.0
      %v2440 = vmax.f32 %v2370, 0.0
      %v2441 = vmax.f32 %v2375, 0.0
      %v2442 = vmax.f32 %v2380, 0.0
      %v2443 = vmax.f32 %v2385, 0.0
      %v2444 = vmax.f32 %v2390, 0.0
      %v2445 = vmax.f32 %v2395, 0.0
      %v2446 = vmax.f32 %v2400, 0.0
      %v2447 = vmax.f32 %v2405, 0.0
      %v2448 = vmax.f32 %v2410, 0.0
      %v2449 = vmax.f32 %v2415, 0.0
      %v2450 = vmax.f32 %v2420, 0.0
      %v2451 = vmax.f32 %v2425, 0.0
      %v2452 = vmax.f32 %v2430, 0.0
      %v2453 = vmax.f32 %v2435, 0.0
      %v2455 = vsel %vm1238, %v2438, 0
      %v2458 = vsel %vm1238, %v2439, 0
      %v2461 = vsel %vm1238, %v2440, 0
      %v2464 = vsel %vm1238, %v2441, 0
      %v2467 = vsel %vm1238, %v2442, 0
      %v2470 = vsel %vm1238, %v2443, 0
      %v2473 = vsel %vm1238, %v2444, 0
      %v2476 = vsel %vm1238, %v2445, 0
      %v2479 = vsel %vm1238, %v2446, 0
      %v2482 = vsel %vm1238, %v2447, 0
      %v2485 = vsel %vm1238, %v2448, 0
      %v2488 = vsel %vm1238, %v2449, 0
      %v2491 = vsel %vm1238, %v2450, 0
      %v2494 = vsel %vm1238, %v2451, 0
      %v2497 = vsel %vm1238, %v2452, 0
      %v2500 = vsel %vm1238, %v2453, 0
      %2502 = vmatprep.subr.mxu0 0.0
      %2503 = vmatpush1.msra.mxu0 %v709
      %2504 = vmatprep.subr.mxu0 0.0
      %2505 = vmatpush1.msra.mxu0 %v710
      %2506 = vmatprep.subr.mxu0 0.0
      %2507 = vmatpush1.msra.mxu0 %v711
      %2508 = vmatprep.subr.mxu0 0.0
      %2509 = vmatpush1.msra.mxu0 %v712
      %2510 = vmatprep.subr.mxu0 0.0
      %2511 = vmatpush1.msra.mxu0 %v713
      %2512 = vmatprep.subr.mxu0 0.0
      %2513 = vmatpush1.msra.mxu0 %v714
      %2514 = vmatprep.subr.mxu0 0.0
      %2515 = vmatpush1.msra.mxu0 %v715
      %2516 = vmatprep.subr.mxu0 0.0
      %2517 = vmatpush1.msra.mxu0 %v716
      %2518 = vmatprep.subr.mxu0 0.0
      %2519 = vmatpush1.msra.mxu0 0.0
      %2520 = vmatprep.subr.mxu0 0.0
      %2521 = vmatpush1.msra.mxu0 0.0
      %2522 = vmatprep.subr.mxu0 0.0
      %2523 = vmatpush1.msra.mxu0 0.0
      %2524 = vmatprep.subr.mxu0 0.0
      %2525 = vmatpush1.msra.mxu0 0.0
      %2526 = vmatprep.subr.mxu0 0.0
      %2527 = vmatpush1.msra.mxu0 0.0
      %2528 = vmatprep.subr.mxu0 0.0
      %2529 = vmatpush1.msra.mxu0 0.0
      %2530 = vmatprep.subr.mxu0 0.0
      %2531 = vmatpush1.msra.mxu0 0.0
      %2532 = vmatprep.subr.mxu0 0.0
      %2533 = vmatpush1.msra.mxu0 0.0
      %2534 = vmatprep.subr.mxu0 0.0
      %2535 = vmatpush1.msra.mxu0 0.0
      %2536 = vmatprep.subr.mxu0 0.0
      %2537 = vmatpush1.msra.mxu0 0.0
      %2538 = vmatprep.subr.mxu0 0.0
      %2539 = vmatpush1.msra.mxu0 0.0
      %2540 = vmatprep.subr.mxu0 0.0
      %2541 = vmatpush1.msra.mxu0 0.0
      %2542 = vmatprep.subr.mxu0 0.0
      %2543 = vmatpush1.msra.mxu0 0.0
      %2544 = vmatprep.subr.mxu0 0.0
      %2545 = vmatpush1.msra.mxu0 0.0
      %2546 = vmatprep.subr.mxu0 0.0
      %2547 = vmatpush1.msra.mxu0 0.0
      %2548 = vmatprep.subr.mxu0 0.0
      %2549 = vmatpush1.msra.mxu0 0.0
      %2550 = vmatprep.subr.mxu0 0.0
      %2551 = vmatpush1.msra.mxu0 0.0
      %2552 = vmatprep.subr.mxu0 0.0
      %2553 = vmatpush1.msra.mxu0 0.0
      %2554 = vmatprep.subr.mxu0 0.0
      %2555 = vmatpush1.msra.mxu0 0.0
      %2556 = vmatprep.subr.mxu0 0.0
      %2557 = vmatpush1.msra.mxu0 0.0
      %2558 = vmatprep.subr.mxu0 0.0
      %2559 = vmatpush1.msra.mxu0 0.0
      %2560 = vmatprep.subr.mxu0 0.0
      %2561 = vmatpush1.msra.mxu0 0.0
      %2562 = vmatprep.subr.mxu0 0.0
      %2563 = vmatpush1.msra.mxu0 0.0
      %2564 = vmatprep.subr.mxu0 0.0
      %2565 = vmatpush1.msra.mxu0 0.0
      %2566 = vmatprep.mubr.f32.mxu0 0.0
      %2567 = vmatmul.mubr.f32.gmra.mrb[0].mxu0 %v2455
      %v2568 = vpop.f32.mrb[0].mxu0
      %v2569 = vadd.f32 %v1452, %v2568
      %v2570 = vpop.f32.mrb[0].mxu0
      %2571 = vmatprep.mubr.f32.mxu0 0.0
      %2572 = vmatmul.mubr.f32.gmra.mrb[0].mxu0 %v2458
      %v2573 = vpop.f32.mrb[0].mxu0
      %v2574 = vadd.f32 %v1452, %v2573
      %v2575 = vpop.f32.mrb[0].mxu0
      %2576 = vmatprep.mubr.f32.mxu0 0.0
      %2577 = vmatmul.mubr.f32.gmra.mrb[0].mxu0 %v2461
      %v2578 = vpop.f32.mrb[0].mxu0
      %v2579 = vadd.f32 %v1452, %v2578
      %v2580 = vpop.f32.mrb[0].mxu0
      %2581 = vmatprep.mubr.f32.mxu0 0.0
      %2582 = vmatmul.mubr.f32.gmra.mrb[0].mxu0 %v2464
      %v2583 = vpop.f32.mrb[0].mxu0
      %v2584 = vadd.f32 %v1452, %v2583
      %v2585 = vpop.f32.mrb[0].mxu0
      %2586 = vmatprep.mubr.f32.mxu0 0.0
      %2587 = vmatmul.mubr.f32.gmra.mrb[0].mxu0 %v2467
      %v2588 = vpop.f32.mrb[0].mxu0
      %v2589 = vadd.f32 %v1452, %v2588
      %v2590 = vpop.f32.mrb[0].mxu0
      %2591 = vmatprep.mubr.f32.mxu0 0.0
      %2592 = vmatmul.mubr.f32.gmra.mrb[0].mxu0 %v2470
      %v2593 = vpop.f32.mrb[0].mxu0
      %v2594 = vadd.f32 %v1452, %v2593
      %v2595 = vpop.f32.mrb[0].mxu0
      %2596 = vmatprep.mubr.f32.mxu0 0.0
      %2597 = vmatmul.mubr.f32.gmra.mrb[0].mxu0 %v2473
      %v2598 = vpop.f32.mrb[0].mxu0
      %v2599 = vadd.f32 %v1452, %v2598
      %v2600 = vpop.f32.mrb[0].mxu0
      %2601 = vmatprep.mubr.f32.mxu0 0.0
      %2602 = vmatmul.mubr.f32.gmra.mrb[0].mxu0 %v2476
      %v2603 = vpop.f32.mrb[0].mxu0
      %v2604 = vadd.f32 %v1452, %v2603
      %v2605 = vpop.f32.mrb[0].mxu0
      %2606 = vmatprep.mubr.f32.mxu0 0.0
      %2607 = vmatmul.mubr.f32.gmra.mrb[0].mxu0 %v2479
      %v2608 = vpop.f32.mrb[0].mxu0
      %v2609 = vadd.f32 %v1452, %v2608
      %v2610 = vpop.f32.mrb[0].mxu0
      %2611 = vmatprep.mubr.f32.mxu0 0.0
      %2612 = vmatmul.mubr.f32.gmra.mrb[0].mxu0 %v2482
      %v2613 = vpop.f32.mrb[0].mxu0
      %v2614 = vadd.f32 %v1452, %v2613
      %v2615 = vpop.f32.mrb[0].mxu0
      %2616 = vmatprep.mubr.f32.mxu0 0.0
      %2617 = vmatmul.mubr.f32.gmra.mrb[0].mxu0 %v2485
      %v2618 = vpop.f32.mrb[0].mxu0
      %v2619 = vadd.f32 %v1452, %v2618
      %v2620 = vpop.f32.mrb[0].mxu0
      %2621 = vmatprep.mubr.f32.mxu0 0.0
      %2622 = vmatmul.mubr.f32.gmra.mrb[0].mxu0 %v2488
      %v2623 = vpop.f32.mrb[0].mxu0
      %v2624 = vadd.f32 %v1452, %v2623
      %v2625 = vpop.f32.mrb[0].mxu0
      %2626 = vmatprep.mubr.f32.mxu0 0.0
      %2627 = vmatmul.mubr.f32.gmra.mrb[0].mxu0 %v2491
      %v2628 = vpop.f32.mrb[0].mxu0
      %v2629 = vadd.f32 %v1452, %v2628
      %v2630 = vpop.f32.mrb[0].mxu0
      %2631 = vmatprep.mubr.f32.mxu0 0.0
      %2632 = vmatmul.mubr.f32.gmra.mrb[0].mxu0 %v2494
      %v2633 = vpop.f32.mrb[0].mxu0
      %v2634 = vadd.f32 %v1452, %v2633
      %v2635 = vpop.f32.mrb[0].mxu0
      %2636 = vmatprep.mubr.f32.mxu0 0.0
      %2637 = vmatmul.mubr.f32.gmra.mrb[0].mxu0 %v2497
      %v2638 = vpop.f32.mrb[0].mxu0
      %v2639 = vadd.f32 %v1452, %v2638
      %v2640 = vpop.f32.mrb[0].mxu0
      %2641 = vmatprep.mubr.f32.mxu0 0.0
      %2642 = vmatmul.mubr.f32.gmra.mrb[0].mxu0 %v2500
      %v2643 = vpop.f32.mrb[0].mxu0
      %v2644 = vadd.f32 %v1452, %v2643
      %v2645 = vpop.f32.mrb[0].mxu0
      %2646 = vdwg.mxu0
      %v2647 = vadd.f32 %v1569, %v2569
      %v2648 = vadd.f32 %v1574, %v2574
      %v2649 = vadd.f32 %v1579, %v2579
      %v2650 = vadd.f32 %v1584, %v2584
      %v2651 = vadd.f32 %v1589, %v2589
      %v2652 = vadd.f32 %v1594, %v2594
      %v2653 = vadd.f32 %v1599, %v2599
      %v2654 = vadd.f32 %v1604, %v2604
      %v2655 = vadd.f32 %v1609, %v2609
      %v2656 = vadd.f32 %v1614, %v2614
      %v2657 = vadd.f32 %v1619, %v2619
      %v2658 = vadd.f32 %v1624, %v2624
      %v2659 = vadd.f32 %v1629, %v2629
      %v2660 = vadd.f32 %v1634, %v2634
      %v2661 = vadd.f32 %v1639, %v2639
      %v2662 = vadd.f32 %v1644, %v2644
      %v2663 = vld [vmem:[%s6] sm:$0xff]
      %v2664 = vld [vmem:[%s6 + $0x8] sm:$0xff]
      %v2665 = vld [vmem:[%s6 + $0x10] sm:$0xff]
      %v2666 = vld [vmem:[%s6 + $0x18] sm:$0xff]
      %v2667 = vld [vmem:[%s7] sm:$0x1]
      %2668 = vmatprep.subr.mxu0 0.0
      %2669 = vmatpush1.msra.mxu0 %v2663
      %2670 = vmatprep.subr.mxu0 0.0
      %2671 = vmatpush1.msra.mxu0 %v2664
      %2672 = vmatprep.subr.mxu0 0.0
      %2673 = vmatpush1.msra.mxu0 %v2665
      %2674 = vmatprep.subr.mxu0 0.0
      %2675 = vmatpush1.msra.mxu0 %v2666
      %2676 = vmatprep.subr.mxu0 0.0
      %2677 = vmatpush1.msra.mxu0 0.0
      %2678 = vmatprep.subr.mxu0 0.0
      %2679 = vmatpush1.msra.mxu0 0.0
      %2680 = vmatprep.subr.mxu0 0.0
      %2681 = vmatpush1.msra.mxu0 0.0
      %2682 = vmatprep.subr.mxu0 0.0
      %2683 = vmatpush1.msra.mxu0 0.0
      %2684 = vmatprep.subr.mxu0 0.0
      %2685 = vmatpush1.msra.mxu0 0.0
      %2686 = vmatprep.subr.mxu0 0.0
      %2687 = vmatpush1.msra.mxu0 0.0
      %2688 = vmatprep.subr.mxu0 0.0
      %2689 = vmatpush1.msra.mxu0 0.0
      %2690 = vmatprep.subr.mxu0 0.0
      %2691 = vmatpush1.msra.mxu0 0.0
      %2692 = vmatprep.subr.mxu0 0.0
      %2693 = vmatpush1.msra.mxu0 0.0
      %2694 = vmatprep.subr.mxu0 0.0
      %2695 = vmatpush1.msra.mxu0 0.0
      %2696 = vmatprep.subr.mxu0 0.0
      %2697 = vmatpush1.msra.mxu0 0.0
      %2698 = vmatprep.subr.mxu0 0.0
      %2699 = vmatpush1.msra.mxu0 0.0
      %2700 = vmatprep.subr.mxu0 0.0
      %2701 = vmatpush1.msra.mxu0 0.0
      %2702 = vmatprep.subr.mxu0 0.0
      %2703 = vmatpush1.msra.mxu0 0.0
      %2704 = vmatprep.subr.mxu0 0.0
      %2705 = vmatpush1.msra.mxu0 0.0
      %2706 = vmatprep.subr.mxu0 0.0
      %2707 = vmatpush1.msra.mxu0 0.0
      %2708 = vmatprep.subr.mxu0 0.0
      %2709 = vmatpush1.msra.mxu0 0.0
      %2710 = vmatprep.subr.mxu0 0.0
      %2711 = vmatpush1.msra.mxu0 0.0
      %2712 = vmatprep.subr.mxu0 0.0
      %2713 = vmatpush1.msra.mxu0 0.0
      %2714 = vmatprep.subr.mxu0 0.0
      %2715 = vmatpush1.msra.mxu0 0.0
      %2716 = vmatprep.subr.mxu0 0.0
      %2717 = vmatpush1.msra.mxu0 0.0
      %2718 = vmatprep.subr.mxu0 0.0
      %2719 = vmatpush1.msra.mxu0 0.0
      %2720 = vmatprep.subr.mxu0 0.0
      %2721 = vmatpush1.msra.mxu0 0.0
      %2722 = vmatprep.subr.mxu0 0.0
      %2723 = vmatpush1.msra.mxu0 0.0
      %2724 = vmatprep.subr.mxu0 0.0
      %2725 = vmatpush1.msra.mxu0 0.0
      %2726 = vmatprep.subr.mxu0 0.0
      %2727 = vmatpush1.msra.mxu0 0.0
      %2728 = vmatprep.subr.mxu0 0.0
      %2729 = vmatpush1.msra.mxu0 0.0
      %2730 = vmatprep.subr.mxu0 0.0
      %2731 = vmatpush1.msra.mxu0 0.0
      %2732 = vmatprep.mubr.f32.mxu0 0.0
      %2733 = vmatmul.mubr.f32.gmra.mrb[0].mxu0 %v2037
      %v2734 = vpop.f32.mrb[0].mxu0
      %v2735 = vadd.f32 0.0, %v2734
      %v2736 = vpop.f32.mrb[0].mxu0
      %2737 = vmatprep.mubr.f32.mxu0 0.0
      %2738 = vmatmul.mubr.f32.gmra.mrb[0].mxu0 %v2040
      %v2739 = vpop.f32.mrb[0].mxu0
      %v2740 = vadd.f32 0.0, %v2739
      %v2741 = vpop.f32.mrb[0].mxu0
      %2742 = vmatprep.mubr.f32.mxu0 0.0
      %2743 = vmatmul.mubr.f32.gmra.mrb[0].mxu0 %v2043
      %v2744 = vpop.f32.mrb[0].mxu0
      %v2745 = vadd.f32 0.0, %v2744
      %v2746 = vpop.f32.mrb[0].mxu0
      %2747 = vmatprep.mubr.f32.mxu0 0.0
      %2748 = vmatmul.mubr.f32.gmra.mrb[0].mxu0 %v2046
      %v2749 = vpop.f32.mrb[0].mxu0
      %v2750 = vadd.f32 0.0, %v2749
      %v2751 = vpop.f32.mrb[0].mxu0
      %2752 = vmatprep.mubr.f32.mxu0 0.0
      %2753 = vmatmul.mubr.f32.gmra.mrb[0].mxu0 %v2049
      %v2754 = vpop.f32.mrb[0].mxu0
      %v2755 = vadd.f32 0.0, %v2754
      %v2756 = vpop.f32.mrb[0].mxu0
      %2757 = vmatprep.mubr.f32.mxu0 0.0
      %2758 = vmatmul.mubr.f32.gmra.mrb[0].mxu0 %v2052
      %v2759 = vpop.f32.mrb[0].mxu0
      %v2760 = vadd.f32 0.0, %v2759
      %v2761 = vpop.f32.mrb[0].mxu0
      %2762 = vmatprep.mubr.f32.mxu0 0.0
      %2763 = vmatmul.mubr.f32.gmra.mrb[0].mxu0 %v2055
      %v2764 = vpop.f32.mrb[0].mxu0
      %v2765 = vadd.f32 0.0, %v2764
      %v2766 = vpop.f32.mrb[0].mxu0
      %2767 = vmatprep.mubr.f32.mxu0 0.0
      %2768 = vmatmul.mubr.f32.gmra.mrb[0].mxu0 %v2058
      %v2769 = vpop.f32.mrb[0].mxu0
      %v2770 = vadd.f32 0.0, %v2769
      %v2771 = vpop.f32.mrb[0].mxu0
      %2772 = vmatprep.mubr.f32.mxu0 0.0
      %2773 = vmatmul.mubr.f32.gmra.mrb[0].mxu0 %v2061
      %v2774 = vpop.f32.mrb[0].mxu0
      %v2775 = vadd.f32 0.0, %v2774
      %v2776 = vpop.f32.mrb[0].mxu0
      %2777 = vmatprep.mubr.f32.mxu0 0.0
      %2778 = vmatmul.mubr.f32.gmra.mrb[0].mxu0 %v2064
      %v2779 = vpop.f32.mrb[0].mxu0
      %v2780 = vadd.f32 0.0, %v2779
      %v2781 = vpop.f32.mrb[0].mxu0
      %2782 = vmatprep.mubr.f32.mxu0 0.0
      %2783 = vmatmul.mubr.f32.gmra.mrb[0].mxu0 %v2067
      %v2784 = vpop.f32.mrb[0].mxu0
      %v2785 = vadd.f32 0.0, %v2784
      %v2786 = vpop.f32.mrb[0].mxu0
      %2787 = vmatprep.mubr.f32.mxu0 0.0
      %2788 = vmatmul.mubr.f32.gmra.mrb[0].mxu0 %v2070
      %v2789 = vpop.f32.mrb[0].mxu0
      %v2790 = vadd.f32 0.0, %v2789
      %v2791 = vpop.f32.mrb[0].mxu0
      %2792 = vmatprep.mubr.f32.mxu0 0.0
      %2793 = vmatmul.mubr.f32.gmra.mrb[0].mxu0 %v2073
      %v2794 = vpop.f32.mrb[0].mxu0
      %v2795 = vadd.f32 0.0, %v2794
      %v2796 = vpop.f32.mrb[0].mxu0
      %2797 = vmatprep.mubr.f32.mxu0 0.0
      %2798 = vmatmul.mubr.f32.gmra.mrb[0].mxu0 %v2076
      %v2799 = vpop.f32.mrb[0].mxu0
      %v2800 = vadd.f32 0.0, %v2799
      %v2801 = vpop.f32.mrb[0].mxu0
      %2802 = vmatprep.mubr.f32.mxu0 0.0
      %2803 = vmatmul.mubr.f32.gmra.mrb[0].mxu0 %v2079
      %v2804 = vpop.f32.mrb[0].mxu0
      %v2805 = vadd.f32 0.0, %v2804
      %v2806 = vpop.f32.mrb[0].mxu0
      %2807 = vmatprep.mubr.f32.mxu0 0.0
      %2808 = vmatmul.mubr.f32.gmra.mrb[0].mxu0 %v2082
      %v2809 = vpop.f32.mrb[0].mxu0
      %v2810 = vadd.f32 0.0, %v2809
      %v2811 = vpop.f32.mrb[0].mxu0
      %2812 = vdwg.mxu0
      %v2813 = vpack.c.bf16 %v2740, %v2735
      %v2814 = vpack.c.bf16 %v2750, %v2745
      %v2815 = vpack.c.bf16 %v2760, %v2755
      %v2816 = vpack.c.bf16 %v2770, %v2765
      %v2817 = vpack.c.bf16 %v2780, %v2775
      %v2818 = vpack.c.bf16 %v2790, %v2785
      %v2819 = vpack.c.bf16 %v2800, %v2795
      %v2820 = vpack.c.bf16 %v2810, %v2805
      %v2822 = vlaneseq
      %v2823 = vshrl.u32 %v2822, 7
      %v2824 = vsub.s32 0, %v2823
      %v2825 = vrot.slane %v2667, %v2824
      %2827 = vmatprep.subr.bf16.mxu0 0
      %2828 = vmatpush1.bf16.msra.mxu0 %v2813
      %2829 = vmatprep.subr.bf16.mxu0 0
      %2830 = vmatpush1.bf16.msra.mxu0 %v2814
      %2831 = vmatprep.subr.bf16.mxu0 0
      %2832 = vmatpush1.bf16.msra.mxu0 %v2815
      %2833 = vmatprep.subr.bf16.mxu0 0
      %2834 = vmatpush1.bf16.msra.mxu0 %v2816
      %2835 = vmatprep.subr.bf16.mxu0 0
      %2836 = vmatpush1.bf16.msra.mxu0 %v2817
      %2837 = vmatprep.subr.bf16.mxu0 0
      %2838 = vmatpush1.bf16.msra.mxu0 %v2818
      %2839 = vmatprep.subr.bf16.mxu0 0
      %2840 = vmatpush1.bf16.msra.mxu0 %v2819
      %2841 = vmatprep.subr.bf16.mxu0 0
      %2842 = vmatpush1.bf16.msra.mxu0 %v2820
      %2843 = vmatprep.subr.bf16.mxu0 0
      %2844 = vmatpush1.bf16.msra.mxu0 0
      %2845 = vmatprep.subr.bf16.mxu0 0
      %2846 = vmatpush1.bf16.msra.mxu0 0
      %2847 = vmatprep.subr.bf16.mxu0 0
      %2848 = vmatpush1.bf16.msra.mxu0 0
      %2849 = vmatprep.subr.bf16.mxu0 0
      %2850 = vmatpush1.bf16.msra.mxu0 0
      %2851 = vmatprep.subr.bf16.mxu0 0
      %2852 = vmatpush1.bf16.msra.mxu0 0
      %2853 = vmatprep.subr.bf16.mxu0 0
      %2854 = vmatpush1.bf16.msra.mxu0 0
      %2855 = vmatprep.subr.bf16.mxu0 0
      %2856 = vmatpush1.bf16.msra.mxu0 0
      %2857 = vmatprep.subr.bf16.mxu0 0
      %2858 = vmatpush1.bf16.msra.mxu0 0
      %2859 = vmatprep.mubr.bf16.mxu0 0
      %2860 = vmatmul.mubr.bf16.gmra.mrb[0].mxu0 %v689
      %v2861 = vpop.f32.mrb[0].mxu0
      %v2862 = vadd.f32 %v2825, %v2861
      %v2863 = vpop.f32.mrb[0].mxu0
      %v2864 = vpop.f32.mrb[0].mxu0
      %v2865 = vadd.f32 %v2825, %v2864
      %v2866 = vpop.f32.mrb[0].mxu0
      %2867 = vmatprep.mubr.bf16.mxu0 0
      %2868 = vmatmul.mubr.bf16.gmra.mrb[0].mxu0 %v690
      %v2869 = vpop.f32.mrb[0].mxu0
      %v2870 = vadd.f32 %v2825, %v2869
      %v2871 = vpop.f32.mrb[0].mxu0
      %v2872 = vpop.f32.mrb[0].mxu0
      %v2873 = vadd.f32 %v2825, %v2872
      %v2874 = vpop.f32.mrb[0].mxu0
      %2875 = vmatprep.mubr.bf16.mxu0 0
      %2876 = vmatmul.mubr.bf16.gmra.mrb[0].mxu0 %v691
      %v2877 = vpop.f32.mrb[0].mxu0
      %v2878 = vadd.f32 %v2825, %v2877
      %v2879 = vpop.f32.mrb[0].mxu0
      %v2880 = vpop.f32.mrb[0].mxu0
      %v2881 = vadd.f32 %v2825, %v2880
      %v2882 = vpop.f32.mrb[0].mxu0
      %2883 = vmatprep.mubr.bf16.mxu0 0
      %2884 = vmatmul.mubr.bf16.gmra.mrb[0].mxu0 %v692
      %v2885 = vpop.f32.mrb[0].mxu0
      %v2886 = vadd.f32 %v2825, %v2885
      %v2887 = vpop.f32.mrb[0].mxu0
      %v2888 = vpop.f32.mrb[0].mxu0
      %v2889 = vadd.f32 %v2825, %v2888
      %v2890 = vpop.f32.mrb[0].mxu0
      %2891 = vmatprep.mubr.bf16.mxu0 0
      %2892 = vmatmul.mubr.bf16.gmra.mrb[0].mxu0 %v693
      %v2893 = vpop.f32.mrb[0].mxu0
      %v2894 = vadd.f32 %v2825, %v2893
      %v2895 = vpop.f32.mrb[0].mxu0
      %v2896 = vpop.f32.mrb[0].mxu0
      %v2897 = vadd.f32 %v2825, %v2896
      %v2898 = vpop.f32.mrb[0].mxu0
      %2899 = vmatprep.mubr.bf16.mxu0 0
      %2900 = vmatmul.mubr.bf16.gmra.mrb[0].mxu0 %v694
      %v2901 = vpop.f32.mrb[0].mxu0
      %v2902 = vadd.f32 %v2825, %v2901
      %v2903 = vpop.f32.mrb[0].mxu0
      %v2904 = vpop.f32.mrb[0].mxu0
      %v2905 = vadd.f32 %v2825, %v2904
      %v2906 = vpop.f32.mrb[0].mxu0
      %2907 = vmatprep.mubr.bf16.mxu0 0
      %2908 = vmatmul.mubr.bf16.gmra.mrb[0].mxu0 %v695
      %v2909 = vpop.f32.mrb[0].mxu0
      %v2910 = vadd.f32 %v2825, %v2909
      %v2911 = vpop.f32.mrb[0].mxu0
      %v2912 = vpop.f32.mrb[0].mxu0
      %v2913 = vadd.f32 %v2825, %v2912
      %v2914 = vpop.f32.mrb[0].mxu0
      %2915 = vmatprep.mubr.bf16.mxu0 0
      %2916 = vmatmul.mubr.bf16.gmra.mrb[0].mxu0 %v696
      %v2917 = vpop.f32.mrb[0].mxu0
      %v2918 = vadd.f32 %v2825, %v2917
      %v2919 = vpop.f32.mrb[0].mxu0
      %v2920 = vpop.f32.mrb[0].mxu0
      %v2921 = vadd.f32 %v2825, %v2920
      %v2922 = vpop.f32.mrb[0].mxu0
      %2923 = vdwg.mxu0
      %v2924 = vmax.f32 %v2862, 0.0
      %v2925 = vmax.f32 %v2865, 0.0
      %v2926 = vmax.f32 %v2870, 0.0
      %v2927 = vmax.f32 %v2873, 0.0
      %v2928 = vmax.f32 %v2878, 0.0
      %v2929 = vmax.f32 %v2881, 0.0
      %v2930 = vmax.f32 %v2886, 0.0
      %v2931 = vmax.f32 %v2889, 0.0
      %v2932 = vmax.f32 %v2894, 0.0
      %v2933 = vmax.f32 %v2897, 0.0
      %v2934 = vmax.f32 %v2902, 0.0
      %v2935 = vmax.f32 %v2905, 0.0
      %v2936 = vmax.f32 %v2910, 0.0
      %v2937 = vmax.f32 %v2913, 0.0
      %v2938 = vmax.f32 %v2918, 0.0
      %v2939 = vmax.f32 %v2921, 0.0
      %v2940 = vmul.f32 %v2924, %v2924
      %v2941 = vmul.f32 %v2925, %v2925
      %v2942 = vmul.f32 %v2926, %v2926
      %v2943 = vmul.f32 %v2927, %v2927
      %v2944 = vmul.f32 %v2928, %v2928
      %v2945 = vmul.f32 %v2929, %v2929
      %v2946 = vmul.f32 %v2930, %v2930
      %v2947 = vmul.f32 %v2931, %v2931
      %v2948 = vmul.f32 %v2932, %v2932
      %v2949 = vmul.f32 %v2933, %v2933
      %v2950 = vmul.f32 %v2934, %v2934
      %v2951 = vmul.f32 %v2935, %v2935
      %v2952 = vmul.f32 %v2936, %v2936
      %v2953 = vmul.f32 %v2937, %v2937
      %v2954 = vmul.f32 %v2938, %v2938
      %v2955 = vmul.f32 %v2939, %v2939
      %v2956 = vsel %vm932, %v2940, 0.0
      %2957 = vadd.xlane.f32.xlu0 %v2956
      %v2958 = vpop.xlane.xlu0 %2957
      %v2959 = vsel %vm932, %v2941, 0.0
      %2960 = vadd.xlane.f32.xlu0 %v2959
      %v2961 = vpop.xlane.xlu0 %2960
      %v2962 = vsel %vm932, %v2942, 0.0
      %2963 = vadd.xlane.f32.xlu0 %v2962
      %v2964 = vpop.xlane.xlu0 %2963
      %v2965 = vsel %vm932, %v2943, 0.0
      %2966 = vadd.xlane.f32.xlu0 %v2965
      %v2967 = vpop.xlane.xlu0 %2966
      %v2968 = vsel %vm932, %v2944, 0.0
      %2969 = vadd.xlane.f32.xlu0 %v2968
      %v2970 = vpop.xlane.xlu0 %2969
      %v2971 = vsel %vm932, %v2945, 0.0
      %2972 = vadd.xlane.f32.xlu0 %v2971
      %v2973 = vpop.xlane.xlu0 %2972
      %v2974 = vsel %vm932, %v2946, 0.0
      %2975 = vadd.xlane.f32.xlu0 %v2974
      %v2976 = vpop.xlane.xlu0 %2975
      %v2977 = vsel %vm932, %v2947, 0.0
      %2978 = vadd.xlane.f32.xlu0 %v2977
      %v2979 = vpop.xlane.xlu0 %2978
      %v2980 = vsel %vm932, %v2948, 0.0
      %2981 = vadd.xlane.f32.xlu0 %v2980
      %v2982 = vpop.xlane.xlu0 %2981
      %v2983 = vsel %vm932, %v2949, 0.0
      %2984 = vadd.xlane.f32.xlu0 %v2983
      %v2985 = vpop.xlane.xlu0 %2984
      %v2986 = vsel %vm932, %v2950, 0.0
      %2987 = vadd.xlane.f32.xlu0 %v2986
      %v2988 = vpop.xlane.xlu0 %2987
      %v2989 = vsel %vm932, %v2951, 0.0
      %2990 = vadd.xlane.f32.xlu0 %v2989
      %v2991 = vpop.xlane.xlu0 %2990
      %v2992 = vsel %vm932, %v2952, 0.0
      %2993 = vadd.xlane.f32.xlu0 %v2992
      %v2994 = vpop.xlane.xlu0 %2993
      %v2995 = vsel %vm932, %v2953, 0.0
      %2996 = vadd.xlane.f32.xlu0 %v2995
      %v2997 = vpop.xlane.xlu0 %2996
      %v2998 = vsel %vm932, %v2954, 0.0
      %2999 = vadd.xlane.f32.xlu0 %v2998
      %v3000 = vpop.xlane.xlu0 %2999
      %v3001 = vsel %vm932, %v2955, 0.0
      %3002 = vadd.xlane.f32.xlu0 %v3001
      %v3003 = vpop.xlane.xlu0 %3002
      %v3004 = vmax.f32 %v2958, 1e-24
      %v3005 = vmax.f32 %v2961, 1e-24
      %v3006 = vmax.f32 %v2964, 1e-24
      %v3007 = vmax.f32 %v2967, 1e-24
      %v3008 = vmax.f32 %v2970, 1e-24
      %v3009 = vmax.f32 %v2973, 1e-24
      %v3010 = vmax.f32 %v2976, 1e-24
      %v3011 = vmax.f32 %v2979, 1e-24
      %v3012 = vmax.f32 %v2982, 1e-24
      %v3013 = vmax.f32 %v2985, 1e-24
      %v3014 = vmax.f32 %v2988, 1e-24
      %v3015 = vmax.f32 %v2991, 1e-24
      %v3016 = vmax.f32 %v2994, 1e-24
      %v3017 = vmax.f32 %v2997, 1e-24
      %v3018 = vmax.f32 %v3000, 1e-24
      %v3019 = vmax.f32 %v3003, 1e-24
      %v3020 = vrsqrt.pop %v3004
      %v3021 = vrsqrt.pop %v3005
      %v3022 = vrsqrt.pop %v3006
      %v3023 = vrsqrt.pop %v3007
      %v3024 = vrsqrt.pop %v3008
      %v3025 = vrsqrt.pop %v3009
      %v3026 = vrsqrt.pop %v3010
      %v3027 = vrsqrt.pop %v3011
      %v3028 = vrsqrt.pop %v3012
      %v3029 = vrsqrt.pop %v3013
      %v3030 = vrsqrt.pop %v3014
      %v3031 = vrsqrt.pop %v3015
      %v3032 = vrsqrt.pop %v3016
      %v3033 = vrsqrt.pop %v3017
      %v3034 = vrsqrt.pop %v3018
      %v3035 = vrsqrt.pop %v3019
      %v3036 = vmul.f32 %v2924, %v3020
      %v3037 = vmul.f32 %v2925, %v3021
      %v3038 = vmul.f32 %v2926, %v3022
      %v3039 = vmul.f32 %v2927, %v3023
      %v3040 = vmul.f32 %v2928, %v3024
      %v3041 = vmul.f32 %v2929, %v3025
      %v3042 = vmul.f32 %v2930, %v3026
      %v3043 = vmul.f32 %v2931, %v3027
      %v3044 = vmul.f32 %v2932, %v3028
      %v3045 = vmul.f32 %v2933, %v3029
      %v3046 = vmul.f32 %v2934, %v3030
      %v3047 = vmul.f32 %v2935, %v3031
      %v3048 = vmul.f32 %v2936, %v3032
      %v3049 = vmul.f32 %v2937, %v3033
      %v3050 = vmul.f32 %v2938, %v3034
      %v3051 = vmul.f32 %v2939, %v3035
      %v3053 = vsel %vm932, %v3036, 0
      %v3056 = vsel %vm932, %v3037, 0
      %v3059 = vsel %vm932, %v3038, 0
      %v3062 = vsel %vm932, %v3039, 0
      %v3065 = vsel %vm932, %v3040, 0
      %v3068 = vsel %vm932, %v3041, 0
      %v3071 = vsel %vm932, %v3042, 0
      %v3074 = vsel %vm932, %v3043, 0
      %v3077 = vsel %vm932, %v3044, 0
      %v3080 = vsel %vm932, %v3045, 0
      %v3083 = vsel %vm932, %v3046, 0
      %v3086 = vsel %vm932, %v3047, 0
      %v3089 = vsel %vm932, %v3048, 0
      %v3092 = vsel %vm932, %v3049, 0
      %v3095 = vsel %vm932, %v3050, 0
      %v3098 = vsel %vm932, %v3051, 0
      %3100 = vmatprep.subr.mxu0 0.0
      %3101 = vmatpush1.msra.mxu0 %v697
      %3102 = vmatprep.subr.mxu0 0.0
      %3103 = vmatpush1.msra.mxu0 %v698
      %3104 = vmatprep.subr.mxu0 0.0
      %3105 = vmatpush1.msra.mxu0 %v699
      %3106 = vmatprep.subr.mxu0 0.0
      %3107 = vmatpush1.msra.mxu0 %v700
      %3108 = vmatprep.subr.mxu0 0.0
      %3109 = vmatpush1.msra.mxu0 0.0
      %3110 = vmatprep.subr.mxu0 0.0
      %3111 = vmatpush1.msra.mxu0 0.0
      %3112 = vmatprep.subr.mxu0 0.0
      %3113 = vmatpush1.msra.mxu0 0.0
      %3114 = vmatprep.subr.mxu0 0.0
      %3115 = vmatpush1.msra.mxu0 0.0
      %3116 = vmatprep.subr.mxu0 0.0
      %3117 = vmatpush1.msra.mxu0 0.0
      %3118 = vmatprep.subr.mxu0 0.0
      %3119 = vmatpush1.msra.mxu0 0.0
      %3120 = vmatprep.subr.mxu0 0.0
      %3121 = vmatpush1.msra.mxu0 0.0
      %3122 = vmatprep.subr.mxu0 0.0
      %3123 = vmatpush1.msra.mxu0 0.0
      %3124 = vmatprep.subr.mxu0 0.0
      %3125 = vmatpush1.msra.mxu0 0.0
      %3126 = vmatprep.subr.mxu0 0.0
      %3127 = vmatpush1.msra.mxu0 0.0
      %3128 = vmatprep.subr.mxu0 0.0
      %3129 = vmatpush1.msra.mxu0 0.0
      %3130 = vmatprep.subr.mxu0 0.0
      %3131 = vmatpush1.msra.mxu0 0.0
      %3132 = vmatprep.subr.mxu0 0.0
      %3133 = vmatpush1.msra.mxu0 0.0
      %3134 = vmatprep.subr.mxu0 0.0
      %3135 = vmatpush1.msra.mxu0 0.0
      %3136 = vmatprep.subr.mxu0 0.0
      %3137 = vmatpush1.msra.mxu0 0.0
      %3138 = vmatprep.subr.mxu0 0.0
      %3139 = vmatpush1.msra.mxu0 0.0
      %3140 = vmatprep.subr.mxu0 0.0
      %3141 = vmatpush1.msra.mxu0 0.0
      %3142 = vmatprep.subr.mxu0 0.0
      %3143 = vmatpush1.msra.mxu0 0.0
      %3144 = vmatprep.subr.mxu0 0.0
      %3145 = vmatpush1.msra.mxu0 0.0
      %3146 = vmatprep.subr.mxu0 0.0
      %3147 = vmatpush1.msra.mxu0 0.0
      %3148 = vmatprep.subr.mxu0 0.0
      %3149 = vmatpush1.msra.mxu0 0.0
      %3150 = vmatprep.subr.mxu0 0.0
      %3151 = vmatpush1.msra.mxu0 0.0
      %3152 = vmatprep.subr.mxu0 0.0
      %3153 = vmatpush1.msra.mxu0 0.0
      %3154 = vmatprep.subr.mxu0 0.0
      %3155 = vmatpush1.msra.mxu0 0.0
      %3156 = vmatprep.subr.mxu0 0.0
      %3157 = vmatpush1.msra.mxu0 0.0
      %3158 = vmatprep.subr.mxu0 0.0
      %3159 = vmatpush1.msra.mxu0 0.0
      %3160 = vmatprep.subr.mxu0 0.0
      %3161 = vmatpush1.msra.mxu0 0.0
      %3162 = vmatprep.subr.mxu0 0.0
      %3163 = vmatpush1.msra.mxu0 0.0
      %3164 = vmatprep.mubr.f32.mxu0 0.0
      %3165 = vmatmul.mubr.f32.gmra.mrb[0].mxu0 %v3053
      %v3166 = vpop.f32.mrb[0].mxu0
      %v3167 = vadd.f32 %v722, %v3166
      %v3168 = vpop.f32.mrb[0].mxu0
      %3169 = vmatprep.mubr.f32.mxu0 0.0
      %3170 = vmatmul.mubr.f32.gmra.mrb[0].mxu0 %v3056
      %v3171 = vpop.f32.mrb[0].mxu0
      %v3172 = vadd.f32 %v722, %v3171
      %v3173 = vpop.f32.mrb[0].mxu0
      %3174 = vmatprep.mubr.f32.mxu0 0.0
      %3175 = vmatmul.mubr.f32.gmra.mrb[0].mxu0 %v3059
      %v3176 = vpop.f32.mrb[0].mxu0
      %v3177 = vadd.f32 %v722, %v3176
      %v3178 = vpop.f32.mrb[0].mxu0
      %3179 = vmatprep.mubr.f32.mxu0 0.0
      %3180 = vmatmul.mubr.f32.gmra.mrb[0].mxu0 %v3062
      %v3181 = vpop.f32.mrb[0].mxu0
      %v3182 = vadd.f32 %v722, %v3181
      %v3183 = vpop.f32.mrb[0].mxu0
      %3184 = vmatprep.mubr.f32.mxu0 0.0
      %3185 = vmatmul.mubr.f32.gmra.mrb[0].mxu0 %v3065
      %v3186 = vpop.f32.mrb[0].mxu0
      %v3187 = vadd.f32 %v722, %v3186
      %v3188 = vpop.f32.mrb[0].mxu0
      %3189 = vmatprep.mubr.f32.mxu0 0.0
      %3190 = vmatmul.mubr.f32.gmra.mrb[0].mxu0 %v3068
      %v3191 = vpop.f32.mrb[0].mxu0
      %v3192 = vadd.f32 %v722, %v3191
      %v3193 = vpop.f32.mrb[0].mxu0
      %3194 = vmatprep.mubr.f32.mxu0 0.0
      %3195 = vmatmul.mubr.f32.gmra.mrb[0].mxu0 %v3071
      %v3196 = vpop.f32.mrb[0].mxu0
      %v3197 = vadd.f32 %v722, %v3196
      %v3198 = vpop.f32.mrb[0].mxu0
      %3199 = vmatprep.mubr.f32.mxu0 0.0
      %3200 = vmatmul.mubr.f32.gmra.mrb[0].mxu0 %v3074
      %v3201 = vpop.f32.mrb[0].mxu0
      %v3202 = vadd.f32 %v722, %v3201
      %v3203 = vpop.f32.mrb[0].mxu0
      %3204 = vmatprep.mubr.f32.mxu0 0.0
      %3205 = vmatmul.mubr.f32.gmra.mrb[0].mxu0 %v3077
      %v3206 = vpop.f32.mrb[0].mxu0
      %v3207 = vadd.f32 %v722, %v3206
      %v3208 = vpop.f32.mrb[0].mxu0
      %3209 = vmatprep.mubr.f32.mxu0 0.0
      %3210 = vmatmul.mubr.f32.gmra.mrb[0].mxu0 %v3080
      %v3211 = vpop.f32.mrb[0].mxu0
      %v3212 = vadd.f32 %v722, %v3211
      %v3213 = vpop.f32.mrb[0].mxu0
      %3214 = vmatprep.mubr.f32.mxu0 0.0
      %3215 = vmatmul.mubr.f32.gmra.mrb[0].mxu0 %v3083
      %v3216 = vpop.f32.mrb[0].mxu0
      %v3217 = vadd.f32 %v722, %v3216
      %v3218 = vpop.f32.mrb[0].mxu0
      %3219 = vmatprep.mubr.f32.mxu0 0.0
      %3220 = vmatmul.mubr.f32.gmra.mrb[0].mxu0 %v3086
      %v3221 = vpop.f32.mrb[0].mxu0
      %v3222 = vadd.f32 %v722, %v3221
      %v3223 = vpop.f32.mrb[0].mxu0
      %3224 = vmatprep.mubr.f32.mxu0 0.0
      %3225 = vmatmul.mubr.f32.gmra.mrb[0].mxu0 %v3089
      %v3226 = vpop.f32.mrb[0].mxu0
      %v3227 = vadd.f32 %v722, %v3226
      %v3228 = vpop.f32.mrb[0].mxu0
      %3229 = vmatprep.mubr.f32.mxu0 0.0
      %3230 = vmatmul.mubr.f32.gmra.mrb[0].mxu0 %v3092
      %v3231 = vpop.f32.mrb[0].mxu0
      %v3232 = vadd.f32 %v722, %v3231
      %v3233 = vpop.f32.mrb[0].mxu0
      %3234 = vmatprep.mubr.f32.mxu0 0.0
      %3235 = vmatmul.mubr.f32.gmra.mrb[0].mxu0 %v3095
      %v3236 = vpop.f32.mrb[0].mxu0
      %v3237 = vadd.f32 %v722, %v3236
      %v3238 = vpop.f32.mrb[0].mxu0
      %3239 = vmatprep.mubr.f32.mxu0 0.0
      %3240 = vmatmul.mubr.f32.gmra.mrb[0].mxu0 %v3098
      %v3241 = vpop.f32.mrb[0].mxu0
      %v3242 = vadd.f32 %v722, %v3241
      %v3243 = vpop.f32.mrb[0].mxu0
      %3244 = vdwg.mxu0
      %v3245 = vmax.f32 %v3167, 0.0
      %v3246 = vmax.f32 %v3172, 0.0
      %v3247 = vmax.f32 %v3177, 0.0
      %v3248 = vmax.f32 %v3182, 0.0
      %v3249 = vmax.f32 %v3187, 0.0
      %v3250 = vmax.f32 %v3192, 0.0
      %v3251 = vmax.f32 %v3197, 0.0
      %v3252 = vmax.f32 %v3202, 0.0
      %v3253 = vmax.f32 %v3207, 0.0
      %v3254 = vmax.f32 %v3212, 0.0
      %v3255 = vmax.f32 %v3217, 0.0
      %v3256 = vmax.f32 %v3222, 0.0
      %v3257 = vmax.f32 %v3227, 0.0
      %v3258 = vmax.f32 %v3232, 0.0
      %v3259 = vmax.f32 %v3237, 0.0
      %v3260 = vmax.f32 %v3242, 0.0
      %v3262 = vsel %vm1238, %v3245, 0
      %v3265 = vsel %vm1238, %v3246, 0
      %v3268 = vsel %vm1238, %v3247, 0
      %v3271 = vsel %vm1238, %v3248, 0
      %v3274 = vsel %vm1238, %v3249, 0
      %v3277 = vsel %vm1238, %v3250, 0
      %v3280 = vsel %vm1238, %v3251, 0
      %v3283 = vsel %vm1238, %v3252, 0
      %v3286 = vsel %vm1238, %v3253, 0
      %v3289 = vsel %vm1238, %v3254, 0
      %v3292 = vsel %vm1238, %v3255, 0
      %v3295 = vsel %vm1238, %v3256, 0
      %v3298 = vsel %vm1238, %v3257, 0
      %v3301 = vsel %vm1238, %v3258, 0
      %v3304 = vsel %vm1238, %v3259, 0
      %v3307 = vsel %vm1238, %v3260, 0
      %3309 = vmatprep.subr.mxu0 0.0
      %3310 = vmatpush1.msra.mxu0 %v701
      %3311 = vmatprep.subr.mxu0 0.0
      %3312 = vmatpush1.msra.mxu0 %v702
      %3313 = vmatprep.subr.mxu0 0.0
      %3314 = vmatpush1.msra.mxu0 %v703
      %3315 = vmatprep.subr.mxu0 0.0
      %3316 = vmatpush1.msra.mxu0 %v704
      %3317 = vmatprep.subr.mxu0 0.0
      %3318 = vmatpush1.msra.mxu0 %v705
      %3319 = vmatprep.subr.mxu0 0.0
      %3320 = vmatpush1.msra.mxu0 %v706
      %3321 = vmatprep.subr.mxu0 0.0
      %3322 = vmatpush1.msra.mxu0 %v707
      %3323 = vmatprep.subr.mxu0 0.0
      %3324 = vmatpush1.msra.mxu0 %v708
      %3325 = vmatprep.subr.mxu0 0.0
      %3326 = vmatpush1.msra.mxu0 0.0
      %3327 = vmatprep.subr.mxu0 0.0
      %3328 = vmatpush1.msra.mxu0 0.0
      %3329 = vmatprep.subr.mxu0 0.0
      %3330 = vmatpush1.msra.mxu0 0.0
      %3331 = vmatprep.subr.mxu0 0.0
      %3332 = vmatpush1.msra.mxu0 0.0
      %3333 = vmatprep.subr.mxu0 0.0
      %3334 = vmatpush1.msra.mxu0 0.0
      %3335 = vmatprep.subr.mxu0 0.0
      %3336 = vmatpush1.msra.mxu0 0.0
      %3337 = vmatprep.subr.mxu0 0.0
      %3338 = vmatpush1.msra.mxu0 0.0
      %3339 = vmatprep.subr.mxu0 0.0
      %3340 = vmatpush1.msra.mxu0 0.0
      %3341 = vmatprep.subr.mxu0 0.0
      %3342 = vmatpush1.msra.mxu0 0.0
      %3343 = vmatprep.subr.mxu0 0.0
      %3344 = vmatpush1.msra.mxu0 0.0
      %3345 = vmatprep.subr.mxu0 0.0
      %3346 = vmatpush1.msra.mxu0 0.0
      %3347 = vmatprep.subr.mxu0 0.0
      %3348 = vmatpush1.msra.mxu0 0.0
      %3349 = vmatprep.subr.mxu0 0.0
      %3350 = vmatpush1.msra.mxu0 0.0
      %3351 = vmatprep.subr.mxu0 0.0
      %3352 = vmatpush1.msra.mxu0 0.0
      %3353 = vmatprep.subr.mxu0 0.0
      %3354 = vmatpush1.msra.mxu0 0.0
      %3355 = vmatprep.subr.mxu0 0.0
      %3356 = vmatpush1.msra.mxu0 0.0
      %3357 = vmatprep.subr.mxu0 0.0
      %3358 = vmatpush1.msra.mxu0 0.0
      %3359 = vmatprep.subr.mxu0 0.0
      %3360 = vmatpush1.msra.mxu0 0.0
      %3361 = vmatprep.subr.mxu0 0.0
      %3362 = vmatpush1.msra.mxu0 0.0
      %3363 = vmatprep.subr.mxu0 0.0
      %3364 = vmatpush1.msra.mxu0 0.0
      %3365 = vmatprep.subr.mxu0 0.0
      %3366 = vmatpush1.msra.mxu0 0.0
      %3367 = vmatprep.subr.mxu0 0.0
      %3368 = vmatpush1.msra.mxu0 0.0
      %3369 = vmatprep.subr.mxu0 0.0
      %3370 = vmatpush1.msra.mxu0 0.0
      %3371 = vmatprep.subr.mxu0 0.0
      %3372 = vmatpush1.msra.mxu0 0.0
      %3373 = vmatprep.mubr.f32.mxu0 0.0
      %3374 = vmatmul.mubr.f32.gmra.mrb[0].mxu0 %v3262
      %v3375 = vpop.f32.mrb[0].mxu0
      %v3376 = vadd.f32 %v729, %v3375
      %v3377 = vpop.f32.mrb[0].mxu0
      %3378 = vmatprep.mubr.f32.mxu0 0.0
      %3379 = vmatmul.mubr.f32.gmra.mrb[0].mxu0 %v3265
      %v3380 = vpop.f32.mrb[0].mxu0
      %v3381 = vadd.f32 %v729, %v3380
      %v3382 = vpop.f32.mrb[0].mxu0
      %3383 = vmatprep.mubr.f32.mxu0 0.0
      %3384 = vmatmul.mubr.f32.gmra.mrb[0].mxu0 %v3268
      %v3385 = vpop.f32.mrb[0].mxu0
      %v3386 = vadd.f32 %v729, %v3385
      %v3387 = vpop.f32.mrb[0].mxu0
      %3388 = vmatprep.mubr.f32.mxu0 0.0
      %3389 = vmatmul.mubr.f32.gmra.mrb[0].mxu0 %v3271
      %v3390 = vpop.f32.mrb[0].mxu0
      %v3391 = vadd.f32 %v729, %v3390
      %v3392 = vpop.f32.mrb[0].mxu0
      %3393 = vmatprep.mubr.f32.mxu0 0.0
      %3394 = vmatmul.mubr.f32.gmra.mrb[0].mxu0 %v3274
      %v3395 = vpop.f32.mrb[0].mxu0
      %v3396 = vadd.f32 %v729, %v3395
      %v3397 = vpop.f32.mrb[0].mxu0
      %3398 = vmatprep.mubr.f32.mxu0 0.0
      %3399 = vmatmul.mubr.f32.gmra.mrb[0].mxu0 %v3277
      %v3400 = vpop.f32.mrb[0].mxu0
      %v3401 = vadd.f32 %v729, %v3400
      %v3402 = vpop.f32.mrb[0].mxu0
      %3403 = vmatprep.mubr.f32.mxu0 0.0
      %3404 = vmatmul.mubr.f32.gmra.mrb[0].mxu0 %v3280
      %v3405 = vpop.f32.mrb[0].mxu0
      %v3406 = vadd.f32 %v729, %v3405
      %v3407 = vpop.f32.mrb[0].mxu0
      %3408 = vmatprep.mubr.f32.mxu0 0.0
      %3409 = vmatmul.mubr.f32.gmra.mrb[0].mxu0 %v3283
      %v3410 = vpop.f32.mrb[0].mxu0
      %v3411 = vadd.f32 %v729, %v3410
      %v3412 = vpop.f32.mrb[0].mxu0
      %3413 = vmatprep.mubr.f32.mxu0 0.0
      %3414 = vmatmul.mubr.f32.gmra.mrb[0].mxu0 %v3286
      %v3415 = vpop.f32.mrb[0].mxu0
      %v3416 = vadd.f32 %v729, %v3415
      %v3417 = vpop.f32.mrb[0].mxu0
      %3418 = vmatprep.mubr.f32.mxu0 0.0
      %3419 = vmatmul.mubr.f32.gmra.mrb[0].mxu0 %v3289
      %v3420 = vpop.f32.mrb[0].mxu0
      %v3421 = vadd.f32 %v729, %v3420
      %v3422 = vpop.f32.mrb[0].mxu0
      %3423 = vmatprep.mubr.f32.mxu0 0.0
      %3424 = vmatmul.mubr.f32.gmra.mrb[0].mxu0 %v3292
      %v3425 = vpop.f32.mrb[0].mxu0
      %v3426 = vadd.f32 %v729, %v3425
      %v3427 = vpop.f32.mrb[0].mxu0
      %3428 = vmatprep.mubr.f32.mxu0 0.0
      %3429 = vmatmul.mubr.f32.gmra.mrb[0].mxu0 %v3295
      %v3430 = vpop.f32.mrb[0].mxu0
      %v3431 = vadd.f32 %v729, %v3430
      %v3432 = vpop.f32.mrb[0].mxu0
      %3433 = vmatprep.mubr.f32.mxu0 0.0
      %3434 = vmatmul.mubr.f32.gmra.mrb[0].mxu0 %v3298
      %v3435 = vpop.f32.mrb[0].mxu0
      %v3436 = vadd.f32 %v729, %v3435
      %v3437 = vpop.f32.mrb[0].mxu0
      %3438 = vmatprep.mubr.f32.mxu0 0.0
      %3439 = vmatmul.mubr.f32.gmra.mrb[0].mxu0 %v3301
      %v3440 = vpop.f32.mrb[0].mxu0
      %v3441 = vadd.f32 %v729, %v3440
      %v3442 = vpop.f32.mrb[0].mxu0
      %3443 = vmatprep.mubr.f32.mxu0 0.0
      %3444 = vmatmul.mubr.f32.gmra.mrb[0].mxu0 %v3304
      %v3445 = vpop.f32.mrb[0].mxu0
      %v3446 = vadd.f32 %v729, %v3445
      %v3447 = vpop.f32.mrb[0].mxu0
      %3448 = vmatprep.mubr.f32.mxu0 0.0
      %3449 = vmatmul.mubr.f32.gmra.mrb[0].mxu0 %v3307
      %v3450 = vpop.f32.mrb[0].mxu0
      %v3451 = vadd.f32 %v729, %v3450
      %v3452 = vpop.f32.mrb[0].mxu0
      %3453 = vdwg.mxu0
      %v3454 = vmax.f32 %v3376, 0.0
      %v3455 = vmax.f32 %v3381, 0.0
      %v3456 = vmax.f32 %v3386, 0.0
      %v3457 = vmax.f32 %v3391, 0.0
      %v3458 = vmax.f32 %v3396, 0.0
      %v3459 = vmax.f32 %v3401, 0.0
      %v3460 = vmax.f32 %v3406, 0.0
      %v3461 = vmax.f32 %v3411, 0.0
      %v3462 = vmax.f32 %v3416, 0.0
      %v3463 = vmax.f32 %v3421, 0.0
      %v3464 = vmax.f32 %v3426, 0.0
      %v3465 = vmax.f32 %v3431, 0.0
      %v3466 = vmax.f32 %v3436, 0.0
      %v3467 = vmax.f32 %v3441, 0.0
      %v3468 = vmax.f32 %v3446, 0.0
      %v3469 = vmax.f32 %v3451, 0.0
      %v3471 = vsel %vm1238, %v3454, 0
      %v3474 = vsel %vm1238, %v3455, 0
      %v3477 = vsel %vm1238, %v3456, 0
      %v3480 = vsel %vm1238, %v3457, 0
      %v3483 = vsel %vm1238, %v3458, 0
      %v3486 = vsel %vm1238, %v3459, 0
      %v3489 = vsel %vm1238, %v3460, 0
      %v3492 = vsel %vm1238, %v3461, 0
      %v3495 = vsel %vm1238, %v3462, 0
      %v3498 = vsel %vm1238, %v3463, 0
      %v3501 = vsel %vm1238, %v3464, 0
      %v3504 = vsel %vm1238, %v3465, 0
      %v3507 = vsel %vm1238, %v3466, 0
      %v3510 = vsel %vm1238, %v3467, 0
      %v3513 = vsel %vm1238, %v3468, 0
      %v3516 = vsel %vm1238, %v3469, 0
      %3518 = vmatprep.subr.mxu0 0.0
      %3519 = vmatpush1.msra.mxu0 %v709
      %3520 = vmatprep.subr.mxu0 0.0
      %3521 = vmatpush1.msra.mxu0 %v710
      %3522 = vmatprep.subr.mxu0 0.0
      %3523 = vmatpush1.msra.mxu0 %v711
      %3524 = vmatprep.subr.mxu0 0.0
      %3525 = vmatpush1.msra.mxu0 %v712
      %3526 = vmatprep.subr.mxu0 0.0
      %3527 = vmatpush1.msra.mxu0 %v713
      %3528 = vmatprep.subr.mxu0 0.0
      %3529 = vmatpush1.msra.mxu0 %v714
      %3530 = vmatprep.subr.mxu0 0.0
      %3531 = vmatpush1.msra.mxu0 %v715
      %3532 = vmatprep.subr.mxu0 0.0
      %3533 = vmatpush1.msra.mxu0 %v716
      %3534 = vmatprep.subr.mxu0 0.0
      %3535 = vmatpush1.msra.mxu0 0.0
      %3536 = vmatprep.subr.mxu0 0.0
      %3537 = vmatpush1.msra.mxu0 0.0
      %3538 = vmatprep.subr.mxu0 0.0
      %3539 = vmatpush1.msra.mxu0 0.0
      %3540 = vmatprep.subr.mxu0 0.0
      %3541 = vmatpush1.msra.mxu0 0.0
      %3542 = vmatprep.subr.mxu0 0.0
      %3543 = vmatpush1.msra.mxu0 0.0
      %3544 = vmatprep.subr.mxu0 0.0
      %3545 = vmatpush1.msra.mxu0 0.0
      %3546 = vmatprep.subr.mxu0 0.0
      %3547 = vmatpush1.msra.mxu0 0.0
      %3548 = vmatprep.subr.mxu0 0.0
      %3549 = vmatpush1.msra.mxu0 0.0
      %3550 = vmatprep.subr.mxu0 0.0
      %3551 = vmatpush1.msra.mxu0 0.0
      %3552 = vmatprep.subr.mxu0 0.0
      %3553 = vmatpush1.msra.mxu0 0.0
      %3554 = vmatprep.subr.mxu0 0.0
      %3555 = vmatpush1.msra.mxu0 0.0
      %3556 = vmatprep.subr.mxu0 0.0
      %3557 = vmatpush1.msra.mxu0 0.0
      %3558 = vmatprep.subr.mxu0 0.0
      %3559 = vmatpush1.msra.mxu0 0.0
      %3560 = vmatprep.subr.mxu0 0.0
      %3561 = vmatpush1.msra.mxu0 0.0
      %3562 = vmatprep.subr.mxu0 0.0
      %3563 = vmatpush1.msra.mxu0 0.0
      %3564 = vmatprep.subr.mxu0 0.0
      %3565 = vmatpush1.msra.mxu0 0.0
      %3566 = vmatprep.subr.mxu0 0.0
      %3567 = vmatpush1.msra.mxu0 0.0
      %3568 = vmatprep.subr.mxu0 0.0
      %3569 = vmatpush1.msra.mxu0 0.0
      %3570 = vmatprep.subr.mxu0 0.0
      %3571 = vmatpush1.msra.mxu0 0.0
      %3572 = vmatprep.subr.mxu0 0.0
      %3573 = vmatpush1.msra.mxu0 0.0
      %3574 = vmatprep.subr.mxu0 0.0
      %3575 = vmatpush1.msra.mxu0 0.0
      %3576 = vmatprep.subr.mxu0 0.0
      %3577 = vmatpush1.msra.mxu0 0.0
      %3578 = vmatprep.subr.mxu0 0.0
      %3579 = vmatpush1.msra.mxu0 0.0
      %3580 = vmatprep.subr.mxu0 0.0
      %3581 = vmatpush1.msra.mxu0 0.0
      %3582 = vmatprep.mubr.f32.mxu0 0.0
      %3583 = vmatmul.mubr.f32.gmra.mrb[0].mxu0 %v3471
      %v3584 = vpop.f32.mrb[0].mxu0
      %v3585 = vadd.f32 %v1452, %v3584
      %v3586 = vpop.f32.mrb[0].mxu0
      %3587 = vmatprep.mubr.f32.mxu0 0.0
      %3588 = vmatmul.mubr.f32.gmra.mrb[0].mxu0 %v3474
      %v3589 = vpop.f32.mrb[0].mxu0
      %v3590 = vadd.f32 %v1452, %v3589
      %v3591 = vpop.f32.mrb[0].mxu0
      %3592 = vmatprep.mubr.f32.mxu0 0.0
      %3593 = vmatmul.mubr.f32.gmra.mrb[0].mxu0 %v3477
      %v3594 = vpop.f32.mrb[0].mxu0
      %v3595 = vadd.f32 %v1452, %v3594
      %v3596 = vpop.f32.mrb[0].mxu0
      %3597 = vmatprep.mubr.f32.mxu0 0.0
      %3598 = vmatmul.mubr.f32.gmra.mrb[0].mxu0 %v3480
      %v3599 = vpop.f32.mrb[0].mxu0
      %v3600 = vadd.f32 %v1452, %v3599
      %v3601 = vpop.f32.mrb[0].mxu0
      %3602 = vmatprep.mubr.f32.mxu0 0.0
      %3603 = vmatmul.mubr.f32.gmra.mrb[0].mxu0 %v3483
      %v3604 = vpop.f32.mrb[0].mxu0
      %v3605 = vadd.f32 %v1452, %v3604
      %v3606 = vpop.f32.mrb[0].mxu0
      %3607 = vmatprep.mubr.f32.mxu0 0.0
      %3608 = vmatmul.mubr.f32.gmra.mrb[0].mxu0 %v3486
      %v3609 = vpop.f32.mrb[0].mxu0
      %v3610 = vadd.f32 %v1452, %v3609
      %v3611 = vpop.f32.mrb[0].mxu0
      %3612 = vmatprep.mubr.f32.mxu0 0.0
      %3613 = vmatmul.mubr.f32.gmra.mrb[0].mxu0 %v3489
      %v3614 = vpop.f32.mrb[0].mxu0
      %v3615 = vadd.f32 %v1452, %v3614
      %v3616 = vpop.f32.mrb[0].mxu0
      %3617 = vmatprep.mubr.f32.mxu0 0.0
      %3618 = vmatmul.mubr.f32.gmra.mrb[0].mxu0 %v3492
      %v3619 = vpop.f32.mrb[0].mxu0
      %v3620 = vadd.f32 %v1452, %v3619
      %v3621 = vpop.f32.mrb[0].mxu0
      %3622 = vmatprep.mubr.f32.mxu0 0.0
      %3623 = vmatmul.mubr.f32.gmra.mrb[0].mxu0 %v3495
      %v3624 = vpop.f32.mrb[0].mxu0
      %v3625 = vadd.f32 %v1452, %v3624
      %v3626 = vpop.f32.mrb[0].mxu0
      %3627 = vmatprep.mubr.f32.mxu0 0.0
      %3628 = vmatmul.mubr.f32.gmra.mrb[0].mxu0 %v3498
      %v3629 = vpop.f32.mrb[0].mxu0
      %v3630 = vadd.f32 %v1452, %v3629
      %v3631 = vpop.f32.mrb[0].mxu0
      %3632 = vmatprep.mubr.f32.mxu0 0.0
      %3633 = vmatmul.mubr.f32.gmra.mrb[0].mxu0 %v3501
      %v3634 = vpop.f32.mrb[0].mxu0
      %v3635 = vadd.f32 %v1452, %v3634
      %v3636 = vpop.f32.mrb[0].mxu0
      %3637 = vmatprep.mubr.f32.mxu0 0.0
      %3638 = vmatmul.mubr.f32.gmra.mrb[0].mxu0 %v3504
      %v3639 = vpop.f32.mrb[0].mxu0
      %v3640 = vadd.f32 %v1452, %v3639
      %v3641 = vpop.f32.mrb[0].mxu0
      %3642 = vmatprep.mubr.f32.mxu0 0.0
      %3643 = vmatmul.mubr.f32.gmra.mrb[0].mxu0 %v3507
      %v3644 = vpop.f32.mrb[0].mxu0
      %v3645 = vadd.f32 %v1452, %v3644
      %v3646 = vpop.f32.mrb[0].mxu0
      %3647 = vmatprep.mubr.f32.mxu0 0.0
      %3648 = vmatmul.mubr.f32.gmra.mrb[0].mxu0 %v3510
      %v3649 = vpop.f32.mrb[0].mxu0
      %v3650 = vadd.f32 %v1452, %v3649
      %v3651 = vpop.f32.mrb[0].mxu0
      %3652 = vmatprep.mubr.f32.mxu0 0.0
      %3653 = vmatmul.mubr.f32.gmra.mrb[0].mxu0 %v3513
      %v3654 = vpop.f32.mrb[0].mxu0
      %v3655 = vadd.f32 %v1452, %v3654
      %v3656 = vpop.f32.mrb[0].mxu0
      %3657 = vmatprep.mubr.f32.mxu0 0.0
      %3658 = vmatmul.mubr.f32.gmra.mrb[0].mxu0 %v3516
      %v3659 = vpop.f32.mrb[0].mxu0
      %v3660 = vadd.f32 %v1452, %v3659
      %v3661 = vpop.f32.mrb[0].mxu0
      %3662 = vdwg.mxu0
      %v3663 = vadd.f32 %v2647, %v3585
      %v3664 = vadd.f32 %v2648, %v3590
      %v3665 = vadd.f32 %v2649, %v3595
      %v3666 = vadd.f32 %v2650, %v3600
      %v3667 = vadd.f32 %v2651, %v3605
      %v3668 = vadd.f32 %v2652, %v3610
      %v3669 = vadd.f32 %v2653, %v3615
      %v3670 = vadd.f32 %v2654, %v3620
      %v3671 = vadd.f32 %v2655, %v3625
      %v3672 = vadd.f32 %v2656, %v3630
      %v3673 = vadd.f32 %v2657, %v3635
      %v3674 = vadd.f32 %v2658, %v3640
      %v3675 = vadd.f32 %v2659, %v3645
      %v3676 = vadd.f32 %v2660, %v3650
      %v3677 = vadd.f32 %v2661, %v3655
      %v3678 = vadd.f32 %v2662, %v3660
      %v3679 = vld [vmem:[%s8] sm:$0xff]
      %v3680 = vld [vmem:[%s8 + $0x8] sm:$0xff]
      %v3681 = vld [vmem:[%s8 + $0x10] sm:$0xff]
      %v3682 = vld [vmem:[%s8 + $0x18] sm:$0xff]
      %v3683 = vld [vmem:[%s9] sm:$0x1]
      %3684 = vmatprep.subr.mxu0 0.0
      %3685 = vmatpush1.msra.mxu0 %v3679
      %3686 = vmatprep.subr.mxu0 0.0
      %3687 = vmatpush1.msra.mxu0 %v3680
      %3688 = vmatprep.subr.mxu0 0.0
      %3689 = vmatpush1.msra.mxu0 %v3681
      %3690 = vmatprep.subr.mxu0 0.0
      %3691 = vmatpush1.msra.mxu0 %v3682
      %3692 = vmatprep.subr.mxu0 0.0
      %3693 = vmatpush1.msra.mxu0 0.0
      %3694 = vmatprep.subr.mxu0 0.0
      %3695 = vmatpush1.msra.mxu0 0.0
      %3696 = vmatprep.subr.mxu0 0.0
      %3697 = vmatpush1.msra.mxu0 0.0
      %3698 = vmatprep.subr.mxu0 0.0
      %3699 = vmatpush1.msra.mxu0 0.0
      %3700 = vmatprep.subr.mxu0 0.0
      %3701 = vmatpush1.msra.mxu0 0.0
      %3702 = vmatprep.subr.mxu0 0.0
      %3703 = vmatpush1.msra.mxu0 0.0
      %3704 = vmatprep.subr.mxu0 0.0
      %3705 = vmatpush1.msra.mxu0 0.0
      %3706 = vmatprep.subr.mxu0 0.0
      %3707 = vmatpush1.msra.mxu0 0.0
      %3708 = vmatprep.subr.mxu0 0.0
      %3709 = vmatpush1.msra.mxu0 0.0
      %3710 = vmatprep.subr.mxu0 0.0
      %3711 = vmatpush1.msra.mxu0 0.0
      %3712 = vmatprep.subr.mxu0 0.0
      %3713 = vmatpush1.msra.mxu0 0.0
      %3714 = vmatprep.subr.mxu0 0.0
      %3715 = vmatpush1.msra.mxu0 0.0
      %3716 = vmatprep.subr.mxu0 0.0
      %3717 = vmatpush1.msra.mxu0 0.0
      %3718 = vmatprep.subr.mxu0 0.0
      %3719 = vmatpush1.msra.mxu0 0.0
      %3720 = vmatprep.subr.mxu0 0.0
      %3721 = vmatpush1.msra.mxu0 0.0
      %3722 = vmatprep.subr.mxu0 0.0
      %3723 = vmatpush1.msra.mxu0 0.0
      %3724 = vmatprep.subr.mxu0 0.0
      %3725 = vmatpush1.msra.mxu0 0.0
      %3726 = vmatprep.subr.mxu0 0.0
      %3727 = vmatpush1.msra.mxu0 0.0
      %3728 = vmatprep.subr.mxu0 0.0
      %3729 = vmatpush1.msra.mxu0 0.0
      %3730 = vmatprep.subr.mxu0 0.0
      %3731 = vmatpush1.msra.mxu0 0.0
      %3732 = vmatprep.subr.mxu0 0.0
      %3733 = vmatpush1.msra.mxu0 0.0
      %3734 = vmatprep.subr.mxu0 0.0
      %3735 = vmatpush1.msra.mxu0 0.0
      %3736 = vmatprep.subr.mxu0 0.0
      %3737 = vmatpush1.msra.mxu0 0.0
      %3738 = vmatprep.subr.mxu0 0.0
      %3739 = vmatpush1.msra.mxu0 0.0
      %3740 = vmatprep.subr.mxu0 0.0
      %3741 = vmatpush1.msra.mxu0 0.0
      %3742 = vmatprep.subr.mxu0 0.0
      %3743 = vmatpush1.msra.mxu0 0.0
      %3744 = vmatprep.subr.mxu0 0.0
      %3745 = vmatpush1.msra.mxu0 0.0
      %3746 = vmatprep.subr.mxu0 0.0
      %3747 = vmatpush1.msra.mxu0 0.0
      %3748 = vmatprep.mubr.f32.mxu0 0.0
      %3749 = vmatmul.mubr.f32.gmra.mrb[0].mxu0 %v3053
      %v3750 = vpop.f32.mrb[0].mxu0
      %v3751 = vadd.f32 0.0, %v3750
      %v3752 = vpop.f32.mrb[0].mxu0
      %3753 = vmatprep.mubr.f32.mxu0 0.0
      %3754 = vmatmul.mubr.f32.gmra.mrb[0].mxu0 %v3056
      %v3755 = vpop.f32.mrb[0].mxu0
      %v3756 = vadd.f32 0.0, %v3755
      %v3757 = vpop.f32.mrb[0].mxu0
      %3758 = vmatprep.mubr.f32.mxu0 0.0
      %3759 = vmatmul.mubr.f32.gmra.mrb[0].mxu0 %v3059
      %v3760 = vpop.f32.mrb[0].mxu0
      %v3761 = vadd.f32 0.0, %v3760
      %v3762 = vpop.f32.mrb[0].mxu0
      %3763 = vmatprep.mubr.f32.mxu0 0.0
      %3764 = vmatmul.mubr.f32.gmra.mrb[0].mxu0 %v3062
      %v3765 = vpop.f32.mrb[0].mxu0
      %v3766 = vadd.f32 0.0, %v3765
      %v3767 = vpop.f32.mrb[0].mxu0
      %3768 = vmatprep.mubr.f32.mxu0 0.0
      %3769 = vmatmul.mubr.f32.gmra.mrb[0].mxu0 %v3065
      %v3770 = vpop.f32.mrb[0].mxu0
      %v3771 = vadd.f32 0.0, %v3770
      %v3772 = vpop.f32.mrb[0].mxu0
      %3773 = vmatprep.mubr.f32.mxu0 0.0
      %3774 = vmatmul.mubr.f32.gmra.mrb[0].mxu0 %v3068
      %v3775 = vpop.f32.mrb[0].mxu0
      %v3776 = vadd.f32 0.0, %v3775
      %v3777 = vpop.f32.mrb[0].mxu0
      %3778 = vmatprep.mubr.f32.mxu0 0.0
      %3779 = vmatmul.mubr.f32.gmra.mrb[0].mxu0 %v3071
      %v3780 = vpop.f32.mrb[0].mxu0
      %v3781 = vadd.f32 0.0, %v3780
      %v3782 = vpop.f32.mrb[0].mxu0
      %3783 = vmatprep.mubr.f32.mxu0 0.0
      %3784 = vmatmul.mubr.f32.gmra.mrb[0].mxu0 %v3074
      %v3785 = vpop.f32.mrb[0].mxu0
      %v3786 = vadd.f32 0.0, %v3785
      %v3787 = vpop.f32.mrb[0].mxu0
      %3788 = vmatprep.mubr.f32.mxu0 0.0
      %3789 = vmatmul.mubr.f32.gmra.mrb[0].mxu0 %v3077
      %v3790 = vpop.f32.mrb[0].mxu0
      %v3791 = vadd.f32 0.0, %v3790
      %v3792 = vpop.f32.mrb[0].mxu0
      %3793 = vmatprep.mubr.f32.mxu0 0.0
      %3794 = vmatmul.mubr.f32.gmra.mrb[0].mxu0 %v3080
      %v3795 = vpop.f32.mrb[0].mxu0
      %v3796 = vadd.f32 0.0, %v3795
      %v3797 = vpop.f32.mrb[0].mxu0
      %3798 = vmatprep.mubr.f32.mxu0 0.0
      %3799 = vmatmul.mubr.f32.gmra.mrb[0].mxu0 %v3083
      %v3800 = vpop.f32.mrb[0].mxu0
      %v3801 = vadd.f32 0.0, %v3800
      %v3802 = vpop.f32.mrb[0].mxu0
      %3803 = vmatprep.mubr.f32.mxu0 0.0
      %3804 = vmatmul.mubr.f32.gmra.mrb[0].mxu0 %v3086
      %v3805 = vpop.f32.mrb[0].mxu0
      %v3806 = vadd.f32 0.0, %v3805
      %v3807 = vpop.f32.mrb[0].mxu0
      %3808 = vmatprep.mubr.f32.mxu0 0.0
      %3809 = vmatmul.mubr.f32.gmra.mrb[0].mxu0 %v3089
      %v3810 = vpop.f32.mrb[0].mxu0
      %v3811 = vadd.f32 0.0, %v3810
      %v3812 = vpop.f32.mrb[0].mxu0
      %3813 = vmatprep.mubr.f32.mxu0 0.0
      %3814 = vmatmul.mubr.f32.gmra.mrb[0].mxu0 %v3092
      %v3815 = vpop.f32.mrb[0].mxu0
      %v3816 = vadd.f32 0.0, %v3815
      %v3817 = vpop.f32.mrb[0].mxu0
      %3818 = vmatprep.mubr.f32.mxu0 0.0
      %3819 = vmatmul.mubr.f32.gmra.mrb[0].mxu0 %v3095
      %v3820 = vpop.f32.mrb[0].mxu0
      %v3821 = vadd.f32 0.0, %v3820
      %v3822 = vpop.f32.mrb[0].mxu0
      %3823 = vmatprep.mubr.f32.mxu0 0.0
      %3824 = vmatmul.mubr.f32.gmra.mrb[0].mxu0 %v3098
      %v3825 = vpop.f32.mrb[0].mxu0
      %v3826 = vadd.f32 0.0, %v3825
      %v3827 = vpop.f32.mrb[0].mxu0
      %3828 = vdwg.mxu0
      %v3829 = vpack.c.bf16 %v3756, %v3751
      %v3830 = vpack.c.bf16 %v3766, %v3761
      %v3831 = vpack.c.bf16 %v3776, %v3771
      %v3832 = vpack.c.bf16 %v3786, %v3781
      %v3833 = vpack.c.bf16 %v3796, %v3791
      %v3834 = vpack.c.bf16 %v3806, %v3801
      %v3835 = vpack.c.bf16 %v3816, %v3811
      %v3836 = vpack.c.bf16 %v3826, %v3821
      %v3838 = vlaneseq
      %v3839 = vshrl.u32 %v3838, 7
      %v3840 = vsub.s32 0, %v3839
      %v3841 = vrot.slane %v3683, %v3840
      %3843 = vmatprep.subr.bf16.mxu0 0
      %3844 = vmatpush1.bf16.msra.mxu0 %v3829
      %3845 = vmatprep.subr.bf16.mxu0 0
      %3846 = vmatpush1.bf16.msra.mxu0 %v3830
      %3847 = vmatprep.subr.bf16.mxu0 0
      %3848 = vmatpush1.bf16.msra.mxu0 %v3831
      %3849 = vmatprep.subr.bf16.mxu0 0
      %3850 = vmatpush1.bf16.msra.mxu0 %v3832
      %3851 = vmatprep.subr.bf16.mxu0 0
      %3852 = vmatpush1.bf16.msra.mxu0 %v3833
      %3853 = vmatprep.subr.bf16.mxu0 0
      %3854 = vmatpush1.bf16.msra.mxu0 %v3834
      %3855 = vmatprep.subr.bf16.mxu0 0
      %3856 = vmatpush1.bf16.msra.mxu0 %v3835
      %3857 = vmatprep.subr.bf16.mxu0 0
      %3858 = vmatpush1.bf16.msra.mxu0 %v3836
      %3859 = vmatprep.subr.bf16.mxu0 0
      %3860 = vmatpush1.bf16.msra.mxu0 0
      %3861 = vmatprep.subr.bf16.mxu0 0
      %3862 = vmatpush1.bf16.msra.mxu0 0
      %3863 = vmatprep.subr.bf16.mxu0 0
      %3864 = vmatpush1.bf16.msra.mxu0 0
      %3865 = vmatprep.subr.bf16.mxu0 0
      %3866 = vmatpush1.bf16.msra.mxu0 0
      %3867 = vmatprep.subr.bf16.mxu0 0
      %3868 = vmatpush1.bf16.msra.mxu0 0
      %3869 = vmatprep.subr.bf16.mxu0 0
      %3870 = vmatpush1.bf16.msra.mxu0 0
      %3871 = vmatprep.subr.bf16.mxu0 0
      %3872 = vmatpush1.bf16.msra.mxu0 0
      %3873 = vmatprep.subr.bf16.mxu0 0
      %3874 = vmatpush1.bf16.msra.mxu0 0
      %3875 = vmatprep.mubr.bf16.mxu0 0
      %3876 = vmatmul.mubr.bf16.gmra.mrb[0].mxu0 %v689
      %v3877 = vpop.f32.mrb[0].mxu0
      %v3878 = vadd.f32 %v3841, %v3877
      %v3879 = vpop.f32.mrb[0].mxu0
      %v3880 = vpop.f32.mrb[0].mxu0
      %v3881 = vadd.f32 %v3841, %v3880
      %v3882 = vpop.f32.mrb[0].mxu0
      %3883 = vmatprep.mubr.bf16.mxu0 0
      %3884 = vmatmul.mubr.bf16.gmra.mrb[0].mxu0 %v690
      %v3885 = vpop.f32.mrb[0].mxu0
      %v3886 = vadd.f32 %v3841, %v3885
      %v3887 = vpop.f32.mrb[0].mxu0
      %v3888 = vpop.f32.mrb[0].mxu0
      %v3889 = vadd.f32 %v3841, %v3888
      %v3890 = vpop.f32.mrb[0].mxu0
      %3891 = vmatprep.mubr.bf16.mxu0 0
      %3892 = vmatmul.mubr.bf16.gmra.mrb[0].mxu0 %v691
      %v3893 = vpop.f32.mrb[0].mxu0
      %v3894 = vadd.f32 %v3841, %v3893
      %v3895 = vpop.f32.mrb[0].mxu0
      %v3896 = vpop.f32.mrb[0].mxu0
      %v3897 = vadd.f32 %v3841, %v3896
      %v3898 = vpop.f32.mrb[0].mxu0
      %3899 = vmatprep.mubr.bf16.mxu0 0
      %3900 = vmatmul.mubr.bf16.gmra.mrb[0].mxu0 %v692
      %v3901 = vpop.f32.mrb[0].mxu0
      %v3902 = vadd.f32 %v3841, %v3901
      %v3903 = vpop.f32.mrb[0].mxu0
      %v3904 = vpop.f32.mrb[0].mxu0
      %v3905 = vadd.f32 %v3841, %v3904
      %v3906 = vpop.f32.mrb[0].mxu0
      %3907 = vmatprep.mubr.bf16.mxu0 0
      %3908 = vmatmul.mubr.bf16.gmra.mrb[0].mxu0 %v693
      %v3909 = vpop.f32.mrb[0].mxu0
      %v3910 = vadd.f32 %v3841, %v3909
      %v3911 = vpop.f32.mrb[0].mxu0
      %v3912 = vpop.f32.mrb[0].mxu0
      %v3913 = vadd.f32 %v3841, %v3912
      %v3914 = vpop.f32.mrb[0].mxu0
      %3915 = vmatprep.mubr.bf16.mxu0 0
      %3916 = vmatmul.mubr.bf16.gmra.mrb[0].mxu0 %v694
      %v3917 = vpop.f32.mrb[0].mxu0
      %v3918 = vadd.f32 %v3841, %v3917
      %v3919 = vpop.f32.mrb[0].mxu0
      %v3920 = vpop.f32.mrb[0].mxu0
      %v3921 = vadd.f32 %v3841, %v3920
      %v3922 = vpop.f32.mrb[0].mxu0
      %3923 = vmatprep.mubr.bf16.mxu0 0
      %3924 = vmatmul.mubr.bf16.gmra.mrb[0].mxu0 %v695
      %v3925 = vpop.f32.mrb[0].mxu0
      %v3926 = vadd.f32 %v3841, %v3925
      %v3927 = vpop.f32.mrb[0].mxu0
      %v3928 = vpop.f32.mrb[0].mxu0
      %v3929 = vadd.f32 %v3841, %v3928
      %v3930 = vpop.f32.mrb[0].mxu0
      %3931 = vmatprep.mubr.bf16.mxu0 0
      %3932 = vmatmul.mubr.bf16.gmra.mrb[0].mxu0 %v696
      %v3933 = vpop.f32.mrb[0].mxu0
      %v3934 = vadd.f32 %v3841, %v3933
      %v3935 = vpop.f32.mrb[0].mxu0
      %v3936 = vpop.f32.mrb[0].mxu0
      %v3937 = vadd.f32 %v3841, %v3936
      %v3938 = vpop.f32.mrb[0].mxu0
      %3939 = vdwg.mxu0
      %v3940 = vmax.f32 %v3878, 0.0
      %v3941 = vmax.f32 %v3881, 0.0
      %v3942 = vmax.f32 %v3886, 0.0
      %v3943 = vmax.f32 %v3889, 0.0
      %v3944 = vmax.f32 %v3894, 0.0
      %v3945 = vmax.f32 %v3897, 0.0
      %v3946 = vmax.f32 %v3902, 0.0
      %v3947 = vmax.f32 %v3905, 0.0
      %v3948 = vmax.f32 %v3910, 0.0
      %v3949 = vmax.f32 %v3913, 0.0
      %v3950 = vmax.f32 %v3918, 0.0
      %v3951 = vmax.f32 %v3921, 0.0
      %v3952 = vmax.f32 %v3926, 0.0
      %v3953 = vmax.f32 %v3929, 0.0
      %v3954 = vmax.f32 %v3934, 0.0
      %v3955 = vmax.f32 %v3937, 0.0
      %v3956 = vmul.f32 %v3940, %v3940
      %v3957 = vmul.f32 %v3941, %v3941
      %v3958 = vmul.f32 %v3942, %v3942
      %v3959 = vmul.f32 %v3943, %v3943
      %v3960 = vmul.f32 %v3944, %v3944
      %v3961 = vmul.f32 %v3945, %v3945
      %v3962 = vmul.f32 %v3946, %v3946
      %v3963 = vmul.f32 %v3947, %v3947
      %v3964 = vmul.f32 %v3948, %v3948
      %v3965 = vmul.f32 %v3949, %v3949
      %v3966 = vmul.f32 %v3950, %v3950
      %v3967 = vmul.f32 %v3951, %v3951
      %v3968 = vmul.f32 %v3952, %v3952
      %v3969 = vmul.f32 %v3953, %v3953
      %v3970 = vmul.f32 %v3954, %v3954
      %v3971 = vmul.f32 %v3955, %v3955
      %v3972 = vsel %vm932, %v3956, 0.0
      %3973 = vadd.xlane.f32.xlu0 %v3972
      %v3974 = vpop.xlane.xlu0 %3973
      %v3975 = vsel %vm932, %v3957, 0.0
      %3976 = vadd.xlane.f32.xlu0 %v3975
      %v3977 = vpop.xlane.xlu0 %3976
      %v3978 = vsel %vm932, %v3958, 0.0
      %3979 = vadd.xlane.f32.xlu0 %v3978
      %v3980 = vpop.xlane.xlu0 %3979
      %v3981 = vsel %vm932, %v3959, 0.0
      %3982 = vadd.xlane.f32.xlu0 %v3981
      %v3983 = vpop.xlane.xlu0 %3982
      %v3984 = vsel %vm932, %v3960, 0.0
      %3985 = vadd.xlane.f32.xlu0 %v3984
      %v3986 = vpop.xlane.xlu0 %3985
      %v3987 = vsel %vm932, %v3961, 0.0
      %3988 = vadd.xlane.f32.xlu0 %v3987
      %v3989 = vpop.xlane.xlu0 %3988
      %v3990 = vsel %vm932, %v3962, 0.0
      %3991 = vadd.xlane.f32.xlu0 %v3990
      %v3992 = vpop.xlane.xlu0 %3991
      %v3993 = vsel %vm932, %v3963, 0.0
      %3994 = vadd.xlane.f32.xlu0 %v3993
      %v3995 = vpop.xlane.xlu0 %3994
      %v3996 = vsel %vm932, %v3964, 0.0
      %3997 = vadd.xlane.f32.xlu0 %v3996
      %v3998 = vpop.xlane.xlu0 %3997
      %v3999 = vsel %vm932, %v3965, 0.0
      %4000 = vadd.xlane.f32.xlu0 %v3999
      %v4001 = vpop.xlane.xlu0 %4000
      %v4002 = vsel %vm932, %v3966, 0.0
      %4003 = vadd.xlane.f32.xlu0 %v4002
      %v4004 = vpop.xlane.xlu0 %4003
      %v4005 = vsel %vm932, %v3967, 0.0
      %4006 = vadd.xlane.f32.xlu0 %v4005
      %v4007 = vpop.xlane.xlu0 %4006
      %v4008 = vsel %vm932, %v3968, 0.0
      %4009 = vadd.xlane.f32.xlu0 %v4008
      %v4010 = vpop.xlane.xlu0 %4009
      %v4011 = vsel %vm932, %v3969, 0.0
      %4012 = vadd.xlane.f32.xlu0 %v4011
      %v4013 = vpop.xlane.xlu0 %4012
      %v4014 = vsel %vm932, %v3970, 0.0
      %4015 = vadd.xlane.f32.xlu0 %v4014
      %v4016 = vpop.xlane.xlu0 %4015
      %v4017 = vsel %vm932, %v3971, 0.0
      %4018 = vadd.xlane.f32.xlu0 %v4017
      %v4019 = vpop.xlane.xlu0 %4018
      %v4020 = vmax.f32 %v3974, 1e-24
      %v4021 = vmax.f32 %v3977, 1e-24
      %v4022 = vmax.f32 %v3980, 1e-24
      %v4023 = vmax.f32 %v3983, 1e-24
      %v4024 = vmax.f32 %v3986, 1e-24
      %v4025 = vmax.f32 %v3989, 1e-24
      %v4026 = vmax.f32 %v3992, 1e-24
      %v4027 = vmax.f32 %v3995, 1e-24
      %v4028 = vmax.f32 %v3998, 1e-24
      %v4029 = vmax.f32 %v4001, 1e-24
      %v4030 = vmax.f32 %v4004, 1e-24
      %v4031 = vmax.f32 %v4007, 1e-24
      %v4032 = vmax.f32 %v4010, 1e-24
      %v4033 = vmax.f32 %v4013, 1e-24
      %v4034 = vmax.f32 %v4016, 1e-24
      %v4035 = vmax.f32 %v4019, 1e-24
      %v4036 = vrsqrt.pop %v4020
      %v4037 = vrsqrt.pop %v4021
      %v4038 = vrsqrt.pop %v4022
      %v4039 = vrsqrt.pop %v4023
      %v4040 = vrsqrt.pop %v4024
      %v4041 = vrsqrt.pop %v4025
      %v4042 = vrsqrt.pop %v4026
      %v4043 = vrsqrt.pop %v4027
      %v4044 = vrsqrt.pop %v4028
      %v4045 = vrsqrt.pop %v4029
      %v4046 = vrsqrt.pop %v4030
      %v4047 = vrsqrt.pop %v4031
      %v4048 = vrsqrt.pop %v4032
      %v4049 = vrsqrt.pop %v4033
      %v4050 = vrsqrt.pop %v4034
      %v4051 = vrsqrt.pop %v4035
      %v4052 = vmul.f32 %v3940, %v4036
      %v4053 = vmul.f32 %v3941, %v4037
      %v4054 = vmul.f32 %v3942, %v4038
      %v4055 = vmul.f32 %v3943, %v4039
      %v4056 = vmul.f32 %v3944, %v4040
      %v4057 = vmul.f32 %v3945, %v4041
      %v4058 = vmul.f32 %v3946, %v4042
      %v4059 = vmul.f32 %v3947, %v4043
      %v4060 = vmul.f32 %v3948, %v4044
      %v4061 = vmul.f32 %v3949, %v4045
      %v4062 = vmul.f32 %v3950, %v4046
      %v4063 = vmul.f32 %v3951, %v4047
      %v4064 = vmul.f32 %v3952, %v4048
      %v4065 = vmul.f32 %v3953, %v4049
      %v4066 = vmul.f32 %v3954, %v4050
      %v4067 = vmul.f32 %v3955, %v4051
      %v4069 = vsel %vm932, %v4052, 0
      %v4072 = vsel %vm932, %v4053, 0
      %v4075 = vsel %vm932, %v4054, 0
      %v4078 = vsel %vm932, %v4055, 0
      %v4081 = vsel %vm932, %v4056, 0
      %v4084 = vsel %vm932, %v4057, 0
      %v4087 = vsel %vm932, %v4058, 0
      %v4090 = vsel %vm932, %v4059, 0
      %v4093 = vsel %vm932, %v4060, 0
      %v4096 = vsel %vm932, %v4061, 0
      %v4099 = vsel %vm932, %v4062, 0
      %v4102 = vsel %vm932, %v4063, 0
      %v4105 = vsel %vm932, %v4064, 0
      %v4108 = vsel %vm932, %v4065, 0
      %v4111 = vsel %vm932, %v4066, 0
      %v4114 = vsel %vm932, %v4067, 0
      %4116 = vmatprep.subr.mxu0 0.0
      %4117 = vmatpush1.msra.mxu0 %v697
      %4118 = vmatprep.subr.mxu0 0.0
      %4119 = vmatpush1.msra.mxu0 %v698
      %4120 = vmatprep.subr.mxu0 0.0
      %4121 = vmatpush1.msra.mxu0 %v699
      %4122 = vmatprep.subr.mxu0 0.0
      %4123 = vmatpush1.msra.mxu0 %v700
      %4124 = vmatprep.subr.mxu0 0.0
      %4125 = vmatpush1.msra.mxu0 0.0
      %4126 = vmatprep.subr.mxu0 0.0
      %4127 = vmatpush1.msra.mxu0 0.0
      %4128 = vmatprep.subr.mxu0 0.0
      %4129 = vmatpush1.msra.mxu0 0.0
      %4130 = vmatprep.subr.mxu0 0.0
      %4131 = vmatpush1.msra.mxu0 0.0
      %4132 = vmatprep.subr.mxu0 0.0
      %4133 = vmatpush1.msra.mxu0 0.0
      %4134 = vmatprep.subr.mxu0 0.0
      %4135 = vmatpush1.msra.mxu0 0.0
      %4136 = vmatprep.subr.mxu0 0.0
      %4137 = vmatpush1.msra.mxu0 0.0
      %4138 = vmatprep.subr.mxu0 0.0
      %4139 = vmatpush1.msra.mxu0 0.0
      %4140 = vmatprep.subr.mxu0 0.0
      %4141 = vmatpush1.msra.mxu0 0.0
      %4142 = vmatprep.subr.mxu0 0.0
      %4143 = vmatpush1.msra.mxu0 0.0
      %4144 = vmatprep.subr.mxu0 0.0
      %4145 = vmatpush1.msra.mxu0 0.0
      %4146 = vmatprep.subr.mxu0 0.0
      %4147 = vmatpush1.msra.mxu0 0.0
      %4148 = vmatprep.subr.mxu0 0.0
      %4149 = vmatpush1.msra.mxu0 0.0
      %4150 = vmatprep.subr.mxu0 0.0
      %4151 = vmatpush1.msra.mxu0 0.0
      %4152 = vmatprep.subr.mxu0 0.0
      %4153 = vmatpush1.msra.mxu0 0.0
      %4154 = vmatprep.subr.mxu0 0.0
      %4155 = vmatpush1.msra.mxu0 0.0
      %4156 = vmatprep.subr.mxu0 0.0
      %4157 = vmatpush1.msra.mxu0 0.0
      %4158 = vmatprep.subr.mxu0 0.0
      %4159 = vmatpush1.msra.mxu0 0.0
      %4160 = vmatprep.subr.mxu0 0.0
      %4161 = vmatpush1.msra.mxu0 0.0
      %4162 = vmatprep.subr.mxu0 0.0
      %4163 = vmatpush1.msra.mxu0 0.0
      %4164 = vmatprep.subr.mxu0 0.0
      %4165 = vmatpush1.msra.mxu0 0.0
      %4166 = vmatprep.subr.mxu0 0.0
      %4167 = vmatpush1.msra.mxu0 0.0
      %4168 = vmatprep.subr.mxu0 0.0
      %4169 = vmatpush1.msra.mxu0 0.0
      %4170 = vmatprep.subr.mxu0 0.0
      %4171 = vmatpush1.msra.mxu0 0.0
      %4172 = vmatprep.subr.mxu0 0.0
      %4173 = vmatpush1.msra.mxu0 0.0
      %4174 = vmatprep.subr.mxu0 0.0
      %4175 = vmatpush1.msra.mxu0 0.0
      %4176 = vmatprep.subr.mxu0 0.0
      %4177 = vmatpush1.msra.mxu0 0.0
      %4178 = vmatprep.subr.mxu0 0.0
      %4179 = vmatpush1.msra.mxu0 0.0
      %4180 = vmatprep.mubr.f32.mxu0 0.0
      %4181 = vmatmul.mubr.f32.gmra.mrb[0].mxu0 %v4069
      %v4182 = vpop.f32.mrb[0].mxu0
      %v4183 = vadd.f32 %v722, %v4182
      %v4184 = vpop.f32.mrb[0].mxu0
      %4185 = vmatprep.mubr.f32.mxu0 0.0
      %4186 = vmatmul.mubr.f32.gmra.mrb[0].mxu0 %v4072
      %v4187 = vpop.f32.mrb[0].mxu0
      %v4188 = vadd.f32 %v722, %v4187
      %v4189 = vpop.f32.mrb[0].mxu0
      %4190 = vmatprep.mubr.f32.mxu0 0.0
      %4191 = vmatmul.mubr.f32.gmra.mrb[0].mxu0 %v4075
      %v4192 = vpop.f32.mrb[0].mxu0
      %v4193 = vadd.f32 %v722, %v4192
      %v4194 = vpop.f32.mrb[0].mxu0
      %4195 = vmatprep.mubr.f32.mxu0 0.0
      %4196 = vmatmul.mubr.f32.gmra.mrb[0].mxu0 %v4078
      %v4197 = vpop.f32.mrb[0].mxu0
      %v4198 = vadd.f32 %v722, %v4197
      %v4199 = vpop.f32.mrb[0].mxu0
      %4200 = vmatprep.mubr.f32.mxu0 0.0
      %4201 = vmatmul.mubr.f32.gmra.mrb[0].mxu0 %v4081
      %v4202 = vpop.f32.mrb[0].mxu0
      %v4203 = vadd.f32 %v722, %v4202
      %v4204 = vpop.f32.mrb[0].mxu0
      %4205 = vmatprep.mubr.f32.mxu0 0.0
      %4206 = vmatmul.mubr.f32.gmra.mrb[0].mxu0 %v4084
      %v4207 = vpop.f32.mrb[0].mxu0
      %v4208 = vadd.f32 %v722, %v4207
      %v4209 = vpop.f32.mrb[0].mxu0
      %4210 = vmatprep.mubr.f32.mxu0 0.0
      %4211 = vmatmul.mubr.f32.gmra.mrb[0].mxu0 %v4087
      %v4212 = vpop.f32.mrb[0].mxu0
      %v4213 = vadd.f32 %v722, %v4212
      %v4214 = vpop.f32.mrb[0].mxu0
      %4215 = vmatprep.mubr.f32.mxu0 0.0
      %4216 = vmatmul.mubr.f32.gmra.mrb[0].mxu0 %v4090
      %v4217 = vpop.f32.mrb[0].mxu0
      %v4218 = vadd.f32 %v722, %v4217
      %v4219 = vpop.f32.mrb[0].mxu0
      %4220 = vmatprep.mubr.f32.mxu0 0.0
      %4221 = vmatmul.mubr.f32.gmra.mrb[0].mxu0 %v4093
      %v4222 = vpop.f32.mrb[0].mxu0
      %v4223 = vadd.f32 %v722, %v4222
      %v4224 = vpop.f32.mrb[0].mxu0
      %4225 = vmatprep.mubr.f32.mxu0 0.0
      %4226 = vmatmul.mubr.f32.gmra.mrb[0].mxu0 %v4096
      %v4227 = vpop.f32.mrb[0].mxu0
      %v4228 = vadd.f32 %v722, %v4227
      %v4229 = vpop.f32.mrb[0].mxu0
      %4230 = vmatprep.mubr.f32.mxu0 0.0
      %4231 = vmatmul.mubr.f32.gmra.mrb[0].mxu0 %v4099
      %v4232 = vpop.f32.mrb[0].mxu0
      %v4233 = vadd.f32 %v722, %v4232
      %v4234 = vpop.f32.mrb[0].mxu0
      %4235 = vmatprep.mubr.f32.mxu0 0.0
      %4236 = vmatmul.mubr.f32.gmra.mrb[0].mxu0 %v4102
      %v4237 = vpop.f32.mrb[0].mxu0
      %v4238 = vadd.f32 %v722, %v4237
      %v4239 = vpop.f32.mrb[0].mxu0
      %4240 = vmatprep.mubr.f32.mxu0 0.0
      %4241 = vmatmul.mubr.f32.gmra.mrb[0].mxu0 %v4105
      %v4242 = vpop.f32.mrb[0].mxu0
      %v4243 = vadd.f32 %v722, %v4242
      %v4244 = vpop.f32.mrb[0].mxu0
      %4245 = vmatprep.mubr.f32.mxu0 0.0
      %4246 = vmatmul.mubr.f32.gmra.mrb[0].mxu0 %v4108
      %v4247 = vpop.f32.mrb[0].mxu0
      %v4248 = vadd.f32 %v722, %v4247
      %v4249 = vpop.f32.mrb[0].mxu0
      %4250 = vmatprep.mubr.f32.mxu0 0.0
      %4251 = vmatmul.mubr.f32.gmra.mrb[0].mxu0 %v4111
      %v4252 = vpop.f32.mrb[0].mxu0
      %v4253 = vadd.f32 %v722, %v4252
      %v4254 = vpop.f32.mrb[0].mxu0
      %4255 = vmatprep.mubr.f32.mxu0 0.0
      %4256 = vmatmul.mubr.f32.gmra.mrb[0].mxu0 %v4114
      %v4257 = vpop.f32.mrb[0].mxu0
      %v4258 = vadd.f32 %v722, %v4257
      %v4259 = vpop.f32.mrb[0].mxu0
      %4260 = vdwg.mxu0
      %v4261 = vmax.f32 %v4183, 0.0
      %v4262 = vmax.f32 %v4188, 0.0
      %v4263 = vmax.f32 %v4193, 0.0
      %v4264 = vmax.f32 %v4198, 0.0
      %v4265 = vmax.f32 %v4203, 0.0
      %v4266 = vmax.f32 %v4208, 0.0
      %v4267 = vmax.f32 %v4213, 0.0
      %v4268 = vmax.f32 %v4218, 0.0
      %v4269 = vmax.f32 %v4223, 0.0
      %v4270 = vmax.f32 %v4228, 0.0
      %v4271 = vmax.f32 %v4233, 0.0
      %v4272 = vmax.f32 %v4238, 0.0
      %v4273 = vmax.f32 %v4243, 0.0
      %v4274 = vmax.f32 %v4248, 0.0
      %v4275 = vmax.f32 %v4253, 0.0
      %v4276 = vmax.f32 %v4258, 0.0
      %v4278 = vsel %vm1238, %v4261, 0
      %v4281 = vsel %vm1238, %v4262, 0
      %v4284 = vsel %vm1238, %v4263, 0
      %v4287 = vsel %vm1238, %v4264, 0
      %v4290 = vsel %vm1238, %v4265, 0
      %v4293 = vsel %vm1238, %v4266, 0
      %v4296 = vsel %vm1238, %v4267, 0
      %v4299 = vsel %vm1238, %v4268, 0
      %v4302 = vsel %vm1238, %v4269, 0
      %v4305 = vsel %vm1238, %v4270, 0
      %v4308 = vsel %vm1238, %v4271, 0
      %v4311 = vsel %vm1238, %v4272, 0
      %v4314 = vsel %vm1238, %v4273, 0
      %v4317 = vsel %vm1238, %v4274, 0
      %v4320 = vsel %vm1238, %v4275, 0
      %v4323 = vsel %vm1238, %v4276, 0
      %4325 = vmatprep.subr.mxu0 0.0
      %4326 = vmatpush1.msra.mxu0 %v701
      %4327 = vmatprep.subr.mxu0 0.0
      %4328 = vmatpush1.msra.mxu0 %v702
      %4329 = vmatprep.subr.mxu0 0.0
      %4330 = vmatpush1.msra.mxu0 %v703
      %4331 = vmatprep.subr.mxu0 0.0
      %4332 = vmatpush1.msra.mxu0 %v704
      %4333 = vmatprep.subr.mxu0 0.0
      %4334 = vmatpush1.msra.mxu0 %v705
      %4335 = vmatprep.subr.mxu0 0.0
      %4336 = vmatpush1.msra.mxu0 %v706
      %4337 = vmatprep.subr.mxu0 0.0
      %4338 = vmatpush1.msra.mxu0 %v707
      %4339 = vmatprep.subr.mxu0 0.0
      %4340 = vmatpush1.msra.mxu0 %v708
      %4341 = vmatprep.subr.mxu0 0.0
      %4342 = vmatpush1.msra.mxu0 0.0
      %4343 = vmatprep.subr.mxu0 0.0
      %4344 = vmatpush1.msra.mxu0 0.0
      %4345 = vmatprep.subr.mxu0 0.0
      %4346 = vmatpush1.msra.mxu0 0.0
      %4347 = vmatprep.subr.mxu0 0.0
      %4348 = vmatpush1.msra.mxu0 0.0
      %4349 = vmatprep.subr.mxu0 0.0
      %4350 = vmatpush1.msra.mxu0 0.0
      %4351 = vmatprep.subr.mxu0 0.0
      %4352 = vmatpush1.msra.mxu0 0.0
      %4353 = vmatprep.subr.mxu0 0.0
      %4354 = vmatpush1.msra.mxu0 0.0
      %4355 = vmatprep.subr.mxu0 0.0
      %4356 = vmatpush1.msra.mxu0 0.0
      %4357 = vmatprep.subr.mxu0 0.0
      %4358 = vmatpush1.msra.mxu0 0.0
      %4359 = vmatprep.subr.mxu0 0.0
      %4360 = vmatpush1.msra.mxu0 0.0
      %4361 = vmatprep.subr.mxu0 0.0
      %4362 = vmatpush1.msra.mxu0 0.0
      %4363 = vmatprep.subr.mxu0 0.0
      %4364 = vmatpush1.msra.mxu0 0.0
      %4365 = vmatprep.subr.mxu0 0.0
      %4366 = vmatpush1.msra.mxu0 0.0
      %4367 = vmatprep.subr.mxu0 0.0
      %4368 = vmatpush1.msra.mxu0 0.0
      %4369 = vmatprep.subr.mxu0 0.0
      %4370 = vmatpush1.msra.mxu0 0.0
      %4371 = vmatprep.subr.mxu0 0.0
      %4372 = vmatpush1.msra.mxu0 0.0
      %4373 = vmatprep.subr.mxu0 0.0
      %4374 = vmatpush1.msra.mxu0 0.0
      %4375 = vmatprep.subr.mxu0 0.0
      %4376 = vmatpush1.msra.mxu0 0.0
      %4377 = vmatprep.subr.mxu0 0.0
      %4378 = vmatpush1.msra.mxu0 0.0
      %4379 = vmatprep.subr.mxu0 0.0
      %4380 = vmatpush1.msra.mxu0 0.0
      %4381 = vmatprep.subr.mxu0 0.0
      %4382 = vmatpush1.msra.mxu0 0.0
      %4383 = vmatprep.subr.mxu0 0.0
      %4384 = vmatpush1.msra.mxu0 0.0
      %4385 = vmatprep.subr.mxu0 0.0
      %4386 = vmatpush1.msra.mxu0 0.0
      %4387 = vmatprep.subr.mxu0 0.0
      %4388 = vmatpush1.msra.mxu0 0.0
      %4389 = vmatprep.mubr.f32.mxu0 0.0
      %4390 = vmatmul.mubr.f32.gmra.mrb[0].mxu0 %v4278
      %v4391 = vpop.f32.mrb[0].mxu0
      %v4392 = vadd.f32 %v729, %v4391
      %v4393 = vpop.f32.mrb[0].mxu0
      %4394 = vmatprep.mubr.f32.mxu0 0.0
      %4395 = vmatmul.mubr.f32.gmra.mrb[0].mxu0 %v4281
      %v4396 = vpop.f32.mrb[0].mxu0
      %v4397 = vadd.f32 %v729, %v4396
      %v4398 = vpop.f32.mrb[0].mxu0
      %4399 = vmatprep.mubr.f32.mxu0 0.0
      %4400 = vmatmul.mubr.f32.gmra.mrb[0].mxu0 %v4284
      %v4401 = vpop.f32.mrb[0].mxu0
      %v4402 = vadd.f32 %v729, %v4401
      %v4403 = vpop.f32.mrb[0].mxu0
      %4404 = vmatprep.mubr.f32.mxu0 0.0
      %4405 = vmatmul.mubr.f32.gmra.mrb[0].mxu0 %v4287
      %v4406 = vpop.f32.mrb[0].mxu0
      %v4407 = vadd.f32 %v729, %v4406
      %v4408 = vpop.f32.mrb[0].mxu0
      %4409 = vmatprep.mubr.f32.mxu0 0.0
      %4410 = vmatmul.mubr.f32.gmra.mrb[0].mxu0 %v4290
      %v4411 = vpop.f32.mrb[0].mxu0
      %v4412 = vadd.f32 %v729, %v4411
      %v4413 = vpop.f32.mrb[0].mxu0
      %4414 = vmatprep.mubr.f32.mxu0 0.0
      %4415 = vmatmul.mubr.f32.gmra.mrb[0].mxu0 %v4293
      %v4416 = vpop.f32.mrb[0].mxu0
      %v4417 = vadd.f32 %v729, %v4416
      %v4418 = vpop.f32.mrb[0].mxu0
      %4419 = vmatprep.mubr.f32.mxu0 0.0
      %4420 = vmatmul.mubr.f32.gmra.mrb[0].mxu0 %v4296
      %v4421 = vpop.f32.mrb[0].mxu0
      %v4422 = vadd.f32 %v729, %v4421
      %v4423 = vpop.f32.mrb[0].mxu0
      %4424 = vmatprep.mubr.f32.mxu0 0.0
      %4425 = vmatmul.mubr.f32.gmra.mrb[0].mxu0 %v4299
      %v4426 = vpop.f32.mrb[0].mxu0
      %v4427 = vadd.f32 %v729, %v4426
      %v4428 = vpop.f32.mrb[0].mxu0
      %4429 = vmatprep.mubr.f32.mxu0 0.0
      %4430 = vmatmul.mubr.f32.gmra.mrb[0].mxu0 %v4302
      %v4431 = vpop.f32.mrb[0].mxu0
      %v4432 = vadd.f32 %v729, %v4431
      %v4433 = vpop.f32.mrb[0].mxu0
      %4434 = vmatprep.mubr.f32.mxu0 0.0
      %4435 = vmatmul.mubr.f32.gmra.mrb[0].mxu0 %v4305
      %v4436 = vpop.f32.mrb[0].mxu0
      %v4437 = vadd.f32 %v729, %v4436
      %v4438 = vpop.f32.mrb[0].mxu0
      %4439 = vmatprep.mubr.f32.mxu0 0.0
      %4440 = vmatmul.mubr.f32.gmra.mrb[0].mxu0 %v4308
      %v4441 = vpop.f32.mrb[0].mxu0
      %v4442 = vadd.f32 %v729, %v4441
      %v4443 = vpop.f32.mrb[0].mxu0
      %4444 = vmatprep.mubr.f32.mxu0 0.0
      %4445 = vmatmul.mubr.f32.gmra.mrb[0].mxu0 %v4311
      %v4446 = vpop.f32.mrb[0].mxu0
      %v4447 = vadd.f32 %v729, %v4446
      %v4448 = vpop.f32.mrb[0].mxu0
      %4449 = vmatprep.mubr.f32.mxu0 0.0
      %4450 = vmatmul.mubr.f32.gmra.mrb[0].mxu0 %v4314
      %v4451 = vpop.f32.mrb[0].mxu0
      %v4452 = vadd.f32 %v729, %v4451
      %v4453 = vpop.f32.mrb[0].mxu0
      %4454 = vmatprep.mubr.f32.mxu0 0.0
      %4455 = vmatmul.mubr.f32.gmra.mrb[0].mxu0 %v4317
      %v4456 = vpop.f32.mrb[0].mxu0
      %v4457 = vadd.f32 %v729, %v4456
      %v4458 = vpop.f32.mrb[0].mxu0
      %4459 = vmatprep.mubr.f32.mxu0 0.0
      %4460 = vmatmul.mubr.f32.gmra.mrb[0].mxu0 %v4320
      %v4461 = vpop.f32.mrb[0].mxu0
      %v4462 = vadd.f32 %v729, %v4461
      %v4463 = vpop.f32.mrb[0].mxu0
      %4464 = vmatprep.mubr.f32.mxu0 0.0
      %4465 = vmatmul.mubr.f32.gmra.mrb[0].mxu0 %v4323
      %v4466 = vpop.f32.mrb[0].mxu0
      %v4467 = vadd.f32 %v729, %v4466
      %v4468 = vpop.f32.mrb[0].mxu0
      %4469 = vdwg.mxu0
      %v4470 = vmax.f32 %v4392, 0.0
      %v4471 = vmax.f32 %v4397, 0.0
      %v4472 = vmax.f32 %v4402, 0.0
      %v4473 = vmax.f32 %v4407, 0.0
      %v4474 = vmax.f32 %v4412, 0.0
      %v4475 = vmax.f32 %v4417, 0.0
      %v4476 = vmax.f32 %v4422, 0.0
      %v4477 = vmax.f32 %v4427, 0.0
      %v4478 = vmax.f32 %v4432, 0.0
      %v4479 = vmax.f32 %v4437, 0.0
      %v4480 = vmax.f32 %v4442, 0.0
      %v4481 = vmax.f32 %v4447, 0.0
      %v4482 = vmax.f32 %v4452, 0.0
      %v4483 = vmax.f32 %v4457, 0.0
      %v4484 = vmax.f32 %v4462, 0.0
      %v4485 = vmax.f32 %v4467, 0.0
      %v4487 = vsel %vm1238, %v4470, 0
      %v4490 = vsel %vm1238, %v4471, 0
      %v4493 = vsel %vm1238, %v4472, 0
      %v4496 = vsel %vm1238, %v4473, 0
      %v4499 = vsel %vm1238, %v4474, 0
      %v4502 = vsel %vm1238, %v4475, 0
      %v4505 = vsel %vm1238, %v4476, 0
      %v4508 = vsel %vm1238, %v4477, 0
      %v4511 = vsel %vm1238, %v4478, 0
      %v4514 = vsel %vm1238, %v4479, 0
      %v4517 = vsel %vm1238, %v4480, 0
      %v4520 = vsel %vm1238, %v4481, 0
      %v4523 = vsel %vm1238, %v4482, 0
      %v4526 = vsel %vm1238, %v4483, 0
      %v4529 = vsel %vm1238, %v4484, 0
      %v4532 = vsel %vm1238, %v4485, 0
      %4534 = vmatprep.subr.mxu0 0.0
      %4535 = vmatpush1.msra.mxu0 %v709
      %4536 = vmatprep.subr.mxu0 0.0
      %4537 = vmatpush1.msra.mxu0 %v710
      %4538 = vmatprep.subr.mxu0 0.0
      %4539 = vmatpush1.msra.mxu0 %v711
      %4540 = vmatprep.subr.mxu0 0.0
      %4541 = vmatpush1.msra.mxu0 %v712
      %4542 = vmatprep.subr.mxu0 0.0
      %4543 = vmatpush1.msra.mxu0 %v713
      %4544 = vmatprep.subr.mxu0 0.0
      %4545 = vmatpush1.msra.mxu0 %v714
      %4546 = vmatprep.subr.mxu0 0.0
      %4547 = vmatpush1.msra.mxu0 %v715
      %4548 = vmatprep.subr.mxu0 0.0
      %4549 = vmatpush1.msra.mxu0 %v716
      %4550 = vmatprep.subr.mxu0 0.0
      %4551 = vmatpush1.msra.mxu0 0.0
      %4552 = vmatprep.subr.mxu0 0.0
      %4553 = vmatpush1.msra.mxu0 0.0
      %4554 = vmatprep.subr.mxu0 0.0
      %4555 = vmatpush1.msra.mxu0 0.0
      %4556 = vmatprep.subr.mxu0 0.0
      %4557 = vmatpush1.msra.mxu0 0.0
      %4558 = vmatprep.subr.mxu0 0.0
      %4559 = vmatpush1.msra.mxu0 0.0
      %4560 = vmatprep.subr.mxu0 0.0
      %4561 = vmatpush1.msra.mxu0 0.0
      %4562 = vmatprep.subr.mxu0 0.0
      %4563 = vmatpush1.msra.mxu0 0.0
      %4564 = vmatprep.subr.mxu0 0.0
      %4565 = vmatpush1.msra.mxu0 0.0
      %4566 = vmatprep.subr.mxu0 0.0
      %4567 = vmatpush1.msra.mxu0 0.0
      %4568 = vmatprep.subr.mxu0 0.0
      %4569 = vmatpush1.msra.mxu0 0.0
      %4570 = vmatprep.subr.mxu0 0.0
      %4571 = vmatpush1.msra.mxu0 0.0
      %4572 = vmatprep.subr.mxu0 0.0
      %4573 = vmatpush1.msra.mxu0 0.0
      %4574 = vmatprep.subr.mxu0 0.0
      %4575 = vmatpush1.msra.mxu0 0.0
      %4576 = vmatprep.subr.mxu0 0.0
      %4577 = vmatpush1.msra.mxu0 0.0
      %4578 = vmatprep.subr.mxu0 0.0
      %4579 = vmatpush1.msra.mxu0 0.0
      %4580 = vmatprep.subr.mxu0 0.0
      %4581 = vmatpush1.msra.mxu0 0.0
      %4582 = vmatprep.subr.mxu0 0.0
      %4583 = vmatpush1.msra.mxu0 0.0
      %4584 = vmatprep.subr.mxu0 0.0
      %4585 = vmatpush1.msra.mxu0 0.0
      %4586 = vmatprep.subr.mxu0 0.0
      %4587 = vmatpush1.msra.mxu0 0.0
      %4588 = vmatprep.subr.mxu0 0.0
      %4589 = vmatpush1.msra.mxu0 0.0
      %4590 = vmatprep.subr.mxu0 0.0
      %4591 = vmatpush1.msra.mxu0 0.0
      %4592 = vmatprep.subr.mxu0 0.0
      %4593 = vmatpush1.msra.mxu0 0.0
      %4594 = vmatprep.subr.mxu0 0.0
      %4595 = vmatpush1.msra.mxu0 0.0
      %4596 = vmatprep.subr.mxu0 0.0
      %4597 = vmatpush1.msra.mxu0 0.0
      %4598 = vmatprep.mubr.f32.mxu0 0.0
      %4599 = vmatmul.mubr.f32.gmra.mrb[0].mxu0 %v4487
      %v4600 = vpop.f32.mrb[0].mxu0
      %v4601 = vadd.f32 %v1452, %v4600
      %v4602 = vpop.f32.mrb[0].mxu0
      %4603 = vmatprep.mubr.f32.mxu0 0.0
      %4604 = vmatmul.mubr.f32.gmra.mrb[0].mxu0 %v4490
      %v4605 = vpop.f32.mrb[0].mxu0
      %v4606 = vadd.f32 %v1452, %v4605
      %v4607 = vpop.f32.mrb[0].mxu0
      %4608 = vmatprep.mubr.f32.mxu0 0.0
      %4609 = vmatmul.mubr.f32.gmra.mrb[0].mxu0 %v4493
      %v4610 = vpop.f32.mrb[0].mxu0
      %v4611 = vadd.f32 %v1452, %v4610
      %v4612 = vpop.f32.mrb[0].mxu0
      %4613 = vmatprep.mubr.f32.mxu0 0.0
      %4614 = vmatmul.mubr.f32.gmra.mrb[0].mxu0 %v4496
      %v4615 = vpop.f32.mrb[0].mxu0
      %v4616 = vadd.f32 %v1452, %v4615
      %v4617 = vpop.f32.mrb[0].mxu0
      %4618 = vmatprep.mubr.f32.mxu0 0.0
      %4619 = vmatmul.mubr.f32.gmra.mrb[0].mxu0 %v4499
      %v4620 = vpop.f32.mrb[0].mxu0
      %v4621 = vadd.f32 %v1452, %v4620
      %v4622 = vpop.f32.mrb[0].mxu0
      %4623 = vmatprep.mubr.f32.mxu0 0.0
      %4624 = vmatmul.mubr.f32.gmra.mrb[0].mxu0 %v4502
      %v4625 = vpop.f32.mrb[0].mxu0
      %v4626 = vadd.f32 %v1452, %v4625
      %v4627 = vpop.f32.mrb[0].mxu0
      %4628 = vmatprep.mubr.f32.mxu0 0.0
      %4629 = vmatmul.mubr.f32.gmra.mrb[0].mxu0 %v4505
      %v4630 = vpop.f32.mrb[0].mxu0
      %v4631 = vadd.f32 %v1452, %v4630
      %v4632 = vpop.f32.mrb[0].mxu0
      %4633 = vmatprep.mubr.f32.mxu0 0.0
      %4634 = vmatmul.mubr.f32.gmra.mrb[0].mxu0 %v4508
      %v4635 = vpop.f32.mrb[0].mxu0
      %v4636 = vadd.f32 %v1452, %v4635
      %v4637 = vpop.f32.mrb[0].mxu0
      %4638 = vmatprep.mubr.f32.mxu0 0.0
      %4639 = vmatmul.mubr.f32.gmra.mrb[0].mxu0 %v4511
      %v4640 = vpop.f32.mrb[0].mxu0
      %v4641 = vadd.f32 %v1452, %v4640
      %v4642 = vpop.f32.mrb[0].mxu0
      %4643 = vmatprep.mubr.f32.mxu0 0.0
      %4644 = vmatmul.mubr.f32.gmra.mrb[0].mxu0 %v4514
      %v4645 = vpop.f32.mrb[0].mxu0
      %v4646 = vadd.f32 %v1452, %v4645
      %v4647 = vpop.f32.mrb[0].mxu0
      %4648 = vmatprep.mubr.f32.mxu0 0.0
      %4649 = vmatmul.mubr.f32.gmra.mrb[0].mxu0 %v4517
      %v4650 = vpop.f32.mrb[0].mxu0
      %v4651 = vadd.f32 %v1452, %v4650
      %v4652 = vpop.f32.mrb[0].mxu0
      %4653 = vmatprep.mubr.f32.mxu0 0.0
      %4654 = vmatmul.mubr.f32.gmra.mrb[0].mxu0 %v4520
      %v4655 = vpop.f32.mrb[0].mxu0
      %v4656 = vadd.f32 %v1452, %v4655
      %v4657 = vpop.f32.mrb[0].mxu0
      %4658 = vmatprep.mubr.f32.mxu0 0.0
      %4659 = vmatmul.mubr.f32.gmra.mrb[0].mxu0 %v4523
      %v4660 = vpop.f32.mrb[0].mxu0
      %v4661 = vadd.f32 %v1452, %v4660
      %v4662 = vpop.f32.mrb[0].mxu0
      %4663 = vmatprep.mubr.f32.mxu0 0.0
      %4664 = vmatmul.mubr.f32.gmra.mrb[0].mxu0 %v4526
      %v4665 = vpop.f32.mrb[0].mxu0
      %v4666 = vadd.f32 %v1452, %v4665
      %v4667 = vpop.f32.mrb[0].mxu0
      %4668 = vmatprep.mubr.f32.mxu0 0.0
      %4669 = vmatmul.mubr.f32.gmra.mrb[0].mxu0 %v4529
      %v4670 = vpop.f32.mrb[0].mxu0
      %v4671 = vadd.f32 %v1452, %v4670
      %v4672 = vpop.f32.mrb[0].mxu0
      %4673 = vmatprep.mubr.f32.mxu0 0.0
      %4674 = vmatmul.mubr.f32.gmra.mrb[0].mxu0 %v4532
      %v4675 = vpop.f32.mrb[0].mxu0
      %v4676 = vadd.f32 %v1452, %v4675
      %v4677 = vpop.f32.mrb[0].mxu0
      %4678 = vdwg.mxu0
      %v4679 = vadd.f32 %v3663, %v4601
      %v4680 = vadd.f32 %v3664, %v4606
      %v4681 = vadd.f32 %v3665, %v4611
      %v4682 = vadd.f32 %v3666, %v4616
      %v4683 = vadd.f32 %v3667, %v4621
      %v4684 = vadd.f32 %v3668, %v4626
      %v4685 = vadd.f32 %v3669, %v4631
      %v4686 = vadd.f32 %v3670, %v4636
      %v4687 = vadd.f32 %v3671, %v4641
      %v4688 = vadd.f32 %v3672, %v4646
      %v4689 = vadd.f32 %v3673, %v4651
      %v4690 = vadd.f32 %v3674, %v4656
      %v4691 = vadd.f32 %v3675, %v4661
      %v4692 = vadd.f32 %v3676, %v4666
      %v4693 = vadd.f32 %v3677, %v4671
      %v4694 = vadd.f32 %v3678, %v4676
      %v4695 = vld [vmem:[%s10] sm:$0xff]
      %v4696 = vld [vmem:[%s10 + $0x8] sm:$0xff]
      %v4697 = vld [vmem:[%s10 + $0x10] sm:$0xff]
      %v4698 = vld [vmem:[%s10 + $0x18] sm:$0xff]
      %v4699 = vld [vmem:[%s11] sm:$0x1]
      %4700 = vmatprep.subr.mxu0 0.0
      %4701 = vmatpush1.msra.mxu0 %v4695
      %4702 = vmatprep.subr.mxu0 0.0
      %4703 = vmatpush1.msra.mxu0 %v4696
      %4704 = vmatprep.subr.mxu0 0.0
      %4705 = vmatpush1.msra.mxu0 %v4697
      %4706 = vmatprep.subr.mxu0 0.0
      %4707 = vmatpush1.msra.mxu0 %v4698
      %4708 = vmatprep.subr.mxu0 0.0
      %4709 = vmatpush1.msra.mxu0 0.0
      %4710 = vmatprep.subr.mxu0 0.0
      %4711 = vmatpush1.msra.mxu0 0.0
      %4712 = vmatprep.subr.mxu0 0.0
      %4713 = vmatpush1.msra.mxu0 0.0
      %4714 = vmatprep.subr.mxu0 0.0
      %4715 = vmatpush1.msra.mxu0 0.0
      %4716 = vmatprep.subr.mxu0 0.0
      %4717 = vmatpush1.msra.mxu0 0.0
      %4718 = vmatprep.subr.mxu0 0.0
      %4719 = vmatpush1.msra.mxu0 0.0
      %4720 = vmatprep.subr.mxu0 0.0
      %4721 = vmatpush1.msra.mxu0 0.0
      %4722 = vmatprep.subr.mxu0 0.0
      %4723 = vmatpush1.msra.mxu0 0.0
      %4724 = vmatprep.subr.mxu0 0.0
      %4725 = vmatpush1.msra.mxu0 0.0
      %4726 = vmatprep.subr.mxu0 0.0
      %4727 = vmatpush1.msra.mxu0 0.0
      %4728 = vmatprep.subr.mxu0 0.0
      %4729 = vmatpush1.msra.mxu0 0.0
      %4730 = vmatprep.subr.mxu0 0.0
      %4731 = vmatpush1.msra.mxu0 0.0
      %4732 = vmatprep.subr.mxu0 0.0
      %4733 = vmatpush1.msra.mxu0 0.0
      %4734 = vmatprep.subr.mxu0 0.0
      %4735 = vmatpush1.msra.mxu0 0.0
      %4736 = vmatprep.subr.mxu0 0.0
      %4737 = vmatpush1.msra.mxu0 0.0
      %4738 = vmatprep.subr.mxu0 0.0
      %4739 = vmatpush1.msra.mxu0 0.0
      %4740 = vmatprep.subr.mxu0 0.0
      %4741 = vmatpush1.msra.mxu0 0.0
      %4742 = vmatprep.subr.mxu0 0.0
      %4743 = vmatpush1.msra.mxu0 0.0
      %4744 = vmatprep.subr.mxu0 0.0
      %4745 = vmatpush1.msra.mxu0 0.0
      %4746 = vmatprep.subr.mxu0 0.0
      %4747 = vmatpush1.msra.mxu0 0.0
      %4748 = vmatprep.subr.mxu0 0.0
      %4749 = vmatpush1.msra.mxu0 0.0
      %4750 = vmatprep.subr.mxu0 0.0
      %4751 = vmatpush1.msra.mxu0 0.0
      %4752 = vmatprep.subr.mxu0 0.0
      %4753 = vmatpush1.msra.mxu0 0.0
      %4754 = vmatprep.subr.mxu0 0.0
      %4755 = vmatpush1.msra.mxu0 0.0
      %4756 = vmatprep.subr.mxu0 0.0
      %4757 = vmatpush1.msra.mxu0 0.0
      %4758 = vmatprep.subr.mxu0 0.0
      %4759 = vmatpush1.msra.mxu0 0.0
      %4760 = vmatprep.subr.mxu0 0.0
      %4761 = vmatpush1.msra.mxu0 0.0
      %4762 = vmatprep.subr.mxu0 0.0
      %4763 = vmatpush1.msra.mxu0 0.0
      %4764 = vmatprep.mubr.f32.mxu0 0.0
      %4765 = vmatmul.mubr.f32.gmra.mrb[0].mxu0 %v4069
      %v4766 = vpop.f32.mrb[0].mxu0
      %v4767 = vadd.f32 0.0, %v4766
      %v4768 = vpop.f32.mrb[0].mxu0
      %4769 = vmatprep.mubr.f32.mxu0 0.0
      %4770 = vmatmul.mubr.f32.gmra.mrb[0].mxu0 %v4072
      %v4771 = vpop.f32.mrb[0].mxu0
      %v4772 = vadd.f32 0.0, %v4771
      %v4773 = vpop.f32.mrb[0].mxu0
      %4774 = vmatprep.mubr.f32.mxu0 0.0
      %4775 = vmatmul.mubr.f32.gmra.mrb[0].mxu0 %v4075
      %v4776 = vpop.f32.mrb[0].mxu0
      %v4777 = vadd.f32 0.0, %v4776
      %v4778 = vpop.f32.mrb[0].mxu0
      %4779 = vmatprep.mubr.f32.mxu0 0.0
      %4780 = vmatmul.mubr.f32.gmra.mrb[0].mxu0 %v4078
      %v4781 = vpop.f32.mrb[0].mxu0
      %v4782 = vadd.f32 0.0, %v4781
      %v4783 = vpop.f32.mrb[0].mxu0
      %4784 = vmatprep.mubr.f32.mxu0 0.0
      %4785 = vmatmul.mubr.f32.gmra.mrb[0].mxu0 %v4081
      %v4786 = vpop.f32.mrb[0].mxu0
      %v4787 = vadd.f32 0.0, %v4786
      %v4788 = vpop.f32.mrb[0].mxu0
      %4789 = vmatprep.mubr.f32.mxu0 0.0
      %4790 = vmatmul.mubr.f32.gmra.mrb[0].mxu0 %v4084
      %v4791 = vpop.f32.mrb[0].mxu0
      %v4792 = vadd.f32 0.0, %v4791
      %v4793 = vpop.f32.mrb[0].mxu0
      %4794 = vmatprep.mubr.f32.mxu0 0.0
      %4795 = vmatmul.mubr.f32.gmra.mrb[0].mxu0 %v4087
      %v4796 = vpop.f32.mrb[0].mxu0
      %v4797 = vadd.f32 0.0, %v4796
      %v4798 = vpop.f32.mrb[0].mxu0
      %4799 = vmatprep.mubr.f32.mxu0 0.0
      %4800 = vmatmul.mubr.f32.gmra.mrb[0].mxu0 %v4090
      %v4801 = vpop.f32.mrb[0].mxu0
      %v4802 = vadd.f32 0.0, %v4801
      %v4803 = vpop.f32.mrb[0].mxu0
      %4804 = vmatprep.mubr.f32.mxu0 0.0
      %4805 = vmatmul.mubr.f32.gmra.mrb[0].mxu0 %v4093
      %v4806 = vpop.f32.mrb[0].mxu0
      %v4807 = vadd.f32 0.0, %v4806
      %v4808 = vpop.f32.mrb[0].mxu0
      %4809 = vmatprep.mubr.f32.mxu0 0.0
      %4810 = vmatmul.mubr.f32.gmra.mrb[0].mxu0 %v4096
      %v4811 = vpop.f32.mrb[0].mxu0
      %v4812 = vadd.f32 0.0, %v4811
      %v4813 = vpop.f32.mrb[0].mxu0
      %4814 = vmatprep.mubr.f32.mxu0 0.0
      %4815 = vmatmul.mubr.f32.gmra.mrb[0].mxu0 %v4099
      %v4816 = vpop.f32.mrb[0].mxu0
      %v4817 = vadd.f32 0.0, %v4816
      %v4818 = vpop.f32.mrb[0].mxu0
      %4819 = vmatprep.mubr.f32.mxu0 0.0
      %4820 = vmatmul.mubr.f32.gmra.mrb[0].mxu0 %v4102
      %v4821 = vpop.f32.mrb[0].mxu0
      %v4822 = vadd.f32 0.0, %v4821
      %v4823 = vpop.f32.mrb[0].mxu0
      %4824 = vmatprep.mubr.f32.mxu0 0.0
      %4825 = vmatmul.mubr.f32.gmra.mrb[0].mxu0 %v4105
      %v4826 = vpop.f32.mrb[0].mxu0
      %v4827 = vadd.f32 0.0, %v4826
      %v4828 = vpop.f32.mrb[0].mxu0
      %4829 = vmatprep.mubr.f32.mxu0 0.0
      %4830 = vmatmul.mubr.f32.gmra.mrb[0].mxu0 %v4108
      %v4831 = vpop.f32.mrb[0].mxu0
      %v4832 = vadd.f32 0.0, %v4831
      %v4833 = vpop.f32.mrb[0].mxu0
      %4834 = vmatprep.mubr.f32.mxu0 0.0
      %4835 = vmatmul.mubr.f32.gmra.mrb[0].mxu0 %v4111
      %v4836 = vpop.f32.mrb[0].mxu0
      %v4837 = vadd.f32 0.0, %v4836
      %v4838 = vpop.f32.mrb[0].mxu0
      %4839 = vmatprep.mubr.f32.mxu0 0.0
      %4840 = vmatmul.mubr.f32.gmra.mrb[0].mxu0 %v4114
      %v4841 = vpop.f32.mrb[0].mxu0
      %v4842 = vadd.f32 0.0, %v4841
      %v4843 = vpop.f32.mrb[0].mxu0
      %4844 = vdwg.mxu0
      %v4845 = vpack.c.bf16 %v4772, %v4767
      %v4846 = vpack.c.bf16 %v4782, %v4777
      %v4847 = vpack.c.bf16 %v4792, %v4787
      %v4848 = vpack.c.bf16 %v4802, %v4797
      %v4849 = vpack.c.bf16 %v4812, %v4807
      %v4850 = vpack.c.bf16 %v4822, %v4817
      %v4851 = vpack.c.bf16 %v4832, %v4827
      %v4852 = vpack.c.bf16 %v4842, %v4837
      %v4854 = vlaneseq
      %v4855 = vshrl.u32 %v4854, 7
      %v4856 = vsub.s32 0, %v4855
      %v4857 = vrot.slane %v4699, %v4856
      %4859 = vmatprep.subr.bf16.mxu0 0
      %4860 = vmatpush1.bf16.msra.mxu0 %v4845
      %4861 = vmatprep.subr.bf16.mxu0 0
      %4862 = vmatpush1.bf16.msra.mxu0 %v4846
      %4863 = vmatprep.subr.bf16.mxu0 0
      %4864 = vmatpush1.bf16.msra.mxu0 %v4847
      %4865 = vmatprep.subr.bf16.mxu0 0
      %4866 = vmatpush1.bf16.msra.mxu0 %v4848
      %4867 = vmatprep.subr.bf16.mxu0 0
      %4868 = vmatpush1.bf16.msra.mxu0 %v4849
      %4869 = vmatprep.subr.bf16.mxu0 0
      %4870 = vmatpush1.bf16.msra.mxu0 %v4850
      %4871 = vmatprep.subr.bf16.mxu0 0
      %4872 = vmatpush1.bf16.msra.mxu0 %v4851
      %4873 = vmatprep.subr.bf16.mxu0 0
      %4874 = vmatpush1.bf16.msra.mxu0 %v4852
      %4875 = vmatprep.subr.bf16.mxu0 0
      %4876 = vmatpush1.bf16.msra.mxu0 0
      %4877 = vmatprep.subr.bf16.mxu0 0
      %4878 = vmatpush1.bf16.msra.mxu0 0
      %4879 = vmatprep.subr.bf16.mxu0 0
      %4880 = vmatpush1.bf16.msra.mxu0 0
      %4881 = vmatprep.subr.bf16.mxu0 0
      %4882 = vmatpush1.bf16.msra.mxu0 0
      %4883 = vmatprep.subr.bf16.mxu0 0
      %4884 = vmatpush1.bf16.msra.mxu0 0
      %4885 = vmatprep.subr.bf16.mxu0 0
      %4886 = vmatpush1.bf16.msra.mxu0 0
      %4887 = vmatprep.subr.bf16.mxu0 0
      %4888 = vmatpush1.bf16.msra.mxu0 0
      %4889 = vmatprep.subr.bf16.mxu0 0
      %4890 = vmatpush1.bf16.msra.mxu0 0
      %4891 = vmatprep.mubr.bf16.mxu0 0
      %4892 = vmatmul.mubr.bf16.gmra.mrb[0].mxu0 %v689
      %v4893 = vpop.f32.mrb[0].mxu0
      %v4894 = vadd.f32 %v4857, %v4893
      %v4895 = vpop.f32.mrb[0].mxu0
      %v4896 = vpop.f32.mrb[0].mxu0
      %v4897 = vadd.f32 %v4857, %v4896
      %v4898 = vpop.f32.mrb[0].mxu0
      %4899 = vmatprep.mubr.bf16.mxu0 0
      %4900 = vmatmul.mubr.bf16.gmra.mrb[0].mxu0 %v690
      %v4901 = vpop.f32.mrb[0].mxu0
      %v4902 = vadd.f32 %v4857, %v4901
      %v4903 = vpop.f32.mrb[0].mxu0
      %v4904 = vpop.f32.mrb[0].mxu0
      %v4905 = vadd.f32 %v4857, %v4904
      %v4906 = vpop.f32.mrb[0].mxu0
      %4907 = vmatprep.mubr.bf16.mxu0 0
      %4908 = vmatmul.mubr.bf16.gmra.mrb[0].mxu0 %v691
      %v4909 = vpop.f32.mrb[0].mxu0
      %v4910 = vadd.f32 %v4857, %v4909
      %v4911 = vpop.f32.mrb[0].mxu0
      %v4912 = vpop.f32.mrb[0].mxu0
      %v4913 = vadd.f32 %v4857, %v4912
      %v4914 = vpop.f32.mrb[0].mxu0
      %4915 = vmatprep.mubr.bf16.mxu0 0
      %4916 = vmatmul.mubr.bf16.gmra.mrb[0].mxu0 %v692
      %v4917 = vpop.f32.mrb[0].mxu0
      %v4918 = vadd.f32 %v4857, %v4917
      %v4919 = vpop.f32.mrb[0].mxu0
      %v4920 = vpop.f32.mrb[0].mxu0
      %v4921 = vadd.f32 %v4857, %v4920
      %v4922 = vpop.f32.mrb[0].mxu0
      %4923 = vmatprep.mubr.bf16.mxu0 0
      %4924 = vmatmul.mubr.bf16.gmra.mrb[0].mxu0 %v693
      %v4925 = vpop.f32.mrb[0].mxu0
      %v4926 = vadd.f32 %v4857, %v4925
      %v4927 = vpop.f32.mrb[0].mxu0
      %v4928 = vpop.f32.mrb[0].mxu0
      %v4929 = vadd.f32 %v4857, %v4928
      %v4930 = vpop.f32.mrb[0].mxu0
      %4931 = vmatprep.mubr.bf16.mxu0 0
      %4932 = vmatmul.mubr.bf16.gmra.mrb[0].mxu0 %v694
      %v4933 = vpop.f32.mrb[0].mxu0
      %v4934 = vadd.f32 %v4857, %v4933
      %v4935 = vpop.f32.mrb[0].mxu0
      %v4936 = vpop.f32.mrb[0].mxu0
      %v4937 = vadd.f32 %v4857, %v4936
      %v4938 = vpop.f32.mrb[0].mxu0
      %4939 = vmatprep.mubr.bf16.mxu0 0
      %4940 = vmatmul.mubr.bf16.gmra.mrb[0].mxu0 %v695
      %v4941 = vpop.f32.mrb[0].mxu0
      %v4942 = vadd.f32 %v4857, %v4941
      %v4943 = vpop.f32.mrb[0].mxu0
      %v4944 = vpop.f32.mrb[0].mxu0
      %v4945 = vadd.f32 %v4857, %v4944
      %v4946 = vpop.f32.mrb[0].mxu0
      %4947 = vmatprep.mubr.bf16.mxu0 0
      %4948 = vmatmul.mubr.bf16.gmra.mrb[0].mxu0 %v696
      %v4949 = vpop.f32.mrb[0].mxu0
      %v4950 = vadd.f32 %v4857, %v4949
      %v4951 = vpop.f32.mrb[0].mxu0
      %v4952 = vpop.f32.mrb[0].mxu0
      %v4953 = vadd.f32 %v4857, %v4952
      %v4954 = vpop.f32.mrb[0].mxu0
      %4955 = vdwg.mxu0
      %v4956 = vmax.f32 %v4894, 0.0
      %v4957 = vmax.f32 %v4897, 0.0
      %v4958 = vmax.f32 %v4902, 0.0
      %v4959 = vmax.f32 %v4905, 0.0
      %v4960 = vmax.f32 %v4910, 0.0
      %v4961 = vmax.f32 %v4913, 0.0
      %v4962 = vmax.f32 %v4918, 0.0
      %v4963 = vmax.f32 %v4921, 0.0
      %v4964 = vmax.f32 %v4926, 0.0
      %v4965 = vmax.f32 %v4929, 0.0
      %v4966 = vmax.f32 %v4934, 0.0
      %v4967 = vmax.f32 %v4937, 0.0
      %v4968 = vmax.f32 %v4942, 0.0
      %v4969 = vmax.f32 %v4945, 0.0
      %v4970 = vmax.f32 %v4950, 0.0
      %v4971 = vmax.f32 %v4953, 0.0
      %v4972 = vmul.f32 %v4956, %v4956
      %v4973 = vmul.f32 %v4957, %v4957
      %v4974 = vmul.f32 %v4958, %v4958
      %v4975 = vmul.f32 %v4959, %v4959
      %v4976 = vmul.f32 %v4960, %v4960
      %v4977 = vmul.f32 %v4961, %v4961
      %v4978 = vmul.f32 %v4962, %v4962
      %v4979 = vmul.f32 %v4963, %v4963
      %v4980 = vmul.f32 %v4964, %v4964
      %v4981 = vmul.f32 %v4965, %v4965
      %v4982 = vmul.f32 %v4966, %v4966
      %v4983 = vmul.f32 %v4967, %v4967
      %v4984 = vmul.f32 %v4968, %v4968
      %v4985 = vmul.f32 %v4969, %v4969
      %v4986 = vmul.f32 %v4970, %v4970
      %v4987 = vmul.f32 %v4971, %v4971
      %v4988 = vsel %vm932, %v4972, 0.0
      %4989 = vadd.xlane.f32.xlu0 %v4988
      %v4990 = vpop.xlane.xlu0 %4989
      %v4991 = vsel %vm932, %v4973, 0.0
      %4992 = vadd.xlane.f32.xlu0 %v4991
      %v4993 = vpop.xlane.xlu0 %4992
      %v4994 = vsel %vm932, %v4974, 0.0
      %4995 = vadd.xlane.f32.xlu0 %v4994
      %v4996 = vpop.xlane.xlu0 %4995
      %v4997 = vsel %vm932, %v4975, 0.0
      %4998 = vadd.xlane.f32.xlu0 %v4997
      %v4999 = vpop.xlane.xlu0 %4998
      %v5000 = vsel %vm932, %v4976, 0.0
      %5001 = vadd.xlane.f32.xlu0 %v5000
      %v5002 = vpop.xlane.xlu0 %5001
      %v5003 = vsel %vm932, %v4977, 0.0
      %5004 = vadd.xlane.f32.xlu0 %v5003
      %v5005 = vpop.xlane.xlu0 %5004
      %v5006 = vsel %vm932, %v4978, 0.0
      %5007 = vadd.xlane.f32.xlu0 %v5006
      %v5008 = vpop.xlane.xlu0 %5007
      %v5009 = vsel %vm932, %v4979, 0.0
      %5010 = vadd.xlane.f32.xlu0 %v5009
      %v5011 = vpop.xlane.xlu0 %5010
      %v5012 = vsel %vm932, %v4980, 0.0
      %5013 = vadd.xlane.f32.xlu0 %v5012
      %v5014 = vpop.xlane.xlu0 %5013
      %v5015 = vsel %vm932, %v4981, 0.0
      %5016 = vadd.xlane.f32.xlu0 %v5015
      %v5017 = vpop.xlane.xlu0 %5016
      %v5018 = vsel %vm932, %v4982, 0.0
      %5019 = vadd.xlane.f32.xlu0 %v5018
      %v5020 = vpop.xlane.xlu0 %5019
      %v5021 = vsel %vm932, %v4983, 0.0
      %5022 = vadd.xlane.f32.xlu0 %v5021
      %v5023 = vpop.xlane.xlu0 %5022
      %v5024 = vsel %vm932, %v4984, 0.0
      %5025 = vadd.xlane.f32.xlu0 %v5024
      %v5026 = vpop.xlane.xlu0 %5025
      %v5027 = vsel %vm932, %v4985, 0.0
      %5028 = vadd.xlane.f32.xlu0 %v5027
      %v5029 = vpop.xlane.xlu0 %5028
      %v5030 = vsel %vm932, %v4986, 0.0
      %5031 = vadd.xlane.f32.xlu0 %v5030
      %v5032 = vpop.xlane.xlu0 %5031
      %v5033 = vsel %vm932, %v4987, 0.0
      %5034 = vadd.xlane.f32.xlu0 %v5033
      %v5035 = vpop.xlane.xlu0 %5034
      %v5036 = vmax.f32 %v4990, 1e-24
      %v5037 = vmax.f32 %v4993, 1e-24
      %v5038 = vmax.f32 %v4996, 1e-24
      %v5039 = vmax.f32 %v4999, 1e-24
      %v5040 = vmax.f32 %v5002, 1e-24
      %v5041 = vmax.f32 %v5005, 1e-24
      %v5042 = vmax.f32 %v5008, 1e-24
      %v5043 = vmax.f32 %v5011, 1e-24
      %v5044 = vmax.f32 %v5014, 1e-24
      %v5045 = vmax.f32 %v5017, 1e-24
      %v5046 = vmax.f32 %v5020, 1e-24
      %v5047 = vmax.f32 %v5023, 1e-24
      %v5048 = vmax.f32 %v5026, 1e-24
      %v5049 = vmax.f32 %v5029, 1e-24
      %v5050 = vmax.f32 %v5032, 1e-24
      %v5051 = vmax.f32 %v5035, 1e-24
      %v5052 = vrsqrt.pop %v5036
      %v5053 = vrsqrt.pop %v5037
      %v5054 = vrsqrt.pop %v5038
      %v5055 = vrsqrt.pop %v5039
      %v5056 = vrsqrt.pop %v5040
      %v5057 = vrsqrt.pop %v5041
      %v5058 = vrsqrt.pop %v5042
      %v5059 = vrsqrt.pop %v5043
      %v5060 = vrsqrt.pop %v5044
      %v5061 = vrsqrt.pop %v5045
      %v5062 = vrsqrt.pop %v5046
      %v5063 = vrsqrt.pop %v5047
      %v5064 = vrsqrt.pop %v5048
      %v5065 = vrsqrt.pop %v5049
      %v5066 = vrsqrt.pop %v5050
      %v5067 = vrsqrt.pop %v5051
      %v5068 = vmul.f32 %v4956, %v5052
      %v5069 = vmul.f32 %v4957, %v5053
      %v5070 = vmul.f32 %v4958, %v5054
      %v5071 = vmul.f32 %v4959, %v5055
      %v5072 = vmul.f32 %v4960, %v5056
      %v5073 = vmul.f32 %v4961, %v5057
      %v5074 = vmul.f32 %v4962, %v5058
      %v5075 = vmul.f32 %v4963, %v5059
      %v5076 = vmul.f32 %v4964, %v5060
      %v5077 = vmul.f32 %v4965, %v5061
      %v5078 = vmul.f32 %v4966, %v5062
      %v5079 = vmul.f32 %v4967, %v5063
      %v5080 = vmul.f32 %v4968, %v5064
      %v5081 = vmul.f32 %v4969, %v5065
      %v5082 = vmul.f32 %v4970, %v5066
      %v5083 = vmul.f32 %v4971, %v5067
      %v5085 = vsel %vm932, %v5068, 0
      %v5088 = vsel %vm932, %v5069, 0
      %v5091 = vsel %vm932, %v5070, 0
      %v5094 = vsel %vm932, %v5071, 0
      %v5097 = vsel %vm932, %v5072, 0
      %v5100 = vsel %vm932, %v5073, 0
      %v5103 = vsel %vm932, %v5074, 0
      %v5106 = vsel %vm932, %v5075, 0
      %v5109 = vsel %vm932, %v5076, 0
      %v5112 = vsel %vm932, %v5077, 0
      %v5115 = vsel %vm932, %v5078, 0
      %v5118 = vsel %vm932, %v5079, 0
      %v5121 = vsel %vm932, %v5080, 0
      %v5124 = vsel %vm932, %v5081, 0
      %v5127 = vsel %vm932, %v5082, 0
      %v5130 = vsel %vm932, %v5083, 0
      %5132 = vmatprep.subr.mxu0 0.0
      %5133 = vmatpush1.msra.mxu0 %v697
      %5134 = vmatprep.subr.mxu0 0.0
      %5135 = vmatpush1.msra.mxu0 %v698
      %5136 = vmatprep.subr.mxu0 0.0
      %5137 = vmatpush1.msra.mxu0 %v699
      %5138 = vmatprep.subr.mxu0 0.0
      %5139 = vmatpush1.msra.mxu0 %v700
      %5140 = vmatprep.subr.mxu0 0.0
      %5141 = vmatpush1.msra.mxu0 0.0
      %5142 = vmatprep.subr.mxu0 0.0
      %5143 = vmatpush1.msra.mxu0 0.0
      %5144 = vmatprep.subr.mxu0 0.0
      %5145 = vmatpush1.msra.mxu0 0.0
      %5146 = vmatprep.subr.mxu0 0.0
      %5147 = vmatpush1.msra.mxu0 0.0
      %5148 = vmatprep.subr.mxu0 0.0
      %5149 = vmatpush1.msra.mxu0 0.0
      %5150 = vmatprep.subr.mxu0 0.0
      %5151 = vmatpush1.msra.mxu0 0.0
      %5152 = vmatprep.subr.mxu0 0.0
      %5153 = vmatpush1.msra.mxu0 0.0
      %5154 = vmatprep.subr.mxu0 0.0
      %5155 = vmatpush1.msra.mxu0 0.0
      %5156 = vmatprep.subr.mxu0 0.0
      %5157 = vmatpush1.msra.mxu0 0.0
      %5158 = vmatprep.subr.mxu0 0.0
      %5159 = vmatpush1.msra.mxu0 0.0
      %5160 = vmatprep.subr.mxu0 0.0
      %5161 = vmatpush1.msra.mxu0 0.0
      %5162 = vmatprep.subr.mxu0 0.0
      %5163 = vmatpush1.msra.mxu0 0.0
      %5164 = vmatprep.subr.mxu0 0.0
      %5165 = vmatpush1.msra.mxu0 0.0
      %5166 = vmatprep.subr.mxu0 0.0
      %5167 = vmatpush1.msra.mxu0 0.0
      %5168 = vmatprep.subr.mxu0 0.0
      %5169 = vmatpush1.msra.mxu0 0.0
      %5170 = vmatprep.subr.mxu0 0.0
      %5171 = vmatpush1.msra.mxu0 0.0
      %5172 = vmatprep.subr.mxu0 0.0
      %5173 = vmatpush1.msra.mxu0 0.0
      %5174 = vmatprep.subr.mxu0 0.0
      %5175 = vmatpush1.msra.mxu0 0.0
      %5176 = vmatprep.subr.mxu0 0.0
      %5177 = vmatpush1.msra.mxu0 0.0
      %5178 = vmatprep.subr.mxu0 0.0
      %5179 = vmatpush1.msra.mxu0 0.0
      %5180 = vmatprep.subr.mxu0 0.0
      %5181 = vmatpush1.msra.mxu0 0.0
      %5182 = vmatprep.subr.mxu0 0.0
      %5183 = vmatpush1.msra.mxu0 0.0
      %5184 = vmatprep.subr.mxu0 0.0
      %5185 = vmatpush1.msra.mxu0 0.0
      %5186 = vmatprep.subr.mxu0 0.0
      %5187 = vmatpush1.msra.mxu0 0.0
      %5188 = vmatprep.subr.mxu0 0.0
      %5189 = vmatpush1.msra.mxu0 0.0
      %5190 = vmatprep.subr.mxu0 0.0
      %5191 = vmatpush1.msra.mxu0 0.0
      %5192 = vmatprep.subr.mxu0 0.0
      %5193 = vmatpush1.msra.mxu0 0.0
      %5194 = vmatprep.subr.mxu0 0.0
      %5195 = vmatpush1.msra.mxu0 0.0
      %5196 = vmatprep.mubr.f32.mxu0 0.0
      %5197 = vmatmul.mubr.f32.gmra.mrb[0].mxu0 %v5085
      %v5198 = vpop.f32.mrb[0].mxu0
      %v5199 = vadd.f32 %v722, %v5198
      %v5200 = vpop.f32.mrb[0].mxu0
      %5201 = vmatprep.mubr.f32.mxu0 0.0
      %5202 = vmatmul.mubr.f32.gmra.mrb[0].mxu0 %v5088
      %v5203 = vpop.f32.mrb[0].mxu0
      %v5204 = vadd.f32 %v722, %v5203
      %v5205 = vpop.f32.mrb[0].mxu0
      %5206 = vmatprep.mubr.f32.mxu0 0.0
      %5207 = vmatmul.mubr.f32.gmra.mrb[0].mxu0 %v5091
      %v5208 = vpop.f32.mrb[0].mxu0
      %v5209 = vadd.f32 %v722, %v5208
      %v5210 = vpop.f32.mrb[0].mxu0
      %5211 = vmatprep.mubr.f32.mxu0 0.0
      %5212 = vmatmul.mubr.f32.gmra.mrb[0].mxu0 %v5094
      %v5213 = vpop.f32.mrb[0].mxu0
      %v5214 = vadd.f32 %v722, %v5213
      %v5215 = vpop.f32.mrb[0].mxu0
      %5216 = vmatprep.mubr.f32.mxu0 0.0
      %5217 = vmatmul.mubr.f32.gmra.mrb[0].mxu0 %v5097
      %v5218 = vpop.f32.mrb[0].mxu0
      %v5219 = vadd.f32 %v722, %v5218
      %v5220 = vpop.f32.mrb[0].mxu0
      %5221 = vmatprep.mubr.f32.mxu0 0.0
      %5222 = vmatmul.mubr.f32.gmra.mrb[0].mxu0 %v5100
      %v5223 = vpop.f32.mrb[0].mxu0
      %v5224 = vadd.f32 %v722, %v5223
      %v5225 = vpop.f32.mrb[0].mxu0
      %5226 = vmatprep.mubr.f32.mxu0 0.0
      %5227 = vmatmul.mubr.f32.gmra.mrb[0].mxu0 %v5103
      %v5228 = vpop.f32.mrb[0].mxu0
      %v5229 = vadd.f32 %v722, %v5228
      %v5230 = vpop.f32.mrb[0].mxu0
      %5231 = vmatprep.mubr.f32.mxu0 0.0
      %5232 = vmatmul.mubr.f32.gmra.mrb[0].mxu0 %v5106
      %v5233 = vpop.f32.mrb[0].mxu0
      %v5234 = vadd.f32 %v722, %v5233
      %v5235 = vpop.f32.mrb[0].mxu0
      %5236 = vmatprep.mubr.f32.mxu0 0.0
      %5237 = vmatmul.mubr.f32.gmra.mrb[0].mxu0 %v5109
      %v5238 = vpop.f32.mrb[0].mxu0
      %v5239 = vadd.f32 %v722, %v5238
      %v5240 = vpop.f32.mrb[0].mxu0
      %5241 = vmatprep.mubr.f32.mxu0 0.0
      %5242 = vmatmul.mubr.f32.gmra.mrb[0].mxu0 %v5112
      %v5243 = vpop.f32.mrb[0].mxu0
      %v5244 = vadd.f32 %v722, %v5243
      %v5245 = vpop.f32.mrb[0].mxu0
      %5246 = vmatprep.mubr.f32.mxu0 0.0
      %5247 = vmatmul.mubr.f32.gmra.mrb[0].mxu0 %v5115
      %v5248 = vpop.f32.mrb[0].mxu0
      %v5249 = vadd.f32 %v722, %v5248
      %v5250 = vpop.f32.mrb[0].mxu0
      %5251 = vmatprep.mubr.f32.mxu0 0.0
      %5252 = vmatmul.mubr.f32.gmra.mrb[0].mxu0 %v5118
      %v5253 = vpop.f32.mrb[0].mxu0
      %v5254 = vadd.f32 %v722, %v5253
      %v5255 = vpop.f32.mrb[0].mxu0
      %5256 = vmatprep.mubr.f32.mxu0 0.0
      %5257 = vmatmul.mubr.f32.gmra.mrb[0].mxu0 %v5121
      %v5258 = vpop.f32.mrb[0].mxu0
      %v5259 = vadd.f32 %v722, %v5258
      %v5260 = vpop.f32.mrb[0].mxu0
      %5261 = vmatprep.mubr.f32.mxu0 0.0
      %5262 = vmatmul.mubr.f32.gmra.mrb[0].mxu0 %v5124
      %v5263 = vpop.f32.mrb[0].mxu0
      %v5264 = vadd.f32 %v722, %v5263
      %v5265 = vpop.f32.mrb[0].mxu0
      %5266 = vmatprep.mubr.f32.mxu0 0.0
      %5267 = vmatmul.mubr.f32.gmra.mrb[0].mxu0 %v5127
      %v5268 = vpop.f32.mrb[0].mxu0
      %v5269 = vadd.f32 %v722, %v5268
      %v5270 = vpop.f32.mrb[0].mxu0
      %5271 = vmatprep.mubr.f32.mxu0 0.0
      %5272 = vmatmul.mubr.f32.gmra.mrb[0].mxu0 %v5130
      %v5273 = vpop.f32.mrb[0].mxu0
      %v5274 = vadd.f32 %v722, %v5273
      %v5275 = vpop.f32.mrb[0].mxu0
      %5276 = vdwg.mxu0
      %v5277 = vmax.f32 %v5199, 0.0
      %v5278 = vmax.f32 %v5204, 0.0
      %v5279 = vmax.f32 %v5209, 0.0
      %v5280 = vmax.f32 %v5214, 0.0
      %v5281 = vmax.f32 %v5219, 0.0
      %v5282 = vmax.f32 %v5224, 0.0
      %v5283 = vmax.f32 %v5229, 0.0
      %v5284 = vmax.f32 %v5234, 0.0
      %v5285 = vmax.f32 %v5239, 0.0
      %v5286 = vmax.f32 %v5244, 0.0
      %v5287 = vmax.f32 %v5249, 0.0
      %v5288 = vmax.f32 %v5254, 0.0
      %v5289 = vmax.f32 %v5259, 0.0
      %v5290 = vmax.f32 %v5264, 0.0
      %v5291 = vmax.f32 %v5269, 0.0
      %v5292 = vmax.f32 %v5274, 0.0
      %v5294 = vsel %vm1238, %v5277, 0
      %v5297 = vsel %vm1238, %v5278, 0
      %v5300 = vsel %vm1238, %v5279, 0
      %v5303 = vsel %vm1238, %v5280, 0
      %v5306 = vsel %vm1238, %v5281, 0
      %v5309 = vsel %vm1238, %v5282, 0
      %v5312 = vsel %vm1238, %v5283, 0
      %v5315 = vsel %vm1238, %v5284, 0
      %v5318 = vsel %vm1238, %v5285, 0
      %v5321 = vsel %vm1238, %v5286, 0
      %v5324 = vsel %vm1238, %v5287, 0
      %v5327 = vsel %vm1238, %v5288, 0
      %v5330 = vsel %vm1238, %v5289, 0
      %v5333 = vsel %vm1238, %v5290, 0
      %v5336 = vsel %vm1238, %v5291, 0
      %v5339 = vsel %vm1238, %v5292, 0
      %5341 = vmatprep.subr.mxu0 0.0
      %5342 = vmatpush1.msra.mxu0 %v701
      %5343 = vmatprep.subr.mxu0 0.0
      %5344 = vmatpush1.msra.mxu0 %v702
      %5345 = vmatprep.subr.mxu0 0.0
      %5346 = vmatpush1.msra.mxu0 %v703
      %5347 = vmatprep.subr.mxu0 0.0
      %5348 = vmatpush1.msra.mxu0 %v704
      %5349 = vmatprep.subr.mxu0 0.0
      %5350 = vmatpush1.msra.mxu0 %v705
      %5351 = vmatprep.subr.mxu0 0.0
      %5352 = vmatpush1.msra.mxu0 %v706
      %5353 = vmatprep.subr.mxu0 0.0
      %5354 = vmatpush1.msra.mxu0 %v707
      %5355 = vmatprep.subr.mxu0 0.0
      %5356 = vmatpush1.msra.mxu0 %v708
      %5357 = vmatprep.subr.mxu0 0.0
      %5358 = vmatpush1.msra.mxu0 0.0
      %5359 = vmatprep.subr.mxu0 0.0
      %5360 = vmatpush1.msra.mxu0 0.0
      %5361 = vmatprep.subr.mxu0 0.0
      %5362 = vmatpush1.msra.mxu0 0.0
      %5363 = vmatprep.subr.mxu0 0.0
      %5364 = vmatpush1.msra.mxu0 0.0
      %5365 = vmatprep.subr.mxu0 0.0
      %5366 = vmatpush1.msra.mxu0 0.0
      %5367 = vmatprep.subr.mxu0 0.0
      %5368 = vmatpush1.msra.mxu0 0.0
      %5369 = vmatprep.subr.mxu0 0.0
      %5370 = vmatpush1.msra.mxu0 0.0
      %5371 = vmatprep.subr.mxu0 0.0
      %5372 = vmatpush1.msra.mxu0 0.0
      %5373 = vmatprep.subr.mxu0 0.0
      %5374 = vmatpush1.msra.mxu0 0.0
      %5375 = vmatprep.subr.mxu0 0.0
      %5376 = vmatpush1.msra.mxu0 0.0
      %5377 = vmatprep.subr.mxu0 0.0
      %5378 = vmatpush1.msra.mxu0 0.0
      %5379 = vmatprep.subr.mxu0 0.0
      %5380 = vmatpush1.msra.mxu0 0.0
      %5381 = vmatprep.subr.mxu0 0.0
      %5382 = vmatpush1.msra.mxu0 0.0
      %5383 = vmatprep.subr.mxu0 0.0
      %5384 = vmatpush1.msra.mxu0 0.0
      %5385 = vmatprep.subr.mxu0 0.0
      %5386 = vmatpush1.msra.mxu0 0.0
      %5387 = vmatprep.subr.mxu0 0.0
      %5388 = vmatpush1.msra.mxu0 0.0
      %5389 = vmatprep.subr.mxu0 0.0
      %5390 = vmatpush1.msra.mxu0 0.0
      %5391 = vmatprep.subr.mxu0 0.0
      %5392 = vmatpush1.msra.mxu0 0.0
      %5393 = vmatprep.subr.mxu0 0.0
      %5394 = vmatpush1.msra.mxu0 0.0
      %5395 = vmatprep.subr.mxu0 0.0
      %5396 = vmatpush1.msra.mxu0 0.0
      %5397 = vmatprep.subr.mxu0 0.0
      %5398 = vmatpush1.msra.mxu0 0.0
      %5399 = vmatprep.subr.mxu0 0.0
      %5400 = vmatpush1.msra.mxu0 0.0
      %5401 = vmatprep.subr.mxu0 0.0
      %5402 = vmatpush1.msra.mxu0 0.0
      %5403 = vmatprep.subr.mxu0 0.0
      %5404 = vmatpush1.msra.mxu0 0.0
      %5405 = vmatprep.mubr.f32.mxu0 0.0
      %5406 = vmatmul.mubr.f32.gmra.mrb[0].mxu0 %v5294
      %v5407 = vpop.f32.mrb[0].mxu0
      %v5408 = vadd.f32 %v729, %v5407
      %v5409 = vpop.f32.mrb[0].mxu0
      %5410 = vmatprep.mubr.f32.mxu0 0.0
      %5411 = vmatmul.mubr.f32.gmra.mrb[0].mxu0 %v5297
      %v5412 = vpop.f32.mrb[0].mxu0
      %v5413 = vadd.f32 %v729, %v5412
      %v5414 = vpop.f32.mrb[0].mxu0
      %5415 = vmatprep.mubr.f32.mxu0 0.0
      %5416 = vmatmul.mubr.f32.gmra.mrb[0].mxu0 %v5300
      %v5417 = vpop.f32.mrb[0].mxu0
      %v5418 = vadd.f32 %v729, %v5417
      %v5419 = vpop.f32.mrb[0].mxu0
      %5420 = vmatprep.mubr.f32.mxu0 0.0
      %5421 = vmatmul.mubr.f32.gmra.mrb[0].mxu0 %v5303
      %v5422 = vpop.f32.mrb[0].mxu0
      %v5423 = vadd.f32 %v729, %v5422
      %v5424 = vpop.f32.mrb[0].mxu0
      %5425 = vmatprep.mubr.f32.mxu0 0.0
      %5426 = vmatmul.mubr.f32.gmra.mrb[0].mxu0 %v5306
      %v5427 = vpop.f32.mrb[0].mxu0
      %v5428 = vadd.f32 %v729, %v5427
      %v5429 = vpop.f32.mrb[0].mxu0
      %5430 = vmatprep.mubr.f32.mxu0 0.0
      %5431 = vmatmul.mubr.f32.gmra.mrb[0].mxu0 %v5309
      %v5432 = vpop.f32.mrb[0].mxu0
      %v5433 = vadd.f32 %v729, %v5432
      %v5434 = vpop.f32.mrb[0].mxu0
      %5435 = vmatprep.mubr.f32.mxu0 0.0
      %5436 = vmatmul.mubr.f32.gmra.mrb[0].mxu0 %v5312
      %v5437 = vpop.f32.mrb[0].mxu0
      %v5438 = vadd.f32 %v729, %v5437
      %v5439 = vpop.f32.mrb[0].mxu0
      %5440 = vmatprep.mubr.f32.mxu0 0.0
      %5441 = vmatmul.mubr.f32.gmra.mrb[0].mxu0 %v5315
      %v5442 = vpop.f32.mrb[0].mxu0
      %v5443 = vadd.f32 %v729, %v5442
      %v5444 = vpop.f32.mrb[0].mxu0
      %5445 = vmatprep.mubr.f32.mxu0 0.0
      %5446 = vmatmul.mubr.f32.gmra.mrb[0].mxu0 %v5318
      %v5447 = vpop.f32.mrb[0].mxu0
      %v5448 = vadd.f32 %v729, %v5447
      %v5449 = vpop.f32.mrb[0].mxu0
      %5450 = vmatprep.mubr.f32.mxu0 0.0
      %5451 = vmatmul.mubr.f32.gmra.mrb[0].mxu0 %v5321
      %v5452 = vpop.f32.mrb[0].mxu0
      %v5453 = vadd.f32 %v729, %v5452
      %v5454 = vpop.f32.mrb[0].mxu0
      %5455 = vmatprep.mubr.f32.mxu0 0.0
      %5456 = vmatmul.mubr.f32.gmra.mrb[0].mxu0 %v5324
      %v5457 = vpop.f32.mrb[0].mxu0
      %v5458 = vadd.f32 %v729, %v5457
      %v5459 = vpop.f32.mrb[0].mxu0
      %5460 = vmatprep.mubr.f32.mxu0 0.0
      %5461 = vmatmul.mubr.f32.gmra.mrb[0].mxu0 %v5327
      %v5462 = vpop.f32.mrb[0].mxu0
      %v5463 = vadd.f32 %v729, %v5462
      %v5464 = vpop.f32.mrb[0].mxu0
      %5465 = vmatprep.mubr.f32.mxu0 0.0
      %5466 = vmatmul.mubr.f32.gmra.mrb[0].mxu0 %v5330
      %v5467 = vpop.f32.mrb[0].mxu0
      %v5468 = vadd.f32 %v729, %v5467
      %v5469 = vpop.f32.mrb[0].mxu0
      %5470 = vmatprep.mubr.f32.mxu0 0.0
      %5471 = vmatmul.mubr.f32.gmra.mrb[0].mxu0 %v5333
      %v5472 = vpop.f32.mrb[0].mxu0
      %v5473 = vadd.f32 %v729, %v5472
      %v5474 = vpop.f32.mrb[0].mxu0
      %5475 = vmatprep.mubr.f32.mxu0 0.0
      %5476 = vmatmul.mubr.f32.gmra.mrb[0].mxu0 %v5336
      %v5477 = vpop.f32.mrb[0].mxu0
      %v5478 = vadd.f32 %v729, %v5477
      %v5479 = vpop.f32.mrb[0].mxu0
      %5480 = vmatprep.mubr.f32.mxu0 0.0
      %5481 = vmatmul.mubr.f32.gmra.mrb[0].mxu0 %v5339
      %v5482 = vpop.f32.mrb[0].mxu0
      %v5483 = vadd.f32 %v729, %v5482
      %v5484 = vpop.f32.mrb[0].mxu0
      %5485 = vdwg.mxu0
      %v5486 = vmax.f32 %v5408, 0.0
      %v5487 = vmax.f32 %v5413, 0.0
      %v5488 = vmax.f32 %v5418, 0.0
      %v5489 = vmax.f32 %v5423, 0.0
      %v5490 = vmax.f32 %v5428, 0.0
      %v5491 = vmax.f32 %v5433, 0.0
      %v5492 = vmax.f32 %v5438, 0.0
      %v5493 = vmax.f32 %v5443, 0.0
      %v5494 = vmax.f32 %v5448, 0.0
      %v5495 = vmax.f32 %v5453, 0.0
      %v5496 = vmax.f32 %v5458, 0.0
      %v5497 = vmax.f32 %v5463, 0.0
      %v5498 = vmax.f32 %v5468, 0.0
      %v5499 = vmax.f32 %v5473, 0.0
      %v5500 = vmax.f32 %v5478, 0.0
      %v5501 = vmax.f32 %v5483, 0.0
      %v5503 = vsel %vm1238, %v5486, 0
      %v5506 = vsel %vm1238, %v5487, 0
      %v5509 = vsel %vm1238, %v5488, 0
      %v5512 = vsel %vm1238, %v5489, 0
      %v5515 = vsel %vm1238, %v5490, 0
      %v5518 = vsel %vm1238, %v5491, 0
      %v5521 = vsel %vm1238, %v5492, 0
      %v5524 = vsel %vm1238, %v5493, 0
      %v5527 = vsel %vm1238, %v5494, 0
      %v5530 = vsel %vm1238, %v5495, 0
      %v5533 = vsel %vm1238, %v5496, 0
      %v5536 = vsel %vm1238, %v5497, 0
      %v5539 = vsel %vm1238, %v5498, 0
      %v5542 = vsel %vm1238, %v5499, 0
      %v5545 = vsel %vm1238, %v5500, 0
      %v5548 = vsel %vm1238, %v5501, 0
      %5550 = vmatprep.subr.mxu0 0.0
      %5551 = vmatpush1.msra.mxu0 %v709
      %5552 = vmatprep.subr.mxu0 0.0
      %5553 = vmatpush1.msra.mxu0 %v710
      %5554 = vmatprep.subr.mxu0 0.0
      %5555 = vmatpush1.msra.mxu0 %v711
      %5556 = vmatprep.subr.mxu0 0.0
      %5557 = vmatpush1.msra.mxu0 %v712
      %5558 = vmatprep.subr.mxu0 0.0
      %5559 = vmatpush1.msra.mxu0 %v713
      %5560 = vmatprep.subr.mxu0 0.0
      %5561 = vmatpush1.msra.mxu0 %v714
      %5562 = vmatprep.subr.mxu0 0.0
      %5563 = vmatpush1.msra.mxu0 %v715
      %5564 = vmatprep.subr.mxu0 0.0
      %5565 = vmatpush1.msra.mxu0 %v716
      %5566 = vmatprep.subr.mxu0 0.0
      %5567 = vmatpush1.msra.mxu0 0.0
      %5568 = vmatprep.subr.mxu0 0.0
      %5569 = vmatpush1.msra.mxu0 0.0
      %5570 = vmatprep.subr.mxu0 0.0
      %5571 = vmatpush1.msra.mxu0 0.0
      %5572 = vmatprep.subr.mxu0 0.0
      %5573 = vmatpush1.msra.mxu0 0.0
      %5574 = vmatprep.subr.mxu0 0.0
      %5575 = vmatpush1.msra.mxu0 0.0
      %5576 = vmatprep.subr.mxu0 0.0
      %5577 = vmatpush1.msra.mxu0 0.0
      %5578 = vmatprep.subr.mxu0 0.0
      %5579 = vmatpush1.msra.mxu0 0.0
      %5580 = vmatprep.subr.mxu0 0.0
      %5581 = vmatpush1.msra.mxu0 0.0
      %5582 = vmatprep.subr.mxu0 0.0
      %5583 = vmatpush1.msra.mxu0 0.0
      %5584 = vmatprep.subr.mxu0 0.0
      %5585 = vmatpush1.msra.mxu0 0.0
      %5586 = vmatprep.subr.mxu0 0.0
      %5587 = vmatpush1.msra.mxu0 0.0
      %5588 = vmatprep.subr.mxu0 0.0
      %5589 = vmatpush1.msra.mxu0 0.0
      %5590 = vmatprep.subr.mxu0 0.0
      %5591 = vmatpush1.msra.mxu0 0.0
      %5592 = vmatprep.subr.mxu0 0.0
      %5593 = vmatpush1.msra.mxu0 0.0
      %5594 = vmatprep.subr.mxu0 0.0
      %5595 = vmatpush1.msra.mxu0 0.0
      %5596 = vmatprep.subr.mxu0 0.0
      %5597 = vmatpush1.msra.mxu0 0.0
      %5598 = vmatprep.subr.mxu0 0.0
      %5599 = vmatpush1.msra.mxu0 0.0
      %5600 = vmatprep.subr.mxu0 0.0
      %5601 = vmatpush1.msra.mxu0 0.0
      %5602 = vmatprep.subr.mxu0 0.0
      %5603 = vmatpush1.msra.mxu0 0.0
      %5604 = vmatprep.subr.mxu0 0.0
      %5605 = vmatpush1.msra.mxu0 0.0
      %5606 = vmatprep.subr.mxu0 0.0
      %5607 = vmatpush1.msra.mxu0 0.0
      %5608 = vmatprep.subr.mxu0 0.0
      %5609 = vmatpush1.msra.mxu0 0.0
      %5610 = vmatprep.subr.mxu0 0.0
      %5611 = vmatpush1.msra.mxu0 0.0
      %5612 = vmatprep.subr.mxu0 0.0
      %5613 = vmatpush1.msra.mxu0 0.0
      %5614 = vmatprep.mubr.f32.mxu0 0.0
      %5615 = vmatmul.mubr.f32.gmra.mrb[0].mxu0 %v5503
      %v5616 = vpop.f32.mrb[0].mxu0
      %v5617 = vadd.f32 %v1452, %v5616
      %v5618 = vpop.f32.mrb[0].mxu0
      %5619 = vmatprep.mubr.f32.mxu0 0.0
      %5620 = vmatmul.mubr.f32.gmra.mrb[0].mxu0 %v5506
      %v5621 = vpop.f32.mrb[0].mxu0
      %v5622 = vadd.f32 %v1452, %v5621
      %v5623 = vpop.f32.mrb[0].mxu0
      %5624 = vmatprep.mubr.f32.mxu0 0.0
      %5625 = vmatmul.mubr.f32.gmra.mrb[0].mxu0 %v5509
      %v5626 = vpop.f32.mrb[0].mxu0
      %v5627 = vadd.f32 %v1452, %v5626
      %v5628 = vpop.f32.mrb[0].mxu0
      %5629 = vmatprep.mubr.f32.mxu0 0.0
      %5630 = vmatmul.mubr.f32.gmra.mrb[0].mxu0 %v5512
      %v5631 = vpop.f32.mrb[0].mxu0
      %v5632 = vadd.f32 %v1452, %v5631
      %v5633 = vpop.f32.mrb[0].mxu0
      %5634 = vmatprep.mubr.f32.mxu0 0.0
      %5635 = vmatmul.mubr.f32.gmra.mrb[0].mxu0 %v5515
      %v5636 = vpop.f32.mrb[0].mxu0
      %v5637 = vadd.f32 %v1452, %v5636
      %v5638 = vpop.f32.mrb[0].mxu0
      %5639 = vmatprep.mubr.f32.mxu0 0.0
      %5640 = vmatmul.mubr.f32.gmra.mrb[0].mxu0 %v5518
      %v5641 = vpop.f32.mrb[0].mxu0
      %v5642 = vadd.f32 %v1452, %v5641
      %v5643 = vpop.f32.mrb[0].mxu0
      %5644 = vmatprep.mubr.f32.mxu0 0.0
      %5645 = vmatmul.mubr.f32.gmra.mrb[0].mxu0 %v5521
      %v5646 = vpop.f32.mrb[0].mxu0
      %v5647 = vadd.f32 %v1452, %v5646
      %v5648 = vpop.f32.mrb[0].mxu0
      %5649 = vmatprep.mubr.f32.mxu0 0.0
      %5650 = vmatmul.mubr.f32.gmra.mrb[0].mxu0 %v5524
      %v5651 = vpop.f32.mrb[0].mxu0
      %v5652 = vadd.f32 %v1452, %v5651
      %v5653 = vpop.f32.mrb[0].mxu0
      %5654 = vmatprep.mubr.f32.mxu0 0.0
      %5655 = vmatmul.mubr.f32.gmra.mrb[0].mxu0 %v5527
      %v5656 = vpop.f32.mrb[0].mxu0
      %v5657 = vadd.f32 %v1452, %v5656
      %v5658 = vpop.f32.mrb[0].mxu0
      %5659 = vmatprep.mubr.f32.mxu0 0.0
      %5660 = vmatmul.mubr.f32.gmra.mrb[0].mxu0 %v5530
      %v5661 = vpop.f32.mrb[0].mxu0
      %v5662 = vadd.f32 %v1452, %v5661
      %v5663 = vpop.f32.mrb[0].mxu0
      %5664 = vmatprep.mubr.f32.mxu0 0.0
      %5665 = vmatmul.mubr.f32.gmra.mrb[0].mxu0 %v5533
      %v5666 = vpop.f32.mrb[0].mxu0
      %v5667 = vadd.f32 %v1452, %v5666
      %v5668 = vpop.f32.mrb[0].mxu0
      %5669 = vmatprep.mubr.f32.mxu0 0.0
      %5670 = vmatmul.mubr.f32.gmra.mrb[0].mxu0 %v5536
      %v5671 = vpop.f32.mrb[0].mxu0
      %v5672 = vadd.f32 %v1452, %v5671
      %v5673 = vpop.f32.mrb[0].mxu0
      %5674 = vmatprep.mubr.f32.mxu0 0.0
      %5675 = vmatmul.mubr.f32.gmra.mrb[0].mxu0 %v5539
      %v5676 = vpop.f32.mrb[0].mxu0
      %v5677 = vadd.f32 %v1452, %v5676
      %v5678 = vpop.f32.mrb[0].mxu0
      %5679 = vmatprep.mubr.f32.mxu0 0.0
      %5680 = vmatmul.mubr.f32.gmra.mrb[0].mxu0 %v5542
      %v5681 = vpop.f32.mrb[0].mxu0
      %v5682 = vadd.f32 %v1452, %v5681
      %v5683 = vpop.f32.mrb[0].mxu0
      %5684 = vmatprep.mubr.f32.mxu0 0.0
      %5685 = vmatmul.mubr.f32.gmra.mrb[0].mxu0 %v5545
      %v5686 = vpop.f32.mrb[0].mxu0
      %v5687 = vadd.f32 %v1452, %v5686
      %v5688 = vpop.f32.mrb[0].mxu0
      %5689 = vmatprep.mubr.f32.mxu0 0.0
      %5690 = vmatmul.mubr.f32.gmra.mrb[0].mxu0 %v5548
      %v5691 = vpop.f32.mrb[0].mxu0
      %v5692 = vadd.f32 %v1452, %v5691
      %v5693 = vpop.f32.mrb[0].mxu0
      %5694 = vdwg.mxu0
      %v5695 = vadd.f32 %v4679, %v5617
      %v5696 = vadd.f32 %v4680, %v5622
      %v5697 = vadd.f32 %v4681, %v5627
      %v5698 = vadd.f32 %v4682, %v5632
      %v5699 = vadd.f32 %v4683, %v5637
      %v5700 = vadd.f32 %v4684, %v5642
      %v5701 = vadd.f32 %v4685, %v5647
      %v5702 = vadd.f32 %v4686, %v5652
      %v5703 = vadd.f32 %v4687, %v5657
      %v5704 = vadd.f32 %v4688, %v5662
      %v5705 = vadd.f32 %v4689, %v5667
      %v5706 = vadd.f32 %v4690, %v5672
      %v5707 = vadd.f32 %v4691, %v5677
      %v5708 = vadd.f32 %v4692, %v5682
      %v5709 = vadd.f32 %v4693, %v5687
      %v5710 = vadd.f32 %v4694, %v5692
      %v5711 = vld [vmem:[%s12] sm:$0xff]
      %v5712 = vld [vmem:[%s12 + $0x8] sm:$0xff]
      %v5713 = vld [vmem:[%s12 + $0x10] sm:$0xff]
      %v5714 = vld [vmem:[%s12 + $0x18] sm:$0xff]
      %v5715 = vld [vmem:[%s13] sm:$0x1]
      %5716 = vmatprep.subr.mxu0 0.0
      %5717 = vmatpush1.msra.mxu0 %v5711
      %5718 = vmatprep.subr.mxu0 0.0
      %5719 = vmatpush1.msra.mxu0 %v5712
      %5720 = vmatprep.subr.mxu0 0.0
      %5721 = vmatpush1.msra.mxu0 %v5713
      %5722 = vmatprep.subr.mxu0 0.0
      %5723 = vmatpush1.msra.mxu0 %v5714
      %5724 = vmatprep.subr.mxu0 0.0
      %5725 = vmatpush1.msra.mxu0 0.0
      %5726 = vmatprep.subr.mxu0 0.0
      %5727 = vmatpush1.msra.mxu0 0.0
      %5728 = vmatprep.subr.mxu0 0.0
      %5729 = vmatpush1.msra.mxu0 0.0
      %5730 = vmatprep.subr.mxu0 0.0
      %5731 = vmatpush1.msra.mxu0 0.0
      %5732 = vmatprep.subr.mxu0 0.0
      %5733 = vmatpush1.msra.mxu0 0.0
      %5734 = vmatprep.subr.mxu0 0.0
      %5735 = vmatpush1.msra.mxu0 0.0
      %5736 = vmatprep.subr.mxu0 0.0
      %5737 = vmatpush1.msra.mxu0 0.0
      %5738 = vmatprep.subr.mxu0 0.0
      %5739 = vmatpush1.msra.mxu0 0.0
      %5740 = vmatprep.subr.mxu0 0.0
      %5741 = vmatpush1.msra.mxu0 0.0
      %5742 = vmatprep.subr.mxu0 0.0
      %5743 = vmatpush1.msra.mxu0 0.0
      %5744 = vmatprep.subr.mxu0 0.0
      %5745 = vmatpush1.msra.mxu0 0.0
      %5746 = vmatprep.subr.mxu0 0.0
      %5747 = vmatpush1.msra.mxu0 0.0
      %5748 = vmatprep.subr.mxu0 0.0
      %5749 = vmatpush1.msra.mxu0 0.0
      %5750 = vmatprep.subr.mxu0 0.0
      %5751 = vmatpush1.msra.mxu0 0.0
      %5752 = vmatprep.subr.mxu0 0.0
      %5753 = vmatpush1.msra.mxu0 0.0
      %5754 = vmatprep.subr.mxu0 0.0
      %5755 = vmatpush1.msra.mxu0 0.0
      %5756 = vmatprep.subr.mxu0 0.0
      %5757 = vmatpush1.msra.mxu0 0.0
      %5758 = vmatprep.subr.mxu0 0.0
      %5759 = vmatpush1.msra.mxu0 0.0
      %5760 = vmatprep.subr.mxu0 0.0
      %5761 = vmatpush1.msra.mxu0 0.0
      %5762 = vmatprep.subr.mxu0 0.0
      %5763 = vmatpush1.msra.mxu0 0.0
      %5764 = vmatprep.subr.mxu0 0.0
      %5765 = vmatpush1.msra.mxu0 0.0
      %5766 = vmatprep.subr.mxu0 0.0
      %5767 = vmatpush1.msra.mxu0 0.0
      %5768 = vmatprep.subr.mxu0 0.0
      %5769 = vmatpush1.msra.mxu0 0.0
      %5770 = vmatprep.subr.mxu0 0.0
      %5771 = vmatpush1.msra.mxu0 0.0
      %5772 = vmatprep.subr.mxu0 0.0
      %5773 = vmatpush1.msra.mxu0 0.0
      %5774 = vmatprep.subr.mxu0 0.0
      %5775 = vmatpush1.msra.mxu0 0.0
      %5776 = vmatprep.subr.mxu0 0.0
      %5777 = vmatpush1.msra.mxu0 0.0
      %5778 = vmatprep.subr.mxu0 0.0
      %5779 = vmatpush1.msra.mxu0 0.0
      %5780 = vmatprep.mubr.f32.mxu0 0.0
      %5781 = vmatmul.mubr.f32.gmra.mrb[0].mxu0 %v5085
      %v5782 = vpop.f32.mrb[0].mxu0
      %v5783 = vadd.f32 0.0, %v5782
      %v5784 = vpop.f32.mrb[0].mxu0
      %5785 = vmatprep.mubr.f32.mxu0 0.0
      %5786 = vmatmul.mubr.f32.gmra.mrb[0].mxu0 %v5088
      %v5787 = vpop.f32.mrb[0].mxu0
      %v5788 = vadd.f32 0.0, %v5787
      %v5789 = vpop.f32.mrb[0].mxu0
      %5790 = vmatprep.mubr.f32.mxu0 0.0
      %5791 = vmatmul.mubr.f32.gmra.mrb[0].mxu0 %v5091
      %v5792 = vpop.f32.mrb[0].mxu0
      %v5793 = vadd.f32 0.0, %v5792
      %v5794 = vpop.f32.mrb[0].mxu0
      %5795 = vmatprep.mubr.f32.mxu0 0.0
      %5796 = vmatmul.mubr.f32.gmra.mrb[0].mxu0 %v5094
      %v5797 = vpop.f32.mrb[0].mxu0
      %v5798 = vadd.f32 0.0, %v5797
      %v5799 = vpop.f32.mrb[0].mxu0
      %5800 = vmatprep.mubr.f32.mxu0 0.0
      %5801 = vmatmul.mubr.f32.gmra.mrb[0].mxu0 %v5097
      %v5802 = vpop.f32.mrb[0].mxu0
      %v5803 = vadd.f32 0.0, %v5802
      %v5804 = vpop.f32.mrb[0].mxu0
      %5805 = vmatprep.mubr.f32.mxu0 0.0
      %5806 = vmatmul.mubr.f32.gmra.mrb[0].mxu0 %v5100
      %v5807 = vpop.f32.mrb[0].mxu0
      %v5808 = vadd.f32 0.0, %v5807
      %v5809 = vpop.f32.mrb[0].mxu0
      %5810 = vmatprep.mubr.f32.mxu0 0.0
      %5811 = vmatmul.mubr.f32.gmra.mrb[0].mxu0 %v5103
      %v5812 = vpop.f32.mrb[0].mxu0
      %v5813 = vadd.f32 0.0, %v5812
      %v5814 = vpop.f32.mrb[0].mxu0
      %5815 = vmatprep.mubr.f32.mxu0 0.0
      %5816 = vmatmul.mubr.f32.gmra.mrb[0].mxu0 %v5106
      %v5817 = vpop.f32.mrb[0].mxu0
      %v5818 = vadd.f32 0.0, %v5817
      %v5819 = vpop.f32.mrb[0].mxu0
      %5820 = vmatprep.mubr.f32.mxu0 0.0
      %5821 = vmatmul.mubr.f32.gmra.mrb[0].mxu0 %v5109
      %v5822 = vpop.f32.mrb[0].mxu0
      %v5823 = vadd.f32 0.0, %v5822
      %v5824 = vpop.f32.mrb[0].mxu0
      %5825 = vmatprep.mubr.f32.mxu0 0.0
      %5826 = vmatmul.mubr.f32.gmra.mrb[0].mxu0 %v5112
      %v5827 = vpop.f32.mrb[0].mxu0
      %v5828 = vadd.f32 0.0, %v5827
      %v5829 = vpop.f32.mrb[0].mxu0
      %5830 = vmatprep.mubr.f32.mxu0 0.0
      %5831 = vmatmul.mubr.f32.gmra.mrb[0].mxu0 %v5115
      %v5832 = vpop.f32.mrb[0].mxu0
      %v5833 = vadd.f32 0.0, %v5832
      %v5834 = vpop.f32.mrb[0].mxu0
      %5835 = vmatprep.mubr.f32.mxu0 0.0
      %5836 = vmatmul.mubr.f32.gmra.mrb[0].mxu0 %v5118
      %v5837 = vpop.f32.mrb[0].mxu0
      %v5838 = vadd.f32 0.0, %v5837
      %v5839 = vpop.f32.mrb[0].mxu0
      %5840 = vmatprep.mubr.f32.mxu0 0.0
      %5841 = vmatmul.mubr.f32.gmra.mrb[0].mxu0 %v5121
      %v5842 = vpop.f32.mrb[0].mxu0
      %v5843 = vadd.f32 0.0, %v5842
      %v5844 = vpop.f32.mrb[0].mxu0
      %5845 = vmatprep.mubr.f32.mxu0 0.0
      %5846 = vmatmul.mubr.f32.gmra.mrb[0].mxu0 %v5124
      %v5847 = vpop.f32.mrb[0].mxu0
      %v5848 = vadd.f32 0.0, %v5847
      %v5849 = vpop.f32.mrb[0].mxu0
      %5850 = vmatprep.mubr.f32.mxu0 0.0
      %5851 = vmatmul.mubr.f32.gmra.mrb[0].mxu0 %v5127
      %v5852 = vpop.f32.mrb[0].mxu0
      %v5853 = vadd.f32 0.0, %v5852
      %v5854 = vpop.f32.mrb[0].mxu0
      %5855 = vmatprep.mubr.f32.mxu0 0.0
      %5856 = vmatmul.mubr.f32.gmra.mrb[0].mxu0 %v5130
      %v5857 = vpop.f32.mrb[0].mxu0
      %v5858 = vadd.f32 0.0, %v5857
      %v5859 = vpop.f32.mrb[0].mxu0
      %5860 = vdwg.mxu0
      %v5861 = vpack.c.bf16 %v5788, %v5783
      %v5862 = vpack.c.bf16 %v5798, %v5793
      %v5863 = vpack.c.bf16 %v5808, %v5803
      %v5864 = vpack.c.bf16 %v5818, %v5813
      %v5865 = vpack.c.bf16 %v5828, %v5823
      %v5866 = vpack.c.bf16 %v5838, %v5833
      %v5867 = vpack.c.bf16 %v5848, %v5843
      %v5868 = vpack.c.bf16 %v5858, %v5853
      %v5870 = vlaneseq
      %v5871 = vshrl.u32 %v5870, 7
      %v5872 = vsub.s32 0, %v5871
      %v5873 = vrot.slane %v5715, %v5872
      %5875 = vmatprep.subr.bf16.mxu0 0
      %5876 = vmatpush1.bf16.msra.mxu0 %v5861
      %5877 = vmatprep.subr.bf16.mxu0 0
      %5878 = vmatpush1.bf16.msra.mxu0 %v5862
      %5879 = vmatprep.subr.bf16.mxu0 0
      %5880 = vmatpush1.bf16.msra.mxu0 %v5863
      %5881 = vmatprep.subr.bf16.mxu0 0
      %5882 = vmatpush1.bf16.msra.mxu0 %v5864
      %5883 = vmatprep.subr.bf16.mxu0 0
      %5884 = vmatpush1.bf16.msra.mxu0 %v5865
      %5885 = vmatprep.subr.bf16.mxu0 0
      %5886 = vmatpush1.bf16.msra.mxu0 %v5866
      %5887 = vmatprep.subr.bf16.mxu0 0
      %5888 = vmatpush1.bf16.msra.mxu0 %v5867
      %5889 = vmatprep.subr.bf16.mxu0 0
      %5890 = vmatpush1.bf16.msra.mxu0 %v5868
      %5891 = vmatprep.subr.bf16.mxu0 0
      %5892 = vmatpush1.bf16.msra.mxu0 0
      %5893 = vmatprep.subr.bf16.mxu0 0
      %5894 = vmatpush1.bf16.msra.mxu0 0
      %5895 = vmatprep.subr.bf16.mxu0 0
      %5896 = vmatpush1.bf16.msra.mxu0 0
      %5897 = vmatprep.subr.bf16.mxu0 0
      %5898 = vmatpush1.bf16.msra.mxu0 0
      %5899 = vmatprep.subr.bf16.mxu0 0
      %5900 = vmatpush1.bf16.msra.mxu0 0
      %5901 = vmatprep.subr.bf16.mxu0 0
      %5902 = vmatpush1.bf16.msra.mxu0 0
      %5903 = vmatprep.subr.bf16.mxu0 0
      %5904 = vmatpush1.bf16.msra.mxu0 0
      %5905 = vmatprep.subr.bf16.mxu0 0
      %5906 = vmatpush1.bf16.msra.mxu0 0
      %5907 = vmatprep.mubr.bf16.mxu0 0
      %5908 = vmatmul.mubr.bf16.gmra.mrb[0].mxu0 %v689
      %v5909 = vpop.f32.mrb[0].mxu0
      %v5910 = vadd.f32 %v5873, %v5909
      %v5911 = vpop.f32.mrb[0].mxu0
      %v5912 = vpop.f32.mrb[0].mxu0
      %v5913 = vadd.f32 %v5873, %v5912
      %v5914 = vpop.f32.mrb[0].mxu0
      %5915 = vmatprep.mubr.bf16.mxu0 0
      %5916 = vmatmul.mubr.bf16.gmra.mrb[0].mxu0 %v690
      %v5917 = vpop.f32.mrb[0].mxu0
      %v5918 = vadd.f32 %v5873, %v5917
      %v5919 = vpop.f32.mrb[0].mxu0
      %v5920 = vpop.f32.mrb[0].mxu0
      %v5921 = vadd.f32 %v5873, %v5920
      %v5922 = vpop.f32.mrb[0].mxu0
      %5923 = vmatprep.mubr.bf16.mxu0 0
      %5924 = vmatmul.mubr.bf16.gmra.mrb[0].mxu0 %v691
      %v5925 = vpop.f32.mrb[0].mxu0
      %v5926 = vadd.f32 %v5873, %v5925
      %v5927 = vpop.f32.mrb[0].mxu0
      %v5928 = vpop.f32.mrb[0].mxu0
      %v5929 = vadd.f32 %v5873, %v5928
      %v5930 = vpop.f32.mrb[0].mxu0
      %5931 = vmatprep.mubr.bf16.mxu0 0
      %5932 = vmatmul.mubr.bf16.gmra.mrb[0].mxu0 %v692
      %v5933 = vpop.f32.mrb[0].mxu0
      %v5934 = vadd.f32 %v5873, %v5933
      %v5935 = vpop.f32.mrb[0].mxu0
      %v5936 = vpop.f32.mrb[0].mxu0
      %v5937 = vadd.f32 %v5873, %v5936
      %v5938 = vpop.f32.mrb[0].mxu0
      %5939 = vmatprep.mubr.bf16.mxu0 0
      %5940 = vmatmul.mubr.bf16.gmra.mrb[0].mxu0 %v693
      %v5941 = vpop.f32.mrb[0].mxu0
      %v5942 = vadd.f32 %v5873, %v5941
      %v5943 = vpop.f32.mrb[0].mxu0
      %v5944 = vpop.f32.mrb[0].mxu0
      %v5945 = vadd.f32 %v5873, %v5944
      %v5946 = vpop.f32.mrb[0].mxu0
      %5947 = vmatprep.mubr.bf16.mxu0 0
      %5948 = vmatmul.mubr.bf16.gmra.mrb[0].mxu0 %v694
      %v5949 = vpop.f32.mrb[0].mxu0
      %v5950 = vadd.f32 %v5873, %v5949
      %v5951 = vpop.f32.mrb[0].mxu0
      %v5952 = vpop.f32.mrb[0].mxu0
      %v5953 = vadd.f32 %v5873, %v5952
      %v5954 = vpop.f32.mrb[0].mxu0
      %5955 = vmatprep.mubr.bf16.mxu0 0
      %5956 = vmatmul.mubr.bf16.gmra.mrb[0].mxu0 %v695
      %v5957 = vpop.f32.mrb[0].mxu0
      %v5958 = vadd.f32 %v5873, %v5957
      %v5959 = vpop.f32.mrb[0].mxu0
      %v5960 = vpop.f32.mrb[0].mxu0
      %v5961 = vadd.f32 %v5873, %v5960
      %v5962 = vpop.f32.mrb[0].mxu0
      %5963 = vmatprep.mubr.bf16.mxu0 0
      %5964 = vmatmul.mubr.bf16.gmra.mrb[0].mxu0 %v696
      %v5965 = vpop.f32.mrb[0].mxu0
      %v5966 = vadd.f32 %v5873, %v5965
      %v5967 = vpop.f32.mrb[0].mxu0
      %v5968 = vpop.f32.mrb[0].mxu0
      %v5969 = vadd.f32 %v5873, %v5968
      %v5970 = vpop.f32.mrb[0].mxu0
      %5971 = vdwg.mxu0
      %v5972 = vmax.f32 %v5910, 0.0
      %v5973 = vmax.f32 %v5913, 0.0
      %v5974 = vmax.f32 %v5918, 0.0
      %v5975 = vmax.f32 %v5921, 0.0
      %v5976 = vmax.f32 %v5926, 0.0
      %v5977 = vmax.f32 %v5929, 0.0
      %v5978 = vmax.f32 %v5934, 0.0
      %v5979 = vmax.f32 %v5937, 0.0
      %v5980 = vmax.f32 %v5942, 0.0
      %v5981 = vmax.f32 %v5945, 0.0
      %v5982 = vmax.f32 %v5950, 0.0
      %v5983 = vmax.f32 %v5953, 0.0
      %v5984 = vmax.f32 %v5958, 0.0
      %v5985 = vmax.f32 %v5961, 0.0
      %v5986 = vmax.f32 %v5966, 0.0
      %v5987 = vmax.f32 %v5969, 0.0
      %v5989 = vsel %vm932, %v5972, 0
      %v5992 = vsel %vm932, %v5973, 0
      %v5995 = vsel %vm932, %v5974, 0
      %v5998 = vsel %vm932, %v5975, 0
      %v6001 = vsel %vm932, %v5976, 0
      %v6004 = vsel %vm932, %v5977, 0
      %v6007 = vsel %vm932, %v5978, 0
      %v6010 = vsel %vm932, %v5979, 0
      %v6013 = vsel %vm932, %v5980, 0
      %v6016 = vsel %vm932, %v5981, 0
      %v6019 = vsel %vm932, %v5982, 0
      %v6022 = vsel %vm932, %v5983, 0
      %v6025 = vsel %vm932, %v5984, 0
      %v6028 = vsel %vm932, %v5985, 0
      %v6031 = vsel %vm932, %v5986, 0
      %v6034 = vsel %vm932, %v5987, 0
      %6036 = vmatprep.subr.mxu0 0.0
      %6037 = vmatpush1.msra.mxu0 %v697
      %6038 = vmatprep.subr.mxu0 0.0
      %6039 = vmatpush1.msra.mxu0 %v698
      %6040 = vmatprep.subr.mxu0 0.0
      %6041 = vmatpush1.msra.mxu0 %v699
      %6042 = vmatprep.subr.mxu0 0.0
      %6043 = vmatpush1.msra.mxu0 %v700
      %6044 = vmatprep.subr.mxu0 0.0
      %6045 = vmatpush1.msra.mxu0 0.0
      %6046 = vmatprep.subr.mxu0 0.0
      %6047 = vmatpush1.msra.mxu0 0.0
      %6048 = vmatprep.subr.mxu0 0.0
      %6049 = vmatpush1.msra.mxu0 0.0
      %6050 = vmatprep.subr.mxu0 0.0
      %6051 = vmatpush1.msra.mxu0 0.0
      %6052 = vmatprep.subr.mxu0 0.0
      %6053 = vmatpush1.msra.mxu0 0.0
      %6054 = vmatprep.subr.mxu0 0.0
      %6055 = vmatpush1.msra.mxu0 0.0
      %6056 = vmatprep.subr.mxu0 0.0
      %6057 = vmatpush1.msra.mxu0 0.0
      %6058 = vmatprep.subr.mxu0 0.0
      %6059 = vmatpush1.msra.mxu0 0.0
      %6060 = vmatprep.subr.mxu0 0.0
      %6061 = vmatpush1.msra.mxu0 0.0
      %6062 = vmatprep.subr.mxu0 0.0
      %6063 = vmatpush1.msra.mxu0 0.0
      %6064 = vmatprep.subr.mxu0 0.0
      %6065 = vmatpush1.msra.mxu0 0.0
      %6066 = vmatprep.subr.mxu0 0.0
      %6067 = vmatpush1.msra.mxu0 0.0
      %6068 = vmatprep.subr.mxu0 0.0
      %6069 = vmatpush1.msra.mxu0 0.0
      %6070 = vmatprep.subr.mxu0 0.0
      %6071 = vmatpush1.msra.mxu0 0.0
      %6072 = vmatprep.subr.mxu0 0.0
      %6073 = vmatpush1.msra.mxu0 0.0
      %6074 = vmatprep.subr.mxu0 0.0
      %6075 = vmatpush1.msra.mxu0 0.0
      %6076 = vmatprep.subr.mxu0 0.0
      %6077 = vmatpush1.msra.mxu0 0.0
      %6078 = vmatprep.subr.mxu0 0.0
      %6079 = vmatpush1.msra.mxu0 0.0
      %6080 = vmatprep.subr.mxu0 0.0
      %6081 = vmatpush1.msra.mxu0 0.0
      %6082 = vmatprep.subr.mxu0 0.0
      %6083 = vmatpush1.msra.mxu0 0.0
      %6084 = vmatprep.subr.mxu0 0.0
      %6085 = vmatpush1.msra.mxu0 0.0
      %6086 = vmatprep.subr.mxu0 0.0
      %6087 = vmatpush1.msra.mxu0 0.0
      %6088 = vmatprep.subr.mxu0 0.0
      %6089 = vmatpush1.msra.mxu0 0.0
      %6090 = vmatprep.subr.mxu0 0.0
      %6091 = vmatpush1.msra.mxu0 0.0
      %6092 = vmatprep.subr.mxu0 0.0
      %6093 = vmatpush1.msra.mxu0 0.0
      %6094 = vmatprep.subr.mxu0 0.0
      %6095 = vmatpush1.msra.mxu0 0.0
      %6096 = vmatprep.subr.mxu0 0.0
      %6097 = vmatpush1.msra.mxu0 0.0
      %6098 = vmatprep.subr.mxu0 0.0
      %6099 = vmatpush1.msra.mxu0 0.0
      %6100 = vmatprep.mubr.f32.mxu0 0.0
      %6101 = vmatmul.mubr.f32.gmra.mrb[0].mxu0 %v5989
      %v6102 = vpop.f32.mrb[0].mxu0
      %v6103 = vadd.f32 %v722, %v6102
      %v6104 = vpop.f32.mrb[0].mxu0
      %6105 = vmatprep.mubr.f32.mxu0 0.0
      %6106 = vmatmul.mubr.f32.gmra.mrb[0].mxu0 %v5992
      %v6107 = vpop.f32.mrb[0].mxu0
      %v6108 = vadd.f32 %v722, %v6107
      %v6109 = vpop.f32.mrb[0].mxu0
      %6110 = vmatprep.mubr.f32.mxu0 0.0
      %6111 = vmatmul.mubr.f32.gmra.mrb[0].mxu0 %v5995
      %v6112 = vpop.f32.mrb[0].mxu0
      %v6113 = vadd.f32 %v722, %v6112
      %v6114 = vpop.f32.mrb[0].mxu0
      %6115 = vmatprep.mubr.f32.mxu0 0.0
      %6116 = vmatmul.mubr.f32.gmra.mrb[0].mxu0 %v5998
      %v6117 = vpop.f32.mrb[0].mxu0
      %v6118 = vadd.f32 %v722, %v6117
      %v6119 = vpop.f32.mrb[0].mxu0
      %6120 = vmatprep.mubr.f32.mxu0 0.0
      %6121 = vmatmul.mubr.f32.gmra.mrb[0].mxu0 %v6001
      %v6122 = vpop.f32.mrb[0].mxu0
      %v6123 = vadd.f32 %v722, %v6122
      %v6124 = vpop.f32.mrb[0].mxu0
      %6125 = vmatprep.mubr.f32.mxu0 0.0
      %6126 = vmatmul.mubr.f32.gmra.mrb[0].mxu0 %v6004
      %v6127 = vpop.f32.mrb[0].mxu0
      %v6128 = vadd.f32 %v722, %v6127
      %v6129 = vpop.f32.mrb[0].mxu0
      %6130 = vmatprep.mubr.f32.mxu0 0.0
      %6131 = vmatmul.mubr.f32.gmra.mrb[0].mxu0 %v6007
      %v6132 = vpop.f32.mrb[0].mxu0
      %v6133 = vadd.f32 %v722, %v6132
      %v6134 = vpop.f32.mrb[0].mxu0
      %6135 = vmatprep.mubr.f32.mxu0 0.0
      %6136 = vmatmul.mubr.f32.gmra.mrb[0].mxu0 %v6010
      %v6137 = vpop.f32.mrb[0].mxu0
      %v6138 = vadd.f32 %v722, %v6137
      %v6139 = vpop.f32.mrb[0].mxu0
      %6140 = vmatprep.mubr.f32.mxu0 0.0
      %6141 = vmatmul.mubr.f32.gmra.mrb[0].mxu0 %v6013
      %v6142 = vpop.f32.mrb[0].mxu0
      %v6143 = vadd.f32 %v722, %v6142
      %v6144 = vpop.f32.mrb[0].mxu0
      %6145 = vmatprep.mubr.f32.mxu0 0.0
      %6146 = vmatmul.mubr.f32.gmra.mrb[0].mxu0 %v6016
      %v6147 = vpop.f32.mrb[0].mxu0
      %v6148 = vadd.f32 %v722, %v6147
      %v6149 = vpop.f32.mrb[0].mxu0
      %6150 = vmatprep.mubr.f32.mxu0 0.0
      %6151 = vmatmul.mubr.f32.gmra.mrb[0].mxu0 %v6019
      %v6152 = vpop.f32.mrb[0].mxu0
      %v6153 = vadd.f32 %v722, %v6152
      %v6154 = vpop.f32.mrb[0].mxu0
      %6155 = vmatprep.mubr.f32.mxu0 0.0
      %6156 = vmatmul.mubr.f32.gmra.mrb[0].mxu0 %v6022
      %v6157 = vpop.f32.mrb[0].mxu0
      %v6158 = vadd.f32 %v722, %v6157
      %v6159 = vpop.f32.mrb[0].mxu0
      %6160 = vmatprep.mubr.f32.mxu0 0.0
      %6161 = vmatmul.mubr.f32.gmra.mrb[0].mxu0 %v6025
      %v6162 = vpop.f32.mrb[0].mxu0
      %v6163 = vadd.f32 %v722, %v6162
      %v6164 = vpop.f32.mrb[0].mxu0
      %6165 = vmatprep.mubr.f32.mxu0 0.0
      %6166 = vmatmul.mubr.f32.gmra.mrb[0].mxu0 %v6028
      %v6167 = vpop.f32.mrb[0].mxu0
      %v6168 = vadd.f32 %v722, %v6167
      %v6169 = vpop.f32.mrb[0].mxu0
      %6170 = vmatprep.mubr.f32.mxu0 0.0
      %6171 = vmatmul.mubr.f32.gmra.mrb[0].mxu0 %v6031
      %v6172 = vpop.f32.mrb[0].mxu0
      %v6173 = vadd.f32 %v722, %v6172
      %v6174 = vpop.f32.mrb[0].mxu0
      %6175 = vmatprep.mubr.f32.mxu0 0.0
      %6176 = vmatmul.mubr.f32.gmra.mrb[0].mxu0 %v6034
      %v6177 = vpop.f32.mrb[0].mxu0
      %v6178 = vadd.f32 %v722, %v6177
      %v6179 = vpop.f32.mrb[0].mxu0
      %6180 = vdwg.mxu0
      %v6181 = vmax.f32 %v6103, 0.0
      %v6182 = vmax.f32 %v6108, 0.0
      %v6183 = vmax.f32 %v6113, 0.0
      %v6184 = vmax.f32 %v6118, 0.0
      %v6185 = vmax.f32 %v6123, 0.0
      %v6186 = vmax.f32 %v6128, 0.0
      %v6187 = vmax.f32 %v6133, 0.0
      %v6188 = vmax.f32 %v6138, 0.0
      %v6189 = vmax.f32 %v6143, 0.0
      %v6190 = vmax.f32 %v6148, 0.0
      %v6191 = vmax.f32 %v6153, 0.0
      %v6192 = vmax.f32 %v6158, 0.0
      %v6193 = vmax.f32 %v6163, 0.0
      %v6194 = vmax.f32 %v6168, 0.0
      %v6195 = vmax.f32 %v6173, 0.0
      %v6196 = vmax.f32 %v6178, 0.0
      %v6198 = vsel %vm1238, %v6181, 0
      %v6201 = vsel %vm1238, %v6182, 0
      %v6204 = vsel %vm1238, %v6183, 0
      %v6207 = vsel %vm1238, %v6184, 0
      %v6210 = vsel %vm1238, %v6185, 0
      %v6213 = vsel %vm1238, %v6186, 0
      %v6216 = vsel %vm1238, %v6187, 0
      %v6219 = vsel %vm1238, %v6188, 0
      %v6222 = vsel %vm1238, %v6189, 0
      %v6225 = vsel %vm1238, %v6190, 0
      %v6228 = vsel %vm1238, %v6191, 0
      %v6231 = vsel %vm1238, %v6192, 0
      %v6234 = vsel %vm1238, %v6193, 0
      %v6237 = vsel %vm1238, %v6194, 0
      %v6240 = vsel %vm1238, %v6195, 0
      %v6243 = vsel %vm1238, %v6196, 0
      %6245 = vmatprep.subr.mxu0 0.0
      %6246 = vmatpush1.msra.mxu0 %v701
      %6247 = vmatprep.subr.mxu0 0.0
      %6248 = vmatpush1.msra.mxu0 %v702
      %6249 = vmatprep.subr.mxu0 0.0
      %6250 = vmatpush1.msra.mxu0 %v703
      %6251 = vmatprep.subr.mxu0 0.0
      %6252 = vmatpush1.msra.mxu0 %v704
      %6253 = vmatprep.subr.mxu0 0.0
      %6254 = vmatpush1.msra.mxu0 %v705
      %6255 = vmatprep.subr.mxu0 0.0
      %6256 = vmatpush1.msra.mxu0 %v706
      %6257 = vmatprep.subr.mxu0 0.0
      %6258 = vmatpush1.msra.mxu0 %v707
      %6259 = vmatprep.subr.mxu0 0.0
      %6260 = vmatpush1.msra.mxu0 %v708
      %6261 = vmatprep.subr.mxu0 0.0
      %6262 = vmatpush1.msra.mxu0 0.0
      %6263 = vmatprep.subr.mxu0 0.0
      %6264 = vmatpush1.msra.mxu0 0.0
      %6265 = vmatprep.subr.mxu0 0.0
      %6266 = vmatpush1.msra.mxu0 0.0
      %6267 = vmatprep.subr.mxu0 0.0
      %6268 = vmatpush1.msra.mxu0 0.0
      %6269 = vmatprep.subr.mxu0 0.0
      %6270 = vmatpush1.msra.mxu0 0.0
      %6271 = vmatprep.subr.mxu0 0.0
      %6272 = vmatpush1.msra.mxu0 0.0
      %6273 = vmatprep.subr.mxu0 0.0
      %6274 = vmatpush1.msra.mxu0 0.0
      %6275 = vmatprep.subr.mxu0 0.0
      %6276 = vmatpush1.msra.mxu0 0.0
      %6277 = vmatprep.subr.mxu0 0.0
      %6278 = vmatpush1.msra.mxu0 0.0
      %6279 = vmatprep.subr.mxu0 0.0
      %6280 = vmatpush1.msra.mxu0 0.0
      %6281 = vmatprep.subr.mxu0 0.0
      %6282 = vmatpush1.msra.mxu0 0.0
      %6283 = vmatprep.subr.mxu0 0.0
      %6284 = vmatpush1.msra.mxu0 0.0
      %6285 = vmatprep.subr.mxu0 0.0
      %6286 = vmatpush1.msra.mxu0 0.0
      %6287 = vmatprep.subr.mxu0 0.0
      %6288 = vmatpush1.msra.mxu0 0.0
      %6289 = vmatprep.subr.mxu0 0.0
      %6290 = vmatpush1.msra.mxu0 0.0
      %6291 = vmatprep.subr.mxu0 0.0
      %6292 = vmatpush1.msra.mxu0 0.0
      %6293 = vmatprep.subr.mxu0 0.0
      %6294 = vmatpush1.msra.mxu0 0.0
      %6295 = vmatprep.subr.mxu0 0.0
      %6296 = vmatpush1.msra.mxu0 0.0
      %6297 = vmatprep.subr.mxu0 0.0
      %6298 = vmatpush1.msra.mxu0 0.0
      %6299 = vmatprep.subr.mxu0 0.0
      %6300 = vmatpush1.msra.mxu0 0.0
      %6301 = vmatprep.subr.mxu0 0.0
      %6302 = vmatpush1.msra.mxu0 0.0
      %6303 = vmatprep.subr.mxu0 0.0
      %6304 = vmatpush1.msra.mxu0 0.0
      %6305 = vmatprep.subr.mxu0 0.0
      %6306 = vmatpush1.msra.mxu0 0.0
      %6307 = vmatprep.subr.mxu0 0.0
      %6308 = vmatpush1.msra.mxu0 0.0
      %6309 = vmatprep.mubr.f32.mxu0 0.0
      %6310 = vmatmul.mubr.f32.gmra.mrb[0].mxu0 %v6198
      %v6311 = vpop.f32.mrb[0].mxu0
      %v6312 = vadd.f32 %v729, %v6311
      %v6313 = vpop.f32.mrb[0].mxu0
      %6314 = vmatprep.mubr.f32.mxu0 0.0
      %6315 = vmatmul.mubr.f32.gmra.mrb[0].mxu0 %v6201
      %v6316 = vpop.f32.mrb[0].mxu0
      %v6317 = vadd.f32 %v729, %v6316
      %v6318 = vpop.f32.mrb[0].mxu0
      %6319 = vmatprep.mubr.f32.mxu0 0.0
      %6320 = vmatmul.mubr.f32.gmra.mrb[0].mxu0 %v6204
      %v6321 = vpop.f32.mrb[0].mxu0
      %v6322 = vadd.f32 %v729, %v6321
      %v6323 = vpop.f32.mrb[0].mxu0
      %6324 = vmatprep.mubr.f32.mxu0 0.0
      %6325 = vmatmul.mubr.f32.gmra.mrb[0].mxu0 %v6207
      %v6326 = vpop.f32.mrb[0].mxu0
      %v6327 = vadd.f32 %v729, %v6326
      %v6328 = vpop.f32.mrb[0].mxu0
      %6329 = vmatprep.mubr.f32.mxu0 0.0
      %6330 = vmatmul.mubr.f32.gmra.mrb[0].mxu0 %v6210
      %v6331 = vpop.f32.mrb[0].mxu0
      %v6332 = vadd.f32 %v729, %v6331
      %v6333 = vpop.f32.mrb[0].mxu0
      %6334 = vmatprep.mubr.f32.mxu0 0.0
      %6335 = vmatmul.mubr.f32.gmra.mrb[0].mxu0 %v6213
      %v6336 = vpop.f32.mrb[0].mxu0
      %v6337 = vadd.f32 %v729, %v6336
      %v6338 = vpop.f32.mrb[0].mxu0
      %6339 = vmatprep.mubr.f32.mxu0 0.0
      %6340 = vmatmul.mubr.f32.gmra.mrb[0].mxu0 %v6216
      %v6341 = vpop.f32.mrb[0].mxu0
      %v6342 = vadd.f32 %v729, %v6341
      %v6343 = vpop.f32.mrb[0].mxu0
      %6344 = vmatprep.mubr.f32.mxu0 0.0
      %6345 = vmatmul.mubr.f32.gmra.mrb[0].mxu0 %v6219
      %v6346 = vpop.f32.mrb[0].mxu0
      %v6347 = vadd.f32 %v729, %v6346
      %v6348 = vpop.f32.mrb[0].mxu0
      %6349 = vmatprep.mubr.f32.mxu0 0.0
      %6350 = vmatmul.mubr.f32.gmra.mrb[0].mxu0 %v6222
      %v6351 = vpop.f32.mrb[0].mxu0
      %v6352 = vadd.f32 %v729, %v6351
      %v6353 = vpop.f32.mrb[0].mxu0
      %6354 = vmatprep.mubr.f32.mxu0 0.0
      %6355 = vmatmul.mubr.f32.gmra.mrb[0].mxu0 %v6225
      %v6356 = vpop.f32.mrb[0].mxu0
      %v6357 = vadd.f32 %v729, %v6356
      %v6358 = vpop.f32.mrb[0].mxu0
      %6359 = vmatprep.mubr.f32.mxu0 0.0
      %6360 = vmatmul.mubr.f32.gmra.mrb[0].mxu0 %v6228
      %v6361 = vpop.f32.mrb[0].mxu0
      %v6362 = vadd.f32 %v729, %v6361
      %v6363 = vpop.f32.mrb[0].mxu0
      %6364 = vmatprep.mubr.f32.mxu0 0.0
      %6365 = vmatmul.mubr.f32.gmra.mrb[0].mxu0 %v6231
      %v6366 = vpop.f32.mrb[0].mxu0
      %v6367 = vadd.f32 %v729, %v6366
      %v6368 = vpop.f32.mrb[0].mxu0
      %6369 = vmatprep.mubr.f32.mxu0 0.0
      %6370 = vmatmul.mubr.f32.gmra.mrb[0].mxu0 %v6234
      %v6371 = vpop.f32.mrb[0].mxu0
      %v6372 = vadd.f32 %v729, %v6371
      %v6373 = vpop.f32.mrb[0].mxu0
      %6374 = vmatprep.mubr.f32.mxu0 0.0
      %6375 = vmatmul.mubr.f32.gmra.mrb[0].mxu0 %v6237
      %v6376 = vpop.f32.mrb[0].mxu0
      %v6377 = vadd.f32 %v729, %v6376
      %v6378 = vpop.f32.mrb[0].mxu0
      %6379 = vmatprep.mubr.f32.mxu0 0.0
      %6380 = vmatmul.mubr.f32.gmra.mrb[0].mxu0 %v6240
      %v6381 = vpop.f32.mrb[0].mxu0
      %v6382 = vadd.f32 %v729, %v6381
      %v6383 = vpop.f32.mrb[0].mxu0
      %6384 = vmatprep.mubr.f32.mxu0 0.0
      %6385 = vmatmul.mubr.f32.gmra.mrb[0].mxu0 %v6243
      %v6386 = vpop.f32.mrb[0].mxu0
      %v6387 = vadd.f32 %v729, %v6386
      %v6388 = vpop.f32.mrb[0].mxu0
      %6389 = vdwg.mxu0
      %v6390 = vmax.f32 %v6312, 0.0
      %v6391 = vmax.f32 %v6317, 0.0
      %v6392 = vmax.f32 %v6322, 0.0
      %v6393 = vmax.f32 %v6327, 0.0
      %v6394 = vmax.f32 %v6332, 0.0
      %v6395 = vmax.f32 %v6337, 0.0
      %v6396 = vmax.f32 %v6342, 0.0
      %v6397 = vmax.f32 %v6347, 0.0
      %v6398 = vmax.f32 %v6352, 0.0
      %v6399 = vmax.f32 %v6357, 0.0
      %v6400 = vmax.f32 %v6362, 0.0
      %v6401 = vmax.f32 %v6367, 0.0
      %v6402 = vmax.f32 %v6372, 0.0
      %v6403 = vmax.f32 %v6377, 0.0
      %v6404 = vmax.f32 %v6382, 0.0
      %v6405 = vmax.f32 %v6387, 0.0
      %v6407 = vsel %vm1238, %v6390, 0
      %v6410 = vsel %vm1238, %v6391, 0
      %v6413 = vsel %vm1238, %v6392, 0
      %v6416 = vsel %vm1238, %v6393, 0
      %v6419 = vsel %vm1238, %v6394, 0
      %v6422 = vsel %vm1238, %v6395, 0
      %v6425 = vsel %vm1238, %v6396, 0
      %v6428 = vsel %vm1238, %v6397, 0
      %v6431 = vsel %vm1238, %v6398, 0
      %v6434 = vsel %vm1238, %v6399, 0
      %v6437 = vsel %vm1238, %v6400, 0
      %v6440 = vsel %vm1238, %v6401, 0
      %v6443 = vsel %vm1238, %v6402, 0
      %v6446 = vsel %vm1238, %v6403, 0
      %v6449 = vsel %vm1238, %v6404, 0
      %v6452 = vsel %vm1238, %v6405, 0
      %6454 = vmatprep.subr.mxu0 0.0
      %6455 = vmatpush1.msra.mxu0 %v709
      %6456 = vmatprep.subr.mxu0 0.0
      %6457 = vmatpush1.msra.mxu0 %v710
      %6458 = vmatprep.subr.mxu0 0.0
      %6459 = vmatpush1.msra.mxu0 %v711
      %6460 = vmatprep.subr.mxu0 0.0
      %6461 = vmatpush1.msra.mxu0 %v712
      %6462 = vmatprep.subr.mxu0 0.0
      %6463 = vmatpush1.msra.mxu0 %v713
      %6464 = vmatprep.subr.mxu0 0.0
      %6465 = vmatpush1.msra.mxu0 %v714
      %6466 = vmatprep.subr.mxu0 0.0
      %6467 = vmatpush1.msra.mxu0 %v715
      %6468 = vmatprep.subr.mxu0 0.0
      %6469 = vmatpush1.msra.mxu0 %v716
      %6470 = vmatprep.subr.mxu0 0.0
      %6471 = vmatpush1.msra.mxu0 0.0
      %6472 = vmatprep.subr.mxu0 0.0
      %6473 = vmatpush1.msra.mxu0 0.0
      %6474 = vmatprep.subr.mxu0 0.0
      %6475 = vmatpush1.msra.mxu0 0.0
      %6476 = vmatprep.subr.mxu0 0.0
      %6477 = vmatpush1.msra.mxu0 0.0
      %6478 = vmatprep.subr.mxu0 0.0
      %6479 = vmatpush1.msra.mxu0 0.0
      %6480 = vmatprep.subr.mxu0 0.0
      %6481 = vmatpush1.msra.mxu0 0.0
      %6482 = vmatprep.subr.mxu0 0.0
      %6483 = vmatpush1.msra.mxu0 0.0
      %6484 = vmatprep.subr.mxu0 0.0
      %6485 = vmatpush1.msra.mxu0 0.0
      %6486 = vmatprep.subr.mxu0 0.0
      %6487 = vmatpush1.msra.mxu0 0.0
      %6488 = vmatprep.subr.mxu0 0.0
      %6489 = vmatpush1.msra.mxu0 0.0
      %6490 = vmatprep.subr.mxu0 0.0
      %6491 = vmatpush1.msra.mxu0 0.0
      %6492 = vmatprep.subr.mxu0 0.0
      %6493 = vmatpush1.msra.mxu0 0.0
      %6494 = vmatprep.subr.mxu0 0.0
      %6495 = vmatpush1.msra.mxu0 0.0
      %6496 = vmatprep.subr.mxu0 0.0
      %6497 = vmatpush1.msra.mxu0 0.0
      %6498 = vmatprep.subr.mxu0 0.0
      %6499 = vmatpush1.msra.mxu0 0.0
      %6500 = vmatprep.subr.mxu0 0.0
      %6501 = vmatpush1.msra.mxu0 0.0
      %6502 = vmatprep.subr.mxu0 0.0
      %6503 = vmatpush1.msra.mxu0 0.0
      %6504 = vmatprep.subr.mxu0 0.0
      %6505 = vmatpush1.msra.mxu0 0.0
      %6506 = vmatprep.subr.mxu0 0.0
      %6507 = vmatpush1.msra.mxu0 0.0
      %6508 = vmatprep.subr.mxu0 0.0
      %6509 = vmatpush1.msra.mxu0 0.0
      %6510 = vmatprep.subr.mxu0 0.0
      %6511 = vmatpush1.msra.mxu0 0.0
      %6512 = vmatprep.subr.mxu0 0.0
      %6513 = vmatpush1.msra.mxu0 0.0
      %6514 = vmatprep.subr.mxu0 0.0
      %6515 = vmatpush1.msra.mxu0 0.0
      %6516 = vmatprep.subr.mxu0 0.0
      %6517 = vmatpush1.msra.mxu0 0.0
      %6518 = vmatprep.mubr.f32.mxu0 0.0
      %6519 = vmatmul.mubr.f32.gmra.mrb[0].mxu0 %v6407
      %v6520 = vpop.f32.mrb[0].mxu0
      %v6521 = vadd.f32 %v1452, %v6520
      %v6522 = vpop.f32.mrb[0].mxu0
      %6523 = vmatprep.mubr.f32.mxu0 0.0
      %6524 = vmatmul.mubr.f32.gmra.mrb[0].mxu0 %v6410
      %v6525 = vpop.f32.mrb[0].mxu0
      %v6526 = vadd.f32 %v1452, %v6525
      %v6527 = vpop.f32.mrb[0].mxu0
      %6528 = vmatprep.mubr.f32.mxu0 0.0
      %6529 = vmatmul.mubr.f32.gmra.mrb[0].mxu0 %v6413
      %v6530 = vpop.f32.mrb[0].mxu0
      %v6531 = vadd.f32 %v1452, %v6530
      %v6532 = vpop.f32.mrb[0].mxu0
      %6533 = vmatprep.mubr.f32.mxu0 0.0
      %6534 = vmatmul.mubr.f32.gmra.mrb[0].mxu0 %v6416
      %v6535 = vpop.f32.mrb[0].mxu0
      %v6536 = vadd.f32 %v1452, %v6535
      %v6537 = vpop.f32.mrb[0].mxu0
      %6538 = vmatprep.mubr.f32.mxu0 0.0
      %6539 = vmatmul.mubr.f32.gmra.mrb[0].mxu0 %v6419
      %v6540 = vpop.f32.mrb[0].mxu0
      %v6541 = vadd.f32 %v1452, %v6540
      %v6542 = vpop.f32.mrb[0].mxu0
      %6543 = vmatprep.mubr.f32.mxu0 0.0
      %6544 = vmatmul.mubr.f32.gmra.mrb[0].mxu0 %v6422
      %v6545 = vpop.f32.mrb[0].mxu0
      %v6546 = vadd.f32 %v1452, %v6545
      %v6547 = vpop.f32.mrb[0].mxu0
      %6548 = vmatprep.mubr.f32.mxu0 0.0
      %6549 = vmatmul.mubr.f32.gmra.mrb[0].mxu0 %v6425
      %v6550 = vpop.f32.mrb[0].mxu0
      %v6551 = vadd.f32 %v1452, %v6550
      %v6552 = vpop.f32.mrb[0].mxu0
      %6553 = vmatprep.mubr.f32.mxu0 0.0
      %6554 = vmatmul.mubr.f32.gmra.mrb[0].mxu0 %v6428
      %v6555 = vpop.f32.mrb[0].mxu0
      %v6556 = vadd.f32 %v1452, %v6555
      %v6557 = vpop.f32.mrb[0].mxu0
      %6558 = vmatprep.mubr.f32.mxu0 0.0
      %6559 = vmatmul.mubr.f32.gmra.mrb[0].mxu0 %v6431
      %v6560 = vpop.f32.mrb[0].mxu0
      %v6561 = vadd.f32 %v1452, %v6560
      %v6562 = vpop.f32.mrb[0].mxu0
      %6563 = vmatprep.mubr.f32.mxu0 0.0
      %6564 = vmatmul.mubr.f32.gmra.mrb[0].mxu0 %v6434
      %v6565 = vpop.f32.mrb[0].mxu0
      %v6566 = vadd.f32 %v1452, %v6565
      %v6567 = vpop.f32.mrb[0].mxu0
      %6568 = vmatprep.mubr.f32.mxu0 0.0
      %6569 = vmatmul.mubr.f32.gmra.mrb[0].mxu0 %v6437
      %v6570 = vpop.f32.mrb[0].mxu0
      %v6571 = vadd.f32 %v1452, %v6570
      %v6572 = vpop.f32.mrb[0].mxu0
      %6573 = vmatprep.mubr.f32.mxu0 0.0
      %6574 = vmatmul.mubr.f32.gmra.mrb[0].mxu0 %v6440
      %v6575 = vpop.f32.mrb[0].mxu0
      %v6576 = vadd.f32 %v1452, %v6575
      %v6577 = vpop.f32.mrb[0].mxu0
      %6578 = vmatprep.mubr.f32.mxu0 0.0
      %6579 = vmatmul.mubr.f32.gmra.mrb[0].mxu0 %v6443
      %v6580 = vpop.f32.mrb[0].mxu0
      %v6581 = vadd.f32 %v1452, %v6580
      %v6582 = vpop.f32.mrb[0].mxu0
      %6583 = vmatprep.mubr.f32.mxu0 0.0
      %6584 = vmatmul.mubr.f32.gmra.mrb[0].mxu0 %v6446
      %v6585 = vpop.f32.mrb[0].mxu0
      %v6586 = vadd.f32 %v1452, %v6585
      %v6587 = vpop.f32.mrb[0].mxu0
      %6588 = vmatprep.mubr.f32.mxu0 0.0
      %6589 = vmatmul.mubr.f32.gmra.mrb[0].mxu0 %v6449
      %v6590 = vpop.f32.mrb[0].mxu0
      %v6591 = vadd.f32 %v1452, %v6590
      %v6592 = vpop.f32.mrb[0].mxu0
      %6593 = vmatprep.mubr.f32.mxu0 0.0
      %6594 = vmatmul.mubr.f32.gmra.mrb[0].mxu0 %v6452
      %v6595 = vpop.f32.mrb[0].mxu0
      %v6596 = vadd.f32 %v1452, %v6595
      %v6597 = vpop.f32.mrb[0].mxu0
      %6598 = vdwg.mxu0
      %v6599 = vadd.f32 %v5695, %v6521
      %v6600 = vadd.f32 %v5696, %v6526
      %v6601 = vadd.f32 %v5697, %v6531
      %v6602 = vadd.f32 %v5698, %v6536
      %v6603 = vadd.f32 %v5699, %v6541
      %v6604 = vadd.f32 %v5700, %v6546
      %v6605 = vadd.f32 %v5701, %v6551
      %v6606 = vadd.f32 %v5702, %v6556
      %v6607 = vadd.f32 %v5703, %v6561
      %v6608 = vadd.f32 %v5704, %v6566
      %v6609 = vadd.f32 %v5705, %v6571
      %v6610 = vadd.f32 %v5706, %v6576
      %v6611 = vadd.f32 %v5707, %v6581
      %v6612 = vadd.f32 %v5708, %v6586
      %v6613 = vadd.f32 %v5709, %v6591
      %v6614 = vadd.f32 %v5710, %v6596
      %vm6615 = vcmask 7168
      %6616 = vst.msk [vmem:[%s559] sm:$0xff] %vm6615, %v6599
      %6617 = vst.msk [vmem:[%s559 + $0x8] sm:$0xff] %vm6615, %v6600
      %6618 = vst.msk [vmem:[%s559 + $0x10] sm:$0xff] %vm6615, %v6601
      %6619 = vst.msk [vmem:[%s559 + $0x18] sm:$0xff] %vm6615, %v6602
      %6620 = vst.msk [vmem:[%s559 + $0x20] sm:$0xff] %vm6615, %v6603
      %6621 = vst.msk [vmem:[%s559 + $0x28] sm:$0xff] %vm6615, %v6604
      %6622 = vst.msk [vmem:[%s559 + $0x30] sm:$0xff] %vm6615, %v6605
      %6623 = vst.msk [vmem:[%s559 + $0x38] sm:$0xff] %vm6615, %v6606
      %6624 = vst.msk [vmem:[%s559 + $0x40] sm:$0xff] %vm6615, %v6607
      %6625 = vst.msk [vmem:[%s559 + $0x48] sm:$0xff] %vm6615, %v6608
      %6626 = vst.msk [vmem:[%s559 + $0x50] sm:$0xff] %vm6615, %v6609
      %6627 = vst.msk [vmem:[%s559 + $0x58] sm:$0xff] %vm6615, %v6610
      %6628 = vst.msk [vmem:[%s559 + $0x60] sm:$0xff] %vm6615, %v6611
      %6629 = vst.msk [vmem:[%s559 + $0x68] sm:$0xff] %vm6615, %v6612
      %6630 = vst.msk [vmem:[%s559 + $0x70] sm:$0xff] %vm6615, %v6613
      %6631 = vst.msk [vmem:[%s559 + $0x78] sm:$0xff] %vm6615, %v6614
      %p6632 = scmp.lt.s32.totalorder %s33, 1
      %s6633 = scalar_select %p6632, %s33, 1
      %s6634 = smul.addr %s6633, 16
      %s6635 = smul.addr %s6634, 8
      %s6636 = scalar_lea.vmem %s20, %s6635
      // Predicated region
      $region169: #{gnn_bet5_forward.1} parent=91 // pred_check
        %p6637 = pneg %p429
      $region170: #{gnn_bet5_forward.1} parent=91 // pred_check_branch
        %6639 = sbr.rel (%p6637) target = $region172
      $region171: #{gnn_bet5_forward.1} parent=91 // pred_region
        _
      $region172: #{gnn_bet5_forward.1} parent=91 // pred_fallthru
        _
    $region92: #{gnn_bet5_forward.1} parent=5 // pred_fallthru
      _
    %p6640 = scmp.le.s32.totalorder 2, %s28
    // Predicated region
    $region173: #{gnn_bet5_forward.1} parent=5 // pred_check
      %p6641 = pneg %p6640
    $region174: #{gnn_bet5_forward.1} parent=5 // pred_check_branch
      %6643 = sbr.rel (%p6641) target = $region176
    $region175: #{gnn_bet5_forward.1} parent=5 // pred_region
      %s6644 = ssub.s32 %s28, 2
      // Predicated region
      $region177: #{gnn_bet5_forward.1} parent=175 // pred_check
        %p6645 = pneg %p435
      $region178: #{gnn_bet5_forward.1} parent=175 // pred_check_branch
        %6647 = sbr.rel (%p6645) target = $region180
      $region179: #{gnn_bet5_forward.1} parent=175 // pred_region
        %p6648 = scmp.lt.s32.totalorder %s34, 1
        %s6649 = scalar_select %p6648, %s34, 1
        %s6650 = smul.addr %s6649, 16
        %s6651 = smul.addr %s6650, 8
        %s6652 = scalar_lea.vmem %s20, %s6651
      $region180: #{gnn_bet5_forward.1} parent=175 // pred_fallthru
        _
    $region176: #{gnn_bet5_forward.1} parent=5 // pred_fallthru
      _
  $region6: #{gnn_bet5_forward.1} parent=0 // loop_footer
    %s32 = sadd.s32 1, %s28
  $region7: #{gnn_bet5_forward.1} parent=0 // loop_footer_branch
    %27 = sbr.rel target = $region3
  $region8: #{gnn_bet5_forward.1} parent=0 // loop_exit
    _
  %6653 = vsyncmov [#allocation3]
  %s6654 = vpop.sfrf %6653
  %p6655 = scmp.eq.s32.totalorder %s6654, 0
  %p6656 = pneg %p6655
  %6658 = shalt.err (%p6656)

</llo_original>
